<compile_context>
chip_gen: v5e
topology: v5e:2x2
jax: 0.10.0
libtpu: 0.0.40
codegen_flags: <defaults>
</compile_context>

<pallas_src>
import functools

import jax
import jax.numpy as jnp
import numpy as np
from jax.experimental import pallas as pl
from jax.experimental.pallas import tpu as pltpu

# The pure-JAX reference runs in full f32 (HIGHEST) to represent the PyTorch
# module exactly; the kernel uses bf16 MXU matmuls (per the perf review) and is
# validated below at bf16-appropriate tolerances.
_REF_PREC = jax.lax.Precision.HIGHEST


# ----------------------- host-side weight restructuring ----------------------
def _band_matrix(w, W):
    """(3, W*Cin, W*Cout): dy-tap band matrices implementing a 3x3 'same' conv
    along W in the lane-dense (lane = w*C + c) layout; zero padding along W is
    folded in by omitting out-of-range taps."""
    w = np.asarray(w, np.float32)                       # (3, 3, Cin, Cout) HWIO
    Cin, Cout = w.shape[2], w.shape[3]
    B = np.zeros((3, W * Cin, W * Cout), np.float32)
    for dy in range(3):
        for wo in range(W):
            for dx in range(3):
                wi = wo + dx - 1
                if 0 <= wi < W:
                    B[dy, wi * Cin:(wi + 1) * Cin,
                      wo * Cout:(wo + 1) * Cout] = w[dy, dx]
    return B


def _wpool_matrix(W, C):
    """(W*C, (W//2)*C): 2x average pool along W in the lane-dense layout
    (folded into the NEXT layer's band matrix on the host)."""
    P = np.zeros((W * C, (W // 2) * C), np.float32)
    for w in range(W):
        for c in range(C):
            P[w * C + c, (w // 2) * C + c] = 0.5
    return P


def _row_transform(nb, h_out, h_in, pool):
    """(3*nb*h_out, nb*h_in): block-diagonal (over the nb batched samples) row
    transform that produces -- for all three dy conv taps at once -- the
    dy-shifted and (if `pool`) 2x H-average-pooled rows of the previous
    activation.  Out-of-range rows (the conv's zero padding along H) are simply
    left at zero, so no halo buffers / halo zeroing are needed in the kernel."""
    M = np.zeros((3 * nb * h_out, nb * h_in), np.float32)
    for dy in range(3):
        for b in range(nb):
            for h in range(h_out):
                src = h + dy - 1
                if not (0 <= src < h_out):
                    continue
                row = dy * nb * h_out + b * h_out + h
                if pool:
                    M[row, b * h_in + 2 * src] = 0.5
                    M[row, b * h_in + 2 * src + 1] = 0.5
                else:
                    M[row, b * h_in + src] = 1.0
    return M


def _gpool_matrix(nb, h_last):
    """(nb, nb*h_last): per-sample row sum for the global average pool (the
    1/(H*W) scale and the W/C lane reduction are folded into wl_eff)."""
    G = np.zeros((nb, nb * h_last), np.float32)
    for b in range(nb):
        G[b, b * h_last:(b + 1) * h_last] = 1.0
    return G


def prepare_params(conv_params, last_params, *, H0, W0, B, cin_pad=None):
    """One-time host-side repacking of torch-style parameters into the fused
    kernel operands (bf16 for everything that feeds the MXU)."""
    L = len(conv_params)
    Hs, Ws = [], []
    H, W = H0, W0
    for i in range(L):
        Hs.append(H)
        Ws.append(W)
        if i < L - 1:
            assert H % 2 == 0 and W % 2 == 0
            H //= 2
            W //= 2

    kbands, biases, mrows = [], [], []
    for i, (w, b) in enumerate(conv_params):
        w_np = np.asarray(w, np.float32)                  # (3, 3, Cin, Cout)
        if i == 0 and cin_pad is not None and cin_pad > w_np.shape[2]:
            w_np = np.pad(w_np,
                          ((0, 0), (0, 0), (0, cin_pad - w_np.shape[2]), (0, 0)))
        band = _band_matrix(w_np, Ws[i])                  # (3, K_i, Ws[i]*Cout_i)
        if i > 0:
            c_prev = int(np.asarray(conv_params[i - 1][0]).shape[-1])
            # Fold the previous layer's W-pool into this layer's band weights.
            band = np.einsum("kp,dpq->dkq",
                             _wpool_matrix(Ws[i - 1], c_prev), band)
        # K-stack the three dy taps -> one conv matmul per layer.
        kbands.append(jnp.asarray(band.reshape(-1, band.shape[-1]), jnp.bfloat16))
        biases.append(jnp.asarray(
            np.tile(np.asarray(b, np.float32).reshape(1, -1), (1, Ws[i])),
            jnp.float32))
        mrows.append(jnp.asarray(
            _row_transform(B, Hs[i], Hs[i - 1] if i else Hs[0], pool=(i > 0)),
            jnp.bfloat16))

    gsum = jnp.asarray(_gpool_matrix(B, Hs[-1]), jnp.bfloat16)

    wl, bl = last_params
    wl_np = np.asarray(wl, np.float32)                    # (C_last, num_classes)
    scale = 1.0 / float(Hs[-1] * Ws[-1])
    wl_eff = jnp.asarray(np.concatenate([scale * wl_np] * Ws[-1], axis=0),
                         jnp.bfloat16)
    bl_eff = jnp.asarray(np.asarray(bl, np.float32).reshape(1, -1), jnp.float32)

    cpad = int(cin_pad) if cin_pad else int(np.asarray(conv_params[0][0]).shape[2])
    meta = {"Hs": tuple(Hs), "Ws": tuple(Ws), "B": int(B), "Cpad": cpad}
    return (kbands, biases, mrows, gsum, wl_eff, bl_eff), meta


# --------------------------------- fused kernel ------------------------------
def _fused_kernel(*refs, L, BH, WC):
    it = iter(refs)
    x_ref = next(it)
    kb = [next(it) for _ in range(L)]
    bias = [next(it) for _ in range(L)]
    mrow = [next(it) for _ in range(L)]
    gsum_ref = next(it)
    wl_ref = next(it)
    bl_ref = next(it)
    o_ref = next(it)
    lhs = [next(it) for _ in range(L)]

    def mm(a, b):  # bf16 x bf16 -> f32 on the MXU, single pass (DEFAULT prec)
        return jnp.dot(a, b, preferred_element_type=jnp.float32)

    prev = x_ref[...]                                     # bf16 (BH[0], WC[0])
    y = None
    for i in range(L):
        bh, wc = BH[i], WC[i]
        # One left matmul produces, for all B samples at once, the three
        # dy-shifted (+ H-pooled, + zero-padded) row sets, stacked along rows.
        shifted = mm(mrow[i][...], prev).astype(jnp.bfloat16)    # (3*bh, wc)
        # Re-stack the three row blocks along lanes -> K-stacked conv LHS.
        lhs[i][:, 0 * wc:1 * wc] = shifted[0 * bh:1 * bh]
        lhs[i][:, 1 * wc:2 * wc] = shifted[1 * bh:2 * bh]
        lhs[i][:, 2 * wc:3 * wc] = shifted[2 * bh:3 * bh]
        # Single MXU matmul per conv layer: the dy taps accumulate along K
        # inside the MXU; dx taps, W zero-padding and (for i>0) the previous
        # layer's W-pool are folded into kb[i] on the host.
        acc = mm(lhs[i][...], kb[i][...]) + bias[i][...]
        if i < L - 1:
            prev = jnp.maximum(acc, 0.0).astype(jnp.bfloat16)    # ReLU (conv1-4)
        else:
            y = acc                                              # no ReLU after conv5
    # Global average pool + final 1x1 conv: per-sample row sums, then the
    # classifier with the 1/(H*W) scale and the W/C lane reduction folded in.
    gp = mm(gsum_ref[...], y.astype(jnp.bfloat16))               # (B, W_L*C_L)
    o_ref[...] = (mm(gp.astype(jnp.bfloat16), wl_ref[...])
                  + bl_ref[...]).astype(o_ref.dtype)


# ---------------------------------- wrapper -----------------------------------
def model5l_forward(x_nchw, prepared, meta):
    kbands, biases, mrows, gsum, wl_eff, bl_eff = prepared
    Hs, Ws, B, Cpad = meta["Hs"], meta["Ws"], meta["B"], meta["Cpad"]
    L = len(kbands)
    N, C0, H0, W0 = x_nchw.shape
    assert (H0, W0) == (Hs[0], Ws[0])
    assert N % B == 0, "batch must be a multiple of the per-step block B"
    num_classes = int(wl_eff.shape[-1])

    # NCHW -> (zero-pad Cin to Cpad) -> NHWC -> lane-dense (N*H, W*Cpad) bf16.
    x = x_nchw
    if Cpad > C0:
        x = jnp.pad(x, ((0, 0), (0, Cpad - C0), (0, 0), (0, 0)))
    x2d = jnp.transpose(x, (0, 2, 3, 1)).reshape(N * H0, W0 * Cpad)
    x2d = x2d.astype(jnp.bfloat16)

    BH = tuple(B * h for h in Hs)                       # matmul M per layer
    WC = tuple(int(k.shape[0]) // 3 for k in kbands)    # LHS lane width per layer

    # Grid-invariant repacked weights: full-array blocks, constant index map
    # (never re-fetched across grid steps).
    # TODO(synk): single-buffer these with pipeline_mode=pl.Buffered(1) once the
    # repacked weights grow; at ~1-2 MB total the default double buffer is noise.
    def wspec(a):
        return pl.BlockSpec(a.shape, lambda g: (0, 0))

    in_specs = [pl.BlockSpec((BH[0], WC[0]), lambda g: (g, 0))]
    in_specs += [wspec(a) for a in kbands]
    in_specs += [wspec(a) for a in biases]
    in_specs += [wspec(a) for a in mrows]
    in_specs += [wspec(gsum), wspec(wl_eff), wspec(bl_eff)]

    # Per-layer K-stacked LHS buffers (bf16, feed the MXU directly).
    scratch_shapes = [pltpu.VMEM((BH[i], 3 * WC[i]), jnp.bfloat16)
                      for i in range(L)]

    kern = functools.partial(_fused_kernel, L=L, BH=BH, WC=WC)
    out = pl.pallas_call(
        kern,
        out_shape=jax.ShapeDtypeStruct((N, num_classes), jnp.float32),
        grid=(N // B,),
        in_specs=in_specs,
        out_specs=pl.BlockSpec((B, num_classes), lambda g: (g, 0)),
        scratch_shapes=scratch_shapes,
        compiler_params=pltpu.CompilerParams(
            dimension_semantics=("parallel",)),
    )(x2d, *kbands, *biases, *mrows, gsum, wl_eff, bl_eff)
    return out.reshape(N, num_classes, 1, 1)


# ------------------------------- parameter init ------------------------------
def init_params(key, *, cin, channels, num_classes):
    conv_params = []
    c_prev = cin
    keys = jax.random.split(key, len(channels) + 1)
    for i, c in enumerate(channels):
        kw, kb = jax.random.split(keys[i])
        fan_in = 9 * c_prev
        w = jax.random.normal(kw, (3, 3, c_prev, c), jnp.float32) * (2.0 / fan_in) ** 0.5
        b = jax.random.normal(kb, (1, c), jnp.float32) * 0.01
        conv_params.append((w, b))
        c_prev = c
    kw, kb = jax.random.split(keys[-1])
    wl = jax.random.normal(kw, (c_prev, num_classes), jnp.float32) * (1.0 / c_prev) ** 0.5
    bl = jax.random.normal(kb, (1, num_classes), jnp.float32) * 0.01
    return conv_params, (wl, bl)


# ---------------------------- pure-JAX reference -----------------------------
def reference_forward(x_nchw, conv_params, last_params):
    x = jnp.transpose(x_nchw, (0, 2, 3, 1))
    for i, (w, b) in enumerate(conv_params):
        x = jax.lax.conv_general_dilated(
            x, w, window_strides=(1, 1), padding="SAME",
            dimension_numbers=("NHWC", "HWIO", "NHWC"), precision=_REF_PREC)
        x = x + b.reshape(1, 1, 1, -1)
        if i < len(conv_params) - 1:
            x = jnp.maximum(x, 0.0)
            N, H, W, C = x.shape
            x = x.reshape(N, H // 2, 2, W // 2, 2, C).mean(axis=(2, 4))
    x = x.mean(axis=(1, 2), keepdims=True)
    wl, bl = last_params
    y = jnp.dot(x.reshape(x.shape[0], -1), wl, precision=_REF_PREC) + bl
    return jnp.transpose(y.reshape(y.shape[0], 1, 1, -1), (0, 3, 1, 2))


if __name__ == "__main__":
    key = jax.random.PRNGKey(0)
    kx, kp = jax.random.split(key)

    N, CIN, H0, W0 = 16, 3, 32, 32
    # B samples per grid step: fills the MXU (layer-1 M = B*H0 = 256) while
    # keeping grid=(2,) so both v7x TensorCores stay busy.
    B = 8

    x = jax.random.normal(kx, (N, CIN, H0, W0), jnp.float32)      # NCHW input
    conv_params, last_params = init_params(
        kp, cin=CIN, channels=(8, 16, 32, 32, 32), num_classes=10)

    prepared, meta = prepare_params(conv_params, last_params,
                                    H0=H0, W0=W0, B=B, cin_pad=4)

    fwd = jax.jit(functools.partial(model5l_forward, prepared=prepared, meta=meta))
    out = jax.block_until_ready(fwd(x))
    assert out.shape == (N, 10, 1, 1), out.shape

    ref = reference_forward(x, conv_params, last_params)
    # bf16-MXU tolerance: kernel matmuls are bf16 with f32 accumulation, the
    # reference is full-f32 HIGHEST; structural bugs would show up as O(1) errors.
    np.testing.assert_allclose(np.asarray(out), np.asarray(ref),
                               rtol=3e-2, atol=3e-2)
    print("KERNEL_OK")
</pallas_src>

<mosaic_0001>
module attributes {stable_mosaic.version = 11 : i64} {
  func.func @_fused_kernel(%arg0: i32, %arg1: memref<256x128xbf16, #tpu.memory_space<vmem>>, %arg2: memref<384x256xbf16, #tpu.memory_space<vmem>>, %arg3: memref<768x256xbf16, #tpu.memory_space<vmem>>, %arg4: memref<768x256xbf16, #tpu.memory_space<vmem>>, %arg5: memref<768x128xbf16, #tpu.memory_space<vmem>>, %arg6: memref<384x64xbf16, #tpu.memory_space<vmem>>, %arg7: memref<1x256xf32, #tpu.memory_space<vmem>>, %arg8: memref<1x256xf32, #tpu.memory_space<vmem>>, %arg9: memref<1x256xf32, #tpu.memory_space<vmem>>, %arg10: memref<1x128xf32, #tpu.memory_space<vmem>>, %arg11: memref<1x64xf32, #tpu.memory_space<vmem>>, %arg12: memref<768x256xbf16, #tpu.memory_space<vmem>>, %arg13: memref<384x256xbf16, #tpu.memory_space<vmem>>, %arg14: memref<192x128xbf16, #tpu.memory_space<vmem>>, %arg15: memref<96x64xbf16, #tpu.memory_space<vmem>>, %arg16: memref<48x32xbf16, #tpu.memory_space<vmem>>, %arg17: memref<8x16xbf16, #tpu.memory_space<vmem>>, %arg18: memref<64x10xbf16, #tpu.memory_space<vmem>>, %arg19: memref<1x10xf32, #tpu.memory_space<vmem>>, %arg20: memref<8x10xf32, #tpu.memory_space<vmem>>, %arg21: memref<256x384xbf16, #tpu.memory_space<vmem>>, %arg22: memref<128x768xbf16, #tpu.memory_space<vmem>>, %arg23: memref<64x768xbf16, #tpu.memory_space<vmem>>, %arg24: memref<32x768xbf16, #tpu.memory_space<vmem>>, %arg25: memref<16x384xbf16, #tpu.memory_space<vmem>>) attributes {dimension_semantics = [#tpu.dimension_semantics<parallel>], iteration_bounds = array<i64: 2>, scalar_prefetch = 0 : i64, scratch_operands = 5 : i64, tpu.core_type = #tpu.core_type<tc>, window_params = [{transform_indices = @transform_0, window_bounds = array<i64: 256, 128>}, {pipeline_mode = #tpu.pipeline_mode<synchronous>, transform_indices = @transform_1, window_bounds = array<i64: 384, 256>}, {pipeline_mode = #tpu.pipeline_mode<synchronous>, transform_indices = @transform_2, window_bounds = array<i64: 768, 256>}, {pipeline_mode = #tpu.pipeline_mode<synchronous>, transform_indices = @transform_3, window_bounds = array<i64: 768, 256>}, {pipeline_mode = #tpu.pipeline_mode<synchronous>, transform_indices = @transform_4, window_bounds = array<i64: 768, 128>}, {pipeline_mode = #tpu.pipeline_mode<synchronous>, transform_indices = @transform_5, window_bounds = array<i64: 384, 64>}, {pipeline_mode = #tpu.pipeline_mode<synchronous>, transform_indices = @transform_6, window_bounds = array<i64: 1, 256>}, {pipeline_mode = #tpu.pipeline_mode<synchronous>, transform_indices = @transform_7, window_bounds = array<i64: 1, 256>}, {pipeline_mode = #tpu.pipeline_mode<synchronous>, transform_indices = @transform_8, window_bounds = array<i64: 1, 256>}, {pipeline_mode = #tpu.pipeline_mode<synchronous>, transform_indices = @transform_9, window_bounds = array<i64: 1, 128>}, {pipeline_mode = #tpu.pipeline_mode<synchronous>, transform_indices = @transform_10, window_bounds = array<i64: 1, 64>}, {pipeline_mode = #tpu.pipeline_mode<synchronous>, transform_indices = @transform_11, window_bounds = array<i64: 768, 256>}, {pipeline_mode = #tpu.pipeline_mode<synchronous>, transform_indices = @transform_12, window_bounds = array<i64: 384, 256>}, {pipeline_mode = #tpu.pipeline_mode<synchronous>, transform_indices = @transform_13, window_bounds = array<i64: 192, 128>}, {pipeline_mode = #tpu.pipeline_mode<synchronous>, transform_indices = @transform_14, window_bounds = array<i64: 96, 64>}, {pipeline_mode = #tpu.pipeline_mode<synchronous>, transform_indices = @transform_15, window_bounds = array<i64: 48, 32>}, {pipeline_mode = #tpu.pipeline_mode<synchronous>, transform_indices = @transform_16, window_bounds = array<i64: 8, 16>}, {pipeline_mode = #tpu.pipeline_mode<synchronous>, transform_indices = @transform_17, window_bounds = array<i64: 64, 10>}, {pipeline_mode = #tpu.pipeline_mode<synchronous>, transform_indices = @transform_18, window_bounds = array<i64: 1, 10>}, {transform_indices = @transform_19, window_bounds = array<i64: 8, 10>}]} {
    %c0 = arith.constant 0 : index
    %c0_0 = arith.constant 0 : index
    %0 = vector.load %arg1[%c0, %c0_0] : memref<256x128xbf16, #tpu.memory_space<vmem>>, vector<256x128xbf16>
    %c0_1 = arith.constant 0 : index
    %c0_2 = arith.constant 0 : index
    %1 = vector.load %arg12[%c0_1, %c0_2] : memref<768x256xbf16, #tpu.memory_space<vmem>>, vector<768x256xbf16>
    %cst = arith.constant dense<0.000000e+00> : vector<768x128xf32>
    %2 = tpu.matmul %1, %0, %cst {dimension_numbers = #tpu.dot_dimension_numbers<[1], [0], [0], [1], [0, 0, 1, 1], [], []>} : vector<768x256xbf16>, vector<256x128xbf16>, vector<768x128xf32> -> vector<768x128xf32>
    %3 = arith.truncf %2 : vector<768x128xf32> to vector<768x128xbf16>
    %4 = vector.extract_strided_slice %3 {offsets = [0, 0], sizes = [256, 128], strides = [1, 1]} : vector<768x128xbf16> to vector<256x128xbf16>
    %c0_3 = arith.constant 0 : index
    %c0_4 = arith.constant 0 : index
    %5 = vector.load %arg21[%c0_3, %c0_4] : memref<256x384xbf16, #tpu.memory_space<vmem>>, vector<256x128xbf16>
    tpu.vector_store %arg21[%c0_3, %c0_4], %4 {strides = array<i32>} : memref<256x384xbf16, #tpu.memory_space<vmem>>, vector<256x128xbf16>,
    %6 = vector.extract_strided_slice %3 {offsets = [256, 0], sizes = [256, 128], strides = [1, 1]} : vector<768x128xbf16> to vector<256x128xbf16>
    %c0_5 = arith.constant 0 : index
    %c128 = arith.constant 128 : index
    %7 = vector.load %arg21[%c0_5, %c128] : memref<256x384xbf16, #tpu.memory_space<vmem>>, vector<256x128xbf16>
    tpu.vector_store %arg21[%c0_5, %c128], %6 {strides = array<i32>} : memref<256x384xbf16, #tpu.memory_space<vmem>>, vector<256x128xbf16>,
    %8 = vector.extract_strided_slice %3 {offsets = [512, 0], sizes = [256, 128], strides = [1, 1]} : vector<768x128xbf16> to vector<256x128xbf16>
    %c0_6 = arith.constant 0 : index
    %c256 = arith.constant 256 : index
    %9 = vector.load %arg21[%c0_6, %c256] : memref<256x384xbf16, #tpu.memory_space<vmem>>, vector<256x128xbf16>
    tpu.vector_store %arg21[%c0_6, %c256], %8 {strides = array<i32>} : memref<256x384xbf16, #tpu.memory_space<vmem>>, vector<256x128xbf16>,
    %c0_7 = arith.constant 0 : index
    %c0_8 = arith.constant 0 : index
    %10 = vector.load %arg21[%c0_7, %c0_8] : memref<256x384xbf16, #tpu.memory_space<vmem>>, vector<256x384xbf16>
    %c0_9 = arith.constant 0 : index
    %c0_10 = arith.constant 0 : index
    %11 = vector.load %arg2[%c0_9, %c0_10] : memref<384x256xbf16, #tpu.memory_space<vmem>>, vector<384x256xbf16>
    %cst_11 = arith.constant dense<0.000000e+00> : vector<256x256xf32>
    %12 = tpu.matmul %10, %11, %cst_11 {dimension_numbers = #tpu.dot_dimension_numbers<[1], [0], [0], [1], [0, 0, 1, 1], [], []>} : vector<256x384xbf16>, vector<384x256xbf16>, vector<256x256xf32> -> vector<256x256xf32>
    %c0_12 = arith.constant 0 : index
    %c0_13 = arith.constant 0 : index
    %13 = vector.load %arg7[%c0_12, %c0_13] : memref<1x256xf32, #tpu.memory_space<vmem>>, vector<1x256xf32>
    %14 = vector.broadcast %13 : vector<1x256xf32> to vector<256x256xf32>
    %15 = arith.addf %12, %14 : vector<256x256xf32>
    %cst_14 = arith.constant 0.000000e+00 : f32
    %16 = vector.broadcast %cst_14 : f32 to vector<256x256xf32>
    %17 = arith.maximumf %15, %16 : vector<256x256xf32>
    %18 = arith.truncf %17 : vector<256x256xf32> to vector<256x256xbf16>
    %c0_15 = arith.constant 0 : index
    %c0_16 = arith.constant 0 : index
    %19 = vector.load %arg13[%c0_15, %c0_16] : memref<384x256xbf16, #tpu.memory_space<vmem>>, vector<384x256xbf16>
    %cst_17 = arith.constant dense<0.000000e+00> : vector<384x256xf32>
    %20 = tpu.matmul %19, %18, %cst_17 {dimension_numbers = #tpu.dot_dimension_numbers<[1], [0], [0], [1], [0, 0, 1, 1], [], []>} : vector<384x256xbf16>, vector<256x256xbf16>, vector<384x256xf32> -> vector<384x256xf32>
    %21 = arith.truncf %20 : vector<384x256xf32> to vector<384x256xbf16>
    %22 = vector.extract_strided_slice %21 {offsets = [0, 0], sizes = [128, 256], strides = [1, 1]} : vector<384x256xbf16> to vector<128x256xbf16>
    %c0_18 = arith.constant 0 : index
    %c0_19 = arith.constant 0 : index
    %23 = vector.load %arg22[%c0_18, %c0_19] : memref<128x768xbf16, #tpu.memory_space<vmem>>, vector<128x256xbf16>
    tpu.vector_store %arg22[%c0_18, %c0_19], %22 {strides = array<i32>} : memref<128x768xbf16, #tpu.memory_space<vmem>>, vector<128x256xbf16>,
    %24 = vector.extract_strided_slice %21 {offsets = [128, 0], sizes = [128, 256], strides = [1, 1]} : vector<384x256xbf16> to vector<128x256xbf16>
    %c0_20 = arith.constant 0 : index
    %c256_21 = arith.constant 256 : index
    %25 = vector.load %arg22[%c0_20, %c256_21] : memref<128x768xbf16, #tpu.memory_space<vmem>>, vector<128x256xbf16>
    tpu.vector_store %arg22[%c0_20, %c256_21], %24 {strides = array<i32>} : memref<128x768xbf16, #tpu.memory_space<vmem>>, vector<128x256xbf16>,
    %26 = vector.extract_strided_slice %21 {offsets = [256, 0], sizes = [128, 256], strides = [1, 1]} : vector<384x256xbf16> to vector<128x256xbf16>
    %c0_22 = arith.constant 0 : index
    %c512 = arith.constant 512 : index
    %27 = vector.load %arg22[%c0_22, %c512] : memref<128x768xbf16, #tpu.memory_space<vmem>>, vector<128x256xbf16>
    tpu.vector_store %arg22[%c0_22, %c512], %26 {strides = array<i32>} : memref<128x768xbf16, #tpu.memory_space<vmem>>, vector<128x256xbf16>,
    %c0_23 = arith.constant 0 : index
    %c0_24 = arith.constant 0 : index
    %28 = vector.load %arg22[%c0_23, %c0_24] : memref<128x768xbf16, #tpu.memory_space<vmem>>, vector<128x768xbf16>
    %c0_25 = arith.constant 0 : index
    %c0_26 = arith.constant 0 : index
    %29 = vector.load %arg3[%c0_25, %c0_26] : memref<768x256xbf16, #tpu.memory_space<vmem>>, vector<768x256xbf16>
    %cst_27 = arith.constant dense<0.000000e+00> : vector<128x256xf32>
    %30 = tpu.matmul %28, %29, %cst_27 {dimension_numbers = #tpu.dot_dimension_numbers<[1], [0], [0], [1], [0, 0, 1, 1], [], []>} : vector<128x768xbf16>, vector<768x256xbf16>, vector<128x256xf32> -> vector<128x256xf32>
    %c0_28 = arith.constant 0 : index
    %c0_29 = arith.constant 0 : index
    %31 = vector.load %arg8[%c0_28, %c0_29] : memref<1x256xf32, #tpu.memory_space<vmem>>, vector<1x256xf32>
    %32 = vector.broadcast %31 : vector<1x256xf32> to vector<128x256xf32>
    %33 = arith.addf %30, %32 : vector<128x256xf32>
    %cst_30 = arith.constant 0.000000e+00 : f32
    %34 = vector.broadcast %cst_30 : f32 to vector<128x256xf32>
    %35 = arith.maximumf %33, %34 : vector<128x256xf32>
    %36 = arith.truncf %35 : vector<128x256xf32> to vector<128x256xbf16>
    %c0_31 = arith.constant 0 : index
    %c0_32 = arith.constant 0 : index
    %37 = vector.load %arg14[%c0_31, %c0_32] : memref<192x128xbf16, #tpu.memory_space<vmem>>, vector<192x128xbf16>
    %cst_33 = arith.constant dense<0.000000e+00> : vector<192x256xf32>
    %38 = tpu.matmul %37, %36, %cst_33 {dimension_numbers = #tpu.dot_dimension_numbers<[1], [0], [0], [1], [0, 0, 1, 1], [], []>} : vector<192x128xbf16>, vector<128x256xbf16>, vector<192x256xf32> -> vector<192x256xf32>
    %39 = arith.truncf %38 : vector<192x256xf32> to vector<192x256xbf16>
    %40 = vector.extract_strided_slice %39 {offsets = [0, 0], sizes = [64, 256], strides = [1, 1]} : vector<192x256xbf16> to vector<64x256xbf16>
    %c0_34 = arith.constant 0 : index
    %c0_35 = arith.constant 0 : index
    %41 = vector.load %arg23[%c0_34, %c0_35] : memref<64x768xbf16, #tpu.memory_space<vmem>>, vector<64x256xbf16>
    tpu.vector_store %arg23[%c0_34, %c0_35], %40 {strides = array<i32>} : memref<64x768xbf16, #tpu.memory_space<vmem>>, vector<64x256xbf16>,
    %42 = vector.extract_strided_slice %39 {offsets = [64, 0], sizes = [64, 256], strides = [1, 1]} : vector<192x256xbf16> to vector<64x256xbf16>
    %c0_36 = arith.constant 0 : index
    %c256_37 = arith.constant 256 : index
    %43 = vector.load %arg23[%c0_36, %c256_37] : memref<64x768xbf16, #tpu.memory_space<vmem>>, vector<64x256xbf16>
    tpu.vector_store %arg23[%c0_36, %c256_37], %42 {strides = array<i32>} : memref<64x768xbf16, #tpu.memory_space<vmem>>, vector<64x256xbf16>,
    %44 = vector.extract_strided_slice %39 {offsets = [128, 0], sizes = [64, 256], strides = [1, 1]} : vector<192x256xbf16> to vector<64x256xbf16>
    %c0_38 = arith.constant 0 : index
    %c512_39 = arith.constant 512 : index
    %45 = vector.load %arg23[%c0_38, %c512_39] : memref<64x768xbf16, #tpu.memory_space<vmem>>, vector<64x256xbf16>
    tpu.vector_store %arg23[%c0_38, %c512_39], %44 {strides = array<i32>} : memref<64x768xbf16, #tpu.memory_space<vmem>>, vector<64x256xbf16>,
    %c0_40 = arith.constant 0 : index
    %c0_41 = arith.constant 0 : index
    %46 = vector.load %arg23[%c0_40, %c0_41] : memref<64x768xbf16, #tpu.memory_space<vmem>>, vector<64x768xbf16>
    %c0_42 = arith.constant 0 : index
    %c0_43 = arith.constant 0 : index
    %47 = vector.load %arg4[%c0_42, %c0_43] : memref<768x256xbf16, #tpu.memory_space<vmem>>, vector<768x256xbf16>
    %cst_44 = arith.constant dense<0.000000e+00> : vector<64x256xf32>
    %48 = tpu.matmul %46, %47, %cst_44 {dimension_numbers = #tpu.dot_dimension_numbers<[1], [0], [0], [1], [0, 0, 1, 1], [], []>} : vector<64x768xbf16>, vector<768x256xbf16>, vector<64x256xf32> -> vector<64x256xf32>
    %c0_45 = arith.constant 0 : index
    %c0_46 = arith.constant 0 : index
    %49 = vector.load %arg9[%c0_45, %c0_46] : memref<1x256xf32, #tpu.memory_space<vmem>>, vector<1x256xf32>
    %50 = vector.broadcast %49 : vector<1x256xf32> to vector<64x256xf32>
    %51 = arith.addf %48, %50 : vector<64x256xf32>
    %cst_47 = arith.constant 0.000000e+00 : f32
    %52 = vector.broadcast %cst_47 : f32 to vector<64x256xf32>
    %53 = arith.maximumf %51, %52 : vector<64x256xf32>
    %54 = arith.truncf %53 : vector<64x256xf32> to vector<64x256xbf16>
    %c0_48 = arith.constant 0 : index
    %c0_49 = arith.constant 0 : index
    %55 = vector.load %arg15[%c0_48, %c0_49] : memref<96x64xbf16, #tpu.memory_space<vmem>>, vector<96x64xbf16>
    %cst_50 = arith.constant dense<0.000000e+00> : vector<96x256xf32>
    %56 = tpu.matmul %55, %54, %cst_50 {dimension_numbers = #tpu.dot_dimension_numbers<[1], [0], [0], [1], [0, 0, 1, 1], [], []>} : vector<96x64xbf16>, vector<64x256xbf16>, vector<96x256xf32> -> vector<96x256xf32>
    %57 = arith.truncf %56 : vector<96x256xf32> to vector<96x256xbf16>
    %58 = vector.extract_strided_slice %57 {offsets = [0, 0], sizes = [32, 256], strides = [1, 1]} : vector<96x256xbf16> to vector<32x256xbf16>
    %c0_51 = arith.constant 0 : index
    %c0_52 = arith.constant 0 : index
    %59 = vector.load %arg24[%c0_51, %c0_52] : memref<32x768xbf16, #tpu.memory_space<vmem>>, vector<32x256xbf16>
    tpu.vector_store %arg24[%c0_51, %c0_52], %58 {strides = array<i32>} : memref<32x768xbf16, #tpu.memory_space<vmem>>, vector<32x256xbf16>,
    %60 = vector.extract_strided_slice %57 {offsets = [32, 0], sizes = [32, 256], strides = [1, 1]} : vector<96x256xbf16> to vector<32x256xbf16>
    %c0_53 = arith.constant 0 : index
    %c256_54 = arith.constant 256 : index
    %61 = vector.load %arg24[%c0_53, %c256_54] : memref<32x768xbf16, #tpu.memory_space<vmem>>, vector<32x256xbf16>
    tpu.vector_store %arg24[%c0_53, %c256_54], %60 {strides = array<i32>} : memref<32x768xbf16, #tpu.memory_space<vmem>>, vector<32x256xbf16>,
    %62 = vector.extract_strided_slice %57 {offsets = [64, 0], sizes = [32, 256], strides = [1, 1]} : vector<96x256xbf16> to vector<32x256xbf16>
    %c0_55 = arith.constant 0 : index
    %c512_56 = arith.constant 512 : index
    %63 = vector.load %arg24[%c0_55, %c512_56] : memref<32x768xbf16, #tpu.memory_space<vmem>>, vector<32x256xbf16>
    tpu.vector_store %arg24[%c0_55, %c512_56], %62 {strides = array<i32>} : memref<32x768xbf16, #tpu.memory_space<vmem>>, vector<32x256xbf16>,
    %c0_57 = arith.constant 0 : index
    %c0_58 = arith.constant 0 : index
    %64 = vector.load %arg24[%c0_57, %c0_58] : memref<32x768xbf16, #tpu.memory_space<vmem>>, vector<32x768xbf16>
    %c0_59 = arith.constant 0 : index
    %c0_60 = arith.constant 0 : index
    %65 = vector.load %arg5[%c0_59, %c0_60] : memref<768x128xbf16, #tpu.memory_space<vmem>>, vector<768x128xbf16>
    %cst_61 = arith.constant dense<0.000000e+00> : vector<32x128xf32>
    %66 = tpu.matmul %64, %65, %cst_61 {dimension_numbers = #tpu.dot_dimension_numbers<[1], [0], [0], [1], [0, 0, 1, 1], [], []>} : vector<32x768xbf16>, vector<768x128xbf16>, vector<32x128xf32> -> vector<32x128xf32>
    %c0_62 = arith.constant 0 : index
    %c0_63 = arith.constant 0 : index
    %67 = vector.load %arg10[%c0_62, %c0_63] : memref<1x128xf32, #tpu.memory_space<vmem>>, vector<1x128xf32>
    %68 = vector.broadcast %67 : vector<1x128xf32> to vector<32x128xf32>
    %69 = arith.addf %66, %68 : vector<32x128xf32>
    %cst_64 = arith.constant 0.000000e+00 : f32
    %70 = vector.broadcast %cst_64 : f32 to vector<32x128xf32>
    %71 = arith.maximumf %69, %70 : vector<32x128xf32>
    %72 = arith.truncf %71 : vector<32x128xf32> to vector<32x128xbf16>
    %c0_65 = arith.constant 0 : index
    %c0_66 = arith.constant 0 : index
    %73 = vector.load %arg16[%c0_65, %c0_66] : memref<48x32xbf16, #tpu.memory_space<vmem>>, vector<48x32xbf16>
    %cst_67 = arith.constant dense<0.000000e+00> : vector<48x128xf32>
    %74 = tpu.matmul %73, %72, %cst_67 {dimension_numbers = #tpu.dot_dimension_numbers<[1], [0], [0], [1], [0, 0, 1, 1], [], []>} : vector<48x32xbf16>, vector<32x128xbf16>, vector<48x128xf32> -> vector<48x128xf32>
    %75 = arith.truncf %74 : vector<48x128xf32> to vector<48x128xbf16>
    %76 = vector.extract_strided_slice %75 {offsets = [0, 0], sizes = [16, 128], strides = [1, 1]} : vector<48x128xbf16> to vector<16x128xbf16>
    %c0_68 = arith.constant 0 : index
    %c0_69 = arith.constant 0 : index
    %77 = vector.load %arg25[%c0_68, %c0_69] : memref<16x384xbf16, #tpu.memory_space<vmem>>, vector<16x128xbf16>
    tpu.vector_store %arg25[%c0_68, %c0_69], %76 {strides = array<i32>} : memref<16x384xbf16, #tpu.memory_space<vmem>>, vector<16x128xbf16>,
    %78 = vector.extract_strided_slice %75 {offsets = [16, 0], sizes = [16, 128], strides = [1, 1]} : vector<48x128xbf16> to vector<16x128xbf16>
    %c0_70 = arith.constant 0 : index
    %c128_71 = arith.constant 128 : index
    %79 = vector.load %arg25[%c0_70, %c128_71] : memref<16x384xbf16, #tpu.memory_space<vmem>>, vector<16x128xbf16>
    tpu.vector_store %arg25[%c0_70, %c128_71], %78 {strides = array<i32>} : memref<16x384xbf16, #tpu.memory_space<vmem>>, vector<16x128xbf16>,
    %80 = vector.extract_strided_slice %75 {offsets = [32, 0], sizes = [16, 128], strides = [1, 1]} : vector<48x128xbf16> to vector<16x128xbf16>
    %c0_72 = arith.constant 0 : index
    %c256_73 = arith.constant 256 : index
    %81 = vector.load %arg25[%c0_72, %c256_73] : memref<16x384xbf16, #tpu.memory_space<vmem>>, vector<16x128xbf16>
    tpu.vector_store %arg25[%c0_72, %c256_73], %80 {strides = array<i32>} : memref<16x384xbf16, #tpu.memory_space<vmem>>, vector<16x128xbf16>,
    %c0_74 = arith.constant 0 : index
    %c0_75 = arith.constant 0 : index
    %82 = vector.load %arg25[%c0_74, %c0_75] : memref<16x384xbf16, #tpu.memory_space<vmem>>, vector<16x384xbf16>
    %c0_76 = arith.constant 0 : index
    %c0_77 = arith.constant 0 : index
    %83 = vector.load %arg6[%c0_76, %c0_77] : memref<384x64xbf16, #tpu.memory_space<vmem>>, vector<384x64xbf16>
    %cst_78 = arith.constant dense<0.000000e+00> : vector<16x64xf32>
    %84 = tpu.matmul %82, %83, %cst_78 {dimension_numbers = #tpu.dot_dimension_numbers<[1], [0], [0], [1], [0, 0, 1, 1], [], []>} : vector<16x384xbf16>, vector<384x64xbf16>, vector<16x64xf32> -> vector<16x64xf32>
    %c0_79 = arith.constant 0 : index
    %c0_80 = arith.constant 0 : index
    %85 = vector.load %arg11[%c0_79, %c0_80] : memref<1x64xf32, #tpu.memory_space<vmem>>, vector<1x64xf32>
    %86 = vector.broadcast %85 : vector<1x64xf32> to vector<16x64xf32>
    %87 = arith.addf %84, %86 : vector<16x64xf32>
    %c0_81 = arith.constant 0 : index
    %c0_82 = arith.constant 0 : index
    %88 = vector.load %arg17[%c0_81, %c0_82] : memref<8x16xbf16, #tpu.memory_space<vmem>>, vector<8x16xbf16>
    %89 = arith.truncf %87 : vector<16x64xf32> to vector<16x64xbf16>
    %cst_83 = arith.constant dense<0.000000e+00> : vector<8x64xf32>
    %90 = tpu.matmul %88, %89, %cst_83 {dimension_numbers = #tpu.dot_dimension_numbers<[1], [0], [0], [1], [0, 0, 1, 1], [], []>} : vector<8x16xbf16>, vector<16x64xbf16>, vector<8x64xf32> -> vector<8x64xf32>
    %91 = arith.truncf %90 : vector<8x64xf32> to vector<8x64xbf16>
    %c0_84 = arith.constant 0 : index
    %c0_85 = arith.constant 0 : index
    %92 = vector.load %arg18[%c0_84, %c0_85] : memref<64x10xbf16, #tpu.memory_space<vmem>>, vector<64x10xbf16>
    %cst_86 = arith.constant dense<0.000000e+00> : vector<8x10xf32>
    %93 = tpu.matmul %91, %92, %cst_86 {dimension_numbers = #tpu.dot_dimension_numbers<[1], [0], [0], [1], [0, 0, 1, 1], [], []>} : vector<8x64xbf16>, vector<64x10xbf16>, vector<8x10xf32> -> vector<8x10xf32>
    %c0_87 = arith.constant 0 : index
    %c0_88 = arith.constant 0 : index
    %94 = vector.load %arg19[%c0_87, %c0_88] : memref<1x10xf32, #tpu.memory_space<vmem>>, vector<1x10xf32>
    %95 = vector.broadcast %94 : vector<1x10xf32> to vector<8x10xf32>
    %96 = arith.addf %93, %95 : vector<8x10xf32>
    %c0_89 = arith.constant 0 : index
    %c0_90 = arith.constant 0 : index
    %97 = vector.load %arg20[%c0_89, %c0_90] : memref<8x10xf32, #tpu.memory_space<vmem>>, vector<8x10xf32>
    tpu.vector_store %arg20[%c0_89, %c0_90], %96 {strides = array<i32>} : memref<8x10xf32, #tpu.memory_space<vmem>>, vector<8x10xf32>,
    return
  }
  func.func @transform_0(%arg0: i32) -> (i32, i32) {
    %c0_i32 = arith.constant 0 : i32
    %c0_i32_0 = arith.constant 0 : i32
    return %arg0, %c0_i32 : i32, i32
  }
  func.func @transform_1(%arg0: i32) -> (i32, i32) {
    %c0_i32 = arith.constant 0 : i32
    %c0_i32_0 = arith.constant 0 : i32
    %c0_i32_1 = arith.constant 0 : i32
    return %c0_i32, %c0_i32_0 : i32, i32
  }
  func.func @transform_2(%arg0: i32) -> (i32, i32) {
    %c0_i32 = arith.constant 0 : i32
    %c0_i32_0 = arith.constant 0 : i32
    %c0_i32_1 = arith.constant 0 : i32
    return %c0_i32, %c0_i32_0 : i32, i32
  }
  func.func @transform_3(%arg0: i32) -> (i32, i32) {
    %c0_i32 = arith.constant 0 : i32
    %c0_i32_0 = arith.constant 0 : i32
    %c0_i32_1 = arith.constant 0 : i32
    return %c0_i32, %c0_i32_0 : i32, i32
  }
  func.func @transform_4(%arg0: i32) -> (i32, i32) {
    %c0_i32 = arith.constant 0 : i32
    %c0_i32_0 = arith.constant 0 : i32
    %c0_i32_1 = arith.constant 0 : i32
    return %c0_i32, %c0_i32_0 : i32, i32
  }
  func.func @transform_5(%arg0: i32) -> (i32, i32) {
    %c0_i32 = arith.constant 0 : i32
    %c0_i32_0 = arith.constant 0 : i32
    %c0_i32_1 = arith.constant 0 : i32
    return %c0_i32, %c0_i32_0 : i32, i32
  }
  func.func @transform_6(%arg0: i32) -> (i32, i32) {
    %c0_i32 = arith.constant 0 : i32
    %c0_i32_0 = arith.constant 0 : i32
    %c0_i32_1 = arith.constant 0 : i32
    return %c0_i32, %c0_i32_0 : i32, i32
  }
  func.func @transform_7(%arg0: i32) -> (i32, i32) {
    %c0_i32 = arith.constant 0 : i32
    %c0_i32_0 = arith.constant 0 : i32
    %c0_i32_1 = arith.constant 0 : i32
    return %c0_i32, %c0_i32_0 : i32, i32
  }
  func.func @transform_8(%arg0: i32) -> (i32, i32) {
    %c0_i32 = arith.constant 0 : i32
    %c0_i32_0 = arith.constant 0 : i32
    %c0_i32_1 = arith.constant 0 : i32
    return %c0_i32, %c0_i32_0 : i32, i32
  }
  func.func @transform_9(%arg0: i32) -> (i32, i32) {
    %c0_i32 = arith.constant 0 : i32
    %c0_i32_0 = arith.constant 0 : i32
    %c0_i32_1 = arith.constant 0 : i32
    return %c0_i32, %c0_i32_0 : i32, i32
  }
  func.func @transform_10(%arg0: i32) -> (i32, i32) {
    %c0_i32 = arith.constant 0 : i32
    %c0_i32_0 = arith.constant 0 : i32
    %c0_i32_1 = arith.constant 0 : i32
    return %c0_i32, %c0_i32_0 : i32, i32
  }
  func.func @transform_11(%arg0: i32) -> (i32, i32) {
    %c0_i32 = arith.constant 0 : i32
    %c0_i32_0 = arith.constant 0 : i32
    %c0_i32_1 = arith.constant 0 : i32
    return %c0_i32, %c0_i32_0 : i32, i32
  }
  func.func @transform_12(%arg0: i32) -> (i32, i32) {
    %c0_i32 = arith.constant 0 : i32
    %c0_i32_0 = arith.constant 0 : i32
    %c0_i32_1 = arith.constant 0 : i32
    return %c0_i32, %c0_i32_0 : i32, i32
  }
  func.func @transform_13(%arg0: i32) -> (i32, i32) {
    %c0_i32 = arith.constant 0 : i32
    %c0_i32_0 = arith.constant 0 : i32
    %c0_i32_1 = arith.constant 0 : i32
    return %c0_i32, %c0_i32_0 : i32, i32
  }
  func.func @transform_14(%arg0: i32) -> (i32, i32) {
    %c0_i32 = arith.constant 0 : i32
    %c0_i32_0 = arith.constant 0 : i32
    %c0_i32_1 = arith.constant 0 : i32
    return %c0_i32, %c0_i32_0 : i32, i32
  }
  func.func @transform_15(%arg0: i32) -> (i32, i32) {
    %c0_i32 = arith.constant 0 : i32
    %c0_i32_0 = arith.constant 0 : i32
    %c0_i32_1 = arith.constant 0 : i32
    return %c0_i32, %c0_i32_0 : i32, i32
  }
  func.func @transform_16(%arg0: i32) -> (i32, i32) {
    %c0_i32 = arith.constant 0 : i32
    %c0_i32_0 = arith.constant 0 : i32
    %c0_i32_1 = arith.constant 0 : i32
    return %c0_i32, %c0_i32_0 : i32, i32
  }
  func.func @transform_17(%arg0: i32) -> (i32, i32) {
    %c0_i32 = arith.constant 0 : i32
    %c0_i32_0 = arith.constant 0 : i32
    %c0_i32_1 = arith.constant 0 : i32
    return %c0_i32, %c0_i32_0 : i32, i32
  }
  func.func @transform_18(%arg0: i32) -> (i32, i32) {
    %c0_i32 = arith.constant 0 : i32
    %c0_i32_0 = arith.constant 0 : i32
    %c0_i32_1 = arith.constant 0 : i32
    return %c0_i32, %c0_i32_0 : i32, i32
  }
  func.func @transform_19(%arg0: i32) -> (i32, i32) {
    %c0_i32 = arith.constant 0 : i32
    %c0_i32_0 = arith.constant 0 : i32
    return %arg0, %c0_i32 : i32, i32
  }
}

</mosaic_0001>

<llo_original>
// kernel: model5l_forward.1
$region0: #{model5l_forward.1}
  #allocation0 [shape = 'u32[]', space=smem, size = 0x4, offset = 0x4, fixed_abs, tag = 'smem constant byte address 0x4 - core index']
  #allocation1 [shape = 'u32[72,128]{1,0:T(1,128)}', space=vmem, size = 0x9000, scoped, tag = 'internal scratch']
  #allocation2 [shape = 'bf16[256,384]{1,0:T(8,128)(2,1)}', space=vmem, size = 0x30000, scoped, tag = 'scratch operand']
  #allocation3 [shape = 'bf16[128,768]{1,0:T(8,128)(2,1)}', space=vmem, size = 0x30000, scoped, tag = 'scratch operand']
  #allocation4 [shape = 'bf16[64,768]{1,0:T(8,128)(2,1)}', space=vmem, size = 0x18000, scoped, tag = 'scratch operand']
  #allocation5 [shape = 'bf16[32,768]{1,0:T(8,128)(2,1)}', space=vmem, size = 0xc000, scoped, tag = 'scratch operand']
  #allocation6 [shape = 'bf16[16,384]{1,0:T(8,128)(2,1)}', space=vmem, size = 0x3000, scoped, tag = 'scratch operand']
  %s0 = inlined_call_operand.vmem [shape: bf16[512,128], index: 0, kind: input, shape index: {}]
  %s1 = inlined_call_operand.vmem [shape: bf16[384,256], index: 1, kind: input, shape index: {}]
  %s2 = inlined_call_operand.vmem [shape: bf16[768,256], index: 2, kind: input, shape index: {}]
  %s3 = inlined_call_operand.vmem [shape: bf16[768,256], index: 3, kind: input, shape index: {}]
  %s4 = inlined_call_operand.vmem [shape: bf16[768,128], index: 4, kind: input, shape index: {}]
  %s5 = inlined_call_operand.vmem [shape: bf16[384,64], index: 5, kind: input, shape index: {}]
  %s6 = inlined_call_operand.vmem [shape: f32[1,256], index: 6, kind: input, shape index: {}]
  %s7 = inlined_call_operand.vmem [shape: f32[1,256], index: 7, kind: input, shape index: {}]
  %s8 = inlined_call_operand.vmem [shape: f32[1,256], index: 8, kind: input, shape index: {}]
  %s9 = inlined_call_operand.vmem [shape: f32[1,128], index: 9, kind: input, shape index: {}]
  %s10 = inlined_call_operand.vmem [shape: f32[1,64], index: 10, kind: input, shape index: {}]
  %s11 = inlined_call_operand.vmem [shape: bf16[768,256], index: 11, kind: input, shape index: {}]
  %s12 = inlined_call_operand.vmem [shape: bf16[384,256], index: 12, kind: input, shape index: {}]
  %s13 = inlined_call_operand.vmem [shape: bf16[192,128], index: 13, kind: input, shape index: {}]
  %s14 = inlined_call_operand.vmem [shape: bf16[96,64], index: 14, kind: input, shape index: {}]
  %s15 = inlined_call_operand.vmem [shape: bf16[48,32], index: 15, kind: input, shape index: {}]
  %s16 = inlined_call_operand.vmem [shape: bf16[8,16], index: 16, kind: input, shape index: {}]
  %s17 = inlined_call_operand.vmem [shape: bf16[64,10], index: 17, kind: input, shape index: {}]
  %s18 = inlined_call_operand.vmem [shape: f32[1,10], index: 18, kind: input, shape index: {}]
  %s19 = inlined_call_operand.vmem [shape: f32[16,10], index: 19, kind: output, shape index: {}]
  %s20 = sld [smem:[#allocation0]]
  $region109: #{model5l_forward.1} parent=0
    _
  %s22 = ssub.s32 1, %s20
  %s23 = scalar_select 0, %s22, %s20
  loop: start=0, step=1, limit=4
  $region2: #{model5l_forward.1} parent=0 // loop_pre_header
    _
  $region3: #{model5l_forward.1} parent=0 // loop_header
    %s25 = sphi 0, %s29
    %p26 = scmp.ge.s32.totalorder %s25, 4
    %s35 = sphi 0, %s37
    %s38 = sphi 0, %s35
    %s39 = sphi 0, %s38
    %s55 = sphi 0, %s39
    %s59 = sphi 0, %s59
    %s61 = sphi 0, %s59
    %s62 = sphi 0, %s61
    %s76 = sphi 0, %s62
    %s80 = sphi 0, %s80
    %s82 = sphi 0, %s80
    %s83 = sphi 0, %s82
    %s97 = sphi 0, %s83
    %s101 = sphi 0, %s101
    %s103 = sphi 0, %s101
    %s104 = sphi 0, %s103
    %s118 = sphi 0, %s104
    %s122 = sphi 0, %s122
    %s124 = sphi 0, %s122
    %s125 = sphi 0, %s124
    %s139 = sphi 0, %s125
    %s143 = sphi 0, %s143
    %s145 = sphi 0, %s143
    %s146 = sphi 0, %s145
    %s160 = sphi 0, %s146
    %s164 = sphi 0, %s164
    %s166 = sphi 0, %s164
    %s167 = sphi 0, %s166
    %s181 = sphi 0, %s167
    %s185 = sphi 0, %s185
    %s187 = sphi 0, %s185
    %s188 = sphi 0, %s187
    %s202 = sphi 0, %s188
    %s206 = sphi 0, %s206
    %s208 = sphi 0, %s206
    %s209 = sphi 0, %s208
    %s223 = sphi 0, %s209
    %s227 = sphi 0, %s227
    %s229 = sphi 0, %s227
    %s230 = sphi 0, %s229
    %s244 = sphi 0, %s230
    %s248 = sphi 0, %s248
    %s250 = sphi 0, %s248
    %s251 = sphi 0, %s250
    %s265 = sphi 0, %s251
    %s269 = sphi 0, %s269
    %s271 = sphi 0, %s269
    %s272 = sphi 0, %s271
    %s286 = sphi 0, %s272
    %s290 = sphi 0, %s290
    %s292 = sphi 0, %s290
    %s293 = sphi 0, %s292
    %s307 = sphi 0, %s293
    %s311 = sphi 0, %s311
    %s313 = sphi 0, %s311
    %s314 = sphi 0, %s313
    %s328 = sphi 0, %s314
    %s332 = sphi 0, %s332
    %s334 = sphi 0, %s332
    %s335 = sphi 0, %s334
    %s349 = sphi 0, %s335
    %s353 = sphi 0, %s353
    %s355 = sphi 0, %s353
    %s356 = sphi 0, %s355
    %s370 = sphi 0, %s356
    %s374 = sphi 0, %s374
    %s376 = sphi 0, %s374
    %s377 = sphi 0, %s376
    %s391 = sphi 0, %s377
    %s395 = sphi 0, %s395
    %s397 = sphi 0, %s395
    %s398 = sphi 0, %s397
    %s412 = sphi 0, %s398
    %s416 = sphi 0, %s416
    %s418 = sphi 0, %s416
    %s419 = sphi 0, %s418
    %s433 = sphi 0, %s419
    %s439 = sphi 0, %s441
    %s442 = sphi 0, %s439
    %s443 = sphi 0, %s442
    %s459 = sphi 0, %s443
  $region4: #{model5l_forward.1} parent=0 // loop_header_branch
    %28 = sbr.rel (%p26) target = $region8
  $region5: #{model5l_forward.1} parent=0 // loop_body
    %s30 = ssub.s32 %s25, 1
    %s31 = ssub.s32 %s25, 2
    %s32 = sadd.s32 %s25, 1
    %s33 = ssub.s32 %s25, %s32
    %p34 = scmp.eq.s32.totalorder %s33, 0
    %s36 = sadd.s32 %s35, 1
    %s37 = scalar_select %p34, %s35, %s36
    %p40 = pneg %p34
    %p41 = scmp.eq.s32.totalorder %s25, 1
    %p42 = por %p40, %p41
    %p43 = scmp.ne.s32.totalorder %s35, %s38
    %p44 = scmp.eq.s32.totalorder %s25, 0
    %p45 = por %p43, %p44
    %p46 = scmp.ne.s32.totalorder %s35, %s38
    %p47 = scmp.eq.s32.totalorder %s30, 1
    %p48 = por %p46, %p47
    %p49 = scmp.ne.s32.totalorder %s38, %s39
    %p50 = scmp.eq.s32.totalorder %s30, 0
    %p51 = por %p49, %p50
    %p52 = scmp.ne.s32.totalorder %s38, %s39
    %p53 = scmp.eq.s32.totalorder %s31, 1
    %p54 = por %p52, %p53
    %p56 = scmp.ne.s32.totalorder %s39, %s55
    %p57 = scmp.eq.s32.totalorder %s31, 0
    %p58 = por %p56, %p57
    %s60 = sadd.s32 %s59, 1
    %p63 = scmp.eq.s32.totalorder %s25, 1
    %p64 = scmp.ne.s32.totalorder %s59, %s61
    %p65 = scmp.eq.s32.totalorder %s25, 0
    %p66 = por %p64, %p65
    %p67 = scmp.ne.s32.totalorder %s59, %s61
    %p68 = scmp.eq.s32.totalorder %s30, 1
    %p69 = por %p67, %p68
    %p70 = scmp.ne.s32.totalorder %s61, %s62
    %p71 = scmp.eq.s32.totalorder %s30, 0
    %p72 = por %p70, %p71
    %p73 = scmp.ne.s32.totalorder %s61, %s62
    %p74 = scmp.eq.s32.totalorder %s31, 1
    %p75 = por %p73, %p74
    %p77 = scmp.ne.s32.totalorder %s62, %s76
    %p78 = scmp.eq.s32.totalorder %s31, 0
    %p79 = por %p77, %p78
    %s81 = sadd.s32 %s80, 1
    %p84 = scmp.eq.s32.totalorder %s25, 1
    %p85 = scmp.ne.s32.totalorder %s80, %s82
    %p86 = scmp.eq.s32.totalorder %s25, 0
    %p87 = por %p85, %p86
    %p88 = scmp.ne.s32.totalorder %s80, %s82
    %p89 = scmp.eq.s32.totalorder %s30, 1
    %p90 = por %p88, %p89
    %p91 = scmp.ne.s32.totalorder %s82, %s83
    %p92 = scmp.eq.s32.totalorder %s30, 0
    %p93 = por %p91, %p92
    %p94 = scmp.ne.s32.totalorder %s82, %s83
    %p95 = scmp.eq.s32.totalorder %s31, 1
    %p96 = por %p94, %p95
    %p98 = scmp.ne.s32.totalorder %s83, %s97
    %p99 = scmp.eq.s32.totalorder %s31, 0
    %p100 = por %p98, %p99
    %s102 = sadd.s32 %s101, 1
    %p105 = scmp.eq.s32.totalorder %s25, 1
    %p106 = scmp.ne.s32.totalorder %s101, %s103
    %p107 = scmp.eq.s32.totalorder %s25, 0
    %p108 = por %p106, %p107
    %p109 = scmp.ne.s32.totalorder %s101, %s103
    %p110 = scmp.eq.s32.totalorder %s30, 1
    %p111 = por %p109, %p110
    %p112 = scmp.ne.s32.totalorder %s103, %s104
    %p113 = scmp.eq.s32.totalorder %s30, 0
    %p114 = por %p112, %p113
    %p115 = scmp.ne.s32.totalorder %s103, %s104
    %p116 = scmp.eq.s32.totalorder %s31, 1
    %p117 = por %p115, %p116
    %p119 = scmp.ne.s32.totalorder %s104, %s118
    %p120 = scmp.eq.s32.totalorder %s31, 0
    %p121 = por %p119, %p120
    %s123 = sadd.s32 %s122, 1
    %p126 = scmp.eq.s32.totalorder %s25, 1
    %p127 = scmp.ne.s32.totalorder %s122, %s124
    %p128 = scmp.eq.s32.totalorder %s25, 0
    %p129 = por %p127, %p128
    %p130 = scmp.ne.s32.totalorder %s122, %s124
    %p131 = scmp.eq.s32.totalorder %s30, 1
    %p132 = por %p130, %p131
    %p133 = scmp.ne.s32.totalorder %s124, %s125
    %p134 = scmp.eq.s32.totalorder %s30, 0
    %p135 = por %p133, %p134
    %p136 = scmp.ne.s32.totalorder %s124, %s125
    %p137 = scmp.eq.s32.totalorder %s31, 1
    %p138 = por %p136, %p137
    %p140 = scmp.ne.s32.totalorder %s125, %s139
    %p141 = scmp.eq.s32.totalorder %s31, 0
    %p142 = por %p140, %p141
    %s144 = sadd.s32 %s143, 1
    %p147 = scmp.eq.s32.totalorder %s25, 1
    %p148 = scmp.ne.s32.totalorder %s143, %s145
    %p149 = scmp.eq.s32.totalorder %s25, 0
    %p150 = por %p148, %p149
    %p151 = scmp.ne.s32.totalorder %s143, %s145
    %p152 = scmp.eq.s32.totalorder %s30, 1
    %p153 = por %p151, %p152
    %p154 = scmp.ne.s32.totalorder %s145, %s146
    %p155 = scmp.eq.s32.totalorder %s30, 0
    %p156 = por %p154, %p155
    %p157 = scmp.ne.s32.totalorder %s145, %s146
    %p158 = scmp.eq.s32.totalorder %s31, 1
    %p159 = por %p157, %p158
    %p161 = scmp.ne.s32.totalorder %s146, %s160
    %p162 = scmp.eq.s32.totalorder %s31, 0
    %p163 = por %p161, %p162
    %s165 = sadd.s32 %s164, 1
    %p168 = scmp.eq.s32.totalorder %s25, 1
    %p169 = scmp.ne.s32.totalorder %s164, %s166
    %p170 = scmp.eq.s32.totalorder %s25, 0
    %p171 = por %p169, %p170
    %p172 = scmp.ne.s32.totalorder %s164, %s166
    %p173 = scmp.eq.s32.totalorder %s30, 1
    %p174 = por %p172, %p173
    %p175 = scmp.ne.s32.totalorder %s166, %s167
    %p176 = scmp.eq.s32.totalorder %s30, 0
    %p177 = por %p175, %p176
    %p178 = scmp.ne.s32.totalorder %s166, %s167
    %p179 = scmp.eq.s32.totalorder %s31, 1
    %p180 = por %p178, %p179
    %p182 = scmp.ne.s32.totalorder %s167, %s181
    %p183 = scmp.eq.s32.totalorder %s31, 0
    %p184 = por %p182, %p183
    %s186 = sadd.s32 %s185, 1
    %p189 = scmp.eq.s32.totalorder %s25, 1
    %p190 = scmp.ne.s32.totalorder %s185, %s187
    %p191 = scmp.eq.s32.totalorder %s25, 0
    %p192 = por %p190, %p191
    %p193 = scmp.ne.s32.totalorder %s185, %s187
    %p194 = scmp.eq.s32.totalorder %s30, 1
    %p195 = por %p193, %p194
    %p196 = scmp.ne.s32.totalorder %s187, %s188
    %p197 = scmp.eq.s32.totalorder %s30, 0
    %p198 = por %p196, %p197
    %p199 = scmp.ne.s32.totalorder %s187, %s188
    %p200 = scmp.eq.s32.totalorder %s31, 1
    %p201 = por %p199, %p200
    %p203 = scmp.ne.s32.totalorder %s188, %s202
    %p204 = scmp.eq.s32.totalorder %s31, 0
    %p205 = por %p203, %p204
    %s207 = sadd.s32 %s206, 1
    %p210 = scmp.eq.s32.totalorder %s25, 1
    %p211 = scmp.ne.s32.totalorder %s206, %s208
    %p212 = scmp.eq.s32.totalorder %s25, 0
    %p213 = por %p211, %p212
    %p214 = scmp.ne.s32.totalorder %s206, %s208
    %p215 = scmp.eq.s32.totalorder %s30, 1
    %p216 = por %p214, %p215
    %p217 = scmp.ne.s32.totalorder %s208, %s209
    %p218 = scmp.eq.s32.totalorder %s30, 0
    %p219 = por %p217, %p218
    %p220 = scmp.ne.s32.totalorder %s208, %s209
    %p221 = scmp.eq.s32.totalorder %s31, 1
    %p222 = por %p220, %p221
    %p224 = scmp.ne.s32.totalorder %s209, %s223
    %p225 = scmp.eq.s32.totalorder %s31, 0
    %p226 = por %p224, %p225
    %s228 = sadd.s32 %s227, 1
    %p231 = scmp.eq.s32.totalorder %s25, 1
    %p232 = scmp.ne.s32.totalorder %s227, %s229
    %p233 = scmp.eq.s32.totalorder %s25, 0
    %p234 = por %p232, %p233
    %p235 = scmp.ne.s32.totalorder %s227, %s229
    %p236 = scmp.eq.s32.totalorder %s30, 1
    %p237 = por %p235, %p236
    %p238 = scmp.ne.s32.totalorder %s229, %s230
    %p239 = scmp.eq.s32.totalorder %s30, 0
    %p240 = por %p238, %p239
    %p241 = scmp.ne.s32.totalorder %s229, %s230
    %p242 = scmp.eq.s32.totalorder %s31, 1
    %p243 = por %p241, %p242
    %p245 = scmp.ne.s32.totalorder %s230, %s244
    %p246 = scmp.eq.s32.totalorder %s31, 0
    %p247 = por %p245, %p246
    %s249 = sadd.s32 %s248, 1
    %p252 = scmp.eq.s32.totalorder %s25, 1
    %p253 = scmp.ne.s32.totalorder %s248, %s250
    %p254 = scmp.eq.s32.totalorder %s25, 0
    %p255 = por %p253, %p254
    %p256 = scmp.ne.s32.totalorder %s248, %s250
    %p257 = scmp.eq.s32.totalorder %s30, 1
    %p258 = por %p256, %p257
    %p259 = scmp.ne.s32.totalorder %s250, %s251
    %p260 = scmp.eq.s32.totalorder %s30, 0
    %p261 = por %p259, %p260
    %p262 = scmp.ne.s32.totalorder %s250, %s251
    %p263 = scmp.eq.s32.totalorder %s31, 1
    %p264 = por %p262, %p263
    %p266 = scmp.ne.s32.totalorder %s251, %s265
    %p267 = scmp.eq.s32.totalorder %s31, 0
    %p268 = por %p266, %p267
    %s270 = sadd.s32 %s269, 1
    %p273 = scmp.eq.s32.totalorder %s25, 1
    %p274 = scmp.ne.s32.totalorder %s269, %s271
    %p275 = scmp.eq.s32.totalorder %s25, 0
    %p276 = por %p274, %p275
    %p277 = scmp.ne.s32.totalorder %s269, %s271
    %p278 = scmp.eq.s32.totalorder %s30, 1
    %p279 = por %p277, %p278
    %p280 = scmp.ne.s32.totalorder %s271, %s272
    %p281 = scmp.eq.s32.totalorder %s30, 0
    %p282 = por %p280, %p281
    %p283 = scmp.ne.s32.totalorder %s271, %s272
    %p284 = scmp.eq.s32.totalorder %s31, 1
    %p285 = por %p283, %p284
    %p287 = scmp.ne.s32.totalorder %s272, %s286
    %p288 = scmp.eq.s32.totalorder %s31, 0
    %p289 = por %p287, %p288
    %s291 = sadd.s32 %s290, 1
    %p294 = scmp.eq.s32.totalorder %s25, 1
    %p295 = scmp.ne.s32.totalorder %s290, %s292
    %p296 = scmp.eq.s32.totalorder %s25, 0
    %p297 = por %p295, %p296
    %p298 = scmp.ne.s32.totalorder %s290, %s292
    %p299 = scmp.eq.s32.totalorder %s30, 1
    %p300 = por %p298, %p299
    %p301 = scmp.ne.s32.totalorder %s292, %s293
    %p302 = scmp.eq.s32.totalorder %s30, 0
    %p303 = por %p301, %p302
    %p304 = scmp.ne.s32.totalorder %s292, %s293
    %p305 = scmp.eq.s32.totalorder %s31, 1
    %p306 = por %p304, %p305
    %p308 = scmp.ne.s32.totalorder %s293, %s307
    %p309 = scmp.eq.s32.totalorder %s31, 0
    %p310 = por %p308, %p309
    %s312 = sadd.s32 %s311, 1
    %p315 = scmp.eq.s32.totalorder %s25, 1
    %p316 = scmp.ne.s32.totalorder %s311, %s313
    %p317 = scmp.eq.s32.totalorder %s25, 0
    %p318 = por %p316, %p317
    %p319 = scmp.ne.s32.totalorder %s311, %s313
    %p320 = scmp.eq.s32.totalorder %s30, 1
    %p321 = por %p319, %p320
    %p322 = scmp.ne.s32.totalorder %s313, %s314
    %p323 = scmp.eq.s32.totalorder %s30, 0
    %p324 = por %p322, %p323
    %p325 = scmp.ne.s32.totalorder %s313, %s314
    %p326 = scmp.eq.s32.totalorder %s31, 1
    %p327 = por %p325, %p326
    %p329 = scmp.ne.s32.totalorder %s314, %s328
    %p330 = scmp.eq.s32.totalorder %s31, 0
    %p331 = por %p329, %p330
    %s333 = sadd.s32 %s332, 1
    %p336 = scmp.eq.s32.totalorder %s25, 1
    %p337 = scmp.ne.s32.totalorder %s332, %s334
    %p338 = scmp.eq.s32.totalorder %s25, 0
    %p339 = por %p337, %p338
    %p340 = scmp.ne.s32.totalorder %s332, %s334
    %p341 = scmp.eq.s32.totalorder %s30, 1
    %p342 = por %p340, %p341
    %p343 = scmp.ne.s32.totalorder %s334, %s335
    %p344 = scmp.eq.s32.totalorder %s30, 0
    %p345 = por %p343, %p344
    %p346 = scmp.ne.s32.totalorder %s334, %s335
    %p347 = scmp.eq.s32.totalorder %s31, 1
    %p348 = por %p346, %p347
    %p350 = scmp.ne.s32.totalorder %s335, %s349
    %p351 = scmp.eq.s32.totalorder %s31, 0
    %p352 = por %p350, %p351
    %s354 = sadd.s32 %s353, 1
    %p357 = scmp.eq.s32.totalorder %s25, 1
    %p358 = scmp.ne.s32.totalorder %s353, %s355
    %p359 = scmp.eq.s32.totalorder %s25, 0
    %p360 = por %p358, %p359
    %p361 = scmp.ne.s32.totalorder %s353, %s355
    %p362 = scmp.eq.s32.totalorder %s30, 1
    %p363 = por %p361, %p362
    %p364 = scmp.ne.s32.totalorder %s355, %s356
    %p365 = scmp.eq.s32.totalorder %s30, 0
    %p366 = por %p364, %p365
    %p367 = scmp.ne.s32.totalorder %s355, %s356
    %p368 = scmp.eq.s32.totalorder %s31, 1
    %p369 = por %p367, %p368
    %p371 = scmp.ne.s32.totalorder %s356, %s370
    %p372 = scmp.eq.s32.totalorder %s31, 0
    %p373 = por %p371, %p372
    %s375 = sadd.s32 %s374, 1
    %p378 = scmp.eq.s32.totalorder %s25, 1
    %p379 = scmp.ne.s32.totalorder %s374, %s376
    %p380 = scmp.eq.s32.totalorder %s25, 0
    %p381 = por %p379, %p380
    %p382 = scmp.ne.s32.totalorder %s374, %s376
    %p383 = scmp.eq.s32.totalorder %s30, 1
    %p384 = por %p382, %p383
    %p385 = scmp.ne.s32.totalorder %s376, %s377
    %p386 = scmp.eq.s32.totalorder %s30, 0
    %p387 = por %p385, %p386
    %p388 = scmp.ne.s32.totalorder %s376, %s377
    %p389 = scmp.eq.s32.totalorder %s31, 1
    %p390 = por %p388, %p389
    %p392 = scmp.ne.s32.totalorder %s377, %s391
    %p393 = scmp.eq.s32.totalorder %s31, 0
    %p394 = por %p392, %p393
    %s396 = sadd.s32 %s395, 1
    %p399 = scmp.eq.s32.totalorder %s25, 1
    %p400 = scmp.ne.s32.totalorder %s395, %s397
    %p401 = scmp.eq.s32.totalorder %s25, 0
    %p402 = por %p400, %p401
    %p403 = scmp.ne.s32.totalorder %s395, %s397
    %p404 = scmp.eq.s32.totalorder %s30, 1
    %p405 = por %p403, %p404
    %p406 = scmp.ne.s32.totalorder %s397, %s398
    %p407 = scmp.eq.s32.totalorder %s30, 0
    %p408 = por %p406, %p407
    %p409 = scmp.ne.s32.totalorder %s397, %s398
    %p410 = scmp.eq.s32.totalorder %s31, 1
    %p411 = por %p409, %p410
    %p413 = scmp.ne.s32.totalorder %s398, %s412
    %p414 = scmp.eq.s32.totalorder %s31, 0
    %p415 = por %p413, %p414
    %s417 = sadd.s32 %s416, 1
    %p420 = scmp.eq.s32.totalorder %s25, 1
    %p421 = scmp.ne.s32.totalorder %s416, %s418
    %p422 = scmp.eq.s32.totalorder %s25, 0
    %p423 = por %p421, %p422
    %p424 = scmp.ne.s32.totalorder %s416, %s418
    %p425 = scmp.eq.s32.totalorder %s30, 1
    %p426 = por %p424, %p425
    %p427 = scmp.ne.s32.totalorder %s418, %s419
    %p428 = scmp.eq.s32.totalorder %s30, 0
    %p429 = por %p427, %p428
    %p430 = scmp.ne.s32.totalorder %s418, %s419
    %p431 = scmp.eq.s32.totalorder %s31, 1
    %p432 = por %p430, %p431
    %p434 = scmp.ne.s32.totalorder %s419, %s433
    %p435 = scmp.eq.s32.totalorder %s31, 0
    %p436 = por %p434, %p435
    %s437 = ssub.s32 %s25, %s32
    %p438 = scmp.eq.s32.totalorder %s437, 0
    %s440 = sadd.s32 %s439, 1
    %s441 = scalar_select %p438, %s439, %s440
    %p444 = pneg %p438
    %p445 = scmp.eq.s32.totalorder %s25, 1
    %p446 = por %p444, %p445
    %p447 = scmp.ne.s32.totalorder %s439, %s442
    %p448 = scmp.eq.s32.totalorder %s25, 0
    %p449 = por %p447, %p448
    %p450 = scmp.ne.s32.totalorder %s439, %s442
    %p451 = scmp.eq.s32.totalorder %s30, 1
    %p452 = por %p450, %p451
    %p453 = scmp.ne.s32.totalorder %s442, %s443
    %p454 = scmp.eq.s32.totalorder %s30, 0
    %p455 = por %p453, %p454
    %p456 = scmp.ne.s32.totalorder %s442, %s443
    %p457 = scmp.eq.s32.totalorder %s31, 1
    %p458 = por %p456, %p457
    %p460 = scmp.ne.s32.totalorder %s443, %s459
    %p461 = scmp.eq.s32.totalorder %s31, 0
    %p462 = por %p460, %p461
    %p463 = scmp.le.s32.totalorder 1, %s25
    %p464 = scmp.lt.s32.totalorder %s25, 3
    %p465 = pnand %p463, %p464
    %p466 = pneg %p465
    // Predicated region
    $region9: #{model5l_forward.1} parent=5 // pred_check
      _
    $region10: #{model5l_forward.1} parent=5 // pred_check_branch
      %468 = sbr.rel (%p465) target = $region12
    $region11: #{model5l_forward.1} parent=5 // pred_region
      %s469 = ssub.s32 %s25, 1
      // Predicated region
      $region13: #{model5l_forward.1} parent=11 // pred_check
        %p470 = pneg %p72
      $region14: #{model5l_forward.1} parent=11 // pred_check_branch
        %472 = sbr.rel (%p470) target = $region16
      $region15: #{model5l_forward.1} parent=11 // pred_region
        _
      $region16: #{model5l_forward.1} parent=11 // pred_fallthru
        _
      // Predicated region
      $region17: #{model5l_forward.1} parent=11 // pred_check
        %p473 = pneg %p93
      $region18: #{model5l_forward.1} parent=11 // pred_check_branch
        %475 = sbr.rel (%p473) target = $region20
      $region19: #{model5l_forward.1} parent=11 // pred_region
        _
      $region20: #{model5l_forward.1} parent=11 // pred_fallthru
        _
      // Predicated region
      $region21: #{model5l_forward.1} parent=11 // pred_check
        %p476 = pneg %p114
      $region22: #{model5l_forward.1} parent=11 // pred_check_branch
        %478 = sbr.rel (%p476) target = $region24
      $region23: #{model5l_forward.1} parent=11 // pred_region
        _
      $region24: #{model5l_forward.1} parent=11 // pred_fallthru
        _
      // Predicated region
      $region25: #{model5l_forward.1} parent=11 // pred_check
        %p479 = pneg %p135
      $region26: #{model5l_forward.1} parent=11 // pred_check_branch
        %481 = sbr.rel (%p479) target = $region28
      $region27: #{model5l_forward.1} parent=11 // pred_region
        _
      $region28: #{model5l_forward.1} parent=11 // pred_fallthru
        _
      // Predicated region
      $region29: #{model5l_forward.1} parent=11 // pred_check
        %p482 = pneg %p156
      $region30: #{model5l_forward.1} parent=11 // pred_check_branch
        %484 = sbr.rel (%p482) target = $region32
      $region31: #{model5l_forward.1} parent=11 // pred_region
        _
      $region32: #{model5l_forward.1} parent=11 // pred_fallthru
        _
      // Predicated region
      $region33: #{model5l_forward.1} parent=11 // pred_check
        %p485 = pneg %p177
      $region34: #{model5l_forward.1} parent=11 // pred_check_branch
        %487 = sbr.rel (%p485) target = $region36
      $region35: #{model5l_forward.1} parent=11 // pred_region
        _
      $region36: #{model5l_forward.1} parent=11 // pred_fallthru
        _
      // Predicated region
      $region37: #{model5l_forward.1} parent=11 // pred_check
        %p488 = pneg %p198
      $region38: #{model5l_forward.1} parent=11 // pred_check_branch
        %490 = sbr.rel (%p488) target = $region40
      $region39: #{model5l_forward.1} parent=11 // pred_region
        _
      $region40: #{model5l_forward.1} parent=11 // pred_fallthru
        _
      // Predicated region
      $region41: #{model5l_forward.1} parent=11 // pred_check
        %p491 = pneg %p219
      $region42: #{model5l_forward.1} parent=11 // pred_check_branch
        %493 = sbr.rel (%p491) target = $region44
      $region43: #{model5l_forward.1} parent=11 // pred_region
        _
      $region44: #{model5l_forward.1} parent=11 // pred_fallthru
        _
      // Predicated region
      $region45: #{model5l_forward.1} parent=11 // pred_check
        %p494 = pneg %p240
      $region46: #{model5l_forward.1} parent=11 // pred_check_branch
        %496 = sbr.rel (%p494) target = $region48
      $region47: #{model5l_forward.1} parent=11 // pred_region
        _
      $region48: #{model5l_forward.1} parent=11 // pred_fallthru
        _
      // Predicated region
      $region49: #{model5l_forward.1} parent=11 // pred_check
        %p497 = pneg %p261
      $region50: #{model5l_forward.1} parent=11 // pred_check_branch
        %499 = sbr.rel (%p497) target = $region52
      $region51: #{model5l_forward.1} parent=11 // pred_region
        _
      $region52: #{model5l_forward.1} parent=11 // pred_fallthru
        _
      // Predicated region
      $region53: #{model5l_forward.1} parent=11 // pred_check
        %p500 = pneg %p282
      $region54: #{model5l_forward.1} parent=11 // pred_check_branch
        %502 = sbr.rel (%p500) target = $region56
      $region55: #{model5l_forward.1} parent=11 // pred_region
        _
      $region56: #{model5l_forward.1} parent=11 // pred_fallthru
        _
      // Predicated region
      $region57: #{model5l_forward.1} parent=11 // pred_check
        %p503 = pneg %p303
      $region58: #{model5l_forward.1} parent=11 // pred_check_branch
        %505 = sbr.rel (%p503) target = $region60
      $region59: #{model5l_forward.1} parent=11 // pred_region
        _
      $region60: #{model5l_forward.1} parent=11 // pred_fallthru
        _
      // Predicated region
      $region61: #{model5l_forward.1} parent=11 // pred_check
        %p506 = pneg %p324
      $region62: #{model5l_forward.1} parent=11 // pred_check_branch
        %508 = sbr.rel (%p506) target = $region64
      $region63: #{model5l_forward.1} parent=11 // pred_region
        _
      $region64: #{model5l_forward.1} parent=11 // pred_fallthru
        _
      // Predicated region
      $region65: #{model5l_forward.1} parent=11 // pred_check
        %p509 = pneg %p345
      $region66: #{model5l_forward.1} parent=11 // pred_check_branch
        %511 = sbr.rel (%p509) target = $region68
      $region67: #{model5l_forward.1} parent=11 // pred_region
        _
      $region68: #{model5l_forward.1} parent=11 // pred_fallthru
        _
      // Predicated region
      $region69: #{model5l_forward.1} parent=11 // pred_check
        %p512 = pneg %p366
      $region70: #{model5l_forward.1} parent=11 // pred_check_branch
        %514 = sbr.rel (%p512) target = $region72
      $region71: #{model5l_forward.1} parent=11 // pred_region
        _
      $region72: #{model5l_forward.1} parent=11 // pred_fallthru
        _
      // Predicated region
      $region73: #{model5l_forward.1} parent=11 // pred_check
        %p515 = pneg %p387
      $region74: #{model5l_forward.1} parent=11 // pred_check_branch
        %517 = sbr.rel (%p515) target = $region76
      $region75: #{model5l_forward.1} parent=11 // pred_region
        _
      $region76: #{model5l_forward.1} parent=11 // pred_fallthru
        _
      // Predicated region
      $region77: #{model5l_forward.1} parent=11 // pred_check
        %p518 = pneg %p408
      $region78: #{model5l_forward.1} parent=11 // pred_check_branch
        %520 = sbr.rel (%p518) target = $region80
      $region79: #{model5l_forward.1} parent=11 // pred_region
        _
      $region80: #{model5l_forward.1} parent=11 // pred_fallthru
        _
      // Predicated region
      $region81: #{model5l_forward.1} parent=11 // pred_check
        %p521 = pneg %p429
      $region82: #{model5l_forward.1} parent=11 // pred_check_branch
        %523 = sbr.rel (%p521) target = $region84
      $region83: #{model5l_forward.1} parent=11 // pred_region
        _
      $region84: #{model5l_forward.1} parent=11 // pred_fallthru
        _
    $region12: #{model5l_forward.1} parent=5 // pred_fallthru
      _
    %p524 = scmp.lt.s32.totalorder %s25, 2
    // Predicated region
    $region85: #{model5l_forward.1} parent=5 // pred_check
      %p525 = pneg %p524
    $region86: #{model5l_forward.1} parent=5 // pred_check_branch
      %527 = sbr.rel (%p525) target = $region88
    $region87: #{model5l_forward.1} parent=5 // pred_region
      // Predicated region
      $region89: #{model5l_forward.1} parent=87 // pred_check
        %p528 = pneg %p45
      $region90: #{model5l_forward.1} parent=87 // pred_check_branch
        %530 = sbr.rel (%p528) target = $region92
      $region91: #{model5l_forward.1} parent=87 // pred_region
        %s531 = smul.u32 32, %s25
        %p532 = scmp.lt.s32.totalorder %s531, 63
        %s533 = scalar_select %p532, %s531, 63
        %s534 = smul.addr %s533, 4
        %s535 = scalar_lea.vmem %s0, %s534
        %s536 = smul.u32 32, %s25
      $region92: #{model5l_forward.1} parent=87 // pred_fallthru
        _
    $region88: #{model5l_forward.1} parent=5 // pred_fallthru
      _
    %p537 = scmp.le.s32.totalorder 1, %s25
    %p538 = scmp.lt.s32.totalorder %s25, 3
    %p539 = pnand %p537, %p538
    %p540 = pneg %p539
    // Predicated region
    $region93: #{model5l_forward.1} parent=5 // pred_check
      _
    $region94: #{model5l_forward.1} parent=5 // pred_check_branch
      %542 = sbr.rel (%p539) target = $region96
    $region95: #{model5l_forward.1} parent=5 // pred_region
      %s543 = ssub.s32 %s25, 1
      %s544 = smul.u32 32, %s30
      %p545 = scmp.lt.s32.totalorder %s544, 63
      %s546 = scalar_select %p545, %s544, 63
      %s547 = smul.addr %s546, 4
      %s548 = scalar_lea.vmem %s0, %s547
      %p549 = pneg %p51
      %p550 = pneg %p48
      %p551 = pneg %p72
      %p552 = pneg %p69
      %p553 = pneg %p93
      %p554 = pneg %p90
      %p555 = pneg %p114
      %p556 = pneg %p111
      %p557 = pneg %p135
      %p558 = pneg %p132
      %p559 = pneg %p156
      %p560 = pneg %p153
      %p561 = pneg %p177
      %p562 = pneg %p174
      %p563 = pneg %p198
      %p564 = pneg %p195
      %p565 = pneg %p219
      %p566 = pneg %p216
      %p567 = pneg %p240
      %p568 = pneg %p237
      %p569 = pneg %p261
      %p570 = pneg %p258
      %p571 = pneg %p282
      %p572 = pneg %p279
      %p573 = pneg %p303
      %p574 = pneg %p300
      %p575 = pneg %p324
      %p576 = pneg %p321
      %p577 = pneg %p345
      %p578 = pneg %p342
      %p579 = pneg %p366
      %p580 = pneg %p363
      %p581 = pneg %p387
      %p582 = pneg %p384
      %p583 = pneg %p408
      %p584 = pneg %p405
      %p585 = pneg %p429
      %p586 = pneg %p426
      %p587 = pneg %p455
      %p588 = pneg %p452
      %p589 = scmp.lt.s32.totalorder %s30, 1
      %s590 = scalar_select %p589, %s30, 1
      %s591 = smul.addr %s590, 8
      %s592 = scalar_lea.vmem %s19, %s591
      %s593 = smul.u32 32, %s30
      %p594 = scmp.lt.s32.totalorder %s593, 63
      %s595 = scalar_select %p594, %s593, 63
      %s596 = smul.addr %s595, 4
      %s597 = scalar_lea.vmem %s0, %s596
      %s598 = smul.u32 32, %s30
      %p599 = scmp.lt.s32.totalorder %s30, 1
      %s600 = scalar_select %p599, %s30, 1
      %s601 = smul.addr %s600, 8
      %s602 = scalar_lea.vmem %s19, %s601
      %v604 = vld [vmem:[%s597] sm:$0xf]
      %v605 = vld [vmem:[%s597 + $0x4] sm:$0xf]
      %v606 = vld [vmem:[%s597 + $0x8] sm:$0xf]
      %v607 = vld [vmem:[%s597 + $0xc] sm:$0xf]
      %v608 = vld [vmem:[%s597 + $0x10] sm:$0xf]
      %v609 = vld [vmem:[%s597 + $0x14] sm:$0xf]
      %v610 = vld [vmem:[%s597 + $0x18] sm:$0xf]
      %v611 = vld [vmem:[%s597 + $0x1c] sm:$0xf]
      %v612 = vld [vmem:[%s597 + $0x20] sm:$0xf]
      %v613 = vld [vmem:[%s597 + $0x24] sm:$0xf]
      %v614 = vld [vmem:[%s597 + $0x28] sm:$0xf]
      %v615 = vld [vmem:[%s597 + $0x2c] sm:$0xf]
      %v616 = vld [vmem:[%s597 + $0x30] sm:$0xf]
      %v617 = vld [vmem:[%s597 + $0x34] sm:$0xf]
      %v618 = vld [vmem:[%s597 + $0x38] sm:$0xf]
      %v619 = vld [vmem:[%s597 + $0x3c] sm:$0xf]
      %v620 = vld [vmem:[%s597 + $0x40] sm:$0xf]
      %v621 = vld [vmem:[%s597 + $0x44] sm:$0xf]
      %v622 = vld [vmem:[%s597 + $0x48] sm:$0xf]
      %v623 = vld [vmem:[%s597 + $0x4c] sm:$0xf]
      %v624 = vld [vmem:[%s597 + $0x50] sm:$0xf]
      %v625 = vld [vmem:[%s597 + $0x54] sm:$0xf]
      %v626 = vld [vmem:[%s597 + $0x58] sm:$0xf]
      %v627 = vld [vmem:[%s597 + $0x5c] sm:$0xf]
      %v628 = vld [vmem:[%s597 + $0x60] sm:$0xf]
      %v629 = vld [vmem:[%s597 + $0x64] sm:$0xf]
      %v630 = vld [vmem:[%s597 + $0x68] sm:$0xf]
      %v631 = vld [vmem:[%s597 + $0x6c] sm:$0xf]
      %v632 = vld [vmem:[%s597 + $0x70] sm:$0xf]
      %v633 = vld [vmem:[%s597 + $0x74] sm:$0xf]
      %v634 = vld [vmem:[%s597 + $0x78] sm:$0xf]
      %v635 = vld [vmem:[%s597 + $0x7c] sm:$0xf]
      %v636 = vld [vmem:[%s11] sm:$0xff]
      %v637 = vld [vmem:[%s11 + $0x8] sm:$0xff]
      %v638 = vld [vmem:[%s11 + $0x10] sm:$0xff]
      %v639 = vld [vmem:[%s11 + $0x18] sm:$0xff]
      %v640 = vld [vmem:[%s11 + $0x20] sm:$0xff]
      %v641 = vld [vmem:[%s11 + $0x28] sm:$0xff]
      %v642 = vld [vmem:[%s11 + $0x30] sm:$0xff]
      %v643 = vld [vmem:[%s11 + $0x38] sm:$0xff]
      %v644 = vld [vmem:[%s11 + $0x40] sm:$0xff]
      %v645 = vld [vmem:[%s11 + $0x48] sm:$0xff]
      %v646 = vld [vmem:[%s11 + $0x50] sm:$0xff]
      %v647 = vld [vmem:[%s11 + $0x58] sm:$0xff]
      %v648 = vld [vmem:[%s11 + $0x60] sm:$0xff]
      %v649 = vld [vmem:[%s11 + $0x68] sm:$0xff]
      %v650 = vld [vmem:[%s11 + $0x70] sm:$0xff]
      %v651 = vld [vmem:[%s11 + $0x78] sm:$0xff]
      %v652 = vld [vmem:[%s11 + $0x80] sm:$0xff]
      %v653 = vld [vmem:[%s11 + $0x88] sm:$0xff]
      %v654 = vld [vmem:[%s11 + $0x90] sm:$0xff]
      %v655 = vld [vmem:[%s11 + $0x98] sm:$0xff]
      %v656 = vld [vmem:[%s11 + $0xa0] sm:$0xff]
      %v657 = vld [vmem:[%s11 + $0xa8] sm:$0xff]
      %v658 = vld [vmem:[%s11 + $0xb0] sm:$0xff]
      %v659 = vld [vmem:[%s11 + $0xb8] sm:$0xff]
      %v660 = vld [vmem:[%s11 + $0xc0] sm:$0xff]
      %v661 = vld [vmem:[%s11 + $0xc8] sm:$0xff]
      %v662 = vld [vmem:[%s11 + $0xd0] sm:$0xff]
      %v663 = vld [vmem:[%s11 + $0xd8] sm:$0xff]
      %v664 = vld [vmem:[%s11 + $0xe0] sm:$0xff]
      %v665 = vld [vmem:[%s11 + $0xe8] sm:$0xff]
      %v666 = vld [vmem:[%s11 + $0xf0] sm:$0xff]
      %v667 = vld [vmem:[%s11 + $0xf8] sm:$0xff]
      %v668 = vld [vmem:[%s11 + $0x100] sm:$0xff]
      %v669 = vld [vmem:[%s11 + $0x108] sm:$0xff]
      %v670 = vld [vmem:[%s11 + $0x110] sm:$0xff]
      %v671 = vld [vmem:[%s11 + $0x118] sm:$0xff]
      %v672 = vld [vmem:[%s11 + $0x120] sm:$0xff]
      %v673 = vld [vmem:[%s11 + $0x128] sm:$0xff]
      %v674 = vld [vmem:[%s11 + $0x130] sm:$0xff]
      %v675 = vld [vmem:[%s11 + $0x138] sm:$0xff]
      %v676 = vld [vmem:[%s11 + $0x140] sm:$0xff]
      %v677 = vld [vmem:[%s11 + $0x148] sm:$0xff]
      %v678 = vld [vmem:[%s11 + $0x150] sm:$0xff]
      %v679 = vld [vmem:[%s11 + $0x158] sm:$0xff]
      %v680 = vld [vmem:[%s11 + $0x160] sm:$0xff]
      %v681 = vld [vmem:[%s11 + $0x168] sm:$0xff]
      %v682 = vld [vmem:[%s11 + $0x170] sm:$0xff]
      %v683 = vld [vmem:[%s11 + $0x178] sm:$0xff]
      %v684 = vld [vmem:[%s11 + $0x180] sm:$0xff]
      %v685 = vld [vmem:[%s11 + $0x188] sm:$0xff]
      %v686 = vld [vmem:[%s11 + $0x190] sm:$0xff]
      %v687 = vld [vmem:[%s11 + $0x198] sm:$0xff]
      %v688 = vld [vmem:[%s11 + $0x1a0] sm:$0xff]
      %v689 = vld [vmem:[%s11 + $0x1a8] sm:$0xff]
      %v690 = vld [vmem:[%s11 + $0x1b0] sm:$0xff]
      %v691 = vld [vmem:[%s11 + $0x1b8] sm:$0xff]
      %v692 = vld [vmem:[%s11 + $0x1c0] sm:$0xff]
      %v693 = vld [vmem:[%s11 + $0x1c8] sm:$0xff]
      %v694 = vld [vmem:[%s11 + $0x1d0] sm:$0xff]
      %v695 = vld [vmem:[%s11 + $0x1d8] sm:$0xff]
      %v696 = vld [vmem:[%s11 + $0x1e0] sm:$0xff]
      %v697 = vld [vmem:[%s11 + $0x1e8] sm:$0xff]
      %v698 = vld [vmem:[%s11 + $0x1f0] sm:$0xff]
      %v699 = vld [vmem:[%s11 + $0x1f8] sm:$0xff]
      %v700 = vld [vmem:[%s11 + $0x200] sm:$0xff]
      %v701 = vld [vmem:[%s11 + $0x208] sm:$0xff]
      %v702 = vld [vmem:[%s11 + $0x210] sm:$0xff]
      %v703 = vld [vmem:[%s11 + $0x218] sm:$0xff]
      %v704 = vld [vmem:[%s11 + $0x220] sm:$0xff]
      %v705 = vld [vmem:[%s11 + $0x228] sm:$0xff]
      %v706 = vld [vmem:[%s11 + $0x230] sm:$0xff]
      %v707 = vld [vmem:[%s11 + $0x238] sm:$0xff]
      %v708 = vld [vmem:[%s11 + $0x240] sm:$0xff]
      %v709 = vld [vmem:[%s11 + $0x248] sm:$0xff]
      %v710 = vld [vmem:[%s11 + $0x250] sm:$0xff]
      %v711 = vld [vmem:[%s11 + $0x258] sm:$0xff]
      %v712 = vld [vmem:[%s11 + $0x260] sm:$0xff]
      %v713 = vld [vmem:[%s11 + $0x268] sm:$0xff]
      %v714 = vld [vmem:[%s11 + $0x270] sm:$0xff]
      %v715 = vld [vmem:[%s11 + $0x278] sm:$0xff]
      %v716 = vld [vmem:[%s11 + $0x280] sm:$0xff]
      %v717 = vld [vmem:[%s11 + $0x288] sm:$0xff]
      %v718 = vld [vmem:[%s11 + $0x290] sm:$0xff]
      %v719 = vld [vmem:[%s11 + $0x298] sm:$0xff]
      %v720 = vld [vmem:[%s11 + $0x2a0] sm:$0xff]
      %v721 = vld [vmem:[%s11 + $0x2a8] sm:$0xff]
      %v722 = vld [vmem:[%s11 + $0x2b0] sm:$0xff]
      %v723 = vld [vmem:[%s11 + $0x2b8] sm:$0xff]
      %v724 = vld [vmem:[%s11 + $0x2c0] sm:$0xff]
      %v725 = vld [vmem:[%s11 + $0x2c8] sm:$0xff]
      %v726 = vld [vmem:[%s11 + $0x2d0] sm:$0xff]
      %v727 = vld [vmem:[%s11 + $0x2d8] sm:$0xff]
      %v728 = vld [vmem:[%s11 + $0x2e0] sm:$0xff]
      %v729 = vld [vmem:[%s11 + $0x2e8] sm:$0xff]
      %v730 = vld [vmem:[%s11 + $0x2f0] sm:$0xff]
      %v731 = vld [vmem:[%s11 + $0x2f8] sm:$0xff]
      %v828 = vunpack.c.l.b16 %v636
      %v829 = vunpack.c.h.b16 %v636
      %v830 = vunpack.c.l.b16 %v637
      %v831 = vunpack.c.h.b16 %v637
      %v832 = vunpack.c.l.b16 %v638
      %v833 = vunpack.c.h.b16 %v638
      %v834 = vunpack.c.l.b16 %v639
      %v835 = vunpack.c.h.b16 %v639
      %v836 = vunpack.c.l.b16 %v640
      %v837 = vunpack.c.h.b16 %v640
      %v838 = vunpack.c.l.b16 %v641
      %v839 = vunpack.c.h.b16 %v641
      %v840 = vunpack.c.l.b16 %v642
      %v841 = vunpack.c.h.b16 %v642
      %v842 = vunpack.c.l.b16 %v643
      %v843 = vunpack.c.h.b16 %v643
      %v844 = vunpack.c.l.b16 %v644
      %v845 = vunpack.c.h.b16 %v644
      %v846 = vunpack.c.l.b16 %v645
      %v847 = vunpack.c.h.b16 %v645
      %v848 = vunpack.c.l.b16 %v646
      %v849 = vunpack.c.h.b16 %v646
      %v850 = vunpack.c.l.b16 %v647
      %v851 = vunpack.c.h.b16 %v647
      %v852 = vunpack.c.l.b16 %v648
      %v853 = vunpack.c.h.b16 %v648
      %v854 = vunpack.c.l.b16 %v649
      %v855 = vunpack.c.h.b16 %v649
      %v856 = vunpack.c.l.b16 %v650
      %v857 = vunpack.c.h.b16 %v650
      %v858 = vunpack.c.l.b16 %v651
      %v859 = vunpack.c.h.b16 %v651
      %v860 = vunpack.c.l.b16 %v652
      %v861 = vunpack.c.h.b16 %v652
      %v862 = vunpack.c.l.b16 %v653
      %v863 = vunpack.c.h.b16 %v653
      %v864 = vunpack.c.l.b16 %v654
      %v865 = vunpack.c.h.b16 %v654
      %v866 = vunpack.c.l.b16 %v655
      %v867 = vunpack.c.h.b16 %v655
      %v868 = vunpack.c.l.b16 %v656
      %v869 = vunpack.c.h.b16 %v656
      %v870 = vunpack.c.l.b16 %v657
      %v871 = vunpack.c.h.b16 %v657
      %v872 = vunpack.c.l.b16 %v658
      %v873 = vunpack.c.h.b16 %v658
      %v874 = vunpack.c.l.b16 %v659
      %v875 = vunpack.c.h.b16 %v659
      %v876 = vunpack.c.l.b16 %v660
      %v877 = vunpack.c.h.b16 %v660
      %v878 = vunpack.c.l.b16 %v661
      %v879 = vunpack.c.h.b16 %v661
      %v880 = vunpack.c.l.b16 %v662
      %v881 = vunpack.c.h.b16 %v662
      %v882 = vunpack.c.l.b16 %v663
      %v883 = vunpack.c.h.b16 %v663
      %v884 = vunpack.c.l.b16 %v664
      %v885 = vunpack.c.h.b16 %v664
      %v886 = vunpack.c.l.b16 %v665
      %v887 = vunpack.c.h.b16 %v665
      %v888 = vunpack.c.l.b16 %v666
      %v889 = vunpack.c.h.b16 %v666
      %v890 = vunpack.c.l.b16 %v667
      %v891 = vunpack.c.h.b16 %v667
      %v892 = vunpack.c.l.b16 %v668
      %v893 = vunpack.c.h.b16 %v668
      %v894 = vunpack.c.l.b16 %v669
      %v895 = vunpack.c.h.b16 %v669
      %v896 = vunpack.c.l.b16 %v670
      %v897 = vunpack.c.h.b16 %v670
      %v898 = vunpack.c.l.b16 %v671
      %v899 = vunpack.c.h.b16 %v671
      %v900 = vunpack.c.l.b16 %v672
      %v901 = vunpack.c.h.b16 %v672
      %v902 = vunpack.c.l.b16 %v673
      %v903 = vunpack.c.h.b16 %v673
      %v904 = vunpack.c.l.b16 %v674
      %v905 = vunpack.c.h.b16 %v674
      %v906 = vunpack.c.l.b16 %v675
      %v907 = vunpack.c.h.b16 %v675
      %v908 = vunpack.c.l.b16 %v676
      %v909 = vunpack.c.h.b16 %v676
      %v910 = vunpack.c.l.b16 %v677
      %v911 = vunpack.c.h.b16 %v677
      %v912 = vunpack.c.l.b16 %v678
      %v913 = vunpack.c.h.b16 %v678
      %v914 = vunpack.c.l.b16 %v679
      %v915 = vunpack.c.h.b16 %v679
      %v916 = vunpack.c.l.b16 %v680
      %v917 = vunpack.c.h.b16 %v680
      %v918 = vunpack.c.l.b16 %v681
      %v919 = vunpack.c.h.b16 %v681
      %v920 = vunpack.c.l.b16 %v682
      %v921 = vunpack.c.h.b16 %v682
      %v922 = vunpack.c.l.b16 %v683
      %v923 = vunpack.c.h.b16 %v683
      %v924 = vunpack.c.l.b16 %v684
      %v925 = vunpack.c.h.b16 %v684
      %v926 = vunpack.c.l.b16 %v685
      %v927 = vunpack.c.h.b16 %v685
      %v928 = vunpack.c.l.b16 %v686
      %v929 = vunpack.c.h.b16 %v686
      %v930 = vunpack.c.l.b16 %v687
      %v931 = vunpack.c.h.b16 %v687
      %v932 = vunpack.c.l.b16 %v688
      %v933 = vunpack.c.h.b16 %v688
      %v934 = vunpack.c.l.b16 %v689
      %v935 = vunpack.c.h.b16 %v689
      %v936 = vunpack.c.l.b16 %v690
      %v937 = vunpack.c.h.b16 %v690
      %v938 = vunpack.c.l.b16 %v691
      %v939 = vunpack.c.h.b16 %v691
      %v940 = vunpack.c.l.b16 %v692
      %v941 = vunpack.c.h.b16 %v692
      %v942 = vunpack.c.l.b16 %v693
      %v943 = vunpack.c.h.b16 %v693
      %v944 = vunpack.c.l.b16 %v694
      %v945 = vunpack.c.h.b16 %v694
      %v946 = vunpack.c.l.b16 %v695
      %v947 = vunpack.c.h.b16 %v695
      %v948 = vunpack.c.l.b16 %v696
      %v949 = vunpack.c.h.b16 %v696
      %v950 = vunpack.c.l.b16 %v697
      %v951 = vunpack.c.h.b16 %v697
      %v952 = vunpack.c.l.b16 %v698
      %v953 = vunpack.c.h.b16 %v698
      %v954 = vunpack.c.l.b16 %v699
      %v955 = vunpack.c.h.b16 %v699
      %v956 = vunpack.c.l.b16 %v700
      %v957 = vunpack.c.h.b16 %v700
      %v958 = vunpack.c.l.b16 %v701
      %v959 = vunpack.c.h.b16 %v701
      %v960 = vunpack.c.l.b16 %v702
      %v961 = vunpack.c.h.b16 %v702
      %v962 = vunpack.c.l.b16 %v703
      %v963 = vunpack.c.h.b16 %v703
      %v964 = vunpack.c.l.b16 %v704
      %v965 = vunpack.c.h.b16 %v704
      %v966 = vunpack.c.l.b16 %v705
      %v967 = vunpack.c.h.b16 %v705
      %v968 = vunpack.c.l.b16 %v706
      %v969 = vunpack.c.h.b16 %v706
      %v970 = vunpack.c.l.b16 %v707
      %v971 = vunpack.c.h.b16 %v707
      %v972 = vunpack.c.l.b16 %v708
      %v973 = vunpack.c.h.b16 %v708
      %v974 = vunpack.c.l.b16 %v709
      %v975 = vunpack.c.h.b16 %v709
      %v976 = vunpack.c.l.b16 %v710
      %v977 = vunpack.c.h.b16 %v710
      %v978 = vunpack.c.l.b16 %v711
      %v979 = vunpack.c.h.b16 %v711
      %v980 = vunpack.c.l.b16 %v712
      %v981 = vunpack.c.h.b16 %v712
      %v982 = vunpack.c.l.b16 %v713
      %v983 = vunpack.c.h.b16 %v713
      %v984 = vunpack.c.l.b16 %v714
      %v985 = vunpack.c.h.b16 %v714
      %v986 = vunpack.c.l.b16 %v715
      %v987 = vunpack.c.h.b16 %v715
      %v988 = vunpack.c.l.b16 %v716
      %v989 = vunpack.c.h.b16 %v716
      %v990 = vunpack.c.l.b16 %v717
      %v991 = vunpack.c.h.b16 %v717
      %v992 = vunpack.c.l.b16 %v718
      %v993 = vunpack.c.h.b16 %v718
      %v994 = vunpack.c.l.b16 %v719
      %v995 = vunpack.c.h.b16 %v719
      %v996 = vunpack.c.l.b16 %v720
      %v997 = vunpack.c.h.b16 %v720
      %v998 = vunpack.c.l.b16 %v721
      %v999 = vunpack.c.h.b16 %v721
      %v1000 = vunpack.c.l.b16 %v722
      %v1001 = vunpack.c.h.b16 %v722
      %v1002 = vunpack.c.l.b16 %v723
      %v1003 = vunpack.c.h.b16 %v723
      %v1004 = vunpack.c.l.b16 %v724
      %v1005 = vunpack.c.h.b16 %v724
      %v1006 = vunpack.c.l.b16 %v725
      %v1007 = vunpack.c.h.b16 %v725
      %v1008 = vunpack.c.l.b16 %v726
      %v1009 = vunpack.c.h.b16 %v726
      %v1010 = vunpack.c.l.b16 %v727
      %v1011 = vunpack.c.h.b16 %v727
      %v1012 = vunpack.c.l.b16 %v728
      %v1013 = vunpack.c.h.b16 %v728
      %v1014 = vunpack.c.l.b16 %v729
      %v1015 = vunpack.c.h.b16 %v729
      %v1016 = vunpack.c.l.b16 %v730
      %v1017 = vunpack.c.h.b16 %v730
      %v1018 = vunpack.c.l.b16 %v731
      %v1019 = vunpack.c.h.b16 %v731
      %v1020 = vpack.c.b16 %v830, %v828
      %v1021 = vpack.c.b16 %v831, %v829
      %v1022 = vpack.c.b16 %v834, %v832
      %v1023 = vpack.c.b16 %v835, %v833
      %v1024 = vpack.c.b16 %v838, %v836
      %v1025 = vpack.c.b16 %v839, %v837
      %v1026 = vpack.c.b16 %v842, %v840
      %v1027 = vpack.c.b16 %v843, %v841
      %v1028 = vpack.c.b16 %v846, %v844
      %v1029 = vpack.c.b16 %v847, %v845
      %v1030 = vpack.c.b16 %v850, %v848
      %v1031 = vpack.c.b16 %v851, %v849
      %v1032 = vpack.c.b16 %v854, %v852
      %v1033 = vpack.c.b16 %v855, %v853
      %v1034 = vpack.c.b16 %v858, %v856
      %v1035 = vpack.c.b16 %v859, %v857
      %v1036 = vpack.c.b16 %v862, %v860
      %v1037 = vpack.c.b16 %v863, %v861
      %v1038 = vpack.c.b16 %v866, %v864
      %v1039 = vpack.c.b16 %v867, %v865
      %v1040 = vpack.c.b16 %v870, %v868
      %v1041 = vpack.c.b16 %v871, %v869
      %v1042 = vpack.c.b16 %v874, %v872
      %v1043 = vpack.c.b16 %v875, %v873
      %v1044 = vpack.c.b16 %v878, %v876
      %v1045 = vpack.c.b16 %v879, %v877
      %v1046 = vpack.c.b16 %v882, %v880
      %v1047 = vpack.c.b16 %v883, %v881
      %v1048 = vpack.c.b16 %v886, %v884
      %v1049 = vpack.c.b16 %v887, %v885
      %v1050 = vpack.c.b16 %v890, %v888
      %v1051 = vpack.c.b16 %v891, %v889
      %v1052 = vpack.c.b16 %v894, %v892
      %v1053 = vpack.c.b16 %v895, %v893
      %v1054 = vpack.c.b16 %v898, %v896
      %v1055 = vpack.c.b16 %v899, %v897
      %v1056 = vpack.c.b16 %v902, %v900
      %v1057 = vpack.c.b16 %v903, %v901
      %v1058 = vpack.c.b16 %v906, %v904
      %v1059 = vpack.c.b16 %v907, %v905
      %v1060 = vpack.c.b16 %v910, %v908
      %v1061 = vpack.c.b16 %v911, %v909
      %v1062 = vpack.c.b16 %v914, %v912
      %v1063 = vpack.c.b16 %v915, %v913
      %v1064 = vpack.c.b16 %v918, %v916
      %v1065 = vpack.c.b16 %v919, %v917
      %v1066 = vpack.c.b16 %v922, %v920
      %v1067 = vpack.c.b16 %v923, %v921
      %v1068 = vpack.c.b16 %v926, %v924
      %v1069 = vpack.c.b16 %v927, %v925
      %v1070 = vpack.c.b16 %v930, %v928
      %v1071 = vpack.c.b16 %v931, %v929
      %v1072 = vpack.c.b16 %v934, %v932
      %v1073 = vpack.c.b16 %v935, %v933
      %v1074 = vpack.c.b16 %v938, %v936
      %v1075 = vpack.c.b16 %v939, %v937
      %v1076 = vpack.c.b16 %v942, %v940
      %v1077 = vpack.c.b16 %v943, %v941
      %v1078 = vpack.c.b16 %v946, %v944
      %v1079 = vpack.c.b16 %v947, %v945
      %v1080 = vpack.c.b16 %v950, %v948
      %v1081 = vpack.c.b16 %v951, %v949
      %v1082 = vpack.c.b16 %v954, %v952
      %v1083 = vpack.c.b16 %v955, %v953
      %v1084 = vpack.c.b16 %v958, %v956
      %v1085 = vpack.c.b16 %v959, %v957
      %v1086 = vpack.c.b16 %v962, %v960
      %v1087 = vpack.c.b16 %v963, %v961
      %v1088 = vpack.c.b16 %v966, %v964
      %v1089 = vpack.c.b16 %v967, %v965
      %v1090 = vpack.c.b16 %v970, %v968
      %v1091 = vpack.c.b16 %v971, %v969
      %v1092 = vpack.c.b16 %v974, %v972
      %v1093 = vpack.c.b16 %v975, %v973
      %v1094 = vpack.c.b16 %v978, %v976
      %v1095 = vpack.c.b16 %v979, %v977
      %v1096 = vpack.c.b16 %v982, %v980
      %v1097 = vpack.c.b16 %v983, %v981
      %v1098 = vpack.c.b16 %v986, %v984
      %v1099 = vpack.c.b16 %v987, %v985
      %v1100 = vpack.c.b16 %v990, %v988
      %v1101 = vpack.c.b16 %v991, %v989
      %v1102 = vpack.c.b16 %v994, %v992
      %v1103 = vpack.c.b16 %v995, %v993
      %v1104 = vpack.c.b16 %v998, %v996
      %v1105 = vpack.c.b16 %v999, %v997
      %v1106 = vpack.c.b16 %v1002, %v1000
      %v1107 = vpack.c.b16 %v1003, %v1001
      %v1108 = vpack.c.b16 %v1006, %v1004
      %v1109 = vpack.c.b16 %v1007, %v1005
      %v1110 = vpack.c.b16 %v1010, %v1008
      %v1111 = vpack.c.b16 %v1011, %v1009
      %v1112 = vpack.c.b16 %v1014, %v1012
      %v1113 = vpack.c.b16 %v1015, %v1013
      %v1114 = vpack.c.b16 %v1018, %v1016
      %v1115 = vpack.c.b16 %v1019, %v1017
      %v1244 = vunpack.c.l.b16 %v604
      %v1245 = vunpack.c.l.b16 %v605
      %v1246 = vunpack.c.l.b16 %v606
      %v1247 = vunpack.c.l.b16 %v607
      %v1248 = vunpack.c.l.b16 %v608
      %v1249 = vunpack.c.l.b16 %v609
      %v1250 = vunpack.c.l.b16 %v610
      %v1251 = vunpack.c.l.b16 %v611
      %v1252 = vunpack.c.l.b16 %v612
      %v1253 = vunpack.c.l.b16 %v613
      %v1254 = vunpack.c.l.b16 %v614
      %v1255 = vunpack.c.l.b16 %v615
      %v1256 = vunpack.c.l.b16 %v616
      %v1257 = vunpack.c.l.b16 %v617
      %v1258 = vunpack.c.l.b16 %v618
      %v1259 = vunpack.c.l.b16 %v619
      %v1260 = vunpack.c.l.b16 %v620
      %v1261 = vunpack.c.l.b16 %v621
      %v1262 = vunpack.c.l.b16 %v622
      %v1263 = vunpack.c.l.b16 %v623
      %v1264 = vunpack.c.l.b16 %v624
      %v1265 = vunpack.c.l.b16 %v625
      %v1266 = vunpack.c.l.b16 %v626
      %v1267 = vunpack.c.l.b16 %v627
      %v1268 = vunpack.c.l.b16 %v628
      %v1269 = vunpack.c.l.b16 %v629
      %v1270 = vunpack.c.l.b16 %v630
      %v1271 = vunpack.c.l.b16 %v631
      %v1272 = vunpack.c.l.b16 %v632
      %v1273 = vunpack.c.l.b16 %v633
      %v1274 = vunpack.c.l.b16 %v634
      %v1275 = vunpack.c.l.b16 %v635
      %v1276 = vpack.c.b16 %v1245, %v1244
      %v1277 = vpack.c.b16 %v1247, %v1246
      %v1278 = vpack.c.b16 %v1249, %v1248
      %v1279 = vpack.c.b16 %v1251, %v1250
      %v1280 = vpack.c.b16 %v1253, %v1252
      %v1281 = vpack.c.b16 %v1255, %v1254
      %v1282 = vpack.c.b16 %v1257, %v1256
      %v1283 = vpack.c.b16 %v1259, %v1258
      %v1284 = vpack.c.b16 %v1261, %v1260
      %v1285 = vpack.c.b16 %v1263, %v1262
      %v1286 = vpack.c.b16 %v1265, %v1264
      %v1287 = vpack.c.b16 %v1267, %v1266
      %v1288 = vpack.c.b16 %v1269, %v1268
      %v1289 = vpack.c.b16 %v1271, %v1270
      %v1290 = vpack.c.b16 %v1273, %v1272
      %v1291 = vpack.c.b16 %v1275, %v1274
      %1308 = vmatpush.bf16.msra.mxu0 %v1283
      %1309 = vmatpush.bf16.msra.mxu0 %v1282
      %1310 = vmatpush.bf16.msra.mxu0 %v1281
      %1311 = vmatpush.bf16.msra.mxu0 %v1280
      %1312 = vmatpush.bf16.msra.mxu0 %v1279
      %1313 = vmatpush.bf16.msra.mxu0 %v1278
      %1314 = vmatpush.bf16.msra.mxu0 %v1277
      %1315 = vmatpush.bf16.msra.mxu0 %v1276
      %1316 = vmatmul.bf16.gmra.mxu0 %v1020
      %v1317 = vpop.f32.mrf.mxu0
      %v1318 = vadd.f32 0.0, %v1317
      %v1319 = vpop.f32.mrf.mxu0
      %v1320 = vadd.f32 0.0, %v1319
      %1321 = vmatmul.bf16.gmra.mxu0 %v1022
      %v1322 = vpop.f32.mrf.mxu0
      %v1323 = vadd.f32 0.0, %v1322
      %v1324 = vpop.f32.mrf.mxu0
      %v1325 = vadd.f32 0.0, %v1324
      %1326 = vmatmul.bf16.gmra.mxu0 %v1024
      %v1327 = vpop.f32.mrf.mxu0
      %v1328 = vadd.f32 0.0, %v1327
      %v1329 = vpop.f32.mrf.mxu0
      %v1330 = vadd.f32 0.0, %v1329
      %1331 = vmatmul.bf16.gmra.mxu0 %v1026
      %v1332 = vpop.f32.mrf.mxu0
      %v1333 = vadd.f32 0.0, %v1332
      %v1334 = vpop.f32.mrf.mxu0
      %v1335 = vadd.f32 0.0, %v1334
      %1336 = vmatmul.bf16.gmra.mxu0 %v1028
      %v1337 = vpop.f32.mrf.mxu0
      %v1338 = vadd.f32 0.0, %v1337
      %v1339 = vpop.f32.mrf.mxu0
      %v1340 = vadd.f32 0.0, %v1339
      %1341 = vmatmul.bf16.gmra.mxu0 %v1030
      %v1342 = vpop.f32.mrf.mxu0
      %v1343 = vadd.f32 0.0, %v1342
      %v1344 = vpop.f32.mrf.mxu0
      %v1345 = vadd.f32 0.0, %v1344
      %1346 = vmatmul.bf16.gmra.mxu0 %v1032
      %v1347 = vpop.f32.mrf.mxu0
      %v1348 = vadd.f32 0.0, %v1347
      %v1349 = vpop.f32.mrf.mxu0
      %v1350 = vadd.f32 0.0, %v1349
      %1351 = vmatmul.bf16.gmra.mxu0 %v1034
      %v1352 = vpop.f32.mrf.mxu0
      %v1353 = vadd.f32 0.0, %v1352
      %v1354 = vpop.f32.mrf.mxu0
      %v1355 = vadd.f32 0.0, %v1354
      %1356 = vmatmul.bf16.gmra.mxu0 %v1036
      %v1357 = vpop.f32.mrf.mxu0
      %v1358 = vadd.f32 0.0, %v1357
      %v1359 = vpop.f32.mrf.mxu0
      %v1360 = vadd.f32 0.0, %v1359
      %1361 = vmatmul.bf16.gmra.mxu0 %v1038
      %v1362 = vpop.f32.mrf.mxu0
      %v1363 = vadd.f32 0.0, %v1362
      %v1364 = vpop.f32.mrf.mxu0
      %v1365 = vadd.f32 0.0, %v1364
      %1366 = vmatmul.bf16.gmra.mxu0 %v1040
      %v1367 = vpop.f32.mrf.mxu0
      %v1368 = vadd.f32 0.0, %v1367
      %v1369 = vpop.f32.mrf.mxu0
      %v1370 = vadd.f32 0.0, %v1369
      %1371 = vmatmul.bf16.gmra.mxu0 %v1042
      %v1372 = vpop.f32.mrf.mxu0
      %v1373 = vadd.f32 0.0, %v1372
      %v1374 = vpop.f32.mrf.mxu0
      %v1375 = vadd.f32 0.0, %v1374
      %1376 = vmatmul.bf16.gmra.mxu0 %v1044
      %v1377 = vpop.f32.mrf.mxu0
      %v1378 = vadd.f32 0.0, %v1377
      %v1379 = vpop.f32.mrf.mxu0
      %v1380 = vadd.f32 0.0, %v1379
      %1381 = vmatmul.bf16.gmra.mxu0 %v1046
      %v1382 = vpop.f32.mrf.mxu0
      %v1383 = vadd.f32 0.0, %v1382
      %v1384 = vpop.f32.mrf.mxu0
      %v1385 = vadd.f32 0.0, %v1384
      %1386 = vmatmul.bf16.gmra.mxu0 %v1048
      %v1387 = vpop.f32.mrf.mxu0
      %v1388 = vadd.f32 0.0, %v1387
      %v1389 = vpop.f32.mrf.mxu0
      %v1390 = vadd.f32 0.0, %v1389
      %1391 = vmatmul.bf16.gmra.mxu0 %v1050
      %v1392 = vpop.f32.mrf.mxu0
      %v1393 = vadd.f32 0.0, %v1392
      %v1394 = vpop.f32.mrf.mxu0
      %v1395 = vadd.f32 0.0, %v1394
      %1396 = vmatmul.bf16.gmra.mxu0 %v1052
      %v1397 = vpop.f32.mrf.mxu0
      %v1398 = vadd.f32 0.0, %v1397
      %v1399 = vpop.f32.mrf.mxu0
      %v1400 = vadd.f32 0.0, %v1399
      %1401 = vmatmul.bf16.gmra.mxu0 %v1054
      %v1402 = vpop.f32.mrf.mxu0
      %v1403 = vadd.f32 0.0, %v1402
      %v1404 = vpop.f32.mrf.mxu0
      %v1405 = vadd.f32 0.0, %v1404
      %1406 = vmatmul.bf16.gmra.mxu0 %v1056
      %v1407 = vpop.f32.mrf.mxu0
      %v1408 = vadd.f32 0.0, %v1407
      %v1409 = vpop.f32.mrf.mxu0
      %v1410 = vadd.f32 0.0, %v1409
      %1411 = vmatmul.bf16.gmra.mxu0 %v1058
      %v1412 = vpop.f32.mrf.mxu0
      %v1413 = vadd.f32 0.0, %v1412
      %v1414 = vpop.f32.mrf.mxu0
      %v1415 = vadd.f32 0.0, %v1414
      %1416 = vmatmul.bf16.gmra.mxu0 %v1060
      %v1417 = vpop.f32.mrf.mxu0
      %v1418 = vadd.f32 0.0, %v1417
      %v1419 = vpop.f32.mrf.mxu0
      %v1420 = vadd.f32 0.0, %v1419
      %1421 = vmatmul.bf16.gmra.mxu0 %v1062
      %v1422 = vpop.f32.mrf.mxu0
      %v1423 = vadd.f32 0.0, %v1422
      %v1424 = vpop.f32.mrf.mxu0
      %v1425 = vadd.f32 0.0, %v1424
      %1426 = vmatmul.bf16.gmra.mxu0 %v1064
      %v1427 = vpop.f32.mrf.mxu0
      %v1428 = vadd.f32 0.0, %v1427
      %v1429 = vpop.f32.mrf.mxu0
      %v1430 = vadd.f32 0.0, %v1429
      %1431 = vmatmul.bf16.gmra.mxu0 %v1066
      %v1432 = vpop.f32.mrf.mxu0
      %v1433 = vadd.f32 0.0, %v1432
      %v1434 = vpop.f32.mrf.mxu0
      %v1435 = vadd.f32 0.0, %v1434
      %1436 = vmatmul.bf16.gmra.mxu0 %v1068
      %v1437 = vpop.f32.mrf.mxu0
      %v1438 = vadd.f32 0.0, %v1437
      %v1439 = vpop.f32.mrf.mxu0
      %v1440 = vadd.f32 0.0, %v1439
      %1441 = vmatmul.bf16.gmra.mxu0 %v1070
      %v1442 = vpop.f32.mrf.mxu0
      %v1443 = vadd.f32 0.0, %v1442
      %v1444 = vpop.f32.mrf.mxu0
      %v1445 = vadd.f32 0.0, %v1444
      %1446 = vmatmul.bf16.gmra.mxu0 %v1072
      %v1447 = vpop.f32.mrf.mxu0
      %v1448 = vadd.f32 0.0, %v1447
      %v1449 = vpop.f32.mrf.mxu0
      %v1450 = vadd.f32 0.0, %v1449
      %1451 = vmatmul.bf16.gmra.mxu0 %v1074
      %v1452 = vpop.f32.mrf.mxu0
      %v1453 = vadd.f32 0.0, %v1452
      %v1454 = vpop.f32.mrf.mxu0
      %v1455 = vadd.f32 0.0, %v1454
      %1456 = vmatmul.bf16.gmra.mxu0 %v1076
      %v1457 = vpop.f32.mrf.mxu0
      %v1458 = vadd.f32 0.0, %v1457
      %v1459 = vpop.f32.mrf.mxu0
      %v1460 = vadd.f32 0.0, %v1459
      %1461 = vmatmul.bf16.gmra.mxu0 %v1078
      %v1462 = vpop.f32.mrf.mxu0
      %v1463 = vadd.f32 0.0, %v1462
      %v1464 = vpop.f32.mrf.mxu0
      %v1465 = vadd.f32 0.0, %v1464
      %1466 = vmatmul.bf16.gmra.mxu0 %v1080
      %v1467 = vpop.f32.mrf.mxu0
      %v1468 = vadd.f32 0.0, %v1467
      %v1469 = vpop.f32.mrf.mxu0
      %v1470 = vadd.f32 0.0, %v1469
      %1471 = vmatmul.bf16.gmra.mxu0 %v1082
      %v1472 = vpop.f32.mrf.mxu0
      %v1473 = vadd.f32 0.0, %v1472
      %v1474 = vpop.f32.mrf.mxu0
      %v1475 = vadd.f32 0.0, %v1474
      %1476 = vmatmul.bf16.gmra.mxu0 %v1084
      %v1477 = vpop.f32.mrf.mxu0
      %v1478 = vadd.f32 0.0, %v1477
      %v1479 = vpop.f32.mrf.mxu0
      %v1480 = vadd.f32 0.0, %v1479
      %1481 = vmatmul.bf16.gmra.mxu0 %v1086
      %v1482 = vpop.f32.mrf.mxu0
      %v1483 = vadd.f32 0.0, %v1482
      %v1484 = vpop.f32.mrf.mxu0
      %v1485 = vadd.f32 0.0, %v1484
      %1486 = vmatmul.bf16.gmra.mxu0 %v1088
      %v1487 = vpop.f32.mrf.mxu0
      %v1488 = vadd.f32 0.0, %v1487
      %v1489 = vpop.f32.mrf.mxu0
      %v1490 = vadd.f32 0.0, %v1489
      %1491 = vmatmul.bf16.gmra.mxu0 %v1090
      %v1492 = vpop.f32.mrf.mxu0
      %v1493 = vadd.f32 0.0, %v1492
      %v1494 = vpop.f32.mrf.mxu0
      %v1495 = vadd.f32 0.0, %v1494
      %1496 = vmatmul.bf16.gmra.mxu0 %v1092
      %v1497 = vpop.f32.mrf.mxu0
      %v1498 = vadd.f32 0.0, %v1497
      %v1499 = vpop.f32.mrf.mxu0
      %v1500 = vadd.f32 0.0, %v1499
      %1501 = vmatmul.bf16.gmra.mxu0 %v1094
      %v1502 = vpop.f32.mrf.mxu0
      %v1503 = vadd.f32 0.0, %v1502
      %v1504 = vpop.f32.mrf.mxu0
      %v1505 = vadd.f32 0.0, %v1504
      %1506 = vmatmul.bf16.gmra.mxu0 %v1096
      %v1507 = vpop.f32.mrf.mxu0
      %v1508 = vadd.f32 0.0, %v1507
      %v1509 = vpop.f32.mrf.mxu0
      %v1510 = vadd.f32 0.0, %v1509
      %1511 = vmatmul.bf16.gmra.mxu0 %v1098
      %v1512 = vpop.f32.mrf.mxu0
      %v1513 = vadd.f32 0.0, %v1512
      %v1514 = vpop.f32.mrf.mxu0
      %v1515 = vadd.f32 0.0, %v1514
      %1516 = vmatmul.bf16.gmra.mxu0 %v1100
      %v1517 = vpop.f32.mrf.mxu0
      %v1518 = vadd.f32 0.0, %v1517
      %v1519 = vpop.f32.mrf.mxu0
      %v1520 = vadd.f32 0.0, %v1519
      %1521 = vmatmul.bf16.gmra.mxu0 %v1102
      %v1522 = vpop.f32.mrf.mxu0
      %v1523 = vadd.f32 0.0, %v1522
      %v1524 = vpop.f32.mrf.mxu0
      %v1525 = vadd.f32 0.0, %v1524
      %1526 = vmatmul.bf16.gmra.mxu0 %v1104
      %v1527 = vpop.f32.mrf.mxu0
      %v1528 = vadd.f32 0.0, %v1527
      %v1529 = vpop.f32.mrf.mxu0
      %v1530 = vadd.f32 0.0, %v1529
      %1531 = vmatmul.bf16.gmra.mxu0 %v1106
      %v1532 = vpop.f32.mrf.mxu0
      %v1533 = vadd.f32 0.0, %v1532
      %v1534 = vpop.f32.mrf.mxu0
      %v1535 = vadd.f32 0.0, %v1534
      %1536 = vmatmul.bf16.gmra.mxu0 %v1108
      %v1537 = vpop.f32.mrf.mxu0
      %v1538 = vadd.f32 0.0, %v1537
      %v1539 = vpop.f32.mrf.mxu0
      %v1540 = vadd.f32 0.0, %v1539
      %1541 = vmatmul.bf16.gmra.mxu0 %v1110
      %v1542 = vpop.f32.mrf.mxu0
      %v1543 = vadd.f32 0.0, %v1542
      %v1544 = vpop.f32.mrf.mxu0
      %v1545 = vadd.f32 0.0, %v1544
      %1546 = vmatmul.bf16.gmra.mxu0 %v1112
      %v1547 = vpop.f32.mrf.mxu0
      %v1548 = vadd.f32 0.0, %v1547
      %v1549 = vpop.f32.mrf.mxu0
      %v1550 = vadd.f32 0.0, %v1549
      %1551 = vmatmul.bf16.gmra.mxu0 %v1114
      %v1552 = vpop.f32.mrf.mxu0
      %v1553 = vadd.f32 0.0, %v1552
      %v1554 = vpop.f32.mrf.mxu0
      %v1555 = vadd.f32 0.0, %v1554
      %1556 = vdwg.mxu0
      %1557 = vmatpush.bf16.msra.mxu0 %v1291
      %1558 = vmatpush.bf16.msra.mxu0 %v1290
      %1559 = vmatpush.bf16.msra.mxu0 %v1289
      %1560 = vmatpush.bf16.msra.mxu0 %v1288
      %1561 = vmatpush.bf16.msra.mxu0 %v1287
      %1562 = vmatpush.bf16.msra.mxu0 %v1286
      %1563 = vmatpush.bf16.msra.mxu0 %v1285
      %1564 = vmatpush.bf16.msra.mxu0 %v1284
      %1565 = vmatmul.bf16.gmra.mxu0 %v1021
      %v1566 = vpop.f32.mrf.mxu0
      %v1567 = vadd.f32 %v1318, %v1566
      %v1568 = vpop.f32.mrf.mxu0
      %v1569 = vadd.f32 %v1320, %v1568
      %1570 = vmatmul.bf16.gmra.mxu0 %v1023
      %v1571 = vpop.f32.mrf.mxu0
      %v1572 = vadd.f32 %v1323, %v1571
      %v1573 = vpop.f32.mrf.mxu0
      %v1574 = vadd.f32 %v1325, %v1573
      %1575 = vmatmul.bf16.gmra.mxu0 %v1025
      %v1576 = vpop.f32.mrf.mxu0
      %v1577 = vadd.f32 %v1328, %v1576
      %v1578 = vpop.f32.mrf.mxu0
      %v1579 = vadd.f32 %v1330, %v1578
      %1580 = vmatmul.bf16.gmra.mxu0 %v1027
      %v1581 = vpop.f32.mrf.mxu0
      %v1582 = vadd.f32 %v1333, %v1581
      %v1583 = vpop.f32.mrf.mxu0
      %v1584 = vadd.f32 %v1335, %v1583
      %1585 = vmatmul.bf16.gmra.mxu0 %v1029
      %v1586 = vpop.f32.mrf.mxu0
      %v1587 = vadd.f32 %v1338, %v1586
      %v1588 = vpop.f32.mrf.mxu0
      %v1589 = vadd.f32 %v1340, %v1588
      %1590 = vmatmul.bf16.gmra.mxu0 %v1031
      %v1591 = vpop.f32.mrf.mxu0
      %v1592 = vadd.f32 %v1343, %v1591
      %v1593 = vpop.f32.mrf.mxu0
      %v1594 = vadd.f32 %v1345, %v1593
      %1595 = vmatmul.bf16.gmra.mxu0 %v1033
      %v1596 = vpop.f32.mrf.mxu0
      %v1597 = vadd.f32 %v1348, %v1596
      %v1598 = vpop.f32.mrf.mxu0
      %v1599 = vadd.f32 %v1350, %v1598
      %1600 = vmatmul.bf16.gmra.mxu0 %v1035
      %v1601 = vpop.f32.mrf.mxu0
      %v1602 = vadd.f32 %v1353, %v1601
      %v1603 = vpop.f32.mrf.mxu0
      %v1604 = vadd.f32 %v1355, %v1603
      %1605 = vmatmul.bf16.gmra.mxu0 %v1037
      %v1606 = vpop.f32.mrf.mxu0
      %v1607 = vadd.f32 %v1358, %v1606
      %v1608 = vpop.f32.mrf.mxu0
      %v1609 = vadd.f32 %v1360, %v1608
      %1610 = vmatmul.bf16.gmra.mxu0 %v1039
      %v1611 = vpop.f32.mrf.mxu0
      %v1612 = vadd.f32 %v1363, %v1611
      %v1613 = vpop.f32.mrf.mxu0
      %v1614 = vadd.f32 %v1365, %v1613
      %1615 = vmatmul.bf16.gmra.mxu0 %v1041
      %v1616 = vpop.f32.mrf.mxu0
      %v1617 = vadd.f32 %v1368, %v1616
      %v1618 = vpop.f32.mrf.mxu0
      %v1619 = vadd.f32 %v1370, %v1618
      %1620 = vmatmul.bf16.gmra.mxu0 %v1043
      %v1621 = vpop.f32.mrf.mxu0
      %v1622 = vadd.f32 %v1373, %v1621
      %v1623 = vpop.f32.mrf.mxu0
      %v1624 = vadd.f32 %v1375, %v1623
      %1625 = vmatmul.bf16.gmra.mxu0 %v1045
      %v1626 = vpop.f32.mrf.mxu0
      %v1627 = vadd.f32 %v1378, %v1626
      %v1628 = vpop.f32.mrf.mxu0
      %v1629 = vadd.f32 %v1380, %v1628
      %1630 = vmatmul.bf16.gmra.mxu0 %v1047
      %v1631 = vpop.f32.mrf.mxu0
      %v1632 = vadd.f32 %v1383, %v1631
      %v1633 = vpop.f32.mrf.mxu0
      %v1634 = vadd.f32 %v1385, %v1633
      %1635 = vmatmul.bf16.gmra.mxu0 %v1049
      %v1636 = vpop.f32.mrf.mxu0
      %v1637 = vadd.f32 %v1388, %v1636
      %v1638 = vpop.f32.mrf.mxu0
      %v1639 = vadd.f32 %v1390, %v1638
      %1640 = vmatmul.bf16.gmra.mxu0 %v1051
      %v1641 = vpop.f32.mrf.mxu0
      %v1642 = vadd.f32 %v1393, %v1641
      %v1643 = vpop.f32.mrf.mxu0
      %v1644 = vadd.f32 %v1395, %v1643
      %1645 = vmatmul.bf16.gmra.mxu0 %v1053
      %v1646 = vpop.f32.mrf.mxu0
      %v1647 = vadd.f32 %v1398, %v1646
      %v1648 = vpop.f32.mrf.mxu0
      %v1649 = vadd.f32 %v1400, %v1648
      %1650 = vmatmul.bf16.gmra.mxu0 %v1055
      %v1651 = vpop.f32.mrf.mxu0
      %v1652 = vadd.f32 %v1403, %v1651
      %v1653 = vpop.f32.mrf.mxu0
      %v1654 = vadd.f32 %v1405, %v1653
      %1655 = vmatmul.bf16.gmra.mxu0 %v1057
      %v1656 = vpop.f32.mrf.mxu0
      %v1657 = vadd.f32 %v1408, %v1656
      %v1658 = vpop.f32.mrf.mxu0
      %v1659 = vadd.f32 %v1410, %v1658
      %1660 = vmatmul.bf16.gmra.mxu0 %v1059
      %v1661 = vpop.f32.mrf.mxu0
      %v1662 = vadd.f32 %v1413, %v1661
      %v1663 = vpop.f32.mrf.mxu0
      %v1664 = vadd.f32 %v1415, %v1663
      %1665 = vmatmul.bf16.gmra.mxu0 %v1061
      %v1666 = vpop.f32.mrf.mxu0
      %v1667 = vadd.f32 %v1418, %v1666
      %v1668 = vpop.f32.mrf.mxu0
      %v1669 = vadd.f32 %v1420, %v1668
      %1670 = vmatmul.bf16.gmra.mxu0 %v1063
      %v1671 = vpop.f32.mrf.mxu0
      %v1672 = vadd.f32 %v1423, %v1671
      %v1673 = vpop.f32.mrf.mxu0
      %v1674 = vadd.f32 %v1425, %v1673
      %1675 = vmatmul.bf16.gmra.mxu0 %v1065
      %v1676 = vpop.f32.mrf.mxu0
      %v1677 = vadd.f32 %v1428, %v1676
      %v1678 = vpop.f32.mrf.mxu0
      %v1679 = vadd.f32 %v1430, %v1678
      %1680 = vmatmul.bf16.gmra.mxu0 %v1067
      %v1681 = vpop.f32.mrf.mxu0
      %v1682 = vadd.f32 %v1433, %v1681
      %v1683 = vpop.f32.mrf.mxu0
      %v1684 = vadd.f32 %v1435, %v1683
      %1685 = vmatmul.bf16.gmra.mxu0 %v1069
      %v1686 = vpop.f32.mrf.mxu0
      %v1687 = vadd.f32 %v1438, %v1686
      %v1688 = vpop.f32.mrf.mxu0
      %v1689 = vadd.f32 %v1440, %v1688
      %1690 = vmatmul.bf16.gmra.mxu0 %v1071
      %v1691 = vpop.f32.mrf.mxu0
      %v1692 = vadd.f32 %v1443, %v1691
      %v1693 = vpop.f32.mrf.mxu0
      %v1694 = vadd.f32 %v1445, %v1693
      %1695 = vmatmul.bf16.gmra.mxu0 %v1073
      %v1696 = vpop.f32.mrf.mxu0
      %v1697 = vadd.f32 %v1448, %v1696
      %v1698 = vpop.f32.mrf.mxu0
      %v1699 = vadd.f32 %v1450, %v1698
      %1700 = vmatmul.bf16.gmra.mxu0 %v1075
      %v1701 = vpop.f32.mrf.mxu0
      %v1702 = vadd.f32 %v1453, %v1701
      %v1703 = vpop.f32.mrf.mxu0
      %v1704 = vadd.f32 %v1455, %v1703
      %1705 = vmatmul.bf16.gmra.mxu0 %v1077
      %v1706 = vpop.f32.mrf.mxu0
      %v1707 = vadd.f32 %v1458, %v1706
      %v1708 = vpop.f32.mrf.mxu0
      %v1709 = vadd.f32 %v1460, %v1708
      %1710 = vmatmul.bf16.gmra.mxu0 %v1079
      %v1711 = vpop.f32.mrf.mxu0
      %v1712 = vadd.f32 %v1463, %v1711
      %v1713 = vpop.f32.mrf.mxu0
      %v1714 = vadd.f32 %v1465, %v1713
      %1715 = vmatmul.bf16.gmra.mxu0 %v1081
      %v1716 = vpop.f32.mrf.mxu0
      %v1717 = vadd.f32 %v1468, %v1716
      %v1718 = vpop.f32.mrf.mxu0
      %v1719 = vadd.f32 %v1470, %v1718
      %1720 = vmatmul.bf16.gmra.mxu0 %v1083
      %v1721 = vpop.f32.mrf.mxu0
      %v1722 = vadd.f32 %v1473, %v1721
      %v1723 = vpop.f32.mrf.mxu0
      %v1724 = vadd.f32 %v1475, %v1723
      %1725 = vmatmul.bf16.gmra.mxu0 %v1085
      %v1726 = vpop.f32.mrf.mxu0
      %v1727 = vadd.f32 %v1478, %v1726
      %v1728 = vpop.f32.mrf.mxu0
      %v1729 = vadd.f32 %v1480, %v1728
      %1730 = vmatmul.bf16.gmra.mxu0 %v1087
      %v1731 = vpop.f32.mrf.mxu0
      %v1732 = vadd.f32 %v1483, %v1731
      %v1733 = vpop.f32.mrf.mxu0
      %v1734 = vadd.f32 %v1485, %v1733
      %1735 = vmatmul.bf16.gmra.mxu0 %v1089
      %v1736 = vpop.f32.mrf.mxu0
      %v1737 = vadd.f32 %v1488, %v1736
      %v1738 = vpop.f32.mrf.mxu0
      %v1739 = vadd.f32 %v1490, %v1738
      %1740 = vmatmul.bf16.gmra.mxu0 %v1091
      %v1741 = vpop.f32.mrf.mxu0
      %v1742 = vadd.f32 %v1493, %v1741
      %v1743 = vpop.f32.mrf.mxu0
      %v1744 = vadd.f32 %v1495, %v1743
      %1745 = vmatmul.bf16.gmra.mxu0 %v1093
      %v1746 = vpop.f32.mrf.mxu0
      %v1747 = vadd.f32 %v1498, %v1746
      %v1748 = vpop.f32.mrf.mxu0
      %v1749 = vadd.f32 %v1500, %v1748
      %1750 = vmatmul.bf16.gmra.mxu0 %v1095
      %v1751 = vpop.f32.mrf.mxu0
      %v1752 = vadd.f32 %v1503, %v1751
      %v1753 = vpop.f32.mrf.mxu0
      %v1754 = vadd.f32 %v1505, %v1753
      %1755 = vmatmul.bf16.gmra.mxu0 %v1097
      %v1756 = vpop.f32.mrf.mxu0
      %v1757 = vadd.f32 %v1508, %v1756
      %v1758 = vpop.f32.mrf.mxu0
      %v1759 = vadd.f32 %v1510, %v1758
      %1760 = vmatmul.bf16.gmra.mxu0 %v1099
      %v1761 = vpop.f32.mrf.mxu0
      %v1762 = vadd.f32 %v1513, %v1761
      %v1763 = vpop.f32.mrf.mxu0
      %v1764 = vadd.f32 %v1515, %v1763
      %1765 = vmatmul.bf16.gmra.mxu0 %v1101
      %v1766 = vpop.f32.mrf.mxu0
      %v1767 = vadd.f32 %v1518, %v1766
      %v1768 = vpop.f32.mrf.mxu0
      %v1769 = vadd.f32 %v1520, %v1768
      %1770 = vmatmul.bf16.gmra.mxu0 %v1103
      %v1771 = vpop.f32.mrf.mxu0
      %v1772 = vadd.f32 %v1523, %v1771
      %v1773 = vpop.f32.mrf.mxu0
      %v1774 = vadd.f32 %v1525, %v1773
      %1775 = vmatmul.bf16.gmra.mxu0 %v1105
      %v1776 = vpop.f32.mrf.mxu0
      %v1777 = vadd.f32 %v1528, %v1776
      %v1778 = vpop.f32.mrf.mxu0
      %v1779 = vadd.f32 %v1530, %v1778
      %1780 = vmatmul.bf16.gmra.mxu0 %v1107
      %v1781 = vpop.f32.mrf.mxu0
      %v1782 = vadd.f32 %v1533, %v1781
      %v1783 = vpop.f32.mrf.mxu0
      %v1784 = vadd.f32 %v1535, %v1783
      %1785 = vmatmul.bf16.gmra.mxu0 %v1109
      %v1786 = vpop.f32.mrf.mxu0
      %v1787 = vadd.f32 %v1538, %v1786
      %v1788 = vpop.f32.mrf.mxu0
      %v1789 = vadd.f32 %v1540, %v1788
      %1790 = vmatmul.bf16.gmra.mxu0 %v1111
      %v1791 = vpop.f32.mrf.mxu0
      %v1792 = vadd.f32 %v1543, %v1791
      %v1793 = vpop.f32.mrf.mxu0
      %v1794 = vadd.f32 %v1545, %v1793
      %1795 = vmatmul.bf16.gmra.mxu0 %v1113
      %v1796 = vpop.f32.mrf.mxu0
      %v1797 = vadd.f32 %v1548, %v1796
      %v1798 = vpop.f32.mrf.mxu0
      %v1799 = vadd.f32 %v1550, %v1798
      %1800 = vmatmul.bf16.gmra.mxu0 %v1115
      %v1801 = vpop.f32.mrf.mxu0
      %v1802 = vadd.f32 %v1553, %v1801
      %v1803 = vpop.f32.mrf.mxu0
      %v1804 = vadd.f32 %v1555, %v1803
      %1805 = vdwg.mxu0
      %v1806 = vpack.c.bf16 %v1567, %v1567
      %v1807 = vpack.c.bf16 %v1569, %v1569
      %v1808 = vpack.c.bf16 %v1572, %v1572
      %v1809 = vpack.c.bf16 %v1574, %v1574
      %v1810 = vpack.c.bf16 %v1577, %v1577
      %v1811 = vpack.c.bf16 %v1579, %v1579
      %v1812 = vpack.c.bf16 %v1582, %v1582
      %v1813 = vpack.c.bf16 %v1584, %v1584
      %v1814 = vpack.c.bf16 %v1587, %v1587
      %v1815 = vpack.c.bf16 %v1589, %v1589
      %v1816 = vpack.c.bf16 %v1592, %v1592
      %v1817 = vpack.c.bf16 %v1594, %v1594
      %v1818 = vpack.c.bf16 %v1597, %v1597
      %v1819 = vpack.c.bf16 %v1599, %v1599
      %v1820 = vpack.c.bf16 %v1602, %v1602
      %v1821 = vpack.c.bf16 %v1604, %v1604
      %v1822 = vpack.c.bf16 %v1607, %v1607
      %v1823 = vpack.c.bf16 %v1609, %v1609
      %v1824 = vpack.c.bf16 %v1612, %v1612
      %v1825 = vpack.c.bf16 %v1614, %v1614
      %v1826 = vpack.c.bf16 %v1617, %v1617
      %v1827 = vpack.c.bf16 %v1619, %v1619
      %v1828 = vpack.c.bf16 %v1622, %v1622
      %v1829 = vpack.c.bf16 %v1624, %v1624
      %v1830 = vpack.c.bf16 %v1627, %v1627
      %v1831 = vpack.c.bf16 %v1629, %v1629
      %v1832 = vpack.c.bf16 %v1632, %v1632
      %v1833 = vpack.c.bf16 %v1634, %v1634
      %v1834 = vpack.c.bf16 %v1637, %v1637
      %v1835 = vpack.c.bf16 %v1639, %v1639
      %v1836 = vpack.c.bf16 %v1642, %v1642
      %v1837 = vpack.c.bf16 %v1644, %v1644
      %v1838 = vpack.c.bf16 %v1647, %v1647
      %v1839 = vpack.c.bf16 %v1649, %v1649
      %v1840 = vpack.c.bf16 %v1652, %v1652
      %v1841 = vpack.c.bf16 %v1654, %v1654
      %v1842 = vpack.c.bf16 %v1657, %v1657
      %v1843 = vpack.c.bf16 %v1659, %v1659
      %v1844 = vpack.c.bf16 %v1662, %v1662
      %v1845 = vpack.c.bf16 %v1664, %v1664
      %v1846 = vpack.c.bf16 %v1667, %v1667
      %v1847 = vpack.c.bf16 %v1669, %v1669
      %v1848 = vpack.c.bf16 %v1672, %v1672
      %v1849 = vpack.c.bf16 %v1674, %v1674
      %v1850 = vpack.c.bf16 %v1677, %v1677
      %v1851 = vpack.c.bf16 %v1679, %v1679
      %v1852 = vpack.c.bf16 %v1682, %v1682
      %v1853 = vpack.c.bf16 %v1684, %v1684
      %v1854 = vpack.c.bf16 %v1687, %v1687
      %v1855 = vpack.c.bf16 %v1689, %v1689
      %v1856 = vpack.c.bf16 %v1692, %v1692
      %v1857 = vpack.c.bf16 %v1694, %v1694
      %v1858 = vpack.c.bf16 %v1697, %v1697
      %v1859 = vpack.c.bf16 %v1699, %v1699
      %v1860 = vpack.c.bf16 %v1702, %v1702
      %v1861 = vpack.c.bf16 %v1704, %v1704
      %v1862 = vpack.c.bf16 %v1707, %v1707
      %v1863 = vpack.c.bf16 %v1709, %v1709
      %v1864 = vpack.c.bf16 %v1712, %v1712
      %v1865 = vpack.c.bf16 %v1714, %v1714
      %v1866 = vpack.c.bf16 %v1717, %v1717
      %v1867 = vpack.c.bf16 %v1719, %v1719
      %v1868 = vpack.c.bf16 %v1722, %v1722
      %v1869 = vpack.c.bf16 %v1724, %v1724
      %v1870 = vpack.c.bf16 %v1727, %v1727
      %v1871 = vpack.c.bf16 %v1729, %v1729
      %v1872 = vpack.c.bf16 %v1732, %v1732
      %v1873 = vpack.c.bf16 %v1734, %v1734
      %v1874 = vpack.c.bf16 %v1737, %v1737
      %v1875 = vpack.c.bf16 %v1739, %v1739
      %v1876 = vpack.c.bf16 %v1742, %v1742
      %v1877 = vpack.c.bf16 %v1744, %v1744
      %v1878 = vpack.c.bf16 %v1747, %v1747
      %v1879 = vpack.c.bf16 %v1749, %v1749
      %v1880 = vpack.c.bf16 %v1752, %v1752
      %v1881 = vpack.c.bf16 %v1754, %v1754
      %v1882 = vpack.c.bf16 %v1757, %v1757
      %v1883 = vpack.c.bf16 %v1759, %v1759
      %v1884 = vpack.c.bf16 %v1762, %v1762
      %v1885 = vpack.c.bf16 %v1764, %v1764
      %v1886 = vpack.c.bf16 %v1767, %v1767
      %v1887 = vpack.c.bf16 %v1769, %v1769
      %v1888 = vpack.c.bf16 %v1772, %v1772
      %v1889 = vpack.c.bf16 %v1774, %v1774
      %v1890 = vpack.c.bf16 %v1777, %v1777
      %v1891 = vpack.c.bf16 %v1779, %v1779
      %v1892 = vpack.c.bf16 %v1782, %v1782
      %v1893 = vpack.c.bf16 %v1784, %v1784
      %v1894 = vpack.c.bf16 %v1787, %v1787
      %v1895 = vpack.c.bf16 %v1789, %v1789
      %v1896 = vpack.c.bf16 %v1792, %v1792
      %v1897 = vpack.c.bf16 %v1794, %v1794
      %v1898 = vpack.c.bf16 %v1797, %v1797
      %v1899 = vpack.c.bf16 %v1799, %v1799
      %v1900 = vpack.c.bf16 %v1802, %v1802
      %v1901 = vpack.c.bf16 %v1804, %v1804
      %1902 = vst [vmem:[#allocation2] sm:$0xf] %v1806
      %1903 = vst [vmem:[#allocation2 + $0xc] sm:$0xf] %v1807
      %1904 = vst [vmem:[#allocation2 + $0x18] sm:$0xf] %v1808
      %1905 = vst [vmem:[#allocation2 + $0x24] sm:$0xf] %v1809
      %1906 = vst [vmem:[#allocation2 + $0x30] sm:$0xf] %v1810
      %1907 = vst [vmem:[#allocation2 + $0x3c] sm:$0xf] %v1811
      %1908 = vst [vmem:[#allocation2 + $0x48] sm:$0xf] %v1812
      %1909 = vst [vmem:[#allocation2 + $0x54] sm:$0xf] %v1813
      %1910 = vst [vmem:[#allocation2 + $0x60] sm:$0xf] %v1814
      %1911 = vst [vmem:[#allocation2 + $0x6c] sm:$0xf] %v1815
      %1912 = vst [vmem:[#allocation2 + $0x78] sm:$0xf] %v1816
      %1913 = vst [vmem:[#allocation2 + $0x84] sm:$0xf] %v1817
      %1914 = vst [vmem:[#allocation2 + $0x90] sm:$0xf] %v1818
      %1915 = vst [vmem:[#allocation2 + $0x9c] sm:$0xf] %v1819
      %1916 = vst [vmem:[#allocation2 + $0xa8] sm:$0xf] %v1820
      %1917 = vst [vmem:[#allocation2 + $0xb4] sm:$0xf] %v1821
      %1918 = vst [vmem:[#allocation2 + $0xc0] sm:$0xf] %v1822
      %1919 = vst [vmem:[#allocation2 + $0xcc] sm:$0xf] %v1823
      %1920 = vst [vmem:[#allocation2 + $0xd8] sm:$0xf] %v1824
      %1921 = vst [vmem:[#allocation2 + $0xe4] sm:$0xf] %v1825
      %1922 = vst [vmem:[#allocation2 + $0xf0] sm:$0xf] %v1826
      %1923 = vst [vmem:[#allocation2 + $0xfc] sm:$0xf] %v1827
      %1924 = vst [vmem:[#allocation2 + $0x108] sm:$0xf] %v1828
      %1925 = vst [vmem:[#allocation2 + $0x114] sm:$0xf] %v1829
      %1926 = vst [vmem:[#allocation2 + $0x120] sm:$0xf] %v1830
      %1927 = vst [vmem:[#allocation2 + $0x12c] sm:$0xf] %v1831
      %1928 = vst [vmem:[#allocation2 + $0x138] sm:$0xf] %v1832
      %1929 = vst [vmem:[#allocation2 + $0x144] sm:$0xf] %v1833
      %1930 = vst [vmem:[#allocation2 + $0x150] sm:$0xf] %v1834
      %1931 = vst [vmem:[#allocation2 + $0x15c] sm:$0xf] %v1835
      %1932 = vst [vmem:[#allocation2 + $0x168] sm:$0xf] %v1836
      %1933 = vst [vmem:[#allocation2 + $0x174] sm:$0xf] %v1837
      %1934 = vst [vmem:[#allocation2 + $0x4] sm:$0xf] %v1838
      %1935 = vst [vmem:[#allocation2 + $0x10] sm:$0xf] %v1839
      %1936 = vst [vmem:[#allocation2 + $0x1c] sm:$0xf] %v1840
      %1937 = vst [vmem:[#allocation2 + $0x28] sm:$0xf] %v1841
      %1938 = vst [vmem:[#allocation2 + $0x34] sm:$0xf] %v1842
      %1939 = vst [vmem:[#allocation2 + $0x40] sm:$0xf] %v1843
      %1940 = vst [vmem:[#allocation2 + $0x4c] sm:$0xf] %v1844
      %1941 = vst [vmem:[#allocation2 + $0x58] sm:$0xf] %v1845
      %1942 = vst [vmem:[#allocation2 + $0x64] sm:$0xf] %v1846
      %1943 = vst [vmem:[#allocation2 + $0x70] sm:$0xf] %v1847
      %1944 = vst [vmem:[#allocation2 + $0x7c] sm:$0xf] %v1848
      %1945 = vst [vmem:[#allocation2 + $0x88] sm:$0xf] %v1849
      %1946 = vst [vmem:[#allocation2 + $0x94] sm:$0xf] %v1850
      %1947 = vst [vmem:[#allocation2 + $0xa0] sm:$0xf] %v1851
      %1948 = vst [vmem:[#allocation2 + $0xac] sm:$0xf] %v1852
      %1949 = vst [vmem:[#allocation2 + $0xb8] sm:$0xf] %v1853
      %1950 = vst [vmem:[#allocation2 + $0xc4] sm:$0xf] %v1854
      %1951 = vst [vmem:[#allocation2 + $0xd0] sm:$0xf] %v1855
      %1952 = vst [vmem:[#allocation2 + $0xdc] sm:$0xf] %v1856
      %1953 = vst [vmem:[#allocation2 + $0xe8] sm:$0xf] %v1857
      %1954 = vst [vmem:[#allocation2 + $0xf4] sm:$0xf] %v1858
      %1955 = vst [vmem:[#allocation2 + $0x100] sm:$0xf] %v1859
      %1956 = vst [vmem:[#allocation2 + $0x10c] sm:$0xf] %v1860
      %1957 = vst [vmem:[#allocation2 + $0x118] sm:$0xf] %v1861
      %1958 = vst [vmem:[#allocation2 + $0x124] sm:$0xf] %v1862
      %1959 = vst [vmem:[#allocation2 + $0x130] sm:$0xf] %v1863
      %1960 = vst [vmem:[#allocation2 + $0x13c] sm:$0xf] %v1864
      %1961 = vst [vmem:[#allocation2 + $0x148] sm:$0xf] %v1865
      %1962 = vst [vmem:[#allocation2 + $0x154] sm:$0xf] %v1866
      %1963 = vst [vmem:[#allocation2 + $0x160] sm:$0xf] %v1867
      %1964 = vst [vmem:[#allocation2 + $0x16c] sm:$0xf] %v1868
      %1965 = vst [vmem:[#allocation2 + $0x178] sm:$0xf] %v1869
      %1966 = vst [vmem:[#allocation2 + $0x8] sm:$0xf] %v1870
      %1967 = vst [vmem:[#allocation2 + $0x14] sm:$0xf] %v1871
      %1968 = vst [vmem:[#allocation2 + $0x20] sm:$0xf] %v1872
      %1969 = vst [vmem:[#allocation2 + $0x2c] sm:$0xf] %v1873
      %1970 = vst [vmem:[#allocation2 + $0x38] sm:$0xf] %v1874
      %1971 = vst [vmem:[#allocation2 + $0x44] sm:$0xf] %v1875
      %1972 = vst [vmem:[#allocation2 + $0x50] sm:$0xf] %v1876
      %1973 = vst [vmem:[#allocation2 + $0x5c] sm:$0xf] %v1877
      %1974 = vst [vmem:[#allocation2 + $0x68] sm:$0xf] %v1878
      %1975 = vst [vmem:[#allocation2 + $0x74] sm:$0xf] %v1879
      %1976 = vst [vmem:[#allocation2 + $0x80] sm:$0xf] %v1880
      %1977 = vst [vmem:[#allocation2 + $0x8c] sm:$0xf] %v1881
      %1978 = vst [vmem:[#allocation2 + $0x98] sm:$0xf] %v1882
      %1979 = vst [vmem:[#allocation2 + $0xa4] sm:$0xf] %v1883
      %1980 = vst [vmem:[#allocation2 + $0xb0] sm:$0xf] %v1884
      %1981 = vst [vmem:[#allocation2 + $0xbc] sm:$0xf] %v1885
      %1982 = vst [vmem:[#allocation2 + $0xc8] sm:$0xf] %v1886
      %1983 = vst [vmem:[#allocation2 + $0xd4] sm:$0xf] %v1887
      %1984 = vst [vmem:[#allocation2 + $0xe0] sm:$0xf] %v1888
      %1985 = vst [vmem:[#allocation2 + $0xec] sm:$0xf] %v1889
      %1986 = vst [vmem:[#allocation2 + $0xf8] sm:$0xf] %v1890
      %1987 = vst [vmem:[#allocation2 + $0x104] sm:$0xf] %v1891
      %1988 = vst [vmem:[#allocation2 + $0x110] sm:$0xf] %v1892
      %1989 = vst [vmem:[#allocation2 + $0x11c] sm:$0xf] %v1893
      %1990 = vst [vmem:[#allocation2 + $0x128] sm:$0xf] %v1894
      %1991 = vst [vmem:[#allocation2 + $0x134] sm:$0xf] %v1895
      %1992 = vst [vmem:[#allocation2 + $0x140] sm:$0xf] %v1896
      %1993 = vst [vmem:[#allocation2 + $0x14c] sm:$0xf] %v1897
      %1994 = vst [vmem:[#allocation2 + $0x158] sm:$0xf] %v1898
      %1995 = vst [vmem:[#allocation2 + $0x164] sm:$0xf] %v1899
      %1996 = vst [vmem:[#allocation2 + $0x170] sm:$0xf] %v1900
      %1997 = vst [vmem:[#allocation2 + $0x17c] sm:$0xf] %v1901
      %v1998 = vld [vmem:[#allocation2] sm:$0xff]
      %v1999 = vld [vmem:[#allocation2 + $0x8] sm:$0xf]
      %v2000 = vld [vmem:[#allocation2 + $0xc] sm:$0xff]
      %v2001 = vld [vmem:[#allocation2 + $0x14] sm:$0xf]
      %v2002 = vld [vmem:[#allocation2 + $0x18] sm:$0xff]
      %v2003 = vld [vmem:[#allocation2 + $0x20] sm:$0xf]
      %v2004 = vld [vmem:[#allocation2 + $0x24] sm:$0xff]
      %v2005 = vld [vmem:[#allocation2 + $0x2c] sm:$0xf]
      %v2006 = vld [vmem:[#allocation2 + $0x30] sm:$0xff]
      %v2007 = vld [vmem:[#allocation2 + $0x38] sm:$0xf]
      %v2008 = vld [vmem:[#allocation2 + $0x3c] sm:$0xff]
      %v2009 = vld [vmem:[#allocation2 + $0x44] sm:$0xf]
      %v2010 = vld [vmem:[#allocation2 + $0x48] sm:$0xff]
      %v2011 = vld [vmem:[#allocation2 + $0x50] sm:$0xf]
      %v2012 = vld [vmem:[#allocation2 + $0x54] sm:$0xff]
      %v2013 = vld [vmem:[#allocation2 + $0x5c] sm:$0xf]
      %v2014 = vld [vmem:[#allocation2 + $0x60] sm:$0xff]
      %v2015 = vld [vmem:[#allocation2 + $0x68] sm:$0xf]
      %v2016 = vld [vmem:[#allocation2 + $0x6c] sm:$0xff]
      %v2017 = vld [vmem:[#allocation2 + $0x74] sm:$0xf]
      %v2018 = vld [vmem:[#allocation2 + $0x78] sm:$0xff]
      %v2019 = vld [vmem:[#allocation2 + $0x80] sm:$0xf]
      %v2020 = vld [vmem:[#allocation2 + $0x84] sm:$0xff]
      %v2021 = vld [vmem:[#allocation2 + $0x8c] sm:$0xf]
      %v2022 = vld [vmem:[#allocation2 + $0x90] sm:$0xff]
      %v2023 = vld [vmem:[#allocation2 + $0x98] sm:$0xf]
      %v2024 = vld [vmem:[#allocation2 + $0x9c] sm:$0xff]
      %v2025 = vld [vmem:[#allocation2 + $0xa4] sm:$0xf]
      %v2026 = vld [vmem:[#allocation2 + $0xa8] sm:$0xff]
      %v2027 = vld [vmem:[#allocation2 + $0xb0] sm:$0xf]
      %v2028 = vld [vmem:[#allocation2 + $0xb4] sm:$0xff]
      %v2029 = vld [vmem:[#allocation2 + $0xbc] sm:$0xf]
      %v2030 = vld [vmem:[#allocation2 + $0xc0] sm:$0xff]
      %v2031 = vld [vmem:[#allocation2 + $0xc8] sm:$0xf]
      %v2032 = vld [vmem:[#allocation2 + $0xcc] sm:$0xff]
      %v2033 = vld [vmem:[#allocation2 + $0xd4] sm:$0xf]
      %v2034 = vld [vmem:[#allocation2 + $0xd8] sm:$0xff]
      %v2035 = vld [vmem:[#allocation2 + $0xe0] sm:$0xf]
      %v2036 = vld [vmem:[#allocation2 + $0xe4] sm:$0xff]
      %v2037 = vld [vmem:[#allocation2 + $0xec] sm:$0xf]
      %v2038 = vld [vmem:[#allocation2 + $0xf0] sm:$0xff]
      %v2039 = vld [vmem:[#allocation2 + $0xf8] sm:$0xf]
      %v2040 = vld [vmem:[#allocation2 + $0xfc] sm:$0xff]
      %v2041 = vld [vmem:[#allocation2 + $0x104] sm:$0xf]
      %v2042 = vld [vmem:[#allocation2 + $0x108] sm:$0xff]
      %v2043 = vld [vmem:[#allocation2 + $0x110] sm:$0xf]
      %v2044 = vld [vmem:[#allocation2 + $0x114] sm:$0xff]
      %v2045 = vld [vmem:[#allocation2 + $0x11c] sm:$0xf]
      %v2046 = vld [vmem:[#allocation2 + $0x120] sm:$0xff]
      %v2047 = vld [vmem:[#allocation2 + $0x128] sm:$0xf]
      %v2048 = vld [vmem:[#allocation2 + $0x12c] sm:$0xff]
      %v2049 = vld [vmem:[#allocation2 + $0x134] sm:$0xf]
      %v2050 = vld [vmem:[#allocation2 + $0x138] sm:$0xff]
      %v2051 = vld [vmem:[#allocation2 + $0x140] sm:$0xf]
      %v2052 = vld [vmem:[#allocation2 + $0x144] sm:$0xff]
      %v2053 = vld [vmem:[#allocation2 + $0x14c] sm:$0xf]
      %v2054 = vld [vmem:[#allocation2 + $0x150] sm:$0xff]
      %v2055 = vld [vmem:[#allocation2 + $0x158] sm:$0xf]
      %v2056 = vld [vmem:[#allocation2 + $0x15c] sm:$0xff]
      %v2057 = vld [vmem:[#allocation2 + $0x164] sm:$0xf]
      %v2058 = vld [vmem:[#allocation2 + $0x168] sm:$0xff]
      %v2059 = vld [vmem:[#allocation2 + $0x170] sm:$0xf]
      %v2060 = vld [vmem:[#allocation2 + $0x174] sm:$0xff]
      %v2061 = vld [vmem:[#allocation2 + $0x17c] sm:$0xf]
      %v2062 = vld [vmem:[%s1] sm:$0xff]
      %v2063 = vld [vmem:[%s1 + $0x8] sm:$0xff]
      %v2064 = vld [vmem:[%s1 + $0x10] sm:$0xff]
      %v2065 = vld [vmem:[%s1 + $0x18] sm:$0xff]
      %v2066 = vld [vmem:[%s1 + $0x20] sm:$0xff]
      %v2067 = vld [vmem:[%s1 + $0x28] sm:$0xff]
      %v2068 = vld [vmem:[%s1 + $0x30] sm:$0xff]
      %v2069 = vld [vmem:[%s1 + $0x38] sm:$0xff]
      %v2070 = vld [vmem:[%s1 + $0x40] sm:$0xff]
      %v2071 = vld [vmem:[%s1 + $0x48] sm:$0xff]
      %v2072 = vld [vmem:[%s1 + $0x50] sm:$0xff]
      %v2073 = vld [vmem:[%s1 + $0x58] sm:$0xff]
      %v2074 = vld [vmem:[%s1 + $0x60] sm:$0xff]
      %v2075 = vld [vmem:[%s1 + $0x68] sm:$0xff]
      %v2076 = vld [vmem:[%s1 + $0x70] sm:$0xff]
      %v2077 = vld [vmem:[%s1 + $0x78] sm:$0xff]
      %v2078 = vld [vmem:[%s1 + $0x80] sm:$0xff]
      %v2079 = vld [vmem:[%s1 + $0x88] sm:$0xff]
      %v2080 = vld [vmem:[%s1 + $0x90] sm:$0xff]
      %v2081 = vld [vmem:[%s1 + $0x98] sm:$0xff]
      %v2082 = vld [vmem:[%s1 + $0xa0] sm:$0xff]
      %v2083 = vld [vmem:[%s1 + $0xa8] sm:$0xff]
      %v2084 = vld [vmem:[%s1 + $0xb0] sm:$0xff]
      %v2085 = vld [vmem:[%s1 + $0xb8] sm:$0xff]
      %v2086 = vld [vmem:[%s1 + $0xc0] sm:$0xff]
      %v2087 = vld [vmem:[%s1 + $0xc8] sm:$0xff]
      %v2088 = vld [vmem:[%s1 + $0xd0] sm:$0xff]
      %v2089 = vld [vmem:[%s1 + $0xd8] sm:$0xff]
      %v2090 = vld [vmem:[%s1 + $0xe0] sm:$0xff]
      %v2091 = vld [vmem:[%s1 + $0xe8] sm:$0xff]
      %v2092 = vld [vmem:[%s1 + $0xf0] sm:$0xff]
      %v2093 = vld [vmem:[%s1 + $0xf8] sm:$0xff]
      %v2094 = vld [vmem:[%s1 + $0x100] sm:$0xff]
      %v2095 = vld [vmem:[%s1 + $0x108] sm:$0xff]
      %v2096 = vld [vmem:[%s1 + $0x110] sm:$0xff]
      %v2097 = vld [vmem:[%s1 + $0x118] sm:$0xff]
      %v2098 = vld [vmem:[%s1 + $0x120] sm:$0xff]
      %v2099 = vld [vmem:[%s1 + $0x128] sm:$0xff]
      %v2100 = vld [vmem:[%s1 + $0x130] sm:$0xff]
      %v2101 = vld [vmem:[%s1 + $0x138] sm:$0xff]
      %v2102 = vld [vmem:[%s1 + $0x140] sm:$0xff]
      %v2103 = vld [vmem:[%s1 + $0x148] sm:$0xff]
      %v2104 = vld [vmem:[%s1 + $0x150] sm:$0xff]
      %v2105 = vld [vmem:[%s1 + $0x158] sm:$0xff]
      %v2106 = vld [vmem:[%s1 + $0x160] sm:$0xff]
      %v2107 = vld [vmem:[%s1 + $0x168] sm:$0xff]
      %v2108 = vld [vmem:[%s1 + $0x170] sm:$0xff]
      %v2109 = vld [vmem:[%s1 + $0x178] sm:$0xff]
      %v2110 = vld [vmem:[%s6] sm:$0x3]
      %v2112 = vperm.slane %v2110, 0
      %v2113 = vperm.slane %v2110, 1
      %v2180 = vunpack.c.l.b16 %v1998
      %v2181 = vunpack.c.h.b16 %v1998
      %v2182 = vunpack.c.l.b16 %v1999
      %v2183 = vunpack.c.l.b16 %v2000
      %v2184 = vunpack.c.h.b16 %v2000
      %v2185 = vunpack.c.l.b16 %v2001
      %v2186 = vunpack.c.l.b16 %v2002
      %v2187 = vunpack.c.h.b16 %v2002
      %v2188 = vunpack.c.l.b16 %v2003
      %v2189 = vunpack.c.l.b16 %v2004
      %v2190 = vunpack.c.h.b16 %v2004
      %v2191 = vunpack.c.l.b16 %v2005
      %v2192 = vunpack.c.l.b16 %v2006
      %v2193 = vunpack.c.h.b16 %v2006
      %v2194 = vunpack.c.l.b16 %v2007
      %v2195 = vunpack.c.l.b16 %v2008
      %v2196 = vunpack.c.h.b16 %v2008
      %v2197 = vunpack.c.l.b16 %v2009
      %v2198 = vunpack.c.l.b16 %v2010
      %v2199 = vunpack.c.h.b16 %v2010
      %v2200 = vunpack.c.l.b16 %v2011
      %v2201 = vunpack.c.l.b16 %v2012
      %v2202 = vunpack.c.h.b16 %v2012
      %v2203 = vunpack.c.l.b16 %v2013
      %v2204 = vunpack.c.l.b16 %v2014
      %v2205 = vunpack.c.h.b16 %v2014
      %v2206 = vunpack.c.l.b16 %v2015
      %v2207 = vunpack.c.l.b16 %v2016
      %v2208 = vunpack.c.h.b16 %v2016
      %v2209 = vunpack.c.l.b16 %v2017
      %v2210 = vunpack.c.l.b16 %v2018
      %v2211 = vunpack.c.h.b16 %v2018
      %v2212 = vunpack.c.l.b16 %v2019
      %v2213 = vunpack.c.l.b16 %v2020
      %v2214 = vunpack.c.h.b16 %v2020
      %v2215 = vunpack.c.l.b16 %v2021
      %v2216 = vunpack.c.l.b16 %v2022
      %v2217 = vunpack.c.h.b16 %v2022
      %v2218 = vunpack.c.l.b16 %v2023
      %v2219 = vunpack.c.l.b16 %v2024
      %v2220 = vunpack.c.h.b16 %v2024
      %v2221 = vunpack.c.l.b16 %v2025
      %v2222 = vunpack.c.l.b16 %v2026
      %v2223 = vunpack.c.h.b16 %v2026
      %v2224 = vunpack.c.l.b16 %v2027
      %v2225 = vunpack.c.l.b16 %v2028
      %v2226 = vunpack.c.h.b16 %v2028
      %v2227 = vunpack.c.l.b16 %v2029
      %v2228 = vunpack.c.l.b16 %v2030
      %v2229 = vunpack.c.h.b16 %v2030
      %v2230 = vunpack.c.l.b16 %v2031
      %v2231 = vunpack.c.l.b16 %v2032
      %v2232 = vunpack.c.h.b16 %v2032
      %v2233 = vunpack.c.l.b16 %v2033
      %v2234 = vunpack.c.l.b16 %v2034
      %v2235 = vunpack.c.h.b16 %v2034
      %v2236 = vunpack.c.l.b16 %v2035
      %v2237 = vunpack.c.l.b16 %v2036
      %v2238 = vunpack.c.h.b16 %v2036
      %v2239 = vunpack.c.l.b16 %v2037
      %v2240 = vunpack.c.l.b16 %v2038
      %v2241 = vunpack.c.h.b16 %v2038
      %v2242 = vunpack.c.l.b16 %v2039
      %v2243 = vunpack.c.l.b16 %v2040
      %v2244 = vunpack.c.h.b16 %v2040
      %v2245 = vunpack.c.l.b16 %v2041
      %v2246 = vunpack.c.l.b16 %v2042
      %v2247 = vunpack.c.h.b16 %v2042
      %v2248 = vunpack.c.l.b16 %v2043
      %v2249 = vunpack.c.l.b16 %v2044
      %v2250 = vunpack.c.h.b16 %v2044
      %v2251 = vunpack.c.l.b16 %v2045
      %v2252 = vunpack.c.l.b16 %v2046
      %v2253 = vunpack.c.h.b16 %v2046
      %v2254 = vunpack.c.l.b16 %v2047
      %v2255 = vunpack.c.l.b16 %v2048
      %v2256 = vunpack.c.h.b16 %v2048
      %v2257 = vunpack.c.l.b16 %v2049
      %v2258 = vunpack.c.l.b16 %v2050
      %v2259 = vunpack.c.h.b16 %v2050
      %v2260 = vunpack.c.l.b16 %v2051
      %v2261 = vunpack.c.l.b16 %v2052
      %v2262 = vunpack.c.h.b16 %v2052
      %v2263 = vunpack.c.l.b16 %v2053
      %v2264 = vunpack.c.l.b16 %v2054
      %v2265 = vunpack.c.h.b16 %v2054
      %v2266 = vunpack.c.l.b16 %v2055
      %v2267 = vunpack.c.l.b16 %v2056
      %v2268 = vunpack.c.h.b16 %v2056
      %v2269 = vunpack.c.l.b16 %v2057
      %v2270 = vunpack.c.l.b16 %v2058
      %v2271 = vunpack.c.h.b16 %v2058
      %v2272 = vunpack.c.l.b16 %v2059
      %v2273 = vunpack.c.l.b16 %v2060
      %v2274 = vunpack.c.h.b16 %v2060
      %v2275 = vunpack.c.l.b16 %v2061
      %v2276 = vpack.c.b16 %v2183, %v2180
      %v2277 = vpack.c.b16 %v2184, %v2181
      %v2278 = vpack.c.b16 %v2185, %v2182
      %v2279 = vpack.c.b16 %v2189, %v2186
      %v2280 = vpack.c.b16 %v2190, %v2187
      %v2281 = vpack.c.b16 %v2191, %v2188
      %v2282 = vpack.c.b16 %v2195, %v2192
      %v2283 = vpack.c.b16 %v2196, %v2193
      %v2284 = vpack.c.b16 %v2197, %v2194
      %v2285 = vpack.c.b16 %v2201, %v2198
      %v2286 = vpack.c.b16 %v2202, %v2199
      %v2287 = vpack.c.b16 %v2203, %v2200
      %v2288 = vpack.c.b16 %v2207, %v2204
      %v2289 = vpack.c.b16 %v2208, %v2205
      %v2290 = vpack.c.b16 %v2209, %v2206
      %v2291 = vpack.c.b16 %v2213, %v2210
      %v2292 = vpack.c.b16 %v2214, %v2211
      %v2293 = vpack.c.b16 %v2215, %v2212
      %v2294 = vpack.c.b16 %v2219, %v2216
      %v2295 = vpack.c.b16 %v2220, %v2217
      %v2296 = vpack.c.b16 %v2221, %v2218
      %v2297 = vpack.c.b16 %v2225, %v2222
      %v2298 = vpack.c.b16 %v2226, %v2223
      %v2299 = vpack.c.b16 %v2227, %v2224
      %v2300 = vpack.c.b16 %v2231, %v2228
      %v2301 = vpack.c.b16 %v2232, %v2229
      %v2302 = vpack.c.b16 %v2233, %v2230
      %v2303 = vpack.c.b16 %v2237, %v2234
      %v2304 = vpack.c.b16 %v2238, %v2235
      %v2305 = vpack.c.b16 %v2239, %v2236
      %v2306 = vpack.c.b16 %v2243, %v2240
      %v2307 = vpack.c.b16 %v2244, %v2241
      %v2308 = vpack.c.b16 %v2245, %v2242
      %v2309 = vpack.c.b16 %v2249, %v2246
      %v2310 = vpack.c.b16 %v2250, %v2247
      %v2311 = vpack.c.b16 %v2251, %v2248
      %v2312 = vpack.c.b16 %v2255, %v2252
      %v2313 = vpack.c.b16 %v2256, %v2253
      %v2314 = vpack.c.b16 %v2257, %v2254
      %v2315 = vpack.c.b16 %v2261, %v2258
      %v2316 = vpack.c.b16 %v2262, %v2259
      %v2317 = vpack.c.b16 %v2263, %v2260
      %v2318 = vpack.c.b16 %v2267, %v2264
      %v2319 = vpack.c.b16 %v2268, %v2265
      %v2320 = vpack.c.b16 %v2269, %v2266
      %v2321 = vpack.c.b16 %v2273, %v2270
      %v2322 = vpack.c.b16 %v2274, %v2271
      %v2323 = vpack.c.b16 %v2275, %v2272
      %v2420 = vunpack.c.l.b16 %v2062
      %v2421 = vunpack.c.h.b16 %v2062
      %v2422 = vunpack.c.l.b16 %v2063
      %v2423 = vunpack.c.h.b16 %v2063
      %v2424 = vunpack.c.l.b16 %v2064
      %v2425 = vunpack.c.h.b16 %v2064
      %v2426 = vunpack.c.l.b16 %v2065
      %v2427 = vunpack.c.h.b16 %v2065
      %v2428 = vunpack.c.l.b16 %v2066
      %v2429 = vunpack.c.h.b16 %v2066
      %v2430 = vunpack.c.l.b16 %v2067
      %v2431 = vunpack.c.h.b16 %v2067
      %v2432 = vunpack.c.l.b16 %v2068
      %v2433 = vunpack.c.h.b16 %v2068
      %v2434 = vunpack.c.l.b16 %v2069
      %v2435 = vunpack.c.h.b16 %v2069
      %v2436 = vunpack.c.l.b16 %v2070
      %v2437 = vunpack.c.h.b16 %v2070
      %v2438 = vunpack.c.l.b16 %v2071
      %v2439 = vunpack.c.h.b16 %v2071
      %v2440 = vunpack.c.l.b16 %v2072
      %v2441 = vunpack.c.h.b16 %v2072
      %v2442 = vunpack.c.l.b16 %v2073
      %v2443 = vunpack.c.h.b16 %v2073
      %v2444 = vunpack.c.l.b16 %v2074
      %v2445 = vunpack.c.h.b16 %v2074
      %v2446 = vunpack.c.l.b16 %v2075
      %v2447 = vunpack.c.h.b16 %v2075
      %v2448 = vunpack.c.l.b16 %v2076
      %v2449 = vunpack.c.h.b16 %v2076
      %v2450 = vunpack.c.l.b16 %v2077
      %v2451 = vunpack.c.h.b16 %v2077
      %v2452 = vunpack.c.l.b16 %v2078
      %v2453 = vunpack.c.h.b16 %v2078
      %v2454 = vunpack.c.l.b16 %v2079
      %v2455 = vunpack.c.h.b16 %v2079
      %v2456 = vunpack.c.l.b16 %v2080
      %v2457 = vunpack.c.h.b16 %v2080
      %v2458 = vunpack.c.l.b16 %v2081
      %v2459 = vunpack.c.h.b16 %v2081
      %v2460 = vunpack.c.l.b16 %v2082
      %v2461 = vunpack.c.h.b16 %v2082
      %v2462 = vunpack.c.l.b16 %v2083
      %v2463 = vunpack.c.h.b16 %v2083
      %v2464 = vunpack.c.l.b16 %v2084
      %v2465 = vunpack.c.h.b16 %v2084
      %v2466 = vunpack.c.l.b16 %v2085
      %v2467 = vunpack.c.h.b16 %v2085
      %v2468 = vunpack.c.l.b16 %v2086
      %v2469 = vunpack.c.h.b16 %v2086
      %v2470 = vunpack.c.l.b16 %v2087
      %v2471 = vunpack.c.h.b16 %v2087
      %v2472 = vunpack.c.l.b16 %v2088
      %v2473 = vunpack.c.h.b16 %v2088
      %v2474 = vunpack.c.l.b16 %v2089
      %v2475 = vunpack.c.h.b16 %v2089
      %v2476 = vunpack.c.l.b16 %v2090
      %v2477 = vunpack.c.h.b16 %v2090
      %v2478 = vunpack.c.l.b16 %v2091
      %v2479 = vunpack.c.h.b16 %v2091
      %v2480 = vunpack.c.l.b16 %v2092
      %v2481 = vunpack.c.h.b16 %v2092
      %v2482 = vunpack.c.l.b16 %v2093
      %v2483 = vunpack.c.h.b16 %v2093
      %v2484 = vunpack.c.l.b16 %v2094
      %v2485 = vunpack.c.h.b16 %v2094
      %v2486 = vunpack.c.l.b16 %v2095
      %v2487 = vunpack.c.h.b16 %v2095
      %v2488 = vunpack.c.l.b16 %v2096
      %v2489 = vunpack.c.h.b16 %v2096
      %v2490 = vunpack.c.l.b16 %v2097
      %v2491 = vunpack.c.h.b16 %v2097
      %v2492 = vunpack.c.l.b16 %v2098
      %v2493 = vunpack.c.h.b16 %v2098
      %v2494 = vunpack.c.l.b16 %v2099
      %v2495 = vunpack.c.h.b16 %v2099
      %v2496 = vunpack.c.l.b16 %v2100
      %v2497 = vunpack.c.h.b16 %v2100
      %v2498 = vunpack.c.l.b16 %v2101
      %v2499 = vunpack.c.h.b16 %v2101
      %v2500 = vunpack.c.l.b16 %v2102
      %v2501 = vunpack.c.h.b16 %v2102
      %v2502 = vunpack.c.l.b16 %v2103
      %v2503 = vunpack.c.h.b16 %v2103
      %v2504 = vunpack.c.l.b16 %v2104
      %v2505 = vunpack.c.h.b16 %v2104
      %v2506 = vunpack.c.l.b16 %v2105
      %v2507 = vunpack.c.h.b16 %v2105
      %v2508 = vunpack.c.l.b16 %v2106
      %v2509 = vunpack.c.h.b16 %v2106
      %v2510 = vunpack.c.l.b16 %v2107
      %v2511 = vunpack.c.h.b16 %v2107
      %v2512 = vunpack.c.l.b16 %v2108
      %v2513 = vunpack.c.h.b16 %v2108
      %v2514 = vunpack.c.l.b16 %v2109
      %v2515 = vunpack.c.h.b16 %v2109
      %v2516 = vpack.c.b16 %v2422, %v2420
      %v2517 = vpack.c.b16 %v2423, %v2421
      %v2518 = vpack.c.b16 %v2426, %v2424
      %v2519 = vpack.c.b16 %v2427, %v2425
      %v2520 = vpack.c.b16 %v2430, %v2428
      %v2521 = vpack.c.b16 %v2431, %v2429
      %v2522 = vpack.c.b16 %v2434, %v2432
      %v2523 = vpack.c.b16 %v2435, %v2433
      %v2524 = vpack.c.b16 %v2438, %v2436
      %v2525 = vpack.c.b16 %v2439, %v2437
      %v2526 = vpack.c.b16 %v2442, %v2440
      %v2527 = vpack.c.b16 %v2443, %v2441
      %v2528 = vpack.c.b16 %v2446, %v2444
      %v2529 = vpack.c.b16 %v2447, %v2445
      %v2530 = vpack.c.b16 %v2450, %v2448
      %v2531 = vpack.c.b16 %v2451, %v2449
      %v2532 = vpack.c.b16 %v2454, %v2452
      %v2533 = vpack.c.b16 %v2455, %v2453
      %v2534 = vpack.c.b16 %v2458, %v2456
      %v2535 = vpack.c.b16 %v2459, %v2457
      %v2536 = vpack.c.b16 %v2462, %v2460
      %v2537 = vpack.c.b16 %v2463, %v2461
      %v2538 = vpack.c.b16 %v2466, %v2464
      %v2539 = vpack.c.b16 %v2467, %v2465
      %v2540 = vpack.c.b16 %v2470, %v2468
      %v2541 = vpack.c.b16 %v2471, %v2469
      %v2542 = vpack.c.b16 %v2474, %v2472
      %v2543 = vpack.c.b16 %v2475, %v2473
      %v2544 = vpack.c.b16 %v2478, %v2476
      %v2545 = vpack.c.b16 %v2479, %v2477
      %v2546 = vpack.c.b16 %v2482, %v2480
      %v2547 = vpack.c.b16 %v2483, %v2481
      %v2548 = vpack.c.b16 %v2486, %v2484
      %v2549 = vpack.c.b16 %v2487, %v2485
      %v2550 = vpack.c.b16 %v2490, %v2488
      %v2551 = vpack.c.b16 %v2491, %v2489
      %v2552 = vpack.c.b16 %v2494, %v2492
      %v2553 = vpack.c.b16 %v2495, %v2493
      %v2554 = vpack.c.b16 %v2498, %v2496
      %v2555 = vpack.c.b16 %v2499, %v2497
      %v2556 = vpack.c.b16 %v2502, %v2500
      %v2557 = vpack.c.b16 %v2503, %v2501
      %v2558 = vpack.c.b16 %v2506, %v2504
      %v2559 = vpack.c.b16 %v2507, %v2505
      %v2560 = vpack.c.b16 %v2510, %v2508
      %v2561 = vpack.c.b16 %v2511, %v2509
      %v2562 = vpack.c.b16 %v2514, %v2512
      %v2563 = vpack.c.b16 %v2515, %v2513
      %2612 = vmatpush.bf16.msra.mxu0 %v2530
      %2613 = vmatpush.bf16.msra.mxu0 %v2528
      %2614 = vmatpush.bf16.msra.mxu0 %v2526
      %2615 = vmatpush.bf16.msra.mxu0 %v2524
      %2616 = vmatpush.bf16.msra.mxu0 %v2522
      %2617 = vmatpush.bf16.msra.mxu0 %v2520
      %2618 = vmatpush.bf16.msra.mxu0 %v2518
      %2619 = vmatpush.bf16.msra.mxu0 %v2516
      %2620 = vmatmul.bf16.gmra.mxu0 %v2276
      %v2621 = vpop.f32.mrf.mxu0
      %v2622 = vadd.f32 %v2112, %v2621
      %v2623 = vpop.f32.mrf.mxu0
      %v2624 = vadd.f32 %v2112, %v2623
      %2625 = vmatmul.bf16.gmra.mxu0 %v2279
      %v2626 = vpop.f32.mrf.mxu0
      %v2627 = vadd.f32 %v2112, %v2626
      %v2628 = vpop.f32.mrf.mxu0
      %v2629 = vadd.f32 %v2112, %v2628
      %2630 = vmatmul.bf16.gmra.mxu0 %v2282
      %v2631 = vpop.f32.mrf.mxu0
      %v2632 = vadd.f32 %v2112, %v2631
      %v2633 = vpop.f32.mrf.mxu0
      %v2634 = vadd.f32 %v2112, %v2633
      %2635 = vmatmul.bf16.gmra.mxu0 %v2285
      %v2636 = vpop.f32.mrf.mxu0
      %v2637 = vadd.f32 %v2112, %v2636
      %v2638 = vpop.f32.mrf.mxu0
      %v2639 = vadd.f32 %v2112, %v2638
      %2640 = vmatmul.bf16.gmra.mxu0 %v2288
      %v2641 = vpop.f32.mrf.mxu0
      %v2642 = vadd.f32 %v2112, %v2641
      %v2643 = vpop.f32.mrf.mxu0
      %v2644 = vadd.f32 %v2112, %v2643
      %2645 = vmatmul.bf16.gmra.mxu0 %v2291
      %v2646 = vpop.f32.mrf.mxu0
      %v2647 = vadd.f32 %v2112, %v2646
      %v2648 = vpop.f32.mrf.mxu0
      %v2649 = vadd.f32 %v2112, %v2648
      %2650 = vmatmul.bf16.gmra.mxu0 %v2294
      %v2651 = vpop.f32.mrf.mxu0
      %v2652 = vadd.f32 %v2112, %v2651
      %v2653 = vpop.f32.mrf.mxu0
      %v2654 = vadd.f32 %v2112, %v2653
      %2655 = vmatmul.bf16.gmra.mxu0 %v2297
      %v2656 = vpop.f32.mrf.mxu0
      %v2657 = vadd.f32 %v2112, %v2656
      %v2658 = vpop.f32.mrf.mxu0
      %v2659 = vadd.f32 %v2112, %v2658
      %2660 = vmatmul.bf16.gmra.mxu0 %v2300
      %v2661 = vpop.f32.mrf.mxu0
      %v2662 = vadd.f32 %v2112, %v2661
      %v2663 = vpop.f32.mrf.mxu0
      %v2664 = vadd.f32 %v2112, %v2663
      %2665 = vmatmul.bf16.gmra.mxu0 %v2303
      %v2666 = vpop.f32.mrf.mxu0
      %v2667 = vadd.f32 %v2112, %v2666
      %v2668 = vpop.f32.mrf.mxu0
      %v2669 = vadd.f32 %v2112, %v2668
      %2670 = vmatmul.bf16.gmra.mxu0 %v2306
      %v2671 = vpop.f32.mrf.mxu0
      %v2672 = vadd.f32 %v2112, %v2671
      %v2673 = vpop.f32.mrf.mxu0
      %v2674 = vadd.f32 %v2112, %v2673
      %2675 = vmatmul.bf16.gmra.mxu0 %v2309
      %v2676 = vpop.f32.mrf.mxu0
      %v2677 = vadd.f32 %v2112, %v2676
      %v2678 = vpop.f32.mrf.mxu0
      %v2679 = vadd.f32 %v2112, %v2678
      %2680 = vmatmul.bf16.gmra.mxu0 %v2312
      %v2681 = vpop.f32.mrf.mxu0
      %v2682 = vadd.f32 %v2112, %v2681
      %v2683 = vpop.f32.mrf.mxu0
      %v2684 = vadd.f32 %v2112, %v2683
      %2685 = vmatmul.bf16.gmra.mxu0 %v2315
      %v2686 = vpop.f32.mrf.mxu0
      %v2687 = vadd.f32 %v2112, %v2686
      %v2688 = vpop.f32.mrf.mxu0
      %v2689 = vadd.f32 %v2112, %v2688
      %2690 = vmatmul.bf16.gmra.mxu0 %v2318
      %v2691 = vpop.f32.mrf.mxu0
      %v2692 = vadd.f32 %v2112, %v2691
      %v2693 = vpop.f32.mrf.mxu0
      %v2694 = vadd.f32 %v2112, %v2693
      %2695 = vmatmul.bf16.gmra.mxu0 %v2321
      %v2696 = vpop.f32.mrf.mxu0
      %v2697 = vadd.f32 %v2112, %v2696
      %v2698 = vpop.f32.mrf.mxu0
      %v2699 = vadd.f32 %v2112, %v2698
      %2700 = vdwg.mxu0
      %2701 = vmatpush.bf16.msra.mxu0 %v2546
      %2702 = vmatpush.bf16.msra.mxu0 %v2544
      %2703 = vmatpush.bf16.msra.mxu0 %v2542
      %2704 = vmatpush.bf16.msra.mxu0 %v2540
      %2705 = vmatpush.bf16.msra.mxu0 %v2538
      %2706 = vmatpush.bf16.msra.mxu0 %v2536
      %2707 = vmatpush.bf16.msra.mxu0 %v2534
      %2708 = vmatpush.bf16.msra.mxu0 %v2532
      %2709 = vmatmul.bf16.gmra.mxu0 %v2277
      %v2710 = vpop.f32.mrf.mxu0
      %v2711 = vadd.f32 %v2622, %v2710
      %v2712 = vpop.f32.mrf.mxu0
      %v2713 = vadd.f32 %v2624, %v2712
      %2714 = vmatmul.bf16.gmra.mxu0 %v2280
      %v2715 = vpop.f32.mrf.mxu0
      %v2716 = vadd.f32 %v2627, %v2715
      %v2717 = vpop.f32.mrf.mxu0
      %v2718 = vadd.f32 %v2629, %v2717
      %2719 = vmatmul.bf16.gmra.mxu0 %v2283
      %v2720 = vpop.f32.mrf.mxu0
      %v2721 = vadd.f32 %v2632, %v2720
      %v2722 = vpop.f32.mrf.mxu0
      %v2723 = vadd.f32 %v2634, %v2722
      %2724 = vmatmul.bf16.gmra.mxu0 %v2286
      %v2725 = vpop.f32.mrf.mxu0
      %v2726 = vadd.f32 %v2637, %v2725
      %v2727 = vpop.f32.mrf.mxu0
      %v2728 = vadd.f32 %v2639, %v2727
      %2729 = vmatmul.bf16.gmra.mxu0 %v2289
      %v2730 = vpop.f32.mrf.mxu0
      %v2731 = vadd.f32 %v2642, %v2730
      %v2732 = vpop.f32.mrf.mxu0
      %v2733 = vadd.f32 %v2644, %v2732
      %2734 = vmatmul.bf16.gmra.mxu0 %v2292
      %v2735 = vpop.f32.mrf.mxu0
      %v2736 = vadd.f32 %v2647, %v2735
      %v2737 = vpop.f32.mrf.mxu0
      %v2738 = vadd.f32 %v2649, %v2737
      %2739 = vmatmul.bf16.gmra.mxu0 %v2295
      %v2740 = vpop.f32.mrf.mxu0
      %v2741 = vadd.f32 %v2652, %v2740
      %v2742 = vpop.f32.mrf.mxu0
      %v2743 = vadd.f32 %v2654, %v2742
      %2744 = vmatmul.bf16.gmra.mxu0 %v2298
      %v2745 = vpop.f32.mrf.mxu0
      %v2746 = vadd.f32 %v2657, %v2745
      %v2747 = vpop.f32.mrf.mxu0
      %v2748 = vadd.f32 %v2659, %v2747
      %2749 = vmatmul.bf16.gmra.mxu0 %v2301
      %v2750 = vpop.f32.mrf.mxu0
      %v2751 = vadd.f32 %v2662, %v2750
      %v2752 = vpop.f32.mrf.mxu0
      %v2753 = vadd.f32 %v2664, %v2752
      %2754 = vmatmul.bf16.gmra.mxu0 %v2304
      %v2755 = vpop.f32.mrf.mxu0
      %v2756 = vadd.f32 %v2667, %v2755
      %v2757 = vpop.f32.mrf.mxu0
      %v2758 = vadd.f32 %v2669, %v2757
      %2759 = vmatmul.bf16.gmra.mxu0 %v2307
      %v2760 = vpop.f32.mrf.mxu0
      %v2761 = vadd.f32 %v2672, %v2760
      %v2762 = vpop.f32.mrf.mxu0
      %v2763 = vadd.f32 %v2674, %v2762
      %2764 = vmatmul.bf16.gmra.mxu0 %v2310
      %v2765 = vpop.f32.mrf.mxu0
      %v2766 = vadd.f32 %v2677, %v2765
      %v2767 = vpop.f32.mrf.mxu0
      %v2768 = vadd.f32 %v2679, %v2767
      %2769 = vmatmul.bf16.gmra.mxu0 %v2313
      %v2770 = vpop.f32.mrf.mxu0
      %v2771 = vadd.f32 %v2682, %v2770
      %v2772 = vpop.f32.mrf.mxu0
      %v2773 = vadd.f32 %v2684, %v2772
      %2774 = vmatmul.bf16.gmra.mxu0 %v2316
      %v2775 = vpop.f32.mrf.mxu0
      %v2776 = vadd.f32 %v2687, %v2775
      %v2777 = vpop.f32.mrf.mxu0
      %v2778 = vadd.f32 %v2689, %v2777
      %2779 = vmatmul.bf16.gmra.mxu0 %v2319
      %v2780 = vpop.f32.mrf.mxu0
      %v2781 = vadd.f32 %v2692, %v2780
      %v2782 = vpop.f32.mrf.mxu0
      %v2783 = vadd.f32 %v2694, %v2782
      %2784 = vmatmul.bf16.gmra.mxu0 %v2322
      %v2785 = vpop.f32.mrf.mxu0
      %v2786 = vadd.f32 %v2697, %v2785
      %v2787 = vpop.f32.mrf.mxu0
      %v2788 = vadd.f32 %v2699, %v2787
      %2789 = vdwg.mxu0
      %2790 = vmatpush.bf16.msra.mxu0 %v2562
      %2791 = vmatpush.bf16.msra.mxu0 %v2560
      %2792 = vmatpush.bf16.msra.mxu0 %v2558
      %2793 = vmatpush.bf16.msra.mxu0 %v2556
      %2794 = vmatpush.bf16.msra.mxu0 %v2554
      %2795 = vmatpush.bf16.msra.mxu0 %v2552
      %2796 = vmatpush.bf16.msra.mxu0 %v2550
      %2797 = vmatpush.bf16.msra.mxu0 %v2548
      %2798 = vmatmul.bf16.gmra.mxu0 %v2278
      %v2799 = vpop.f32.mrf.mxu0
      %v2800 = vadd.f32 %v2711, %v2799
      %v2801 = vpop.f32.mrf.mxu0
      %v2802 = vadd.f32 %v2713, %v2801
      %2803 = vmatmul.bf16.gmra.mxu0 %v2281
      %v2804 = vpop.f32.mrf.mxu0
      %v2805 = vadd.f32 %v2716, %v2804
      %v2806 = vpop.f32.mrf.mxu0
      %v2807 = vadd.f32 %v2718, %v2806
      %2808 = vmatmul.bf16.gmra.mxu0 %v2284
      %v2809 = vpop.f32.mrf.mxu0
      %v2810 = vadd.f32 %v2721, %v2809
      %v2811 = vpop.f32.mrf.mxu0
      %v2812 = vadd.f32 %v2723, %v2811
      %2813 = vmatmul.bf16.gmra.mxu0 %v2287
      %v2814 = vpop.f32.mrf.mxu0
      %v2815 = vadd.f32 %v2726, %v2814
      %v2816 = vpop.f32.mrf.mxu0
      %v2817 = vadd.f32 %v2728, %v2816
      %2818 = vmatmul.bf16.gmra.mxu0 %v2290
      %v2819 = vpop.f32.mrf.mxu0
      %v2820 = vadd.f32 %v2731, %v2819
      %v2821 = vpop.f32.mrf.mxu0
      %v2822 = vadd.f32 %v2733, %v2821
      %2823 = vmatmul.bf16.gmra.mxu0 %v2293
      %v2824 = vpop.f32.mrf.mxu0
      %v2825 = vadd.f32 %v2736, %v2824
      %v2826 = vpop.f32.mrf.mxu0
      %v2827 = vadd.f32 %v2738, %v2826
      %2828 = vmatmul.bf16.gmra.mxu0 %v2296
      %v2829 = vpop.f32.mrf.mxu0
      %v2830 = vadd.f32 %v2741, %v2829
      %v2831 = vpop.f32.mrf.mxu0
      %v2832 = vadd.f32 %v2743, %v2831
      %2833 = vmatmul.bf16.gmra.mxu0 %v2299
      %v2834 = vpop.f32.mrf.mxu0
      %v2835 = vadd.f32 %v2746, %v2834
      %v2836 = vpop.f32.mrf.mxu0
      %v2837 = vadd.f32 %v2748, %v2836
      %2838 = vmatmul.bf16.gmra.mxu0 %v2302
      %v2839 = vpop.f32.mrf.mxu0
      %v2840 = vadd.f32 %v2751, %v2839
      %v2841 = vpop.f32.mrf.mxu0
      %v2842 = vadd.f32 %v2753, %v2841
      %2843 = vmatmul.bf16.gmra.mxu0 %v2305
      %v2844 = vpop.f32.mrf.mxu0
      %v2845 = vadd.f32 %v2756, %v2844
      %v2846 = vpop.f32.mrf.mxu0
      %v2847 = vadd.f32 %v2758, %v2846
      %2848 = vmatmul.bf16.gmra.mxu0 %v2308
      %v2849 = vpop.f32.mrf.mxu0
      %v2850 = vadd.f32 %v2761, %v2849
      %v2851 = vpop.f32.mrf.mxu0
      %v2852 = vadd.f32 %v2763, %v2851
      %2853 = vmatmul.bf16.gmra.mxu0 %v2311
      %v2854 = vpop.f32.mrf.mxu0
      %v2855 = vadd.f32 %v2766, %v2854
      %v2856 = vpop.f32.mrf.mxu0
      %v2857 = vadd.f32 %v2768, %v2856
      %2858 = vmatmul.bf16.gmra.mxu0 %v2314
      %v2859 = vpop.f32.mrf.mxu0
      %v2860 = vadd.f32 %v2771, %v2859
      %v2861 = vpop.f32.mrf.mxu0
      %v2862 = vadd.f32 %v2773, %v2861
      %2863 = vmatmul.bf16.gmra.mxu0 %v2317
      %v2864 = vpop.f32.mrf.mxu0
      %v2865 = vadd.f32 %v2776, %v2864
      %v2866 = vpop.f32.mrf.mxu0
      %v2867 = vadd.f32 %v2778, %v2866
      %2868 = vmatmul.bf16.gmra.mxu0 %v2320
      %v2869 = vpop.f32.mrf.mxu0
      %v2870 = vadd.f32 %v2781, %v2869
      %v2871 = vpop.f32.mrf.mxu0
      %v2872 = vadd.f32 %v2783, %v2871
      %2873 = vmatmul.bf16.gmra.mxu0 %v2323
      %v2874 = vpop.f32.mrf.mxu0
      %v2875 = vadd.f32 %v2786, %v2874
      %v2876 = vpop.f32.mrf.mxu0
      %v2877 = vadd.f32 %v2788, %v2876
      %2878 = vdwg.mxu0
      %2879 = vmatpush.bf16.msra.mxu0 %v2531
      %2880 = vmatpush.bf16.msra.mxu0 %v2529
      %2881 = vmatpush.bf16.msra.mxu0 %v2527
      %2882 = vmatpush.bf16.msra.mxu0 %v2525
      %2883 = vmatpush.bf16.msra.mxu0 %v2523
      %2884 = vmatpush.bf16.msra.mxu0 %v2521
      %2885 = vmatpush.bf16.msra.mxu0 %v2519
      %2886 = vmatpush.bf16.msra.mxu0 %v2517
      %2887 = vmatmul.bf16.gmra.mxu0 %v2276
      %v2888 = vpop.f32.mrf.mxu0
      %v2889 = vadd.f32 %v2113, %v2888
      %v2890 = vpop.f32.mrf.mxu0
      %v2891 = vadd.f32 %v2113, %v2890
      %2892 = vmatmul.bf16.gmra.mxu0 %v2279
      %v2893 = vpop.f32.mrf.mxu0
      %v2894 = vadd.f32 %v2113, %v2893
      %v2895 = vpop.f32.mrf.mxu0
      %v2896 = vadd.f32 %v2113, %v2895
      %2897 = vmatmul.bf16.gmra.mxu0 %v2282
      %v2898 = vpop.f32.mrf.mxu0
      %v2899 = vadd.f32 %v2113, %v2898
      %v2900 = vpop.f32.mrf.mxu0
      %v2901 = vadd.f32 %v2113, %v2900
      %2902 = vmatmul.bf16.gmra.mxu0 %v2285
      %v2903 = vpop.f32.mrf.mxu0
      %v2904 = vadd.f32 %v2113, %v2903
      %v2905 = vpop.f32.mrf.mxu0
      %v2906 = vadd.f32 %v2113, %v2905
      %2907 = vmatmul.bf16.gmra.mxu0 %v2288
      %v2908 = vpop.f32.mrf.mxu0
      %v2909 = vadd.f32 %v2113, %v2908
      %v2910 = vpop.f32.mrf.mxu0
      %v2911 = vadd.f32 %v2113, %v2910
      %2912 = vmatmul.bf16.gmra.mxu0 %v2291
      %v2913 = vpop.f32.mrf.mxu0
      %v2914 = vadd.f32 %v2113, %v2913
      %v2915 = vpop.f32.mrf.mxu0
      %v2916 = vadd.f32 %v2113, %v2915
      %2917 = vmatmul.bf16.gmra.mxu0 %v2294
      %v2918 = vpop.f32.mrf.mxu0
      %v2919 = vadd.f32 %v2113, %v2918
      %v2920 = vpop.f32.mrf.mxu0
      %v2921 = vadd.f32 %v2113, %v2920
      %2922 = vmatmul.bf16.gmra.mxu0 %v2297
      %v2923 = vpop.f32.mrf.mxu0
      %v2924 = vadd.f32 %v2113, %v2923
      %v2925 = vpop.f32.mrf.mxu0
      %v2926 = vadd.f32 %v2113, %v2925
      %2927 = vmatmul.bf16.gmra.mxu0 %v2300
      %v2928 = vpop.f32.mrf.mxu0
      %v2929 = vadd.f32 %v2113, %v2928
      %v2930 = vpop.f32.mrf.mxu0
      %v2931 = vadd.f32 %v2113, %v2930
      %2932 = vmatmul.bf16.gmra.mxu0 %v2303
      %v2933 = vpop.f32.mrf.mxu0
      %v2934 = vadd.f32 %v2113, %v2933
      %v2935 = vpop.f32.mrf.mxu0
      %v2936 = vadd.f32 %v2113, %v2935
      %2937 = vmatmul.bf16.gmra.mxu0 %v2306
      %v2938 = vpop.f32.mrf.mxu0
      %v2939 = vadd.f32 %v2113, %v2938
      %v2940 = vpop.f32.mrf.mxu0
      %v2941 = vadd.f32 %v2113, %v2940
      %2942 = vmatmul.bf16.gmra.mxu0 %v2309
      %v2943 = vpop.f32.mrf.mxu0
      %v2944 = vadd.f32 %v2113, %v2943
      %v2945 = vpop.f32.mrf.mxu0
      %v2946 = vadd.f32 %v2113, %v2945
      %2947 = vmatmul.bf16.gmra.mxu0 %v2312
      %v2948 = vpop.f32.mrf.mxu0
      %v2949 = vadd.f32 %v2113, %v2948
      %v2950 = vpop.f32.mrf.mxu0
      %v2951 = vadd.f32 %v2113, %v2950
      %2952 = vmatmul.bf16.gmra.mxu0 %v2315
      %v2953 = vpop.f32.mrf.mxu0
      %v2954 = vadd.f32 %v2113, %v2953
      %v2955 = vpop.f32.mrf.mxu0
      %v2956 = vadd.f32 %v2113, %v2955
      %2957 = vmatmul.bf16.gmra.mxu0 %v2318
      %v2958 = vpop.f32.mrf.mxu0
      %v2959 = vadd.f32 %v2113, %v2958
      %v2960 = vpop.f32.mrf.mxu0
      %v2961 = vadd.f32 %v2113, %v2960
      %2962 = vmatmul.bf16.gmra.mxu0 %v2321
      %v2963 = vpop.f32.mrf.mxu0
      %v2964 = vadd.f32 %v2113, %v2963
      %v2965 = vpop.f32.mrf.mxu0
      %v2966 = vadd.f32 %v2113, %v2965
      %2967 = vdwg.mxu0
      %2968 = vmatpush.bf16.msra.mxu0 %v2547
      %2969 = vmatpush.bf16.msra.mxu0 %v2545
      %2970 = vmatpush.bf16.msra.mxu0 %v2543
      %2971 = vmatpush.bf16.msra.mxu0 %v2541
      %2972 = vmatpush.bf16.msra.mxu0 %v2539
      %2973 = vmatpush.bf16.msra.mxu0 %v2537
      %2974 = vmatpush.bf16.msra.mxu0 %v2535
      %2975 = vmatpush.bf16.msra.mxu0 %v2533
      %2976 = vmatmul.bf16.gmra.mxu0 %v2277
      %v2977 = vpop.f32.mrf.mxu0
      %v2978 = vadd.f32 %v2889, %v2977
      %v2979 = vpop.f32.mrf.mxu0
      %v2980 = vadd.f32 %v2891, %v2979
      %2981 = vmatmul.bf16.gmra.mxu0 %v2280
      %v2982 = vpop.f32.mrf.mxu0
      %v2983 = vadd.f32 %v2894, %v2982
      %v2984 = vpop.f32.mrf.mxu0
      %v2985 = vadd.f32 %v2896, %v2984
      %2986 = vmatmul.bf16.gmra.mxu0 %v2283
      %v2987 = vpop.f32.mrf.mxu0
      %v2988 = vadd.f32 %v2899, %v2987
      %v2989 = vpop.f32.mrf.mxu0
      %v2990 = vadd.f32 %v2901, %v2989
      %2991 = vmatmul.bf16.gmra.mxu0 %v2286
      %v2992 = vpop.f32.mrf.mxu0
      %v2993 = vadd.f32 %v2904, %v2992
      %v2994 = vpop.f32.mrf.mxu0
      %v2995 = vadd.f32 %v2906, %v2994
      %2996 = vmatmul.bf16.gmra.mxu0 %v2289
      %v2997 = vpop.f32.mrf.mxu0
      %v2998 = vadd.f32 %v2909, %v2997
      %v2999 = vpop.f32.mrf.mxu0
      %v3000 = vadd.f32 %v2911, %v2999
      %3001 = vmatmul.bf16.gmra.mxu0 %v2292
      %v3002 = vpop.f32.mrf.mxu0
      %v3003 = vadd.f32 %v2914, %v3002
      %v3004 = vpop.f32.mrf.mxu0
      %v3005 = vadd.f32 %v2916, %v3004
      %3006 = vmatmul.bf16.gmra.mxu0 %v2295
      %v3007 = vpop.f32.mrf.mxu0
      %v3008 = vadd.f32 %v2919, %v3007
      %v3009 = vpop.f32.mrf.mxu0
      %v3010 = vadd.f32 %v2921, %v3009
      %3011 = vmatmul.bf16.gmra.mxu0 %v2298
      %v3012 = vpop.f32.mrf.mxu0
      %v3013 = vadd.f32 %v2924, %v3012
      %v3014 = vpop.f32.mrf.mxu0
      %v3015 = vadd.f32 %v2926, %v3014
      %3016 = vmatmul.bf16.gmra.mxu0 %v2301
      %v3017 = vpop.f32.mrf.mxu0
      %v3018 = vadd.f32 %v2929, %v3017
      %v3019 = vpop.f32.mrf.mxu0
      %v3020 = vadd.f32 %v2931, %v3019
      %3021 = vmatmul.bf16.gmra.mxu0 %v2304
      %v3022 = vpop.f32.mrf.mxu0
      %v3023 = vadd.f32 %v2934, %v3022
      %v3024 = vpop.f32.mrf.mxu0
      %v3025 = vadd.f32 %v2936, %v3024
      %3026 = vmatmul.bf16.gmra.mxu0 %v2307
      %v3027 = vpop.f32.mrf.mxu0
      %v3028 = vadd.f32 %v2939, %v3027
      %v3029 = vpop.f32.mrf.mxu0
      %v3030 = vadd.f32 %v2941, %v3029
      %3031 = vmatmul.bf16.gmra.mxu0 %v2310
      %v3032 = vpop.f32.mrf.mxu0
      %v3033 = vadd.f32 %v2944, %v3032
      %v3034 = vpop.f32.mrf.mxu0
      %v3035 = vadd.f32 %v2946, %v3034
      %3036 = vmatmul.bf16.gmra.mxu0 %v2313
      %v3037 = vpop.f32.mrf.mxu0
      %v3038 = vadd.f32 %v2949, %v3037
      %v3039 = vpop.f32.mrf.mxu0
      %v3040 = vadd.f32 %v2951, %v3039
      %3041 = vmatmul.bf16.gmra.mxu0 %v2316
      %v3042 = vpop.f32.mrf.mxu0
      %v3043 = vadd.f32 %v2954, %v3042
      %v3044 = vpop.f32.mrf.mxu0
      %v3045 = vadd.f32 %v2956, %v3044
      %3046 = vmatmul.bf16.gmra.mxu0 %v2319
      %v3047 = vpop.f32.mrf.mxu0
      %v3048 = vadd.f32 %v2959, %v3047
      %v3049 = vpop.f32.mrf.mxu0
      %v3050 = vadd.f32 %v2961, %v3049
      %3051 = vmatmul.bf16.gmra.mxu0 %v2322
      %v3052 = vpop.f32.mrf.mxu0
      %v3053 = vadd.f32 %v2964, %v3052
      %v3054 = vpop.f32.mrf.mxu0
      %v3055 = vadd.f32 %v2966, %v3054
      %3056 = vdwg.mxu0
      %3057 = vmatpush.bf16.msra.mxu0 %v2563
      %3058 = vmatpush.bf16.msra.mxu0 %v2561
      %3059 = vmatpush.bf16.msra.mxu0 %v2559
      %3060 = vmatpush.bf16.msra.mxu0 %v2557
      %3061 = vmatpush.bf16.msra.mxu0 %v2555
      %3062 = vmatpush.bf16.msra.mxu0 %v2553
      %3063 = vmatpush.bf16.msra.mxu0 %v2551
      %3064 = vmatpush.bf16.msra.mxu0 %v2549
      %3065 = vmatmul.bf16.gmra.mxu0 %v2278
      %v3066 = vpop.f32.mrf.mxu0
      %v3067 = vadd.f32 %v2978, %v3066
      %v3068 = vpop.f32.mrf.mxu0
      %v3069 = vadd.f32 %v2980, %v3068
      %3070 = vmatmul.bf16.gmra.mxu0 %v2281
      %v3071 = vpop.f32.mrf.mxu0
      %v3072 = vadd.f32 %v2983, %v3071
      %v3073 = vpop.f32.mrf.mxu0
      %v3074 = vadd.f32 %v2985, %v3073
      %3075 = vmatmul.bf16.gmra.mxu0 %v2284
      %v3076 = vpop.f32.mrf.mxu0
      %v3077 = vadd.f32 %v2988, %v3076
      %v3078 = vpop.f32.mrf.mxu0
      %v3079 = vadd.f32 %v2990, %v3078
      %3080 = vmatmul.bf16.gmra.mxu0 %v2287
      %v3081 = vpop.f32.mrf.mxu0
      %v3082 = vadd.f32 %v2993, %v3081
      %v3083 = vpop.f32.mrf.mxu0
      %v3084 = vadd.f32 %v2995, %v3083
      %3085 = vmatmul.bf16.gmra.mxu0 %v2290
      %v3086 = vpop.f32.mrf.mxu0
      %v3087 = vadd.f32 %v2998, %v3086
      %v3088 = vpop.f32.mrf.mxu0
      %v3089 = vadd.f32 %v3000, %v3088
      %3090 = vmatmul.bf16.gmra.mxu0 %v2293
      %v3091 = vpop.f32.mrf.mxu0
      %v3092 = vadd.f32 %v3003, %v3091
      %v3093 = vpop.f32.mrf.mxu0
      %v3094 = vadd.f32 %v3005, %v3093
      %3095 = vmatmul.bf16.gmra.mxu0 %v2296
      %v3096 = vpop.f32.mrf.mxu0
      %v3097 = vadd.f32 %v3008, %v3096
      %v3098 = vpop.f32.mrf.mxu0
      %v3099 = vadd.f32 %v3010, %v3098
      %3100 = vmatmul.bf16.gmra.mxu0 %v2299
      %v3101 = vpop.f32.mrf.mxu0
      %v3102 = vadd.f32 %v3013, %v3101
      %v3103 = vpop.f32.mrf.mxu0
      %v3104 = vadd.f32 %v3015, %v3103
      %3105 = vmatmul.bf16.gmra.mxu0 %v2302
      %v3106 = vpop.f32.mrf.mxu0
      %v3107 = vadd.f32 %v3018, %v3106
      %v3108 = vpop.f32.mrf.mxu0
      %v3109 = vadd.f32 %v3020, %v3108
      %3110 = vmatmul.bf16.gmra.mxu0 %v2305
      %v3111 = vpop.f32.mrf.mxu0
      %v3112 = vadd.f32 %v3023, %v3111
      %v3113 = vpop.f32.mrf.mxu0
      %v3114 = vadd.f32 %v3025, %v3113
      %3115 = vmatmul.bf16.gmra.mxu0 %v2308
      %v3116 = vpop.f32.mrf.mxu0
      %v3117 = vadd.f32 %v3028, %v3116
      %v3118 = vpop.f32.mrf.mxu0
      %v3119 = vadd.f32 %v3030, %v3118
      %3120 = vmatmul.bf16.gmra.mxu0 %v2311
      %v3121 = vpop.f32.mrf.mxu0
      %v3122 = vadd.f32 %v3033, %v3121
      %v3123 = vpop.f32.mrf.mxu0
      %v3124 = vadd.f32 %v3035, %v3123
      %3125 = vmatmul.bf16.gmra.mxu0 %v2314
      %v3126 = vpop.f32.mrf.mxu0
      %v3127 = vadd.f32 %v3038, %v3126
      %v3128 = vpop.f32.mrf.mxu0
      %v3129 = vadd.f32 %v3040, %v3128
      %3130 = vmatmul.bf16.gmra.mxu0 %v2317
      %v3131 = vpop.f32.mrf.mxu0
      %v3132 = vadd.f32 %v3043, %v3131
      %v3133 = vpop.f32.mrf.mxu0
      %v3134 = vadd.f32 %v3045, %v3133
      %3135 = vmatmul.bf16.gmra.mxu0 %v2320
      %v3136 = vpop.f32.mrf.mxu0
      %v3137 = vadd.f32 %v3048, %v3136
      %v3138 = vpop.f32.mrf.mxu0
      %v3139 = vadd.f32 %v3050, %v3138
      %3140 = vmatmul.bf16.gmra.mxu0 %v2323
      %v3141 = vpop.f32.mrf.mxu0
      %v3142 = vadd.f32 %v3053, %v3141
      %v3143 = vpop.f32.mrf.mxu0
      %v3144 = vadd.f32 %v3055, %v3143
      %3145 = vdwg.mxu0
      %v3146 = vmax.f32 %v2800, 0.0
      %v3147 = vmax.f32 %v3067, 0.0
      %v3148 = vmax.f32 %v2802, 0.0
      %v3149 = vmax.f32 %v3069, 0.0
      %v3150 = vmax.f32 %v2805, 0.0
      %v3151 = vmax.f32 %v3072, 0.0
      %v3152 = vmax.f32 %v2807, 0.0
      %v3153 = vmax.f32 %v3074, 0.0
      %v3154 = vmax.f32 %v2810, 0.0
      %v3155 = vmax.f32 %v3077, 0.0
      %v3156 = vmax.f32 %v2812, 0.0
      %v3157 = vmax.f32 %v3079, 0.0
      %v3158 = vmax.f32 %v2815, 0.0
      %v3159 = vmax.f32 %v3082, 0.0
      %v3160 = vmax.f32 %v2817, 0.0
      %v3161 = vmax.f32 %v3084, 0.0
      %v3162 = vmax.f32 %v2820, 0.0
      %v3163 = vmax.f32 %v3087, 0.0
      %v3164 = vmax.f32 %v2822, 0.0
      %v3165 = vmax.f32 %v3089, 0.0
      %v3166 = vmax.f32 %v2825, 0.0
      %v3167 = vmax.f32 %v3092, 0.0
      %v3168 = vmax.f32 %v2827, 0.0
      %v3169 = vmax.f32 %v3094, 0.0
      %v3170 = vmax.f32 %v2830, 0.0
      %v3171 = vmax.f32 %v3097, 0.0
      %v3172 = vmax.f32 %v2832, 0.0
      %v3173 = vmax.f32 %v3099, 0.0
      %v3174 = vmax.f32 %v2835, 0.0
      %v3175 = vmax.f32 %v3102, 0.0
      %v3176 = vmax.f32 %v2837, 0.0
      %v3177 = vmax.f32 %v3104, 0.0
      %v3178 = vmax.f32 %v2840, 0.0
      %v3179 = vmax.f32 %v3107, 0.0
      %v3180 = vmax.f32 %v2842, 0.0
      %v3181 = vmax.f32 %v3109, 0.0
      %v3182 = vmax.f32 %v2845, 0.0
      %v3183 = vmax.f32 %v3112, 0.0
      %v3184 = vmax.f32 %v2847, 0.0
      %v3185 = vmax.f32 %v3114, 0.0
      %v3186 = vmax.f32 %v2850, 0.0
      %v3187 = vmax.f32 %v3117, 0.0
      %v3188 = vmax.f32 %v2852, 0.0
      %v3189 = vmax.f32 %v3119, 0.0
      %v3190 = vmax.f32 %v2855, 0.0
      %v3191 = vmax.f32 %v3122, 0.0
      %v3192 = vmax.f32 %v2857, 0.0
      %v3193 = vmax.f32 %v3124, 0.0
      %v3194 = vmax.f32 %v2860, 0.0
      %v3195 = vmax.f32 %v3127, 0.0
      %v3196 = vmax.f32 %v2862, 0.0
      %v3197 = vmax.f32 %v3129, 0.0
      %v3198 = vmax.f32 %v2865, 0.0
      %v3199 = vmax.f32 %v3132, 0.0
      %v3200 = vmax.f32 %v2867, 0.0
      %v3201 = vmax.f32 %v3134, 0.0
      %v3202 = vmax.f32 %v2870, 0.0
      %v3203 = vmax.f32 %v3137, 0.0
      %v3204 = vmax.f32 %v2872, 0.0
      %v3205 = vmax.f32 %v3139, 0.0
      %v3206 = vmax.f32 %v2875, 0.0
      %v3207 = vmax.f32 %v3142, 0.0
      %v3208 = vmax.f32 %v2877, 0.0
      %v3209 = vmax.f32 %v3144, 0.0
      %v3210 = vpack.c.bf16 %v3148, %v3146
      %v3211 = vpack.c.bf16 %v3149, %v3147
      %v3212 = vpack.c.bf16 %v3152, %v3150
      %v3213 = vpack.c.bf16 %v3153, %v3151
      %v3214 = vpack.c.bf16 %v3156, %v3154
      %v3215 = vpack.c.bf16 %v3157, %v3155
      %v3216 = vpack.c.bf16 %v3160, %v3158
      %v3217 = vpack.c.bf16 %v3161, %v3159
      %v3218 = vpack.c.bf16 %v3164, %v3162
      %v3219 = vpack.c.bf16 %v3165, %v3163
      %v3220 = vpack.c.bf16 %v3168, %v3166
      %v3221 = vpack.c.bf16 %v3169, %v3167
      %v3222 = vpack.c.bf16 %v3172, %v3170
      %v3223 = vpack.c.bf16 %v3173, %v3171
      %v3224 = vpack.c.bf16 %v3176, %v3174
      %v3225 = vpack.c.bf16 %v3177, %v3175
      %v3226 = vpack.c.bf16 %v3180, %v3178
      %v3227 = vpack.c.bf16 %v3181, %v3179
      %v3228 = vpack.c.bf16 %v3184, %v3182
      %v3229 = vpack.c.bf16 %v3185, %v3183
      %v3230 = vpack.c.bf16 %v3188, %v3186
      %v3231 = vpack.c.bf16 %v3189, %v3187
      %v3232 = vpack.c.bf16 %v3192, %v3190
      %v3233 = vpack.c.bf16 %v3193, %v3191
      %v3234 = vpack.c.bf16 %v3196, %v3194
      %v3235 = vpack.c.bf16 %v3197, %v3195
      %v3236 = vpack.c.bf16 %v3200, %v3198
      %v3237 = vpack.c.bf16 %v3201, %v3199
      %v3238 = vpack.c.bf16 %v3204, %v3202
      %v3239 = vpack.c.bf16 %v3205, %v3203
      %v3240 = vpack.c.bf16 %v3208, %v3206
      %v3241 = vpack.c.bf16 %v3209, %v3207
      %v3242 = vld [vmem:[%s12] sm:$0xff]
      %v3243 = vld [vmem:[%s12 + $0x8] sm:$0xff]
      %v3244 = vld [vmem:[%s12 + $0x10] sm:$0xff]
      %v3245 = vld [vmem:[%s12 + $0x18] sm:$0xff]
      %v3246 = vld [vmem:[%s12 + $0x20] sm:$0xff]
      %v3247 = vld [vmem:[%s12 + $0x28] sm:$0xff]
      %v3248 = vld [vmem:[%s12 + $0x30] sm:$0xff]
      %v3249 = vld [vmem:[%s12 + $0x38] sm:$0xff]
      %v3250 = vld [vmem:[%s12 + $0x40] sm:$0xff]
      %v3251 = vld [vmem:[%s12 + $0x48] sm:$0xff]
      %v3252 = vld [vmem:[%s12 + $0x50] sm:$0xff]
      %v3253 = vld [vmem:[%s12 + $0x58] sm:$0xff]
      %v3254 = vld [vmem:[%s12 + $0x60] sm:$0xff]
      %v3255 = vld [vmem:[%s12 + $0x68] sm:$0xff]
      %v3256 = vld [vmem:[%s12 + $0x70] sm:$0xff]
      %v3257 = vld [vmem:[%s12 + $0x78] sm:$0xff]
      %v3258 = vld [vmem:[%s12 + $0x80] sm:$0xff]
      %v3259 = vld [vmem:[%s12 + $0x88] sm:$0xff]
      %v3260 = vld [vmem:[%s12 + $0x90] sm:$0xff]
      %v3261 = vld [vmem:[%s12 + $0x98] sm:$0xff]
      %v3262 = vld [vmem:[%s12 + $0xa0] sm:$0xff]
      %v3263 = vld [vmem:[%s12 + $0xa8] sm:$0xff]
      %v3264 = vld [vmem:[%s12 + $0xb0] sm:$0xff]
      %v3265 = vld [vmem:[%s12 + $0xb8] sm:$0xff]
      %v3266 = vld [vmem:[%s12 + $0xc0] sm:$0xff]
      %v3267 = vld [vmem:[%s12 + $0xc8] sm:$0xff]
      %v3268 = vld [vmem:[%s12 + $0xd0] sm:$0xff]
      %v3269 = vld [vmem:[%s12 + $0xd8] sm:$0xff]
      %v3270 = vld [vmem:[%s12 + $0xe0] sm:$0xff]
      %v3271 = vld [vmem:[%s12 + $0xe8] sm:$0xff]
      %v3272 = vld [vmem:[%s12 + $0xf0] sm:$0xff]
      %v3273 = vld [vmem:[%s12 + $0xf8] sm:$0xff]
      %v3274 = vld [vmem:[%s12 + $0x100] sm:$0xff]
      %v3275 = vld [vmem:[%s12 + $0x108] sm:$0xff]
      %v3276 = vld [vmem:[%s12 + $0x110] sm:$0xff]
      %v3277 = vld [vmem:[%s12 + $0x118] sm:$0xff]
      %v3278 = vld [vmem:[%s12 + $0x120] sm:$0xff]
      %v3279 = vld [vmem:[%s12 + $0x128] sm:$0xff]
      %v3280 = vld [vmem:[%s12 + $0x130] sm:$0xff]
      %v3281 = vld [vmem:[%s12 + $0x138] sm:$0xff]
      %v3282 = vld [vmem:[%s12 + $0x140] sm:$0xff]
      %v3283 = vld [vmem:[%s12 + $0x148] sm:$0xff]
      %v3284 = vld [vmem:[%s12 + $0x150] sm:$0xff]
      %v3285 = vld [vmem:[%s12 + $0x158] sm:$0xff]
      %v3286 = vld [vmem:[%s12 + $0x160] sm:$0xff]
      %v3287 = vld [vmem:[%s12 + $0x168] sm:$0xff]
      %v3288 = vld [vmem:[%s12 + $0x170] sm:$0xff]
      %v3289 = vld [vmem:[%s12 + $0x178] sm:$0xff]
      %v3338 = vunpack.c.l.b16 %v3242
      %v3339 = vunpack.c.h.b16 %v3242
      %v3340 = vunpack.c.l.b16 %v3243
      %v3341 = vunpack.c.h.b16 %v3243
      %v3342 = vunpack.c.l.b16 %v3244
      %v3343 = vunpack.c.h.b16 %v3244
      %v3344 = vunpack.c.l.b16 %v3245
      %v3345 = vunpack.c.h.b16 %v3245
      %v3346 = vunpack.c.l.b16 %v3246
      %v3347 = vunpack.c.h.b16 %v3246
      %v3348 = vunpack.c.l.b16 %v3247
      %v3349 = vunpack.c.h.b16 %v3247
      %v3350 = vunpack.c.l.b16 %v3248
      %v3351 = vunpack.c.h.b16 %v3248
      %v3352 = vunpack.c.l.b16 %v3249
      %v3353 = vunpack.c.h.b16 %v3249
      %v3354 = vunpack.c.l.b16 %v3250
      %v3355 = vunpack.c.h.b16 %v3250
      %v3356 = vunpack.c.l.b16 %v3251
      %v3357 = vunpack.c.h.b16 %v3251
      %v3358 = vunpack.c.l.b16 %v3252
      %v3359 = vunpack.c.h.b16 %v3252
      %v3360 = vunpack.c.l.b16 %v3253
      %v3361 = vunpack.c.h.b16 %v3253
      %v3362 = vunpack.c.l.b16 %v3254
      %v3363 = vunpack.c.h.b16 %v3254
      %v3364 = vunpack.c.l.b16 %v3255
      %v3365 = vunpack.c.h.b16 %v3255
      %v3366 = vunpack.c.l.b16 %v3256
      %v3367 = vunpack.c.h.b16 %v3256
      %v3368 = vunpack.c.l.b16 %v3257
      %v3369 = vunpack.c.h.b16 %v3257
      %v3370 = vunpack.c.l.b16 %v3258
      %v3371 = vunpack.c.h.b16 %v3258
      %v3372 = vunpack.c.l.b16 %v3259
      %v3373 = vunpack.c.h.b16 %v3259
      %v3374 = vunpack.c.l.b16 %v3260
      %v3375 = vunpack.c.h.b16 %v3260
      %v3376 = vunpack.c.l.b16 %v3261
      %v3377 = vunpack.c.h.b16 %v3261
      %v3378 = vunpack.c.l.b16 %v3262
      %v3379 = vunpack.c.h.b16 %v3262
      %v3380 = vunpack.c.l.b16 %v3263
      %v3381 = vunpack.c.h.b16 %v3263
      %v3382 = vunpack.c.l.b16 %v3264
      %v3383 = vunpack.c.h.b16 %v3264
      %v3384 = vunpack.c.l.b16 %v3265
      %v3385 = vunpack.c.h.b16 %v3265
      %v3386 = vunpack.c.l.b16 %v3266
      %v3387 = vunpack.c.h.b16 %v3266
      %v3388 = vunpack.c.l.b16 %v3267
      %v3389 = vunpack.c.h.b16 %v3267
      %v3390 = vunpack.c.l.b16 %v3268
      %v3391 = vunpack.c.h.b16 %v3268
      %v3392 = vunpack.c.l.b16 %v3269
      %v3393 = vunpack.c.h.b16 %v3269
      %v3394 = vunpack.c.l.b16 %v3270
      %v3395 = vunpack.c.h.b16 %v3270
      %v3396 = vunpack.c.l.b16 %v3271
      %v3397 = vunpack.c.h.b16 %v3271
      %v3398 = vunpack.c.l.b16 %v3272
      %v3399 = vunpack.c.h.b16 %v3272
      %v3400 = vunpack.c.l.b16 %v3273
      %v3401 = vunpack.c.h.b16 %v3273
      %v3402 = vunpack.c.l.b16 %v3274
      %v3403 = vunpack.c.h.b16 %v3274
      %v3404 = vunpack.c.l.b16 %v3275
      %v3405 = vunpack.c.h.b16 %v3275
      %v3406 = vunpack.c.l.b16 %v3276
      %v3407 = vunpack.c.h.b16 %v3276
      %v3408 = vunpack.c.l.b16 %v3277
      %v3409 = vunpack.c.h.b16 %v3277
      %v3410 = vunpack.c.l.b16 %v3278
      %v3411 = vunpack.c.h.b16 %v3278
      %v3412 = vunpack.c.l.b16 %v3279
      %v3413 = vunpack.c.h.b16 %v3279
      %v3414 = vunpack.c.l.b16 %v3280
      %v3415 = vunpack.c.h.b16 %v3280
      %v3416 = vunpack.c.l.b16 %v3281
      %v3417 = vunpack.c.h.b16 %v3281
      %v3418 = vunpack.c.l.b16 %v3282
      %v3419 = vunpack.c.h.b16 %v3282
      %v3420 = vunpack.c.l.b16 %v3283
      %v3421 = vunpack.c.h.b16 %v3283
      %v3422 = vunpack.c.l.b16 %v3284
      %v3423 = vunpack.c.h.b16 %v3284
      %v3424 = vunpack.c.l.b16 %v3285
      %v3425 = vunpack.c.h.b16 %v3285
      %v3426 = vunpack.c.l.b16 %v3286
      %v3427 = vunpack.c.h.b16 %v3286
      %v3428 = vunpack.c.l.b16 %v3287
      %v3429 = vunpack.c.h.b16 %v3287
      %v3430 = vunpack.c.l.b16 %v3288
      %v3431 = vunpack.c.h.b16 %v3288
      %v3432 = vunpack.c.l.b16 %v3289
      %v3433 = vunpack.c.h.b16 %v3289
      %v3434 = vpack.c.b16 %v3340, %v3338
      %v3435 = vpack.c.b16 %v3341, %v3339
      %v3436 = vpack.c.b16 %v3344, %v3342
      %v3437 = vpack.c.b16 %v3345, %v3343
      %v3438 = vpack.c.b16 %v3348, %v3346
      %v3439 = vpack.c.b16 %v3349, %v3347
      %v3440 = vpack.c.b16 %v3352, %v3350
      %v3441 = vpack.c.b16 %v3353, %v3351
      %v3442 = vpack.c.b16 %v3356, %v3354
      %v3443 = vpack.c.b16 %v3357, %v3355
      %v3444 = vpack.c.b16 %v3360, %v3358
      %v3445 = vpack.c.b16 %v3361, %v3359
      %v3446 = vpack.c.b16 %v3364, %v3362
      %v3447 = vpack.c.b16 %v3365, %v3363
      %v3448 = vpack.c.b16 %v3368, %v3366
      %v3449 = vpack.c.b16 %v3369, %v3367
      %v3450 = vpack.c.b16 %v3372, %v3370
      %v3451 = vpack.c.b16 %v3373, %v3371
      %v3452 = vpack.c.b16 %v3376, %v3374
      %v3453 = vpack.c.b16 %v3377, %v3375
      %v3454 = vpack.c.b16 %v3380, %v3378
      %v3455 = vpack.c.b16 %v3381, %v3379
      %v3456 = vpack.c.b16 %v3384, %v3382
      %v3457 = vpack.c.b16 %v3385, %v3383
      %v3458 = vpack.c.b16 %v3388, %v3386
      %v3459 = vpack.c.b16 %v3389, %v3387
      %v3460 = vpack.c.b16 %v3392, %v3390
      %v3461 = vpack.c.b16 %v3393, %v3391
      %v3462 = vpack.c.b16 %v3396, %v3394
      %v3463 = vpack.c.b16 %v3397, %v3395
      %v3464 = vpack.c.b16 %v3400, %v3398
      %v3465 = vpack.c.b16 %v3401, %v3399
      %v3466 = vpack.c.b16 %v3404, %v3402
      %v3467 = vpack.c.b16 %v3405, %v3403
      %v3468 = vpack.c.b16 %v3408, %v3406
      %v3469 = vpack.c.b16 %v3409, %v3407
      %v3470 = vpack.c.b16 %v3412, %v3410
      %v3471 = vpack.c.b16 %v3413, %v3411
      %v3472 = vpack.c.b16 %v3416, %v3414
      %v3473 = vpack.c.b16 %v3417, %v3415
      %v3474 = vpack.c.b16 %v3420, %v3418
      %v3475 = vpack.c.b16 %v3421, %v3419
      %v3476 = vpack.c.b16 %v3424, %v3422
      %v3477 = vpack.c.b16 %v3425, %v3423
      %v3478 = vpack.c.b16 %v3428, %v3426
      %v3479 = vpack.c.b16 %v3429, %v3427
      %v3480 = vpack.c.b16 %v3432, %v3430
      %v3481 = vpack.c.b16 %v3433, %v3431
      %3530 = vmatpush.bf16.msra.mxu0 %v3224
      %3531 = vmatpush.bf16.msra.mxu0 %v3222
      %3532 = vmatpush.bf16.msra.mxu0 %v3220
      %3533 = vmatpush.bf16.msra.mxu0 %v3218
      %3534 = vmatpush.bf16.msra.mxu0 %v3216
      %3535 = vmatpush.bf16.msra.mxu0 %v3214
      %3536 = vmatpush.bf16.msra.mxu0 %v3212
      %3537 = vmatpush.bf16.msra.mxu0 %v3210
      %3538 = vmatmul.bf16.gmra.mxu0 %v3434
      %v3539 = vpop.f32.mrf.mxu0
      %v3540 = vadd.f32 0.0, %v3539
      %v3541 = vpop.f32.mrf.mxu0
      %v3542 = vadd.f32 0.0, %v3541
      %3543 = vmatmul.bf16.gmra.mxu0 %v3436
      %v3544 = vpop.f32.mrf.mxu0
      %v3545 = vadd.f32 0.0, %v3544
      %v3546 = vpop.f32.mrf.mxu0
      %v3547 = vadd.f32 0.0, %v3546
      %3548 = vmatmul.bf16.gmra.mxu0 %v3438
      %v3549 = vpop.f32.mrf.mxu0
      %v3550 = vadd.f32 0.0, %v3549
      %v3551 = vpop.f32.mrf.mxu0
      %v3552 = vadd.f32 0.0, %v3551
      %3553 = vmatmul.bf16.gmra.mxu0 %v3440
      %v3554 = vpop.f32.mrf.mxu0
      %v3555 = vadd.f32 0.0, %v3554
      %v3556 = vpop.f32.mrf.mxu0
      %v3557 = vadd.f32 0.0, %v3556
      %3558 = vmatmul.bf16.gmra.mxu0 %v3442
      %v3559 = vpop.f32.mrf.mxu0
      %v3560 = vadd.f32 0.0, %v3559
      %v3561 = vpop.f32.mrf.mxu0
      %v3562 = vadd.f32 0.0, %v3561
      %3563 = vmatmul.bf16.gmra.mxu0 %v3444
      %v3564 = vpop.f32.mrf.mxu0
      %v3565 = vadd.f32 0.0, %v3564
      %v3566 = vpop.f32.mrf.mxu0
      %v3567 = vadd.f32 0.0, %v3566
      %3568 = vmatmul.bf16.gmra.mxu0 %v3446
      %v3569 = vpop.f32.mrf.mxu0
      %v3570 = vadd.f32 0.0, %v3569
      %v3571 = vpop.f32.mrf.mxu0
      %v3572 = vadd.f32 0.0, %v3571
      %3573 = vmatmul.bf16.gmra.mxu0 %v3448
      %v3574 = vpop.f32.mrf.mxu0
      %v3575 = vadd.f32 0.0, %v3574
      %v3576 = vpop.f32.mrf.mxu0
      %v3577 = vadd.f32 0.0, %v3576
      %3578 = vmatmul.bf16.gmra.mxu0 %v3450
      %v3579 = vpop.f32.mrf.mxu0
      %v3580 = vadd.f32 0.0, %v3579
      %v3581 = vpop.f32.mrf.mxu0
      %v3582 = vadd.f32 0.0, %v3581
      %3583 = vmatmul.bf16.gmra.mxu0 %v3452
      %v3584 = vpop.f32.mrf.mxu0
      %v3585 = vadd.f32 0.0, %v3584
      %v3586 = vpop.f32.mrf.mxu0
      %v3587 = vadd.f32 0.0, %v3586
      %3588 = vmatmul.bf16.gmra.mxu0 %v3454
      %v3589 = vpop.f32.mrf.mxu0
      %v3590 = vadd.f32 0.0, %v3589
      %v3591 = vpop.f32.mrf.mxu0
      %v3592 = vadd.f32 0.0, %v3591
      %3593 = vmatmul.bf16.gmra.mxu0 %v3456
      %v3594 = vpop.f32.mrf.mxu0
      %v3595 = vadd.f32 0.0, %v3594
      %v3596 = vpop.f32.mrf.mxu0
      %v3597 = vadd.f32 0.0, %v3596
      %3598 = vmatmul.bf16.gmra.mxu0 %v3458
      %v3599 = vpop.f32.mrf.mxu0
      %v3600 = vadd.f32 0.0, %v3599
      %v3601 = vpop.f32.mrf.mxu0
      %v3602 = vadd.f32 0.0, %v3601
      %3603 = vmatmul.bf16.gmra.mxu0 %v3460
      %v3604 = vpop.f32.mrf.mxu0
      %v3605 = vadd.f32 0.0, %v3604
      %v3606 = vpop.f32.mrf.mxu0
      %v3607 = vadd.f32 0.0, %v3606
      %3608 = vmatmul.bf16.gmra.mxu0 %v3462
      %v3609 = vpop.f32.mrf.mxu0
      %v3610 = vadd.f32 0.0, %v3609
      %v3611 = vpop.f32.mrf.mxu0
      %v3612 = vadd.f32 0.0, %v3611
      %3613 = vmatmul.bf16.gmra.mxu0 %v3464
      %v3614 = vpop.f32.mrf.mxu0
      %v3615 = vadd.f32 0.0, %v3614
      %v3616 = vpop.f32.mrf.mxu0
      %v3617 = vadd.f32 0.0, %v3616
      %3618 = vmatmul.bf16.gmra.mxu0 %v3466
      %v3619 = vpop.f32.mrf.mxu0
      %v3620 = vadd.f32 0.0, %v3619
      %v3621 = vpop.f32.mrf.mxu0
      %v3622 = vadd.f32 0.0, %v3621
      %3623 = vmatmul.bf16.gmra.mxu0 %v3468
      %v3624 = vpop.f32.mrf.mxu0
      %v3625 = vadd.f32 0.0, %v3624
      %v3626 = vpop.f32.mrf.mxu0
      %v3627 = vadd.f32 0.0, %v3626
      %3628 = vmatmul.bf16.gmra.mxu0 %v3470
      %v3629 = vpop.f32.mrf.mxu0
      %v3630 = vadd.f32 0.0, %v3629
      %v3631 = vpop.f32.mrf.mxu0
      %v3632 = vadd.f32 0.0, %v3631
      %3633 = vmatmul.bf16.gmra.mxu0 %v3472
      %v3634 = vpop.f32.mrf.mxu0
      %v3635 = vadd.f32 0.0, %v3634
      %v3636 = vpop.f32.mrf.mxu0
      %v3637 = vadd.f32 0.0, %v3636
      %3638 = vmatmul.bf16.gmra.mxu0 %v3474
      %v3639 = vpop.f32.mrf.mxu0
      %v3640 = vadd.f32 0.0, %v3639
      %v3641 = vpop.f32.mrf.mxu0
      %v3642 = vadd.f32 0.0, %v3641
      %3643 = vmatmul.bf16.gmra.mxu0 %v3476
      %v3644 = vpop.f32.mrf.mxu0
      %v3645 = vadd.f32 0.0, %v3644
      %v3646 = vpop.f32.mrf.mxu0
      %v3647 = vadd.f32 0.0, %v3646
      %3648 = vmatmul.bf16.gmra.mxu0 %v3478
      %v3649 = vpop.f32.mrf.mxu0
      %v3650 = vadd.f32 0.0, %v3649
      %v3651 = vpop.f32.mrf.mxu0
      %v3652 = vadd.f32 0.0, %v3651
      %3653 = vmatmul.bf16.gmra.mxu0 %v3480
      %v3654 = vpop.f32.mrf.mxu0
      %v3655 = vadd.f32 0.0, %v3654
      %v3656 = vpop.f32.mrf.mxu0
      %v3657 = vadd.f32 0.0, %v3656
      %3658 = vdwg.mxu0
      %3659 = vmatpush.bf16.msra.mxu0 %v3240
      %3660 = vmatpush.bf16.msra.mxu0 %v3238
      %3661 = vmatpush.bf16.msra.mxu0 %v3236
      %3662 = vmatpush.bf16.msra.mxu0 %v3234
      %3663 = vmatpush.bf16.msra.mxu0 %v3232
      %3664 = vmatpush.bf16.msra.mxu0 %v3230
      %3665 = vmatpush.bf16.msra.mxu0 %v3228
      %3666 = vmatpush.bf16.msra.mxu0 %v3226
      %3667 = vmatmul.bf16.gmra.mxu0 %v3435
      %v3668 = vpop.f32.mrf.mxu0
      %v3669 = vadd.f32 %v3540, %v3668
      %v3670 = vpop.f32.mrf.mxu0
      %v3671 = vadd.f32 %v3542, %v3670
      %3672 = vmatmul.bf16.gmra.mxu0 %v3437
      %v3673 = vpop.f32.mrf.mxu0
      %v3674 = vadd.f32 %v3545, %v3673
      %v3675 = vpop.f32.mrf.mxu0
      %v3676 = vadd.f32 %v3547, %v3675
      %3677 = vmatmul.bf16.gmra.mxu0 %v3439
      %v3678 = vpop.f32.mrf.mxu0
      %v3679 = vadd.f32 %v3550, %v3678
      %v3680 = vpop.f32.mrf.mxu0
      %v3681 = vadd.f32 %v3552, %v3680
      %3682 = vmatmul.bf16.gmra.mxu0 %v3441
      %v3683 = vpop.f32.mrf.mxu0
      %v3684 = vadd.f32 %v3555, %v3683
      %v3685 = vpop.f32.mrf.mxu0
      %v3686 = vadd.f32 %v3557, %v3685
      %3687 = vmatmul.bf16.gmra.mxu0 %v3443
      %v3688 = vpop.f32.mrf.mxu0
      %v3689 = vadd.f32 %v3560, %v3688
      %v3690 = vpop.f32.mrf.mxu0
      %v3691 = vadd.f32 %v3562, %v3690
      %3692 = vmatmul.bf16.gmra.mxu0 %v3445
      %v3693 = vpop.f32.mrf.mxu0
      %v3694 = vadd.f32 %v3565, %v3693
      %v3695 = vpop.f32.mrf.mxu0
      %v3696 = vadd.f32 %v3567, %v3695
      %3697 = vmatmul.bf16.gmra.mxu0 %v3447
      %v3698 = vpop.f32.mrf.mxu0
      %v3699 = vadd.f32 %v3570, %v3698
      %v3700 = vpop.f32.mrf.mxu0
      %v3701 = vadd.f32 %v3572, %v3700
      %3702 = vmatmul.bf16.gmra.mxu0 %v3449
      %v3703 = vpop.f32.mrf.mxu0
      %v3704 = vadd.f32 %v3575, %v3703
      %v3705 = vpop.f32.mrf.mxu0
      %v3706 = vadd.f32 %v3577, %v3705
      %3707 = vmatmul.bf16.gmra.mxu0 %v3451
      %v3708 = vpop.f32.mrf.mxu0
      %v3709 = vadd.f32 %v3580, %v3708
      %v3710 = vpop.f32.mrf.mxu0
      %v3711 = vadd.f32 %v3582, %v3710
      %3712 = vmatmul.bf16.gmra.mxu0 %v3453
      %v3713 = vpop.f32.mrf.mxu0
      %v3714 = vadd.f32 %v3585, %v3713
      %v3715 = vpop.f32.mrf.mxu0
      %v3716 = vadd.f32 %v3587, %v3715
      %3717 = vmatmul.bf16.gmra.mxu0 %v3455
      %v3718 = vpop.f32.mrf.mxu0
      %v3719 = vadd.f32 %v3590, %v3718
      %v3720 = vpop.f32.mrf.mxu0
      %v3721 = vadd.f32 %v3592, %v3720
      %3722 = vmatmul.bf16.gmra.mxu0 %v3457
      %v3723 = vpop.f32.mrf.mxu0
      %v3724 = vadd.f32 %v3595, %v3723
      %v3725 = vpop.f32.mrf.mxu0
      %v3726 = vadd.f32 %v3597, %v3725
      %3727 = vmatmul.bf16.gmra.mxu0 %v3459
      %v3728 = vpop.f32.mrf.mxu0
      %v3729 = vadd.f32 %v3600, %v3728
      %v3730 = vpop.f32.mrf.mxu0
      %v3731 = vadd.f32 %v3602, %v3730
      %3732 = vmatmul.bf16.gmra.mxu0 %v3461
      %v3733 = vpop.f32.mrf.mxu0
      %v3734 = vadd.f32 %v3605, %v3733
      %v3735 = vpop.f32.mrf.mxu0
      %v3736 = vadd.f32 %v3607, %v3735
      %3737 = vmatmul.bf16.gmra.mxu0 %v3463
      %v3738 = vpop.f32.mrf.mxu0
      %v3739 = vadd.f32 %v3610, %v3738
      %v3740 = vpop.f32.mrf.mxu0
      %v3741 = vadd.f32 %v3612, %v3740
      %3742 = vmatmul.bf16.gmra.mxu0 %v3465
      %v3743 = vpop.f32.mrf.mxu0
      %v3744 = vadd.f32 %v3615, %v3743
      %v3745 = vpop.f32.mrf.mxu0
      %v3746 = vadd.f32 %v3617, %v3745
      %3747 = vmatmul.bf16.gmra.mxu0 %v3467
      %v3748 = vpop.f32.mrf.mxu0
      %v3749 = vadd.f32 %v3620, %v3748
      %v3750 = vpop.f32.mrf.mxu0
      %v3751 = vadd.f32 %v3622, %v3750
      %3752 = vmatmul.bf16.gmra.mxu0 %v3469
      %v3753 = vpop.f32.mrf.mxu0
      %v3754 = vadd.f32 %v3625, %v3753
      %v3755 = vpop.f32.mrf.mxu0
      %v3756 = vadd.f32 %v3627, %v3755
      %3757 = vmatmul.bf16.gmra.mxu0 %v3471
      %v3758 = vpop.f32.mrf.mxu0
      %v3759 = vadd.f32 %v3630, %v3758
      %v3760 = vpop.f32.mrf.mxu0
      %v3761 = vadd.f32 %v3632, %v3760
      %3762 = vmatmul.bf16.gmra.mxu0 %v3473
      %v3763 = vpop.f32.mrf.mxu0
      %v3764 = vadd.f32 %v3635, %v3763
      %v3765 = vpop.f32.mrf.mxu0
      %v3766 = vadd.f32 %v3637, %v3765
      %3767 = vmatmul.bf16.gmra.mxu0 %v3475
      %v3768 = vpop.f32.mrf.mxu0
      %v3769 = vadd.f32 %v3640, %v3768
      %v3770 = vpop.f32.mrf.mxu0
      %v3771 = vadd.f32 %v3642, %v3770
      %3772 = vmatmul.bf16.gmra.mxu0 %v3477
      %v3773 = vpop.f32.mrf.mxu0
      %v3774 = vadd.f32 %v3645, %v3773
      %v3775 = vpop.f32.mrf.mxu0
      %v3776 = vadd.f32 %v3647, %v3775
      %3777 = vmatmul.bf16.gmra.mxu0 %v3479
      %v3778 = vpop.f32.mrf.mxu0
      %v3779 = vadd.f32 %v3650, %v3778
      %v3780 = vpop.f32.mrf.mxu0
      %v3781 = vadd.f32 %v3652, %v3780
      %3782 = vmatmul.bf16.gmra.mxu0 %v3481
      %v3783 = vpop.f32.mrf.mxu0
      %v3784 = vadd.f32 %v3655, %v3783
      %v3785 = vpop.f32.mrf.mxu0
      %v3786 = vadd.f32 %v3657, %v3785
      %3787 = vdwg.mxu0
      %3788 = vmatpush.bf16.msra.mxu0 %v3225
      %3789 = vmatpush.bf16.msra.mxu0 %v3223
      %3790 = vmatpush.bf16.msra.mxu0 %v3221
      %3791 = vmatpush.bf16.msra.mxu0 %v3219
      %3792 = vmatpush.bf16.msra.mxu0 %v3217
      %3793 = vmatpush.bf16.msra.mxu0 %v3215
      %3794 = vmatpush.bf16.msra.mxu0 %v3213
      %3795 = vmatpush.bf16.msra.mxu0 %v3211
      %3796 = vmatmul.bf16.gmra.mxu0 %v3434
      %v3797 = vpop.f32.mrf.mxu0
      %v3798 = vadd.f32 0.0, %v3797
      %v3799 = vpop.f32.mrf.mxu0
      %v3800 = vadd.f32 0.0, %v3799
      %3801 = vmatmul.bf16.gmra.mxu0 %v3436
      %v3802 = vpop.f32.mrf.mxu0
      %v3803 = vadd.f32 0.0, %v3802
      %v3804 = vpop.f32.mrf.mxu0
      %v3805 = vadd.f32 0.0, %v3804
      %3806 = vmatmul.bf16.gmra.mxu0 %v3438
      %v3807 = vpop.f32.mrf.mxu0
      %v3808 = vadd.f32 0.0, %v3807
      %v3809 = vpop.f32.mrf.mxu0
      %v3810 = vadd.f32 0.0, %v3809
      %3811 = vmatmul.bf16.gmra.mxu0 %v3440
      %v3812 = vpop.f32.mrf.mxu0
      %v3813 = vadd.f32 0.0, %v3812
      %v3814 = vpop.f32.mrf.mxu0
      %v3815 = vadd.f32 0.0, %v3814
      %3816 = vmatmul.bf16.gmra.mxu0 %v3442
      %v3817 = vpop.f32.mrf.mxu0
      %v3818 = vadd.f32 0.0, %v3817
      %v3819 = vpop.f32.mrf.mxu0
      %v3820 = vadd.f32 0.0, %v3819
      %3821 = vmatmul.bf16.gmra.mxu0 %v3444
      %v3822 = vpop.f32.mrf.mxu0
      %v3823 = vadd.f32 0.0, %v3822
      %v3824 = vpop.f32.mrf.mxu0
      %v3825 = vadd.f32 0.0, %v3824
      %3826 = vmatmul.bf16.gmra.mxu0 %v3446
      %v3827 = vpop.f32.mrf.mxu0
      %v3828 = vadd.f32 0.0, %v3827
      %v3829 = vpop.f32.mrf.mxu0
      %v3830 = vadd.f32 0.0, %v3829
      %3831 = vmatmul.bf16.gmra.mxu0 %v3448
      %v3832 = vpop.f32.mrf.mxu0
      %v3833 = vadd.f32 0.0, %v3832
      %v3834 = vpop.f32.mrf.mxu0
      %v3835 = vadd.f32 0.0, %v3834
      %3836 = vmatmul.bf16.gmra.mxu0 %v3450
      %v3837 = vpop.f32.mrf.mxu0
      %v3838 = vadd.f32 0.0, %v3837
      %v3839 = vpop.f32.mrf.mxu0
      %v3840 = vadd.f32 0.0, %v3839
      %3841 = vmatmul.bf16.gmra.mxu0 %v3452
      %v3842 = vpop.f32.mrf.mxu0
      %v3843 = vadd.f32 0.0, %v3842
      %v3844 = vpop.f32.mrf.mxu0
      %v3845 = vadd.f32 0.0, %v3844
      %3846 = vmatmul.bf16.gmra.mxu0 %v3454
      %v3847 = vpop.f32.mrf.mxu0
      %v3848 = vadd.f32 0.0, %v3847
      %v3849 = vpop.f32.mrf.mxu0
      %v3850 = vadd.f32 0.0, %v3849
      %3851 = vmatmul.bf16.gmra.mxu0 %v3456
      %v3852 = vpop.f32.mrf.mxu0
      %v3853 = vadd.f32 0.0, %v3852
      %v3854 = vpop.f32.mrf.mxu0
      %v3855 = vadd.f32 0.0, %v3854
      %3856 = vmatmul.bf16.gmra.mxu0 %v3458
      %v3857 = vpop.f32.mrf.mxu0
      %v3858 = vadd.f32 0.0, %v3857
      %v3859 = vpop.f32.mrf.mxu0
      %v3860 = vadd.f32 0.0, %v3859
      %3861 = vmatmul.bf16.gmra.mxu0 %v3460
      %v3862 = vpop.f32.mrf.mxu0
      %v3863 = vadd.f32 0.0, %v3862
      %v3864 = vpop.f32.mrf.mxu0
      %v3865 = vadd.f32 0.0, %v3864
      %3866 = vmatmul.bf16.gmra.mxu0 %v3462
      %v3867 = vpop.f32.mrf.mxu0
      %v3868 = vadd.f32 0.0, %v3867
      %v3869 = vpop.f32.mrf.mxu0
      %v3870 = vadd.f32 0.0, %v3869
      %3871 = vmatmul.bf16.gmra.mxu0 %v3464
      %v3872 = vpop.f32.mrf.mxu0
      %v3873 = vadd.f32 0.0, %v3872
      %v3874 = vpop.f32.mrf.mxu0
      %v3875 = vadd.f32 0.0, %v3874
      %3876 = vmatmul.bf16.gmra.mxu0 %v3466
      %v3877 = vpop.f32.mrf.mxu0
      %v3878 = vadd.f32 0.0, %v3877
      %v3879 = vpop.f32.mrf.mxu0
      %v3880 = vadd.f32 0.0, %v3879
      %3881 = vmatmul.bf16.gmra.mxu0 %v3468
      %v3882 = vpop.f32.mrf.mxu0
      %v3883 = vadd.f32 0.0, %v3882
      %v3884 = vpop.f32.mrf.mxu0
      %v3885 = vadd.f32 0.0, %v3884
      %3886 = vmatmul.bf16.gmra.mxu0 %v3470
      %v3887 = vpop.f32.mrf.mxu0
      %v3888 = vadd.f32 0.0, %v3887
      %v3889 = vpop.f32.mrf.mxu0
      %v3890 = vadd.f32 0.0, %v3889
      %3891 = vmatmul.bf16.gmra.mxu0 %v3472
      %v3892 = vpop.f32.mrf.mxu0
      %v3893 = vadd.f32 0.0, %v3892
      %v3894 = vpop.f32.mrf.mxu0
      %v3895 = vadd.f32 0.0, %v3894
      %3896 = vmatmul.bf16.gmra.mxu0 %v3474
      %v3897 = vpop.f32.mrf.mxu0
      %v3898 = vadd.f32 0.0, %v3897
      %v3899 = vpop.f32.mrf.mxu0
      %v3900 = vadd.f32 0.0, %v3899
      %3901 = vmatmul.bf16.gmra.mxu0 %v3476
      %v3902 = vpop.f32.mrf.mxu0
      %v3903 = vadd.f32 0.0, %v3902
      %v3904 = vpop.f32.mrf.mxu0
      %v3905 = vadd.f32 0.0, %v3904
      %3906 = vmatmul.bf16.gmra.mxu0 %v3478
      %v3907 = vpop.f32.mrf.mxu0
      %v3908 = vadd.f32 0.0, %v3907
      %v3909 = vpop.f32.mrf.mxu0
      %v3910 = vadd.f32 0.0, %v3909
      %3911 = vmatmul.bf16.gmra.mxu0 %v3480
      %v3912 = vpop.f32.mrf.mxu0
      %v3913 = vadd.f32 0.0, %v3912
      %v3914 = vpop.f32.mrf.mxu0
      %v3915 = vadd.f32 0.0, %v3914
      %3916 = vdwg.mxu0
      %3917 = vmatpush.bf16.msra.mxu0 %v3241
      %3918 = vmatpush.bf16.msra.mxu0 %v3239
      %3919 = vmatpush.bf16.msra.mxu0 %v3237
      %3920 = vmatpush.bf16.msra.mxu0 %v3235
      %3921 = vmatpush.bf16.msra.mxu0 %v3233
      %3922 = vmatpush.bf16.msra.mxu0 %v3231
      %3923 = vmatpush.bf16.msra.mxu0 %v3229
      %3924 = vmatpush.bf16.msra.mxu0 %v3227
      %3925 = vmatmul.bf16.gmra.mxu0 %v3435
      %v3926 = vpop.f32.mrf.mxu0
      %v3927 = vadd.f32 %v3798, %v3926
      %v3928 = vpop.f32.mrf.mxu0
      %v3929 = vadd.f32 %v3800, %v3928
      %3930 = vmatmul.bf16.gmra.mxu0 %v3437
      %v3931 = vpop.f32.mrf.mxu0
      %v3932 = vadd.f32 %v3803, %v3931
      %v3933 = vpop.f32.mrf.mxu0
      %v3934 = vadd.f32 %v3805, %v3933
      %3935 = vmatmul.bf16.gmra.mxu0 %v3439
      %v3936 = vpop.f32.mrf.mxu0
      %v3937 = vadd.f32 %v3808, %v3936
      %v3938 = vpop.f32.mrf.mxu0
      %v3939 = vadd.f32 %v3810, %v3938
      %3940 = vmatmul.bf16.gmra.mxu0 %v3441
      %v3941 = vpop.f32.mrf.mxu0
      %v3942 = vadd.f32 %v3813, %v3941
      %v3943 = vpop.f32.mrf.mxu0
      %v3944 = vadd.f32 %v3815, %v3943
      %3945 = vmatmul.bf16.gmra.mxu0 %v3443
      %v3946 = vpop.f32.mrf.mxu0
      %v3947 = vadd.f32 %v3818, %v3946
      %v3948 = vpop.f32.mrf.mxu0
      %v3949 = vadd.f32 %v3820, %v3948
      %3950 = vmatmul.bf16.gmra.mxu0 %v3445
      %v3951 = vpop.f32.mrf.mxu0
      %v3952 = vadd.f32 %v3823, %v3951
      %v3953 = vpop.f32.mrf.mxu0
      %v3954 = vadd.f32 %v3825, %v3953
      %3955 = vmatmul.bf16.gmra.mxu0 %v3447
      %v3956 = vpop.f32.mrf.mxu0
      %v3957 = vadd.f32 %v3828, %v3956
      %v3958 = vpop.f32.mrf.mxu0
      %v3959 = vadd.f32 %v3830, %v3958
      %3960 = vmatmul.bf16.gmra.mxu0 %v3449
      %v3961 = vpop.f32.mrf.mxu0
      %v3962 = vadd.f32 %v3833, %v3961
      %v3963 = vpop.f32.mrf.mxu0
      %v3964 = vadd.f32 %v3835, %v3963
      %3965 = vmatmul.bf16.gmra.mxu0 %v3451
      %v3966 = vpop.f32.mrf.mxu0
      %v3967 = vadd.f32 %v3838, %v3966
      %v3968 = vpop.f32.mrf.mxu0
      %v3969 = vadd.f32 %v3840, %v3968
      %3970 = vmatmul.bf16.gmra.mxu0 %v3453
      %v3971 = vpop.f32.mrf.mxu0
      %v3972 = vadd.f32 %v3843, %v3971
      %v3973 = vpop.f32.mrf.mxu0
      %v3974 = vadd.f32 %v3845, %v3973
      %3975 = vmatmul.bf16.gmra.mxu0 %v3455
      %v3976 = vpop.f32.mrf.mxu0
      %v3977 = vadd.f32 %v3848, %v3976
      %v3978 = vpop.f32.mrf.mxu0
      %v3979 = vadd.f32 %v3850, %v3978
      %3980 = vmatmul.bf16.gmra.mxu0 %v3457
      %v3981 = vpop.f32.mrf.mxu0
      %v3982 = vadd.f32 %v3853, %v3981
      %v3983 = vpop.f32.mrf.mxu0
      %v3984 = vadd.f32 %v3855, %v3983
      %3985 = vmatmul.bf16.gmra.mxu0 %v3459
      %v3986 = vpop.f32.mrf.mxu0
      %v3987 = vadd.f32 %v3858, %v3986
      %v3988 = vpop.f32.mrf.mxu0
      %v3989 = vadd.f32 %v3860, %v3988
      %3990 = vmatmul.bf16.gmra.mxu0 %v3461
      %v3991 = vpop.f32.mrf.mxu0
      %v3992 = vadd.f32 %v3863, %v3991
      %v3993 = vpop.f32.mrf.mxu0
      %v3994 = vadd.f32 %v3865, %v3993
      %3995 = vmatmul.bf16.gmra.mxu0 %v3463
      %v3996 = vpop.f32.mrf.mxu0
      %v3997 = vadd.f32 %v3868, %v3996
      %v3998 = vpop.f32.mrf.mxu0
      %v3999 = vadd.f32 %v3870, %v3998
      %4000 = vmatmul.bf16.gmra.mxu0 %v3465
      %v4001 = vpop.f32.mrf.mxu0
      %v4002 = vadd.f32 %v3873, %v4001
      %v4003 = vpop.f32.mrf.mxu0
      %v4004 = vadd.f32 %v3875, %v4003
      %4005 = vmatmul.bf16.gmra.mxu0 %v3467
      %v4006 = vpop.f32.mrf.mxu0
      %v4007 = vadd.f32 %v3878, %v4006
      %v4008 = vpop.f32.mrf.mxu0
      %v4009 = vadd.f32 %v3880, %v4008
      %4010 = vmatmul.bf16.gmra.mxu0 %v3469
      %v4011 = vpop.f32.mrf.mxu0
      %v4012 = vadd.f32 %v3883, %v4011
      %v4013 = vpop.f32.mrf.mxu0
      %v4014 = vadd.f32 %v3885, %v4013
      %4015 = vmatmul.bf16.gmra.mxu0 %v3471
      %v4016 = vpop.f32.mrf.mxu0
      %v4017 = vadd.f32 %v3888, %v4016
      %v4018 = vpop.f32.mrf.mxu0
      %v4019 = vadd.f32 %v3890, %v4018
      %4020 = vmatmul.bf16.gmra.mxu0 %v3473
      %v4021 = vpop.f32.mrf.mxu0
      %v4022 = vadd.f32 %v3893, %v4021
      %v4023 = vpop.f32.mrf.mxu0
      %v4024 = vadd.f32 %v3895, %v4023
      %4025 = vmatmul.bf16.gmra.mxu0 %v3475
      %v4026 = vpop.f32.mrf.mxu0
      %v4027 = vadd.f32 %v3898, %v4026
      %v4028 = vpop.f32.mrf.mxu0
      %v4029 = vadd.f32 %v3900, %v4028
      %4030 = vmatmul.bf16.gmra.mxu0 %v3477
      %v4031 = vpop.f32.mrf.mxu0
      %v4032 = vadd.f32 %v3903, %v4031
      %v4033 = vpop.f32.mrf.mxu0
      %v4034 = vadd.f32 %v3905, %v4033
      %4035 = vmatmul.bf16.gmra.mxu0 %v3479
      %v4036 = vpop.f32.mrf.mxu0
      %v4037 = vadd.f32 %v3908, %v4036
      %v4038 = vpop.f32.mrf.mxu0
      %v4039 = vadd.f32 %v3910, %v4038
      %4040 = vmatmul.bf16.gmra.mxu0 %v3481
      %v4041 = vpop.f32.mrf.mxu0
      %v4042 = vadd.f32 %v3913, %v4041
      %v4043 = vpop.f32.mrf.mxu0
      %v4044 = vadd.f32 %v3915, %v4043
      %4045 = vdwg.mxu0
      %v4046 = vpack.c.bf16 %v3927, %v3669
      %v4047 = vpack.c.bf16 %v3929, %v3671
      %v4048 = vpack.c.bf16 %v3932, %v3674
      %v4049 = vpack.c.bf16 %v3934, %v3676
      %v4050 = vpack.c.bf16 %v3937, %v3679
      %v4051 = vpack.c.bf16 %v3939, %v3681
      %v4052 = vpack.c.bf16 %v3942, %v3684
      %v4053 = vpack.c.bf16 %v3944, %v3686
      %v4054 = vpack.c.bf16 %v3947, %v3689
      %v4055 = vpack.c.bf16 %v3949, %v3691
      %v4056 = vpack.c.bf16 %v3952, %v3694
      %v4057 = vpack.c.bf16 %v3954, %v3696
      %v4058 = vpack.c.bf16 %v3957, %v3699
      %v4059 = vpack.c.bf16 %v3959, %v3701
      %v4060 = vpack.c.bf16 %v3962, %v3704
      %v4061 = vpack.c.bf16 %v3964, %v3706
      %v4062 = vpack.c.bf16 %v3967, %v3709
      %v4063 = vpack.c.bf16 %v3969, %v3711
      %v4064 = vpack.c.bf16 %v3972, %v3714
      %v4065 = vpack.c.bf16 %v3974, %v3716
      %v4066 = vpack.c.bf16 %v3977, %v3719
      %v4067 = vpack.c.bf16 %v3979, %v3721
      %v4068 = vpack.c.bf16 %v3982, %v3724
      %v4069 = vpack.c.bf16 %v3984, %v3726
      %v4070 = vpack.c.bf16 %v3987, %v3729
      %v4071 = vpack.c.bf16 %v3989, %v3731
      %v4072 = vpack.c.bf16 %v3992, %v3734
      %v4073 = vpack.c.bf16 %v3994, %v3736
      %v4074 = vpack.c.bf16 %v3997, %v3739
      %v4075 = vpack.c.bf16 %v3999, %v3741
      %v4076 = vpack.c.bf16 %v4002, %v3744
      %v4077 = vpack.c.bf16 %v4004, %v3746
      %v4078 = vpack.c.bf16 %v4007, %v3749
      %v4079 = vpack.c.bf16 %v4009, %v3751
      %v4080 = vpack.c.bf16 %v4012, %v3754
      %v4081 = vpack.c.bf16 %v4014, %v3756
      %v4082 = vpack.c.bf16 %v4017, %v3759
      %v4083 = vpack.c.bf16 %v4019, %v3761
      %v4084 = vpack.c.bf16 %v4022, %v3764
      %v4085 = vpack.c.bf16 %v4024, %v3766
      %v4086 = vpack.c.bf16 %v4027, %v3769
      %v4087 = vpack.c.bf16 %v4029, %v3771
      %v4088 = vpack.c.bf16 %v4032, %v3774
      %v4089 = vpack.c.bf16 %v4034, %v3776
      %v4090 = vpack.c.bf16 %v4037, %v3779
      %v4091 = vpack.c.bf16 %v4039, %v3781
      %v4092 = vpack.c.bf16 %v4042, %v3784
      %v4093 = vpack.c.bf16 %v4044, %v3786
      %4094 = vst [vmem:[#allocation3] sm:$0xff] %v4046
      %4095 = vst [vmem:[#allocation3 + $0x18] sm:$0xff] %v4047
      %4096 = vst [vmem:[#allocation3 + $0x30] sm:$0xff] %v4048
      %4097 = vst [vmem:[#allocation3 + $0x48] sm:$0xff] %v4049
      %4098 = vst [vmem:[#allocation3 + $0x60] sm:$0xff] %v4050
      %4099 = vst [vmem:[#allocation3 + $0x78] sm:$0xff] %v4051
      %4100 = vst [vmem:[#allocation3 + $0x90] sm:$0xff] %v4052
      %4101 = vst [vmem:[#allocation3 + $0xa8] sm:$0xff] %v4053
      %4102 = vst [vmem:[#allocation3 + $0xc0] sm:$0xff] %v4054
      %4103 = vst [vmem:[#allocation3 + $0xd8] sm:$0xff] %v4055
      %4104 = vst [vmem:[#allocation3 + $0xf0] sm:$0xff] %v4056
      %4105 = vst [vmem:[#allocation3 + $0x108] sm:$0xff] %v4057
      %4106 = vst [vmem:[#allocation3 + $0x120] sm:$0xff] %v4058
      %4107 = vst [vmem:[#allocation3 + $0x138] sm:$0xff] %v4059
      %4108 = vst [vmem:[#allocation3 + $0x150] sm:$0xff] %v4060
      %4109 = vst [vmem:[#allocation3 + $0x168] sm:$0xff] %v4061
      %4110 = vst [vmem:[#allocation3 + $0x8] sm:$0xff] %v4062
      %4111 = vst [vmem:[#allocation3 + $0x20] sm:$0xff] %v4063
      %4112 = vst [vmem:[#allocation3 + $0x38] sm:$0xff] %v4064
      %4113 = vst [vmem:[#allocation3 + $0x50] sm:$0xff] %v4065
      %4114 = vst [vmem:[#allocation3 + $0x68] sm:$0xff] %v4066
      %4115 = vst [vmem:[#allocation3 + $0x80] sm:$0xff] %v4067
      %4116 = vst [vmem:[#allocation3 + $0x98] sm:$0xff] %v4068
      %4117 = vst [vmem:[#allocation3 + $0xb0] sm:$0xff] %v4069
      %4118 = vst [vmem:[#allocation3 + $0xc8] sm:$0xff] %v4070
      %4119 = vst [vmem:[#allocation3 + $0xe0] sm:$0xff] %v4071
      %4120 = vst [vmem:[#allocation3 + $0xf8] sm:$0xff] %v4072
      %4121 = vst [vmem:[#allocation3 + $0x110] sm:$0xff] %v4073
      %4122 = vst [vmem:[#allocation3 + $0x128] sm:$0xff] %v4074
      %4123 = vst [vmem:[#allocation3 + $0x140] sm:$0xff] %v4075
      %4124 = vst [vmem:[#allocation3 + $0x158] sm:$0xff] %v4076
      %4125 = vst [vmem:[#allocation3 + $0x170] sm:$0xff] %v4077
      %4126 = vst [vmem:[#allocation3 + $0x10] sm:$0xff] %v4078
      %4127 = vst [vmem:[#allocation3 + $0x28] sm:$0xff] %v4079
      %4128 = vst [vmem:[#allocation3 + $0x40] sm:$0xff] %v4080
      %4129 = vst [vmem:[#allocation3 + $0x58] sm:$0xff] %v4081
      %4130 = vst [vmem:[#allocation3 + $0x70] sm:$0xff] %v4082
      %4131 = vst [vmem:[#allocation3 + $0x88] sm:$0xff] %v4083
      %4132 = vst [vmem:[#allocation3 + $0xa0] sm:$0xff] %v4084
      %4133 = vst [vmem:[#allocation3 + $0xb8] sm:$0xff] %v4085
      %4134 = vst [vmem:[#allocation3 + $0xd0] sm:$0xff] %v4086
      %4135 = vst [vmem:[#allocation3 + $0xe8] sm:$0xff] %v4087
      %4136 = vst [vmem:[#allocation3 + $0x100] sm:$0xff] %v4088
      %4137 = vst [vmem:[#allocation3 + $0x118] sm:$0xff] %v4089
      %4138 = vst [vmem:[#allocation3 + $0x130] sm:$0xff] %v4090
      %4139 = vst [vmem:[#allocation3 + $0x148] sm:$0xff] %v4091
      %4140 = vst [vmem:[#allocation3 + $0x160] sm:$0xff] %v4092
      %4141 = vst [vmem:[#allocation3 + $0x178] sm:$0xff] %v4093
      %v4142 = vld [vmem:[#allocation3] sm:$0xff]
      %v4143 = vld [vmem:[#allocation3 + $0x8] sm:$0xff]
      %v4144 = vld [vmem:[#allocation3 + $0x10] sm:$0xff]
      %v4145 = vld [vmem:[#allocation3 + $0x18] sm:$0xff]
      %v4146 = vld [vmem:[#allocation3 + $0x20] sm:$0xff]
      %v4147 = vld [vmem:[#allocation3 + $0x28] sm:$0xff]
      %v4148 = vld [vmem:[#allocation3 + $0x30] sm:$0xff]
      %v4149 = vld [vmem:[#allocation3 + $0x38] sm:$0xff]
      %v4150 = vld [vmem:[#allocation3 + $0x40] sm:$0xff]
      %v4151 = vld [vmem:[#allocation3 + $0x48] sm:$0xff]
      %v4152 = vld [vmem:[#allocation3 + $0x50] sm:$0xff]
      %v4153 = vld [vmem:[#allocation3 + $0x58] sm:$0xff]
      %v4154 = vld [vmem:[#allocation3 + $0x60] sm:$0xff]
      %v4155 = vld [vmem:[#allocation3 + $0x68] sm:$0xff]
      %v4156 = vld [vmem:[#allocation3 + $0x70] sm:$0xff]
      %v4157 = vld [vmem:[#allocation3 + $0x78] sm:$0xff]
      %v4158 = vld [vmem:[#allocation3 + $0x80] sm:$0xff]
      %v4159 = vld [vmem:[#allocation3 + $0x88] sm:$0xff]
      %v4160 = vld [vmem:[#allocation3 + $0x90] sm:$0xff]
      %v4161 = vld [vmem:[#allocation3 + $0x98] sm:$0xff]
      %v4162 = vld [vmem:[#allocation3 + $0xa0] sm:$0xff]
      %v4163 = vld [vmem:[#allocation3 + $0xa8] sm:$0xff]
      %v4164 = vld [vmem:[#allocation3 + $0xb0] sm:$0xff]
      %v4165 = vld [vmem:[#allocation3 + $0xb8] sm:$0xff]
      %v4166 = vld [vmem:[#allocation3 + $0xc0] sm:$0xff]
      %v4167 = vld [vmem:[#allocation3 + $0xc8] sm:$0xff]
      %v4168 = vld [vmem:[#allocation3 + $0xd0] sm:$0xff]
      %v4169 = vld [vmem:[#allocation3 + $0xd8] sm:$0xff]
      %v4170 = vld [vmem:[#allocation3 + $0xe0] sm:$0xff]
      %v4171 = vld [vmem:[#allocation3 + $0xe8] sm:$0xff]
      %v4172 = vld [vmem:[#allocation3 + $0xf0] sm:$0xff]
      %v4173 = vld [vmem:[#allocation3 + $0xf8] sm:$0xff]
      %v4174 = vld [vmem:[#allocation3 + $0x100] sm:$0xff]
      %v4175 = vld [vmem:[#allocation3 + $0x108] sm:$0xff]
      %v4176 = vld [vmem:[#allocation3 + $0x110] sm:$0xff]
      %v4177 = vld [vmem:[#allocation3 + $0x118] sm:$0xff]
      %v4178 = vld [vmem:[#allocation3 + $0x120] sm:$0xff]
      %v4179 = vld [vmem:[#allocation3 + $0x128] sm:$0xff]
      %v4180 = vld [vmem:[#allocation3 + $0x130] sm:$0xff]
      %v4181 = vld [vmem:[#allocation3 + $0x138] sm:$0xff]
      %v4182 = vld [vmem:[#allocation3 + $0x140] sm:$0xff]
      %v4183 = vld [vmem:[#allocation3 + $0x148] sm:$0xff]
      %v4184 = vld [vmem:[#allocation3 + $0x150] sm:$0xff]
      %v4185 = vld [vmem:[#allocation3 + $0x158] sm:$0xff]
      %v4186 = vld [vmem:[#allocation3 + $0x160] sm:$0xff]
      %v4187 = vld [vmem:[#allocation3 + $0x168] sm:$0xff]
      %v4188 = vld [vmem:[#allocation3 + $0x170] sm:$0xff]
      %v4189 = vld [vmem:[#allocation3 + $0x178] sm:$0xff]
      %v4190 = vld [vmem:[%s2] sm:$0xff]
      %v4191 = vld [vmem:[%s2 + $0x8] sm:$0xff]
      %v4192 = vld [vmem:[%s2 + $0x10] sm:$0xff]
      %v4193 = vld [vmem:[%s2 + $0x18] sm:$0xff]
      %v4194 = vld [vmem:[%s2 + $0x20] sm:$0xff]
      %v4195 = vld [vmem:[%s2 + $0x28] sm:$0xff]
      %v4196 = vld [vmem:[%s2 + $0x30] sm:$0xff]
      %v4197 = vld [vmem:[%s2 + $0x38] sm:$0xff]
      %v4198 = vld [vmem:[%s2 + $0x40] sm:$0xff]
      %v4199 = vld [vmem:[%s2 + $0x48] sm:$0xff]
      %v4200 = vld [vmem:[%s2 + $0x50] sm:$0xff]
      %v4201 = vld [vmem:[%s2 + $0x58] sm:$0xff]
      %v4202 = vld [vmem:[%s2 + $0x60] sm:$0xff]
      %v4203 = vld [vmem:[%s2 + $0x68] sm:$0xff]
      %v4204 = vld [vmem:[%s2 + $0x70] sm:$0xff]
      %v4205 = vld [vmem:[%s2 + $0x78] sm:$0xff]
      %v4206 = vld [vmem:[%s2 + $0x80] sm:$0xff]
      %v4207 = vld [vmem:[%s2 + $0x88] sm:$0xff]
      %v4208 = vld [vmem:[%s2 + $0x90] sm:$0xff]
      %v4209 = vld [vmem:[%s2 + $0x98] sm:$0xff]
      %v4210 = vld [vmem:[%s2 + $0xa0] sm:$0xff]
      %v4211 = vld [vmem:[%s2 + $0xa8] sm:$0xff]
      %v4212 = vld [vmem:[%s2 + $0xb0] sm:$0xff]
      %v4213 = vld [vmem:[%s2 + $0xb8] sm:$0xff]
      %v4214 = vld [vmem:[%s2 + $0xc0] sm:$0xff]
      %v4215 = vld [vmem:[%s2 + $0xc8] sm:$0xff]
      %v4216 = vld [vmem:[%s2 + $0xd0] sm:$0xff]
      %v4217 = vld [vmem:[%s2 + $0xd8] sm:$0xff]
      %v4218 = vld [vmem:[%s2 + $0xe0] sm:$0xff]
      %v4219 = vld [vmem:[%s2 + $0xe8] sm:$0xff]
      %v4220 = vld [vmem:[%s2 + $0xf0] sm:$0xff]
      %v4221 = vld [vmem:[%s2 + $0xf8] sm:$0xff]
      %v4222 = vld [vmem:[%s2 + $0x100] sm:$0xff]
      %v4223 = vld [vmem:[%s2 + $0x108] sm:$0xff]
      %v4224 = vld [vmem:[%s2 + $0x110] sm:$0xff]
      %v4225 = vld [vmem:[%s2 + $0x118] sm:$0xff]
      %v4226 = vld [vmem:[%s2 + $0x120] sm:$0xff]
      %v4227 = vld [vmem:[%s2 + $0x128] sm:$0xff]
      %v4228 = vld [vmem:[%s2 + $0x130] sm:$0xff]
      %v4229 = vld [vmem:[%s2 + $0x138] sm:$0xff]
      %v4230 = vld [vmem:[%s2 + $0x140] sm:$0xff]
      %v4231 = vld [vmem:[%s2 + $0x148] sm:$0xff]
      %v4232 = vld [vmem:[%s2 + $0x150] sm:$0xff]
      %v4233 = vld [vmem:[%s2 + $0x158] sm:$0xff]
      %v4234 = vld [vmem:[%s2 + $0x160] sm:$0xff]
      %v4235 = vld [vmem:[%s2 + $0x168] sm:$0xff]
      %v4236 = vld [vmem:[%s2 + $0x170] sm:$0xff]
      %v4237 = vld [vmem:[%s2 + $0x178] sm:$0xff]
      %v4238 = vld [vmem:[%s2 + $0x180] sm:$0xff]
      %v4239 = vld [vmem:[%s2 + $0x188] sm:$0xff]
      %v4240 = vld [vmem:[%s2 + $0x190] sm:$0xff]
      %v4241 = vld [vmem:[%s2 + $0x198] sm:$0xff]
      %v4242 = vld [vmem:[%s2 + $0x1a0] sm:$0xff]
      %v4243 = vld [vmem:[%s2 + $0x1a8] sm:$0xff]
      %v4244 = vld [vmem:[%s2 + $0x1b0] sm:$0xff]
      %v4245 = vld [vmem:[%s2 + $0x1b8] sm:$0xff]
      %v4246 = vld [vmem:[%s2 + $0x1c0] sm:$0xff]
      %v4247 = vld [vmem:[%s2 + $0x1c8] sm:$0xff]
      %v4248 = vld [vmem:[%s2 + $0x1d0] sm:$0xff]
      %v4249 = vld [vmem:[%s2 + $0x1d8] sm:$0xff]
      %v4250 = vld [vmem:[%s2 + $0x1e0] sm:$0xff]
      %v4251 = vld [vmem:[%s2 + $0x1e8] sm:$0xff]
      %v4252 = vld [vmem:[%s2 + $0x1f0] sm:$0xff]
      %v4253 = vld [vmem:[%s2 + $0x1f8] sm:$0xff]
      %v4254 = vld [vmem:[%s2 + $0x200] sm:$0xff]
      %v4255 = vld [vmem:[%s2 + $0x208] sm:$0xff]
      %v4256 = vld [vmem:[%s2 + $0x210] sm:$0xff]
      %v4257 = vld [vmem:[%s2 + $0x218] sm:$0xff]
      %v4258 = vld [vmem:[%s2 + $0x220] sm:$0xff]
      %v4259 = vld [vmem:[%s2 + $0x228] sm:$0xff]
      %v4260 = vld [vmem:[%s2 + $0x230] sm:$0xff]
      %v4261 = vld [vmem:[%s2 + $0x238] sm:$0xff]
      %v4262 = vld [vmem:[%s2 + $0x240] sm:$0xff]
      %v4263 = vld [vmem:[%s2 + $0x248] sm:$0xff]
      %v4264 = vld [vmem:[%s2 + $0x250] sm:$0xff]
      %v4265 = vld [vmem:[%s2 + $0x258] sm:$0xff]
      %v4266 = vld [vmem:[%s2 + $0x260] sm:$0xff]
      %v4267 = vld [vmem:[%s2 + $0x268] sm:$0xff]
      %v4268 = vld [vmem:[%s2 + $0x270] sm:$0xff]
      %v4269 = vld [vmem:[%s2 + $0x278] sm:$0xff]
      %v4270 = vld [vmem:[%s2 + $0x280] sm:$0xff]
      %v4271 = vld [vmem:[%s2 + $0x288] sm:$0xff]
      %v4272 = vld [vmem:[%s2 + $0x290] sm:$0xff]
      %v4273 = vld [vmem:[%s2 + $0x298] sm:$0xff]
      %v4274 = vld [vmem:[%s2 + $0x2a0] sm:$0xff]
      %v4275 = vld [vmem:[%s2 + $0x2a8] sm:$0xff]
      %v4276 = vld [vmem:[%s2 + $0x2b0] sm:$0xff]
      %v4277 = vld [vmem:[%s2 + $0x2b8] sm:$0xff]
      %v4278 = vld [vmem:[%s2 + $0x2c0] sm:$0xff]
      %v4279 = vld [vmem:[%s2 + $0x2c8] sm:$0xff]
      %v4280 = vld [vmem:[%s2 + $0x2d0] sm:$0xff]
      %v4281 = vld [vmem:[%s2 + $0x2d8] sm:$0xff]
      %v4282 = vld [vmem:[%s2 + $0x2e0] sm:$0xff]
      %v4283 = vld [vmem:[%s2 + $0x2e8] sm:$0xff]
      %v4284 = vld [vmem:[%s2 + $0x2f0] sm:$0xff]
      %v4285 = vld [vmem:[%s2 + $0x2f8] sm:$0xff]
      %v4286 = vld [vmem:[%s7] sm:$0x3]
      %v4288 = vperm.slane %v4286, 0
      %v4289 = vperm.slane %v4286, 1
      %v4340 = vunpack.c.l.b16 %v4142
      %v4341 = vunpack.c.h.b16 %v4142
      %v4342 = vunpack.c.l.b16 %v4143
      %v4343 = vunpack.c.h.b16 %v4143
      %v4344 = vunpack.c.l.b16 %v4144
      %v4345 = vunpack.c.h.b16 %v4144
      %v4346 = vunpack.c.l.b16 %v4145
      %v4347 = vunpack.c.h.b16 %v4145
      %v4348 = vunpack.c.l.b16 %v4146
      %v4349 = vunpack.c.h.b16 %v4146
      %v4350 = vunpack.c.l.b16 %v4147
      %v4351 = vunpack.c.h.b16 %v4147
      %v4352 = vunpack.c.l.b16 %v4148
      %v4353 = vunpack.c.h.b16 %v4148
      %v4354 = vunpack.c.l.b16 %v4149
      %v4355 = vunpack.c.h.b16 %v4149
      %v4356 = vunpack.c.l.b16 %v4150
      %v4357 = vunpack.c.h.b16 %v4150
      %v4358 = vunpack.c.l.b16 %v4151
      %v4359 = vunpack.c.h.b16 %v4151
      %v4360 = vunpack.c.l.b16 %v4152
      %v4361 = vunpack.c.h.b16 %v4152
      %v4362 = vunpack.c.l.b16 %v4153
      %v4363 = vunpack.c.h.b16 %v4153
      %v4364 = vunpack.c.l.b16 %v4154
      %v4365 = vunpack.c.h.b16 %v4154
      %v4366 = vunpack.c.l.b16 %v4155
      %v4367 = vunpack.c.h.b16 %v4155
      %v4368 = vunpack.c.l.b16 %v4156
      %v4369 = vunpack.c.h.b16 %v4156
      %v4370 = vunpack.c.l.b16 %v4157
      %v4371 = vunpack.c.h.b16 %v4157
      %v4372 = vunpack.c.l.b16 %v4158
      %v4373 = vunpack.c.h.b16 %v4158
      %v4374 = vunpack.c.l.b16 %v4159
      %v4375 = vunpack.c.h.b16 %v4159
      %v4376 = vunpack.c.l.b16 %v4160
      %v4377 = vunpack.c.h.b16 %v4160
      %v4378 = vunpack.c.l.b16 %v4161
      %v4379 = vunpack.c.h.b16 %v4161
      %v4380 = vunpack.c.l.b16 %v4162
      %v4381 = vunpack.c.h.b16 %v4162
      %v4382 = vunpack.c.l.b16 %v4163
      %v4383 = vunpack.c.h.b16 %v4163
      %v4384 = vunpack.c.l.b16 %v4164
      %v4385 = vunpack.c.h.b16 %v4164
      %v4386 = vunpack.c.l.b16 %v4165
      %v4387 = vunpack.c.h.b16 %v4165
      %v4388 = vunpack.c.l.b16 %v4166
      %v4389 = vunpack.c.h.b16 %v4166
      %v4390 = vunpack.c.l.b16 %v4167
      %v4391 = vunpack.c.h.b16 %v4167
      %v4392 = vunpack.c.l.b16 %v4168
      %v4393 = vunpack.c.h.b16 %v4168
      %v4394 = vunpack.c.l.b16 %v4169
      %v4395 = vunpack.c.h.b16 %v4169
      %v4396 = vunpack.c.l.b16 %v4170
      %v4397 = vunpack.c.h.b16 %v4170
      %v4398 = vunpack.c.l.b16 %v4171
      %v4399 = vunpack.c.h.b16 %v4171
      %v4400 = vunpack.c.l.b16 %v4172
      %v4401 = vunpack.c.h.b16 %v4172
      %v4402 = vunpack.c.l.b16 %v4173
      %v4403 = vunpack.c.h.b16 %v4173
      %v4404 = vunpack.c.l.b16 %v4174
      %v4405 = vunpack.c.h.b16 %v4174
      %v4406 = vunpack.c.l.b16 %v4175
      %v4407 = vunpack.c.h.b16 %v4175
      %v4408 = vunpack.c.l.b16 %v4176
      %v4409 = vunpack.c.h.b16 %v4176
      %v4410 = vunpack.c.l.b16 %v4177
      %v4411 = vunpack.c.h.b16 %v4177
      %v4412 = vunpack.c.l.b16 %v4178
      %v4413 = vunpack.c.h.b16 %v4178
      %v4414 = vunpack.c.l.b16 %v4179
      %v4415 = vunpack.c.h.b16 %v4179
      %v4416 = vunpack.c.l.b16 %v4180
      %v4417 = vunpack.c.h.b16 %v4180
      %v4418 = vunpack.c.l.b16 %v4181
      %v4419 = vunpack.c.h.b16 %v4181
      %v4420 = vunpack.c.l.b16 %v4182
      %v4421 = vunpack.c.h.b16 %v4182
      %v4422 = vunpack.c.l.b16 %v4183
      %v4423 = vunpack.c.h.b16 %v4183
      %v4424 = vunpack.c.l.b16 %v4184
      %v4425 = vunpack.c.h.b16 %v4184
      %v4426 = vunpack.c.l.b16 %v4185
      %v4427 = vunpack.c.h.b16 %v4185
      %v4428 = vunpack.c.l.b16 %v4186
      %v4429 = vunpack.c.h.b16 %v4186
      %v4430 = vunpack.c.l.b16 %v4187
      %v4431 = vunpack.c.h.b16 %v4187
      %v4432 = vunpack.c.l.b16 %v4188
      %v4433 = vunpack.c.h.b16 %v4188
      %v4434 = vunpack.c.l.b16 %v4189
      %v4435 = vunpack.c.h.b16 %v4189
      %v4436 = vpack.c.b16 %v4346, %v4340
      %v4437 = vpack.c.b16 %v4347, %v4341
      %v4438 = vpack.c.b16 %v4348, %v4342
      %v4439 = vpack.c.b16 %v4349, %v4343
      %v4440 = vpack.c.b16 %v4350, %v4344
      %v4441 = vpack.c.b16 %v4351, %v4345
      %v4442 = vpack.c.b16 %v4358, %v4352
      %v4443 = vpack.c.b16 %v4359, %v4353
      %v4444 = vpack.c.b16 %v4360, %v4354
      %v4445 = vpack.c.b16 %v4361, %v4355
      %v4446 = vpack.c.b16 %v4362, %v4356
      %v4447 = vpack.c.b16 %v4363, %v4357
      %v4448 = vpack.c.b16 %v4370, %v4364
      %v4449 = vpack.c.b16 %v4371, %v4365
      %v4450 = vpack.c.b16 %v4372, %v4366
      %v4451 = vpack.c.b16 %v4373, %v4367
      %v4452 = vpack.c.b16 %v4374, %v4368
      %v4453 = vpack.c.b16 %v4375, %v4369
      %v4454 = vpack.c.b16 %v4382, %v4376
      %v4455 = vpack.c.b16 %v4383, %v4377
      %v4456 = vpack.c.b16 %v4384, %v4378
      %v4457 = vpack.c.b16 %v4385, %v4379
      %v4458 = vpack.c.b16 %v4386, %v4380
      %v4459 = vpack.c.b16 %v4387, %v4381
      %v4460 = vpack.c.b16 %v4394, %v4388
      %v4461 = vpack.c.b16 %v4395, %v4389
      %v4462 = vpack.c.b16 %v4396, %v4390
      %v4463 = vpack.c.b16 %v4397, %v4391
      %v4464 = vpack.c.b16 %v4398, %v4392
      %v4465 = vpack.c.b16 %v4399, %v4393
      %v4466 = vpack.c.b16 %v4406, %v4400
      %v4467 = vpack.c.b16 %v4407, %v4401
      %v4468 = vpack.c.b16 %v4408, %v4402
      %v4469 = vpack.c.b16 %v4409, %v4403
      %v4470 = vpack.c.b16 %v4410, %v4404
      %v4471 = vpack.c.b16 %v4411, %v4405
      %v4472 = vpack.c.b16 %v4418, %v4412
      %v4473 = vpack.c.b16 %v4419, %v4413
      %v4474 = vpack.c.b16 %v4420, %v4414
      %v4475 = vpack.c.b16 %v4421, %v4415
      %v4476 = vpack.c.b16 %v4422, %v4416
      %v4477 = vpack.c.b16 %v4423, %v4417
      %v4478 = vpack.c.b16 %v4430, %v4424
      %v4479 = vpack.c.b16 %v4431, %v4425
      %v4480 = vpack.c.b16 %v4432, %v4426
      %v4481 = vpack.c.b16 %v4433, %v4427
      %v4482 = vpack.c.b16 %v4434, %v4428
      %v4483 = vpack.c.b16 %v4435, %v4429
      %v4628 = vunpack.c.l.b16 %v4190
      %v4629 = vunpack.c.h.b16 %v4190
      %v4630 = vunpack.c.l.b16 %v4191
      %v4631 = vunpack.c.h.b16 %v4191
      %v4632 = vunpack.c.l.b16 %v4192
      %v4633 = vunpack.c.h.b16 %v4192
      %v4634 = vunpack.c.l.b16 %v4193
      %v4635 = vunpack.c.h.b16 %v4193
      %v4636 = vunpack.c.l.b16 %v4194
      %v4637 = vunpack.c.h.b16 %v4194
      %v4638 = vunpack.c.l.b16 %v4195
      %v4639 = vunpack.c.h.b16 %v4195
      %v4640 = vunpack.c.l.b16 %v4196
      %v4641 = vunpack.c.h.b16 %v4196
      %v4642 = vunpack.c.l.b16 %v4197
      %v4643 = vunpack.c.h.b16 %v4197
      %v4644 = vunpack.c.l.b16 %v4198
      %v4645 = vunpack.c.h.b16 %v4198
      %v4646 = vunpack.c.l.b16 %v4199
      %v4647 = vunpack.c.h.b16 %v4199
      %v4648 = vunpack.c.l.b16 %v4200
      %v4649 = vunpack.c.h.b16 %v4200
      %v4650 = vunpack.c.l.b16 %v4201
      %v4651 = vunpack.c.h.b16 %v4201
      %v4652 = vunpack.c.l.b16 %v4202
      %v4653 = vunpack.c.h.b16 %v4202
      %v4654 = vunpack.c.l.b16 %v4203
      %v4655 = vunpack.c.h.b16 %v4203
      %v4656 = vunpack.c.l.b16 %v4204
      %v4657 = vunpack.c.h.b16 %v4204
      %v4658 = vunpack.c.l.b16 %v4205
      %v4659 = vunpack.c.h.b16 %v4205
      %v4660 = vunpack.c.l.b16 %v4206
      %v4661 = vunpack.c.h.b16 %v4206
      %v4662 = vunpack.c.l.b16 %v4207
      %v4663 = vunpack.c.h.b16 %v4207
      %v4664 = vunpack.c.l.b16 %v4208
      %v4665 = vunpack.c.h.b16 %v4208
      %v4666 = vunpack.c.l.b16 %v4209
      %v4667 = vunpack.c.h.b16 %v4209
      %v4668 = vunpack.c.l.b16 %v4210
      %v4669 = vunpack.c.h.b16 %v4210
      %v4670 = vunpack.c.l.b16 %v4211
      %v4671 = vunpack.c.h.b16 %v4211
      %v4672 = vunpack.c.l.b16 %v4212
      %v4673 = vunpack.c.h.b16 %v4212
      %v4674 = vunpack.c.l.b16 %v4213
      %v4675 = vunpack.c.h.b16 %v4213
      %v4676 = vunpack.c.l.b16 %v4214
      %v4677 = vunpack.c.h.b16 %v4214
      %v4678 = vunpack.c.l.b16 %v4215
      %v4679 = vunpack.c.h.b16 %v4215
      %v4680 = vunpack.c.l.b16 %v4216
      %v4681 = vunpack.c.h.b16 %v4216
      %v4682 = vunpack.c.l.b16 %v4217
      %v4683 = vunpack.c.h.b16 %v4217
      %v4684 = vunpack.c.l.b16 %v4218
      %v4685 = vunpack.c.h.b16 %v4218
      %v4686 = vunpack.c.l.b16 %v4219
      %v4687 = vunpack.c.h.b16 %v4219
      %v4688 = vunpack.c.l.b16 %v4220
      %v4689 = vunpack.c.h.b16 %v4220
      %v4690 = vunpack.c.l.b16 %v4221
      %v4691 = vunpack.c.h.b16 %v4221
      %v4692 = vunpack.c.l.b16 %v4222
      %v4693 = vunpack.c.h.b16 %v4222
      %v4694 = vunpack.c.l.b16 %v4223
      %v4695 = vunpack.c.h.b16 %v4223
      %v4696 = vunpack.c.l.b16 %v4224
      %v4697 = vunpack.c.h.b16 %v4224
      %v4698 = vunpack.c.l.b16 %v4225
      %v4699 = vunpack.c.h.b16 %v4225
      %v4700 = vunpack.c.l.b16 %v4226
      %v4701 = vunpack.c.h.b16 %v4226
      %v4702 = vunpack.c.l.b16 %v4227
      %v4703 = vunpack.c.h.b16 %v4227
      %v4704 = vunpack.c.l.b16 %v4228
      %v4705 = vunpack.c.h.b16 %v4228
      %v4706 = vunpack.c.l.b16 %v4229
      %v4707 = vunpack.c.h.b16 %v4229
      %v4708 = vunpack.c.l.b16 %v4230
      %v4709 = vunpack.c.h.b16 %v4230
      %v4710 = vunpack.c.l.b16 %v4231
      %v4711 = vunpack.c.h.b16 %v4231
      %v4712 = vunpack.c.l.b16 %v4232
      %v4713 = vunpack.c.h.b16 %v4232
      %v4714 = vunpack.c.l.b16 %v4233
      %v4715 = vunpack.c.h.b16 %v4233
      %v4716 = vunpack.c.l.b16 %v4234
      %v4717 = vunpack.c.h.b16 %v4234
      %v4718 = vunpack.c.l.b16 %v4235
      %v4719 = vunpack.c.h.b16 %v4235
      %v4720 = vunpack.c.l.b16 %v4236
      %v4721 = vunpack.c.h.b16 %v4236
      %v4722 = vunpack.c.l.b16 %v4237
      %v4723 = vunpack.c.h.b16 %v4237
      %v4724 = vunpack.c.l.b16 %v4238
      %v4725 = vunpack.c.h.b16 %v4238
      %v4726 = vunpack.c.l.b16 %v4239
      %v4727 = vunpack.c.h.b16 %v4239
      %v4728 = vunpack.c.l.b16 %v4240
      %v4729 = vunpack.c.h.b16 %v4240
      %v4730 = vunpack.c.l.b16 %v4241
      %v4731 = vunpack.c.h.b16 %v4241
      %v4732 = vunpack.c.l.b16 %v4242
      %v4733 = vunpack.c.h.b16 %v4242
      %v4734 = vunpack.c.l.b16 %v4243
      %v4735 = vunpack.c.h.b16 %v4243
      %v4736 = vunpack.c.l.b16 %v4244
      %v4737 = vunpack.c.h.b16 %v4244
      %v4738 = vunpack.c.l.b16 %v4245
      %v4739 = vunpack.c.h.b16 %v4245
      %v4740 = vunpack.c.l.b16 %v4246
      %v4741 = vunpack.c.h.b16 %v4246
      %v4742 = vunpack.c.l.b16 %v4247
      %v4743 = vunpack.c.h.b16 %v4247
      %v4744 = vunpack.c.l.b16 %v4248
      %v4745 = vunpack.c.h.b16 %v4248
      %v4746 = vunpack.c.l.b16 %v4249
      %v4747 = vunpack.c.h.b16 %v4249
      %v4748 = vunpack.c.l.b16 %v4250
      %v4749 = vunpack.c.h.b16 %v4250
      %v4750 = vunpack.c.l.b16 %v4251
      %v4751 = vunpack.c.h.b16 %v4251
      %v4752 = vunpack.c.l.b16 %v4252
      %v4753 = vunpack.c.h.b16 %v4252
      %v4754 = vunpack.c.l.b16 %v4253
      %v4755 = vunpack.c.h.b16 %v4253
      %v4756 = vunpack.c.l.b16 %v4254
      %v4757 = vunpack.c.h.b16 %v4254
      %v4758 = vunpack.c.l.b16 %v4255
      %v4759 = vunpack.c.h.b16 %v4255
      %v4760 = vunpack.c.l.b16 %v4256
      %v4761 = vunpack.c.h.b16 %v4256
      %v4762 = vunpack.c.l.b16 %v4257
      %v4763 = vunpack.c.h.b16 %v4257
      %v4764 = vunpack.c.l.b16 %v4258
      %v4765 = vunpack.c.h.b16 %v4258
      %v4766 = vunpack.c.l.b16 %v4259
      %v4767 = vunpack.c.h.b16 %v4259
      %v4768 = vunpack.c.l.b16 %v4260
      %v4769 = vunpack.c.h.b16 %v4260
      %v4770 = vunpack.c.l.b16 %v4261
      %v4771 = vunpack.c.h.b16 %v4261
      %v4772 = vunpack.c.l.b16 %v4262
      %v4773 = vunpack.c.h.b16 %v4262
      %v4774 = vunpack.c.l.b16 %v4263
      %v4775 = vunpack.c.h.b16 %v4263
      %v4776 = vunpack.c.l.b16 %v4264
      %v4777 = vunpack.c.h.b16 %v4264
      %v4778 = vunpack.c.l.b16 %v4265
      %v4779 = vunpack.c.h.b16 %v4265
      %v4780 = vunpack.c.l.b16 %v4266
      %v4781 = vunpack.c.h.b16 %v4266
      %v4782 = vunpack.c.l.b16 %v4267
      %v4783 = vunpack.c.h.b16 %v4267
      %v4784 = vunpack.c.l.b16 %v4268
      %v4785 = vunpack.c.h.b16 %v4268
      %v4786 = vunpack.c.l.b16 %v4269
      %v4787 = vunpack.c.h.b16 %v4269
      %v4788 = vunpack.c.l.b16 %v4270
      %v4789 = vunpack.c.h.b16 %v4270
      %v4790 = vunpack.c.l.b16 %v4271
      %v4791 = vunpack.c.h.b16 %v4271
      %v4792 = vunpack.c.l.b16 %v4272
      %v4793 = vunpack.c.h.b16 %v4272
      %v4794 = vunpack.c.l.b16 %v4273
      %v4795 = vunpack.c.h.b16 %v4273
      %v4796 = vunpack.c.l.b16 %v4274
      %v4797 = vunpack.c.h.b16 %v4274
      %v4798 = vunpack.c.l.b16 %v4275
      %v4799 = vunpack.c.h.b16 %v4275
      %v4800 = vunpack.c.l.b16 %v4276
      %v4801 = vunpack.c.h.b16 %v4276
      %v4802 = vunpack.c.l.b16 %v4277
      %v4803 = vunpack.c.h.b16 %v4277
      %v4804 = vunpack.c.l.b16 %v4278
      %v4805 = vunpack.c.h.b16 %v4278
      %v4806 = vunpack.c.l.b16 %v4279
      %v4807 = vunpack.c.h.b16 %v4279
      %v4808 = vunpack.c.l.b16 %v4280
      %v4809 = vunpack.c.h.b16 %v4280
      %v4810 = vunpack.c.l.b16 %v4281
      %v4811 = vunpack.c.h.b16 %v4281
      %v4812 = vunpack.c.l.b16 %v4282
      %v4813 = vunpack.c.h.b16 %v4282
      %v4814 = vunpack.c.l.b16 %v4283
      %v4815 = vunpack.c.h.b16 %v4283
      %v4816 = vunpack.c.l.b16 %v4284
      %v4817 = vunpack.c.h.b16 %v4284
      %v4818 = vunpack.c.l.b16 %v4285
      %v4819 = vunpack.c.h.b16 %v4285
      %v4820 = vpack.c.b16 %v4630, %v4628
      %v4821 = vpack.c.b16 %v4631, %v4629
      %v4822 = vpack.c.b16 %v4634, %v4632
      %v4823 = vpack.c.b16 %v4635, %v4633
      %v4824 = vpack.c.b16 %v4638, %v4636
      %v4825 = vpack.c.b16 %v4639, %v4637
      %v4826 = vpack.c.b16 %v4642, %v4640
      %v4827 = vpack.c.b16 %v4643, %v4641
      %v4828 = vpack.c.b16 %v4646, %v4644
      %v4829 = vpack.c.b16 %v4647, %v4645
      %v4830 = vpack.c.b16 %v4650, %v4648
      %v4831 = vpack.c.b16 %v4651, %v4649
      %v4832 = vpack.c.b16 %v4654, %v4652
      %v4833 = vpack.c.b16 %v4655, %v4653
      %v4834 = vpack.c.b16 %v4658, %v4656
      %v4835 = vpack.c.b16 %v4659, %v4657
      %v4836 = vpack.c.b16 %v4662, %v4660
      %v4837 = vpack.c.b16 %v4663, %v4661
      %v4838 = vpack.c.b16 %v4666, %v4664
      %v4839 = vpack.c.b16 %v4667, %v4665
      %v4840 = vpack.c.b16 %v4670, %v4668
      %v4841 = vpack.c.b16 %v4671, %v4669
      %v4842 = vpack.c.b16 %v4674, %v4672
      %v4843 = vpack.c.b16 %v4675, %v4673
      %v4844 = vpack.c.b16 %v4678, %v4676
      %v4845 = vpack.c.b16 %v4679, %v4677
      %v4846 = vpack.c.b16 %v4682, %v4680
      %v4847 = vpack.c.b16 %v4683, %v4681
      %v4848 = vpack.c.b16 %v4686, %v4684
      %v4849 = vpack.c.b16 %v4687, %v4685
      %v4850 = vpack.c.b16 %v4690, %v4688
      %v4851 = vpack.c.b16 %v4691, %v4689
      %v4852 = vpack.c.b16 %v4694, %v4692
      %v4853 = vpack.c.b16 %v4695, %v4693
      %v4854 = vpack.c.b16 %v4698, %v4696
      %v4855 = vpack.c.b16 %v4699, %v4697
      %v4856 = vpack.c.b16 %v4702, %v4700
      %v4857 = vpack.c.b16 %v4703, %v4701
      %v4858 = vpack.c.b16 %v4706, %v4704
      %v4859 = vpack.c.b16 %v4707, %v4705
      %v4860 = vpack.c.b16 %v4710, %v4708
      %v4861 = vpack.c.b16 %v4711, %v4709
      %v4862 = vpack.c.b16 %v4714, %v4712
      %v4863 = vpack.c.b16 %v4715, %v4713
      %v4864 = vpack.c.b16 %v4718, %v4716
      %v4865 = vpack.c.b16 %v4719, %v4717
      %v4866 = vpack.c.b16 %v4722, %v4720
      %v4867 = vpack.c.b16 %v4723, %v4721
      %v4868 = vpack.c.b16 %v4726, %v4724
      %v4869 = vpack.c.b16 %v4727, %v4725
      %v4870 = vpack.c.b16 %v4730, %v4728
      %v4871 = vpack.c.b16 %v4731, %v4729
      %v4872 = vpack.c.b16 %v4734, %v4732
      %v4873 = vpack.c.b16 %v4735, %v4733
      %v4874 = vpack.c.b16 %v4738, %v4736
      %v4875 = vpack.c.b16 %v4739, %v4737
      %v4876 = vpack.c.b16 %v4742, %v4740
      %v4877 = vpack.c.b16 %v4743, %v4741
      %v4878 = vpack.c.b16 %v4746, %v4744
      %v4879 = vpack.c.b16 %v4747, %v4745
      %v4880 = vpack.c.b16 %v4750, %v4748
      %v4881 = vpack.c.b16 %v4751, %v4749
      %v4882 = vpack.c.b16 %v4754, %v4752
      %v4883 = vpack.c.b16 %v4755, %v4753
      %v4884 = vpack.c.b16 %v4758, %v4756
      %v4885 = vpack.c.b16 %v4759, %v4757
      %v4886 = vpack.c.b16 %v4762, %v4760
      %v4887 = vpack.c.b16 %v4763, %v4761
      %v4888 = vpack.c.b16 %v4766, %v4764
      %v4889 = vpack.c.b16 %v4767, %v4765
      %v4890 = vpack.c.b16 %v4770, %v4768
      %v4891 = vpack.c.b16 %v4771, %v4769
      %v4892 = vpack.c.b16 %v4774, %v4772
      %v4893 = vpack.c.b16 %v4775, %v4773
      %v4894 = vpack.c.b16 %v4778, %v4776
      %v4895 = vpack.c.b16 %v4779, %v4777
      %v4896 = vpack.c.b16 %v4782, %v4780
      %v4897 = vpack.c.b16 %v4783, %v4781
      %v4898 = vpack.c.b16 %v4786, %v4784
      %v4899 = vpack.c.b16 %v4787, %v4785
      %v4900 = vpack.c.b16 %v4790, %v4788
      %v4901 = vpack.c.b16 %v4791, %v4789
      %v4902 = vpack.c.b16 %v4794, %v4792
      %v4903 = vpack.c.b16 %v4795, %v4793
      %v4904 = vpack.c.b16 %v4798, %v4796
      %v4905 = vpack.c.b16 %v4799, %v4797
      %v4906 = vpack.c.b16 %v4802, %v4800
      %v4907 = vpack.c.b16 %v4803, %v4801
      %v4908 = vpack.c.b16 %v4806, %v4804
      %v4909 = vpack.c.b16 %v4807, %v4805
      %v4910 = vpack.c.b16 %v4810, %v4808
      %v4911 = vpack.c.b16 %v4811, %v4809
      %v4912 = vpack.c.b16 %v4814, %v4812
      %v4913 = vpack.c.b16 %v4815, %v4813
      %v4914 = vpack.c.b16 %v4818, %v4816
      %v4915 = vpack.c.b16 %v4819, %v4817
      %5012 = vmatpush.bf16.msra.mxu0 %v4834
      %5013 = vmatpush.bf16.msra.mxu0 %v4832
      %5014 = vmatpush.bf16.msra.mxu0 %v4830
      %5015 = vmatpush.bf16.msra.mxu0 %v4828
      %5016 = vmatpush.bf16.msra.mxu0 %v4826
      %5017 = vmatpush.bf16.msra.mxu0 %v4824
      %5018 = vmatpush.bf16.msra.mxu0 %v4822
      %5019 = vmatpush.bf16.msra.mxu0 %v4820
      %5020 = vmatmul.bf16.gmra.mxu0 %v4436
      %v5021 = vpop.f32.mrf.mxu0
      %v5022 = vadd.f32 %v4288, %v5021
      %v5023 = vpop.f32.mrf.mxu0
      %v5024 = vadd.f32 %v4288, %v5023
      %5025 = vmatmul.bf16.gmra.mxu0 %v4442
      %v5026 = vpop.f32.mrf.mxu0
      %v5027 = vadd.f32 %v4288, %v5026
      %v5028 = vpop.f32.mrf.mxu0
      %v5029 = vadd.f32 %v4288, %v5028
      %5030 = vmatmul.bf16.gmra.mxu0 %v4448
      %v5031 = vpop.f32.mrf.mxu0
      %v5032 = vadd.f32 %v4288, %v5031
      %v5033 = vpop.f32.mrf.mxu0
      %v5034 = vadd.f32 %v4288, %v5033
      %5035 = vmatmul.bf16.gmra.mxu0 %v4454
      %v5036 = vpop.f32.mrf.mxu0
      %v5037 = vadd.f32 %v4288, %v5036
      %v5038 = vpop.f32.mrf.mxu0
      %v5039 = vadd.f32 %v4288, %v5038
      %5040 = vmatmul.bf16.gmra.mxu0 %v4460
      %v5041 = vpop.f32.mrf.mxu0
      %v5042 = vadd.f32 %v4288, %v5041
      %v5043 = vpop.f32.mrf.mxu0
      %v5044 = vadd.f32 %v4288, %v5043
      %5045 = vmatmul.bf16.gmra.mxu0 %v4466
      %v5046 = vpop.f32.mrf.mxu0
      %v5047 = vadd.f32 %v4288, %v5046
      %v5048 = vpop.f32.mrf.mxu0
      %v5049 = vadd.f32 %v4288, %v5048
      %5050 = vmatmul.bf16.gmra.mxu0 %v4472
      %v5051 = vpop.f32.mrf.mxu0
      %v5052 = vadd.f32 %v4288, %v5051
      %v5053 = vpop.f32.mrf.mxu0
      %v5054 = vadd.f32 %v4288, %v5053
      %5055 = vmatmul.bf16.gmra.mxu0 %v4478
      %v5056 = vpop.f32.mrf.mxu0
      %v5057 = vadd.f32 %v4288, %v5056
      %v5058 = vpop.f32.mrf.mxu0
      %v5059 = vadd.f32 %v4288, %v5058
      %5060 = vdwg.mxu0
      %5061 = vmatpush.bf16.msra.mxu0 %v4850
      %5062 = vmatpush.bf16.msra.mxu0 %v4848
      %5063 = vmatpush.bf16.msra.mxu0 %v4846
      %5064 = vmatpush.bf16.msra.mxu0 %v4844
      %5065 = vmatpush.bf16.msra.mxu0 %v4842
      %5066 = vmatpush.bf16.msra.mxu0 %v4840
      %5067 = vmatpush.bf16.msra.mxu0 %v4838
      %5068 = vmatpush.bf16.msra.mxu0 %v4836
      %5069 = vmatmul.bf16.gmra.mxu0 %v4437
      %v5070 = vpop.f32.mrf.mxu0
      %v5071 = vadd.f32 %v5022, %v5070
      %v5072 = vpop.f32.mrf.mxu0
      %v5073 = vadd.f32 %v5024, %v5072
      %5074 = vmatmul.bf16.gmra.mxu0 %v4443
      %v5075 = vpop.f32.mrf.mxu0
      %v5076 = vadd.f32 %v5027, %v5075
      %v5077 = vpop.f32.mrf.mxu0
      %v5078 = vadd.f32 %v5029, %v5077
      %5079 = vmatmul.bf16.gmra.mxu0 %v4449
      %v5080 = vpop.f32.mrf.mxu0
      %v5081 = vadd.f32 %v5032, %v5080
      %v5082 = vpop.f32.mrf.mxu0
      %v5083 = vadd.f32 %v5034, %v5082
      %5084 = vmatmul.bf16.gmra.mxu0 %v4455
      %v5085 = vpop.f32.mrf.mxu0
      %v5086 = vadd.f32 %v5037, %v5085
      %v5087 = vpop.f32.mrf.mxu0
      %v5088 = vadd.f32 %v5039, %v5087
      %5089 = vmatmul.bf16.gmra.mxu0 %v4461
      %v5090 = vpop.f32.mrf.mxu0
      %v5091 = vadd.f32 %v5042, %v5090
      %v5092 = vpop.f32.mrf.mxu0
      %v5093 = vadd.f32 %v5044, %v5092
      %5094 = vmatmul.bf16.gmra.mxu0 %v4467
      %v5095 = vpop.f32.mrf.mxu0
      %v5096 = vadd.f32 %v5047, %v5095
      %v5097 = vpop.f32.mrf.mxu0
      %v5098 = vadd.f32 %v5049, %v5097
      %5099 = vmatmul.bf16.gmra.mxu0 %v4473
      %v5100 = vpop.f32.mrf.mxu0
      %v5101 = vadd.f32 %v5052, %v5100
      %v5102 = vpop.f32.mrf.mxu0
      %v5103 = vadd.f32 %v5054, %v5102
      %5104 = vmatmul.bf16.gmra.mxu0 %v4479
      %v5105 = vpop.f32.mrf.mxu0
      %v5106 = vadd.f32 %v5057, %v5105
      %v5107 = vpop.f32.mrf.mxu0
      %v5108 = vadd.f32 %v5059, %v5107
      %5109 = vdwg.mxu0
      %5110 = vmatpush.bf16.msra.mxu0 %v4866
      %5111 = vmatpush.bf16.msra.mxu0 %v4864
      %5112 = vmatpush.bf16.msra.mxu0 %v4862
      %5113 = vmatpush.bf16.msra.mxu0 %v4860
      %5114 = vmatpush.bf16.msra.mxu0 %v4858
      %5115 = vmatpush.bf16.msra.mxu0 %v4856
      %5116 = vmatpush.bf16.msra.mxu0 %v4854
      %5117 = vmatpush.bf16.msra.mxu0 %v4852
      %5118 = vmatmul.bf16.gmra.mxu0 %v4438
      %v5119 = vpop.f32.mrf.mxu0
      %v5120 = vadd.f32 %v5071, %v5119
      %v5121 = vpop.f32.mrf.mxu0
      %v5122 = vadd.f32 %v5073, %v5121
      %5123 = vmatmul.bf16.gmra.mxu0 %v4444
      %v5124 = vpop.f32.mrf.mxu0
      %v5125 = vadd.f32 %v5076, %v5124
      %v5126 = vpop.f32.mrf.mxu0
      %v5127 = vadd.f32 %v5078, %v5126
      %5128 = vmatmul.bf16.gmra.mxu0 %v4450
      %v5129 = vpop.f32.mrf.mxu0
      %v5130 = vadd.f32 %v5081, %v5129
      %v5131 = vpop.f32.mrf.mxu0
      %v5132 = vadd.f32 %v5083, %v5131
      %5133 = vmatmul.bf16.gmra.mxu0 %v4456
      %v5134 = vpop.f32.mrf.mxu0
      %v5135 = vadd.f32 %v5086, %v5134
      %v5136 = vpop.f32.mrf.mxu0
      %v5137 = vadd.f32 %v5088, %v5136
      %5138 = vmatmul.bf16.gmra.mxu0 %v4462
      %v5139 = vpop.f32.mrf.mxu0
      %v5140 = vadd.f32 %v5091, %v5139
      %v5141 = vpop.f32.mrf.mxu0
      %v5142 = vadd.f32 %v5093, %v5141
      %5143 = vmatmul.bf16.gmra.mxu0 %v4468
      %v5144 = vpop.f32.mrf.mxu0
      %v5145 = vadd.f32 %v5096, %v5144
      %v5146 = vpop.f32.mrf.mxu0
      %v5147 = vadd.f32 %v5098, %v5146
      %5148 = vmatmul.bf16.gmra.mxu0 %v4474
      %v5149 = vpop.f32.mrf.mxu0
      %v5150 = vadd.f32 %v5101, %v5149
      %v5151 = vpop.f32.mrf.mxu0
      %v5152 = vadd.f32 %v5103, %v5151
      %5153 = vmatmul.bf16.gmra.mxu0 %v4480
      %v5154 = vpop.f32.mrf.mxu0
      %v5155 = vadd.f32 %v5106, %v5154
      %v5156 = vpop.f32.mrf.mxu0
      %v5157 = vadd.f32 %v5108, %v5156
      %5158 = vdwg.mxu0
      %5159 = vmatpush.bf16.msra.mxu0 %v4882
      %5160 = vmatpush.bf16.msra.mxu0 %v4880
      %5161 = vmatpush.bf16.msra.mxu0 %v4878
      %5162 = vmatpush.bf16.msra.mxu0 %v4876
      %5163 = vmatpush.bf16.msra.mxu0 %v4874
      %5164 = vmatpush.bf16.msra.mxu0 %v4872
      %5165 = vmatpush.bf16.msra.mxu0 %v4870
      %5166 = vmatpush.bf16.msra.mxu0 %v4868
      %5167 = vmatmul.bf16.gmra.mxu0 %v4439
      %v5168 = vpop.f32.mrf.mxu0
      %v5169 = vadd.f32 %v5120, %v5168
      %v5170 = vpop.f32.mrf.mxu0
      %v5171 = vadd.f32 %v5122, %v5170
      %5172 = vmatmul.bf16.gmra.mxu0 %v4445
      %v5173 = vpop.f32.mrf.mxu0
      %v5174 = vadd.f32 %v5125, %v5173
      %v5175 = vpop.f32.mrf.mxu0
      %v5176 = vadd.f32 %v5127, %v5175
      %5177 = vmatmul.bf16.gmra.mxu0 %v4451
      %v5178 = vpop.f32.mrf.mxu0
      %v5179 = vadd.f32 %v5130, %v5178
      %v5180 = vpop.f32.mrf.mxu0
      %v5181 = vadd.f32 %v5132, %v5180
      %5182 = vmatmul.bf16.gmra.mxu0 %v4457
      %v5183 = vpop.f32.mrf.mxu0
      %v5184 = vadd.f32 %v5135, %v5183
      %v5185 = vpop.f32.mrf.mxu0
      %v5186 = vadd.f32 %v5137, %v5185
      %5187 = vmatmul.bf16.gmra.mxu0 %v4463
      %v5188 = vpop.f32.mrf.mxu0
      %v5189 = vadd.f32 %v5140, %v5188
      %v5190 = vpop.f32.mrf.mxu0
      %v5191 = vadd.f32 %v5142, %v5190
      %5192 = vmatmul.bf16.gmra.mxu0 %v4469
      %v5193 = vpop.f32.mrf.mxu0
      %v5194 = vadd.f32 %v5145, %v5193
      %v5195 = vpop.f32.mrf.mxu0
      %v5196 = vadd.f32 %v5147, %v5195
      %5197 = vmatmul.bf16.gmra.mxu0 %v4475
      %v5198 = vpop.f32.mrf.mxu0
      %v5199 = vadd.f32 %v5150, %v5198
      %v5200 = vpop.f32.mrf.mxu0
      %v5201 = vadd.f32 %v5152, %v5200
      %5202 = vmatmul.bf16.gmra.mxu0 %v4481
      %v5203 = vpop.f32.mrf.mxu0
      %v5204 = vadd.f32 %v5155, %v5203
      %v5205 = vpop.f32.mrf.mxu0
      %v5206 = vadd.f32 %v5157, %v5205
      %5207 = vdwg.mxu0
      %5208 = vmatpush.bf16.msra.mxu0 %v4898
      %5209 = vmatpush.bf16.msra.mxu0 %v4896
      %5210 = vmatpush.bf16.msra.mxu0 %v4894
      %5211 = vmatpush.bf16.msra.mxu0 %v4892
      %5212 = vmatpush.bf16.msra.mxu0 %v4890
      %5213 = vmatpush.bf16.msra.mxu0 %v4888
      %5214 = vmatpush.bf16.msra.mxu0 %v4886
      %5215 = vmatpush.bf16.msra.mxu0 %v4884
      %5216 = vmatmul.bf16.gmra.mxu0 %v4440
      %v5217 = vpop.f32.mrf.mxu0
      %v5218 = vadd.f32 %v5169, %v5217
      %v5219 = vpop.f32.mrf.mxu0
      %v5220 = vadd.f32 %v5171, %v5219
      %5221 = vmatmul.bf16.gmra.mxu0 %v4446
      %v5222 = vpop.f32.mrf.mxu0
      %v5223 = vadd.f32 %v5174, %v5222
      %v5224 = vpop.f32.mrf.mxu0
      %v5225 = vadd.f32 %v5176, %v5224
      %5226 = vmatmul.bf16.gmra.mxu0 %v4452
      %v5227 = vpop.f32.mrf.mxu0
      %v5228 = vadd.f32 %v5179, %v5227
      %v5229 = vpop.f32.mrf.mxu0
      %v5230 = vadd.f32 %v5181, %v5229
      %5231 = vmatmul.bf16.gmra.mxu0 %v4458
      %v5232 = vpop.f32.mrf.mxu0
      %v5233 = vadd.f32 %v5184, %v5232
      %v5234 = vpop.f32.mrf.mxu0
      %v5235 = vadd.f32 %v5186, %v5234
      %5236 = vmatmul.bf16.gmra.mxu0 %v4464
      %v5237 = vpop.f32.mrf.mxu0
      %v5238 = vadd.f32 %v5189, %v5237
      %v5239 = vpop.f32.mrf.mxu0
      %v5240 = vadd.f32 %v5191, %v5239
      %5241 = vmatmul.bf16.gmra.mxu0 %v4470
      %v5242 = vpop.f32.mrf.mxu0
      %v5243 = vadd.f32 %v5194, %v5242
      %v5244 = vpop.f32.mrf.mxu0
      %v5245 = vadd.f32 %v5196, %v5244
      %5246 = vmatmul.bf16.gmra.mxu0 %v4476
      %v5247 = vpop.f32.mrf.mxu0
      %v5248 = vadd.f32 %v5199, %v5247
      %v5249 = vpop.f32.mrf.mxu0
      %v5250 = vadd.f32 %v5201, %v5249
      %5251 = vmatmul.bf16.gmra.mxu0 %v4482
      %v5252 = vpop.f32.mrf.mxu0
      %v5253 = vadd.f32 %v5204, %v5252
      %v5254 = vpop.f32.mrf.mxu0
      %v5255 = vadd.f32 %v5206, %v5254
      %5256 = vdwg.mxu0
      %5257 = vmatpush.bf16.msra.mxu0 %v4914
      %5258 = vmatpush.bf16.msra.mxu0 %v4912
      %5259 = vmatpush.bf16.msra.mxu0 %v4910
      %5260 = vmatpush.bf16.msra.mxu0 %v4908
      %5261 = vmatpush.bf16.msra.mxu0 %v4906
      %5262 = vmatpush.bf16.msra.mxu0 %v4904
      %5263 = vmatpush.bf16.msra.mxu0 %v4902
      %5264 = vmatpush.bf16.msra.mxu0 %v4900
      %5265 = vmatmul.bf16.gmra.mxu0 %v4441
      %v5266 = vpop.f32.mrf.mxu0
      %v5267 = vadd.f32 %v5218, %v5266
      %v5268 = vpop.f32.mrf.mxu0
      %v5269 = vadd.f32 %v5220, %v5268
      %5270 = vmatmul.bf16.gmra.mxu0 %v4447
      %v5271 = vpop.f32.mrf.mxu0
      %v5272 = vadd.f32 %v5223, %v5271
      %v5273 = vpop.f32.mrf.mxu0
      %v5274 = vadd.f32 %v5225, %v5273
      %5275 = vmatmul.bf16.gmra.mxu0 %v4453
      %v5276 = vpop.f32.mrf.mxu0
      %v5277 = vadd.f32 %v5228, %v5276
      %v5278 = vpop.f32.mrf.mxu0
      %v5279 = vadd.f32 %v5230, %v5278
      %5280 = vmatmul.bf16.gmra.mxu0 %v4459
      %v5281 = vpop.f32.mrf.mxu0
      %v5282 = vadd.f32 %v5233, %v5281
      %v5283 = vpop.f32.mrf.mxu0
      %v5284 = vadd.f32 %v5235, %v5283
      %5285 = vmatmul.bf16.gmra.mxu0 %v4465
      %v5286 = vpop.f32.mrf.mxu0
      %v5287 = vadd.f32 %v5238, %v5286
      %v5288 = vpop.f32.mrf.mxu0
      %v5289 = vadd.f32 %v5240, %v5288
      %5290 = vmatmul.bf16.gmra.mxu0 %v4471
      %v5291 = vpop.f32.mrf.mxu0
      %v5292 = vadd.f32 %v5243, %v5291
      %v5293 = vpop.f32.mrf.mxu0
      %v5294 = vadd.f32 %v5245, %v5293
      %5295 = vmatmul.bf16.gmra.mxu0 %v4477
      %v5296 = vpop.f32.mrf.mxu0
      %v5297 = vadd.f32 %v5248, %v5296
      %v5298 = vpop.f32.mrf.mxu0
      %v5299 = vadd.f32 %v5250, %v5298
      %5300 = vmatmul.bf16.gmra.mxu0 %v4483
      %v5301 = vpop.f32.mrf.mxu0
      %v5302 = vadd.f32 %v5253, %v5301
      %v5303 = vpop.f32.mrf.mxu0
      %v5304 = vadd.f32 %v5255, %v5303
      %5305 = vdwg.mxu0
      %5306 = vmatpush.bf16.msra.mxu0 %v4835
      %5307 = vmatpush.bf16.msra.mxu0 %v4833
      %5308 = vmatpush.bf16.msra.mxu0 %v4831
      %5309 = vmatpush.bf16.msra.mxu0 %v4829
      %5310 = vmatpush.bf16.msra.mxu0 %v4827
      %5311 = vmatpush.bf16.msra.mxu0 %v4825
      %5312 = vmatpush.bf16.msra.mxu0 %v4823
      %5313 = vmatpush.bf16.msra.mxu0 %v4821
      %5314 = vmatmul.bf16.gmra.mxu0 %v4436
      %v5315 = vpop.f32.mrf.mxu0
      %v5316 = vadd.f32 %v4289, %v5315
      %v5317 = vpop.f32.mrf.mxu0
      %v5318 = vadd.f32 %v4289, %v5317
      %5319 = vmatmul.bf16.gmra.mxu0 %v4442
      %v5320 = vpop.f32.mrf.mxu0
      %v5321 = vadd.f32 %v4289, %v5320
      %v5322 = vpop.f32.mrf.mxu0
      %v5323 = vadd.f32 %v4289, %v5322
      %5324 = vmatmul.bf16.gmra.mxu0 %v4448
      %v5325 = vpop.f32.mrf.mxu0
      %v5326 = vadd.f32 %v4289, %v5325
      %v5327 = vpop.f32.mrf.mxu0
      %v5328 = vadd.f32 %v4289, %v5327
      %5329 = vmatmul.bf16.gmra.mxu0 %v4454
      %v5330 = vpop.f32.mrf.mxu0
      %v5331 = vadd.f32 %v4289, %v5330
      %v5332 = vpop.f32.mrf.mxu0
      %v5333 = vadd.f32 %v4289, %v5332
      %5334 = vmatmul.bf16.gmra.mxu0 %v4460
      %v5335 = vpop.f32.mrf.mxu0
      %v5336 = vadd.f32 %v4289, %v5335
      %v5337 = vpop.f32.mrf.mxu0
      %v5338 = vadd.f32 %v4289, %v5337
      %5339 = vmatmul.bf16.gmra.mxu0 %v4466
      %v5340 = vpop.f32.mrf.mxu0
      %v5341 = vadd.f32 %v4289, %v5340
      %v5342 = vpop.f32.mrf.mxu0
      %v5343 = vadd.f32 %v4289, %v5342
      %5344 = vmatmul.bf16.gmra.mxu0 %v4472
      %v5345 = vpop.f32.mrf.mxu0
      %v5346 = vadd.f32 %v4289, %v5345
      %v5347 = vpop.f32.mrf.mxu0
      %v5348 = vadd.f32 %v4289, %v5347
      %5349 = vmatmul.bf16.gmra.mxu0 %v4478
      %v5350 = vpop.f32.mrf.mxu0
      %v5351 = vadd.f32 %v4289, %v5350
      %v5352 = vpop.f32.mrf.mxu0
      %v5353 = vadd.f32 %v4289, %v5352
      %5354 = vdwg.mxu0
      %5355 = vmatpush.bf16.msra.mxu0 %v4851
      %5356 = vmatpush.bf16.msra.mxu0 %v4849
      %5357 = vmatpush.bf16.msra.mxu0 %v4847
      %5358 = vmatpush.bf16.msra.mxu0 %v4845
      %5359 = vmatpush.bf16.msra.mxu0 %v4843
      %5360 = vmatpush.bf16.msra.mxu0 %v4841
      %5361 = vmatpush.bf16.msra.mxu0 %v4839
      %5362 = vmatpush.bf16.msra.mxu0 %v4837
      %5363 = vmatmul.bf16.gmra.mxu0 %v4437
      %v5364 = vpop.f32.mrf.mxu0
      %v5365 = vadd.f32 %v5316, %v5364
      %v5366 = vpop.f32.mrf.mxu0
      %v5367 = vadd.f32 %v5318, %v5366
      %5368 = vmatmul.bf16.gmra.mxu0 %v4443
      %v5369 = vpop.f32.mrf.mxu0
      %v5370 = vadd.f32 %v5321, %v5369
      %v5371 = vpop.f32.mrf.mxu0
      %v5372 = vadd.f32 %v5323, %v5371
      %5373 = vmatmul.bf16.gmra.mxu0 %v4449
      %v5374 = vpop.f32.mrf.mxu0
      %v5375 = vadd.f32 %v5326, %v5374
      %v5376 = vpop.f32.mrf.mxu0
      %v5377 = vadd.f32 %v5328, %v5376
      %5378 = vmatmul.bf16.gmra.mxu0 %v4455
      %v5379 = vpop.f32.mrf.mxu0
      %v5380 = vadd.f32 %v5331, %v5379
      %v5381 = vpop.f32.mrf.mxu0
      %v5382 = vadd.f32 %v5333, %v5381
      %5383 = vmatmul.bf16.gmra.mxu0 %v4461
      %v5384 = vpop.f32.mrf.mxu0
      %v5385 = vadd.f32 %v5336, %v5384
      %v5386 = vpop.f32.mrf.mxu0
      %v5387 = vadd.f32 %v5338, %v5386
      %5388 = vmatmul.bf16.gmra.mxu0 %v4467
      %v5389 = vpop.f32.mrf.mxu0
      %v5390 = vadd.f32 %v5341, %v5389
      %v5391 = vpop.f32.mrf.mxu0
      %v5392 = vadd.f32 %v5343, %v5391
      %5393 = vmatmul.bf16.gmra.mxu0 %v4473
      %v5394 = vpop.f32.mrf.mxu0
      %v5395 = vadd.f32 %v5346, %v5394
      %v5396 = vpop.f32.mrf.mxu0
      %v5397 = vadd.f32 %v5348, %v5396
      %5398 = vmatmul.bf16.gmra.mxu0 %v4479
      %v5399 = vpop.f32.mrf.mxu0
      %v5400 = vadd.f32 %v5351, %v5399
      %v5401 = vpop.f32.mrf.mxu0
      %v5402 = vadd.f32 %v5353, %v5401
      %5403 = vdwg.mxu0
      %5404 = vmatpush.bf16.msra.mxu0 %v4867
      %5405 = vmatpush.bf16.msra.mxu0 %v4865
      %5406 = vmatpush.bf16.msra.mxu0 %v4863
      %5407 = vmatpush.bf16.msra.mxu0 %v4861
      %5408 = vmatpush.bf16.msra.mxu0 %v4859
      %5409 = vmatpush.bf16.msra.mxu0 %v4857
      %5410 = vmatpush.bf16.msra.mxu0 %v4855
      %5411 = vmatpush.bf16.msra.mxu0 %v4853
      %5412 = vmatmul.bf16.gmra.mxu0 %v4438
      %v5413 = vpop.f32.mrf.mxu0
      %v5414 = vadd.f32 %v5365, %v5413
      %v5415 = vpop.f32.mrf.mxu0
      %v5416 = vadd.f32 %v5367, %v5415
      %5417 = vmatmul.bf16.gmra.mxu0 %v4444
      %v5418 = vpop.f32.mrf.mxu0
      %v5419 = vadd.f32 %v5370, %v5418
      %v5420 = vpop.f32.mrf.mxu0
      %v5421 = vadd.f32 %v5372, %v5420
      %5422 = vmatmul.bf16.gmra.mxu0 %v4450
      %v5423 = vpop.f32.mrf.mxu0
      %v5424 = vadd.f32 %v5375, %v5423
      %v5425 = vpop.f32.mrf.mxu0
      %v5426 = vadd.f32 %v5377, %v5425
      %5427 = vmatmul.bf16.gmra.mxu0 %v4456
      %v5428 = vpop.f32.mrf.mxu0
      %v5429 = vadd.f32 %v5380, %v5428
      %v5430 = vpop.f32.mrf.mxu0
      %v5431 = vadd.f32 %v5382, %v5430
      %5432 = vmatmul.bf16.gmra.mxu0 %v4462
      %v5433 = vpop.f32.mrf.mxu0
      %v5434 = vadd.f32 %v5385, %v5433
      %v5435 = vpop.f32.mrf.mxu0
      %v5436 = vadd.f32 %v5387, %v5435
      %5437 = vmatmul.bf16.gmra.mxu0 %v4468
      %v5438 = vpop.f32.mrf.mxu0
      %v5439 = vadd.f32 %v5390, %v5438
      %v5440 = vpop.f32.mrf.mxu0
      %v5441 = vadd.f32 %v5392, %v5440
      %5442 = vmatmul.bf16.gmra.mxu0 %v4474
      %v5443 = vpop.f32.mrf.mxu0
      %v5444 = vadd.f32 %v5395, %v5443
      %v5445 = vpop.f32.mrf.mxu0
      %v5446 = vadd.f32 %v5397, %v5445
      %5447 = vmatmul.bf16.gmra.mxu0 %v4480
      %v5448 = vpop.f32.mrf.mxu0
      %v5449 = vadd.f32 %v5400, %v5448
      %v5450 = vpop.f32.mrf.mxu0
      %v5451 = vadd.f32 %v5402, %v5450
      %5452 = vdwg.mxu0
      %5453 = vmatpush.bf16.msra.mxu0 %v4883
      %5454 = vmatpush.bf16.msra.mxu0 %v4881
      %5455 = vmatpush.bf16.msra.mxu0 %v4879
      %5456 = vmatpush.bf16.msra.mxu0 %v4877
      %5457 = vmatpush.bf16.msra.mxu0 %v4875
      %5458 = vmatpush.bf16.msra.mxu0 %v4873
      %5459 = vmatpush.bf16.msra.mxu0 %v4871
      %5460 = vmatpush.bf16.msra.mxu0 %v4869
      %5461 = vmatmul.bf16.gmra.mxu0 %v4439
      %v5462 = vpop.f32.mrf.mxu0
      %v5463 = vadd.f32 %v5414, %v5462
      %v5464 = vpop.f32.mrf.mxu0
      %v5465 = vadd.f32 %v5416, %v5464
      %5466 = vmatmul.bf16.gmra.mxu0 %v4445
      %v5467 = vpop.f32.mrf.mxu0
      %v5468 = vadd.f32 %v5419, %v5467
      %v5469 = vpop.f32.mrf.mxu0
      %v5470 = vadd.f32 %v5421, %v5469
      %5471 = vmatmul.bf16.gmra.mxu0 %v4451
      %v5472 = vpop.f32.mrf.mxu0
      %v5473 = vadd.f32 %v5424, %v5472
      %v5474 = vpop.f32.mrf.mxu0
      %v5475 = vadd.f32 %v5426, %v5474
      %5476 = vmatmul.bf16.gmra.mxu0 %v4457
      %v5477 = vpop.f32.mrf.mxu0
      %v5478 = vadd.f32 %v5429, %v5477
      %v5479 = vpop.f32.mrf.mxu0
      %v5480 = vadd.f32 %v5431, %v5479
      %5481 = vmatmul.bf16.gmra.mxu0 %v4463
      %v5482 = vpop.f32.mrf.mxu0
      %v5483 = vadd.f32 %v5434, %v5482
      %v5484 = vpop.f32.mrf.mxu0
      %v5485 = vadd.f32 %v5436, %v5484
      %5486 = vmatmul.bf16.gmra.mxu0 %v4469
      %v5487 = vpop.f32.mrf.mxu0
      %v5488 = vadd.f32 %v5439, %v5487
      %v5489 = vpop.f32.mrf.mxu0
      %v5490 = vadd.f32 %v5441, %v5489
      %5491 = vmatmul.bf16.gmra.mxu0 %v4475
      %v5492 = vpop.f32.mrf.mxu0
      %v5493 = vadd.f32 %v5444, %v5492
      %v5494 = vpop.f32.mrf.mxu0
      %v5495 = vadd.f32 %v5446, %v5494
      %5496 = vmatmul.bf16.gmra.mxu0 %v4481
      %v5497 = vpop.f32.mrf.mxu0
      %v5498 = vadd.f32 %v5449, %v5497
      %v5499 = vpop.f32.mrf.mxu0
      %v5500 = vadd.f32 %v5451, %v5499
      %5501 = vdwg.mxu0
      %5502 = vmatpush.bf16.msra.mxu0 %v4899
      %5503 = vmatpush.bf16.msra.mxu0 %v4897
      %5504 = vmatpush.bf16.msra.mxu0 %v4895
      %5505 = vmatpush.bf16.msra.mxu0 %v4893
      %5506 = vmatpush.bf16.msra.mxu0 %v4891
      %5507 = vmatpush.bf16.msra.mxu0 %v4889
      %5508 = vmatpush.bf16.msra.mxu0 %v4887
      %5509 = vmatpush.bf16.msra.mxu0 %v4885
      %5510 = vmatmul.bf16.gmra.mxu0 %v4440
      %v5511 = vpop.f32.mrf.mxu0
      %v5512 = vadd.f32 %v5463, %v5511
      %v5513 = vpop.f32.mrf.mxu0
      %v5514 = vadd.f32 %v5465, %v5513
      %5515 = vmatmul.bf16.gmra.mxu0 %v4446
      %v5516 = vpop.f32.mrf.mxu0
      %v5517 = vadd.f32 %v5468, %v5516
      %v5518 = vpop.f32.mrf.mxu0
      %v5519 = vadd.f32 %v5470, %v5518
      %5520 = vmatmul.bf16.gmra.mxu0 %v4452
      %v5521 = vpop.f32.mrf.mxu0
      %v5522 = vadd.f32 %v5473, %v5521
      %v5523 = vpop.f32.mrf.mxu0
      %v5524 = vadd.f32 %v5475, %v5523
      %5525 = vmatmul.bf16.gmra.mxu0 %v4458
      %v5526 = vpop.f32.mrf.mxu0
      %v5527 = vadd.f32 %v5478, %v5526
      %v5528 = vpop.f32.mrf.mxu0
      %v5529 = vadd.f32 %v5480, %v5528
      %5530 = vmatmul.bf16.gmra.mxu0 %v4464
      %v5531 = vpop.f32.mrf.mxu0
      %v5532 = vadd.f32 %v5483, %v5531
      %v5533 = vpop.f32.mrf.mxu0
      %v5534 = vadd.f32 %v5485, %v5533
      %5535 = vmatmul.bf16.gmra.mxu0 %v4470
      %v5536 = vpop.f32.mrf.mxu0
      %v5537 = vadd.f32 %v5488, %v5536
      %v5538 = vpop.f32.mrf.mxu0
      %v5539 = vadd.f32 %v5490, %v5538
      %5540 = vmatmul.bf16.gmra.mxu0 %v4476
      %v5541 = vpop.f32.mrf.mxu0
      %v5542 = vadd.f32 %v5493, %v5541
      %v5543 = vpop.f32.mrf.mxu0
      %v5544 = vadd.f32 %v5495, %v5543
      %5545 = vmatmul.bf16.gmra.mxu0 %v4482
      %v5546 = vpop.f32.mrf.mxu0
      %v5547 = vadd.f32 %v5498, %v5546
      %v5548 = vpop.f32.mrf.mxu0
      %v5549 = vadd.f32 %v5500, %v5548
      %5550 = vdwg.mxu0
      %5551 = vmatpush.bf16.msra.mxu0 %v4915
      %5552 = vmatpush.bf16.msra.mxu0 %v4913
      %5553 = vmatpush.bf16.msra.mxu0 %v4911
      %5554 = vmatpush.bf16.msra.mxu0 %v4909
      %5555 = vmatpush.bf16.msra.mxu0 %v4907
      %5556 = vmatpush.bf16.msra.mxu0 %v4905
      %5557 = vmatpush.bf16.msra.mxu0 %v4903
      %5558 = vmatpush.bf16.msra.mxu0 %v4901
      %5559 = vmatmul.bf16.gmra.mxu0 %v4441
      %v5560 = vpop.f32.mrf.mxu0
      %v5561 = vadd.f32 %v5512, %v5560
      %v5562 = vpop.f32.mrf.mxu0
      %v5563 = vadd.f32 %v5514, %v5562
      %5564 = vmatmul.bf16.gmra.mxu0 %v4447
      %v5565 = vpop.f32.mrf.mxu0
      %v5566 = vadd.f32 %v5517, %v5565
      %v5567 = vpop.f32.mrf.mxu0
      %v5568 = vadd.f32 %v5519, %v5567
      %5569 = vmatmul.bf16.gmra.mxu0 %v4453
      %v5570 = vpop.f32.mrf.mxu0
      %v5571 = vadd.f32 %v5522, %v5570
      %v5572 = vpop.f32.mrf.mxu0
      %v5573 = vadd.f32 %v5524, %v5572
      %5574 = vmatmul.bf16.gmra.mxu0 %v4459
      %v5575 = vpop.f32.mrf.mxu0
      %v5576 = vadd.f32 %v5527, %v5575
      %v5577 = vpop.f32.mrf.mxu0
      %v5578 = vadd.f32 %v5529, %v5577
      %5579 = vmatmul.bf16.gmra.mxu0 %v4465
      %v5580 = vpop.f32.mrf.mxu0
      %v5581 = vadd.f32 %v5532, %v5580
      %v5582 = vpop.f32.mrf.mxu0
      %v5583 = vadd.f32 %v5534, %v5582
      %5584 = vmatmul.bf16.gmra.mxu0 %v4471
      %v5585 = vpop.f32.mrf.mxu0
      %v5586 = vadd.f32 %v5537, %v5585
      %v5587 = vpop.f32.mrf.mxu0
      %v5588 = vadd.f32 %v5539, %v5587
      %5589 = vmatmul.bf16.gmra.mxu0 %v4477
      %v5590 = vpop.f32.mrf.mxu0
      %v5591 = vadd.f32 %v5542, %v5590
      %v5592 = vpop.f32.mrf.mxu0
      %v5593 = vadd.f32 %v5544, %v5592
      %5594 = vmatmul.bf16.gmra.mxu0 %v4483
      %v5595 = vpop.f32.mrf.mxu0
      %v5596 = vadd.f32 %v5547, %v5595
      %v5597 = vpop.f32.mrf.mxu0
      %v5598 = vadd.f32 %v5549, %v5597
      %5599 = vdwg.mxu0
      %v5600 = vmax.f32 %v5267, 0.0
      %v5601 = vmax.f32 %v5561, 0.0
      %v5602 = vmax.f32 %v5269, 0.0
      %v5603 = vmax.f32 %v5563, 0.0
      %v5604 = vmax.f32 %v5272, 0.0
      %v5605 = vmax.f32 %v5566, 0.0
      %v5606 = vmax.f32 %v5274, 0.0
      %v5607 = vmax.f32 %v5568, 0.0
      %v5608 = vmax.f32 %v5277, 0.0
      %v5609 = vmax.f32 %v5571, 0.0
      %v5610 = vmax.f32 %v5279, 0.0
      %v5611 = vmax.f32 %v5573, 0.0
      %v5612 = vmax.f32 %v5282, 0.0
      %v5613 = vmax.f32 %v5576, 0.0
      %v5614 = vmax.f32 %v5284, 0.0
      %v5615 = vmax.f32 %v5578, 0.0
      %v5616 = vmax.f32 %v5287, 0.0
      %v5617 = vmax.f32 %v5581, 0.0
      %v5618 = vmax.f32 %v5289, 0.0
      %v5619 = vmax.f32 %v5583, 0.0
      %v5620 = vmax.f32 %v5292, 0.0
      %v5621 = vmax.f32 %v5586, 0.0
      %v5622 = vmax.f32 %v5294, 0.0
      %v5623 = vmax.f32 %v5588, 0.0
      %v5624 = vmax.f32 %v5297, 0.0
      %v5625 = vmax.f32 %v5591, 0.0
      %v5626 = vmax.f32 %v5299, 0.0
      %v5627 = vmax.f32 %v5593, 0.0
      %v5628 = vmax.f32 %v5302, 0.0
      %v5629 = vmax.f32 %v5596, 0.0
      %v5630 = vmax.f32 %v5304, 0.0
      %v5631 = vmax.f32 %v5598, 0.0
      %v5632 = vpack.c.bf16 %v5602, %v5600
      %v5633 = vpack.c.bf16 %v5603, %v5601
      %v5634 = vpack.c.bf16 %v5606, %v5604
      %v5635 = vpack.c.bf16 %v5607, %v5605
      %v5636 = vpack.c.bf16 %v5610, %v5608
      %v5637 = vpack.c.bf16 %v5611, %v5609
      %v5638 = vpack.c.bf16 %v5614, %v5612
      %v5639 = vpack.c.bf16 %v5615, %v5613
      %v5640 = vpack.c.bf16 %v5618, %v5616
      %v5641 = vpack.c.bf16 %v5619, %v5617
      %v5642 = vpack.c.bf16 %v5622, %v5620
      %v5643 = vpack.c.bf16 %v5623, %v5621
      %v5644 = vpack.c.bf16 %v5626, %v5624
      %v5645 = vpack.c.bf16 %v5627, %v5625
      %v5646 = vpack.c.bf16 %v5630, %v5628
      %v5647 = vpack.c.bf16 %v5631, %v5629
      %v5648 = vld [vmem:[%s13] sm:$0xf]
      %v5649 = vld [vmem:[%s13 + $0x4] sm:$0xf]
      %v5650 = vld [vmem:[%s13 + $0x8] sm:$0xf]
      %v5651 = vld [vmem:[%s13 + $0xc] sm:$0xf]
      %v5652 = vld [vmem:[%s13 + $0x10] sm:$0xf]
      %v5653 = vld [vmem:[%s13 + $0x14] sm:$0xf]
      %v5654 = vld [vmem:[%s13 + $0x18] sm:$0xf]
      %v5655 = vld [vmem:[%s13 + $0x1c] sm:$0xf]
      %v5656 = vld [vmem:[%s13 + $0x20] sm:$0xf]
      %v5657 = vld [vmem:[%s13 + $0x24] sm:$0xf]
      %v5658 = vld [vmem:[%s13 + $0x28] sm:$0xf]
      %v5659 = vld [vmem:[%s13 + $0x2c] sm:$0xf]
      %v5660 = vld [vmem:[%s13 + $0x30] sm:$0xf]
      %v5661 = vld [vmem:[%s13 + $0x34] sm:$0xf]
      %v5662 = vld [vmem:[%s13 + $0x38] sm:$0xf]
      %v5663 = vld [vmem:[%s13 + $0x3c] sm:$0xf]
      %v5664 = vld [vmem:[%s13 + $0x40] sm:$0xf]
      %v5665 = vld [vmem:[%s13 + $0x44] sm:$0xf]
      %v5666 = vld [vmem:[%s13 + $0x48] sm:$0xf]
      %v5667 = vld [vmem:[%s13 + $0x4c] sm:$0xf]
      %v5668 = vld [vmem:[%s13 + $0x50] sm:$0xf]
      %v5669 = vld [vmem:[%s13 + $0x54] sm:$0xf]
      %v5670 = vld [vmem:[%s13 + $0x58] sm:$0xf]
      %v5671 = vld [vmem:[%s13 + $0x5c] sm:$0xf]
      %v5696 = vunpack.c.l.b16 %v5648
      %v5697 = vunpack.c.l.b16 %v5649
      %v5698 = vunpack.c.l.b16 %v5650
      %v5699 = vunpack.c.l.b16 %v5651
      %v5700 = vunpack.c.l.b16 %v5652
      %v5701 = vunpack.c.l.b16 %v5653
      %v5702 = vunpack.c.l.b16 %v5654
      %v5703 = vunpack.c.l.b16 %v5655
      %v5704 = vunpack.c.l.b16 %v5656
      %v5705 = vunpack.c.l.b16 %v5657
      %v5706 = vunpack.c.l.b16 %v5658
      %v5707 = vunpack.c.l.b16 %v5659
      %v5708 = vunpack.c.l.b16 %v5660
      %v5709 = vunpack.c.l.b16 %v5661
      %v5710 = vunpack.c.l.b16 %v5662
      %v5711 = vunpack.c.l.b16 %v5663
      %v5712 = vunpack.c.l.b16 %v5664
      %v5713 = vunpack.c.l.b16 %v5665
      %v5714 = vunpack.c.l.b16 %v5666
      %v5715 = vunpack.c.l.b16 %v5667
      %v5716 = vunpack.c.l.b16 %v5668
      %v5717 = vunpack.c.l.b16 %v5669
      %v5718 = vunpack.c.l.b16 %v5670
      %v5719 = vunpack.c.l.b16 %v5671
      %v5720 = vpack.c.b16 %v5697, %v5696
      %v5721 = vpack.c.b16 %v5699, %v5698
      %v5722 = vpack.c.b16 %v5701, %v5700
      %v5723 = vpack.c.b16 %v5703, %v5702
      %v5724 = vpack.c.b16 %v5705, %v5704
      %v5725 = vpack.c.b16 %v5707, %v5706
      %v5726 = vpack.c.b16 %v5709, %v5708
      %v5727 = vpack.c.b16 %v5711, %v5710
      %v5728 = vpack.c.b16 %v5713, %v5712
      %v5729 = vpack.c.b16 %v5715, %v5714
      %v5730 = vpack.c.b16 %v5717, %v5716
      %v5731 = vpack.c.b16 %v5719, %v5718
      %5744 = vmatpush.bf16.msra.mxu0 %v5646
      %5745 = vmatpush.bf16.msra.mxu0 %v5644
      %5746 = vmatpush.bf16.msra.mxu0 %v5642
      %5747 = vmatpush.bf16.msra.mxu0 %v5640
      %5748 = vmatpush.bf16.msra.mxu0 %v5638
      %5749 = vmatpush.bf16.msra.mxu0 %v5636
      %5750 = vmatpush.bf16.msra.mxu0 %v5634
      %5751 = vmatpush.bf16.msra.mxu0 %v5632
      %5752 = vmatmul.bf16.gmra.mxu0 %v5720
      %v5753 = vpop.f32.mrf.mxu0
      %v5754 = vadd.f32 0.0, %v5753
      %v5755 = vpop.f32.mrf.mxu0
      %v5756 = vadd.f32 0.0, %v5755
      %5757 = vmatmul.bf16.gmra.mxu0 %v5721
      %v5758 = vpop.f32.mrf.mxu0
      %v5759 = vadd.f32 0.0, %v5758
      %v5760 = vpop.f32.mrf.mxu0
      %v5761 = vadd.f32 0.0, %v5760
      %5762 = vmatmul.bf16.gmra.mxu0 %v5722
      %v5763 = vpop.f32.mrf.mxu0
      %v5764 = vadd.f32 0.0, %v5763
      %v5765 = vpop.f32.mrf.mxu0
      %v5766 = vadd.f32 0.0, %v5765
      %5767 = vmatmul.bf16.gmra.mxu0 %v5723
      %v5768 = vpop.f32.mrf.mxu0
      %v5769 = vadd.f32 0.0, %v5768
      %v5770 = vpop.f32.mrf.mxu0
      %v5771 = vadd.f32 0.0, %v5770
      %5772 = vmatmul.bf16.gmra.mxu0 %v5724
      %v5773 = vpop.f32.mrf.mxu0
      %v5774 = vadd.f32 0.0, %v5773
      %v5775 = vpop.f32.mrf.mxu0
      %v5776 = vadd.f32 0.0, %v5775
      %5777 = vmatmul.bf16.gmra.mxu0 %v5725
      %v5778 = vpop.f32.mrf.mxu0
      %v5779 = vadd.f32 0.0, %v5778
      %v5780 = vpop.f32.mrf.mxu0
      %v5781 = vadd.f32 0.0, %v5780
      %5782 = vmatmul.bf16.gmra.mxu0 %v5726
      %v5783 = vpop.f32.mrf.mxu0
      %v5784 = vadd.f32 0.0, %v5783
      %v5785 = vpop.f32.mrf.mxu0
      %v5786 = vadd.f32 0.0, %v5785
      %5787 = vmatmul.bf16.gmra.mxu0 %v5727
      %v5788 = vpop.f32.mrf.mxu0
      %v5789 = vadd.f32 0.0, %v5788
      %v5790 = vpop.f32.mrf.mxu0
      %v5791 = vadd.f32 0.0, %v5790
      %5792 = vmatmul.bf16.gmra.mxu0 %v5728
      %v5793 = vpop.f32.mrf.mxu0
      %v5794 = vadd.f32 0.0, %v5793
      %v5795 = vpop.f32.mrf.mxu0
      %v5796 = vadd.f32 0.0, %v5795
      %5797 = vmatmul.bf16.gmra.mxu0 %v5729
      %v5798 = vpop.f32.mrf.mxu0
      %v5799 = vadd.f32 0.0, %v5798
      %v5800 = vpop.f32.mrf.mxu0
      %v5801 = vadd.f32 0.0, %v5800
      %5802 = vmatmul.bf16.gmra.mxu0 %v5730
      %v5803 = vpop.f32.mrf.mxu0
      %v5804 = vadd.f32 0.0, %v5803
      %v5805 = vpop.f32.mrf.mxu0
      %v5806 = vadd.f32 0.0, %v5805
      %5807 = vmatmul.bf16.gmra.mxu0 %v5731
      %v5808 = vpop.f32.mrf.mxu0
      %v5809 = vadd.f32 0.0, %v5808
      %v5810 = vpop.f32.mrf.mxu0
      %v5811 = vadd.f32 0.0, %v5810
      %5812 = vdwg.mxu0
      %5813 = vmatpush.bf16.msra.mxu0 %v5647
      %5814 = vmatpush.bf16.msra.mxu0 %v5645
      %5815 = vmatpush.bf16.msra.mxu0 %v5643
      %5816 = vmatpush.bf16.msra.mxu0 %v5641
      %5817 = vmatpush.bf16.msra.mxu0 %v5639
      %5818 = vmatpush.bf16.msra.mxu0 %v5637
      %5819 = vmatpush.bf16.msra.mxu0 %v5635
      %5820 = vmatpush.bf16.msra.mxu0 %v5633
      %5821 = vmatmul.bf16.gmra.mxu0 %v5720
      %v5822 = vpop.f32.mrf.mxu0
      %v5823 = vadd.f32 0.0, %v5822
      %v5824 = vpop.f32.mrf.mxu0
      %v5825 = vadd.f32 0.0, %v5824
      %5826 = vmatmul.bf16.gmra.mxu0 %v5721
      %v5827 = vpop.f32.mrf.mxu0
      %v5828 = vadd.f32 0.0, %v5827
      %v5829 = vpop.f32.mrf.mxu0
      %v5830 = vadd.f32 0.0, %v5829
      %5831 = vmatmul.bf16.gmra.mxu0 %v5722
      %v5832 = vpop.f32.mrf.mxu0
      %v5833 = vadd.f32 0.0, %v5832
      %v5834 = vpop.f32.mrf.mxu0
      %v5835 = vadd.f32 0.0, %v5834
      %5836 = vmatmul.bf16.gmra.mxu0 %v5723
      %v5837 = vpop.f32.mrf.mxu0
      %v5838 = vadd.f32 0.0, %v5837
      %v5839 = vpop.f32.mrf.mxu0
      %v5840 = vadd.f32 0.0, %v5839
      %5841 = vmatmul.bf16.gmra.mxu0 %v5724
      %v5842 = vpop.f32.mrf.mxu0
      %v5843 = vadd.f32 0.0, %v5842
      %v5844 = vpop.f32.mrf.mxu0
      %v5845 = vadd.f32 0.0, %v5844
      %5846 = vmatmul.bf16.gmra.mxu0 %v5725
      %v5847 = vpop.f32.mrf.mxu0
      %v5848 = vadd.f32 0.0, %v5847
      %v5849 = vpop.f32.mrf.mxu0
      %v5850 = vadd.f32 0.0, %v5849
      %5851 = vmatmul.bf16.gmra.mxu0 %v5726
      %v5852 = vpop.f32.mrf.mxu0
      %v5853 = vadd.f32 0.0, %v5852
      %v5854 = vpop.f32.mrf.mxu0
      %v5855 = vadd.f32 0.0, %v5854
      %5856 = vmatmul.bf16.gmra.mxu0 %v5727
      %v5857 = vpop.f32.mrf.mxu0
      %v5858 = vadd.f32 0.0, %v5857
      %v5859 = vpop.f32.mrf.mxu0
      %v5860 = vadd.f32 0.0, %v5859
      %5861 = vmatmul.bf16.gmra.mxu0 %v5728
      %v5862 = vpop.f32.mrf.mxu0
      %v5863 = vadd.f32 0.0, %v5862
      %v5864 = vpop.f32.mrf.mxu0
      %v5865 = vadd.f32 0.0, %v5864
      %5866 = vmatmul.bf16.gmra.mxu0 %v5729
      %v5867 = vpop.f32.mrf.mxu0
      %v5868 = vadd.f32 0.0, %v5867
      %v5869 = vpop.f32.mrf.mxu0
      %v5870 = vadd.f32 0.0, %v5869
      %5871 = vmatmul.bf16.gmra.mxu0 %v5730
      %v5872 = vpop.f32.mrf.mxu0
      %v5873 = vadd.f32 0.0, %v5872
      %v5874 = vpop.f32.mrf.mxu0
      %v5875 = vadd.f32 0.0, %v5874
      %5876 = vmatmul.bf16.gmra.mxu0 %v5731
      %v5877 = vpop.f32.mrf.mxu0
      %v5878 = vadd.f32 0.0, %v5877
      %v5879 = vpop.f32.mrf.mxu0
      %v5880 = vadd.f32 0.0, %v5879
      %5881 = vdwg.mxu0
      %v5882 = vpack.c.bf16 %v5823, %v5754
      %v5883 = vpack.c.bf16 %v5825, %v5756
      %v5884 = vpack.c.bf16 %v5828, %v5759
      %v5885 = vpack.c.bf16 %v5830, %v5761
      %v5886 = vpack.c.bf16 %v5833, %v5764
      %v5887 = vpack.c.bf16 %v5835, %v5766
      %v5888 = vpack.c.bf16 %v5838, %v5769
      %v5889 = vpack.c.bf16 %v5840, %v5771
      %v5890 = vpack.c.bf16 %v5843, %v5774
      %v5891 = vpack.c.bf16 %v5845, %v5776
      %v5892 = vpack.c.bf16 %v5848, %v5779
      %v5893 = vpack.c.bf16 %v5850, %v5781
      %v5894 = vpack.c.bf16 %v5853, %v5784
      %v5895 = vpack.c.bf16 %v5855, %v5786
      %v5896 = vpack.c.bf16 %v5858, %v5789
      %v5897 = vpack.c.bf16 %v5860, %v5791
      %v5898 = vpack.c.bf16 %v5863, %v5794
      %v5899 = vpack.c.bf16 %v5865, %v5796
      %v5900 = vpack.c.bf16 %v5868, %v5799
      %v5901 = vpack.c.bf16 %v5870, %v5801
      %v5902 = vpack.c.bf16 %v5873, %v5804
      %v5903 = vpack.c.bf16 %v5875, %v5806
      %v5904 = vpack.c.bf16 %v5878, %v5809
      %v5905 = vpack.c.bf16 %v5880, %v5811
      %5906 = vst [vmem:[#allocation4] sm:$0xff] %v5882
      %5907 = vst [vmem:[#allocation4 + $0x18] sm:$0xff] %v5883
      %5908 = vst [vmem:[#allocation4 + $0x30] sm:$0xff] %v5884
      %5909 = vst [vmem:[#allocation4 + $0x48] sm:$0xff] %v5885
      %5910 = vst [vmem:[#allocation4 + $0x60] sm:$0xff] %v5886
      %5911 = vst [vmem:[#allocation4 + $0x78] sm:$0xff] %v5887
      %5912 = vst [vmem:[#allocation4 + $0x90] sm:$0xff] %v5888
      %5913 = vst [vmem:[#allocation4 + $0xa8] sm:$0xff] %v5889
      %5914 = vst [vmem:[#allocation4 + $0x8] sm:$0xff] %v5890
      %5915 = vst [vmem:[#allocation4 + $0x20] sm:$0xff] %v5891
      %5916 = vst [vmem:[#allocation4 + $0x38] sm:$0xff] %v5892
      %5917 = vst [vmem:[#allocation4 + $0x50] sm:$0xff] %v5893
      %5918 = vst [vmem:[#allocation4 + $0x68] sm:$0xff] %v5894
      %5919 = vst [vmem:[#allocation4 + $0x80] sm:$0xff] %v5895
      %5920 = vst [vmem:[#allocation4 + $0x98] sm:$0xff] %v5896
      %5921 = vst [vmem:[#allocation4 + $0xb0] sm:$0xff] %v5897
      %5922 = vst [vmem:[#allocation4 + $0x10] sm:$0xff] %v5898
      %5923 = vst [vmem:[#allocation4 + $0x28] sm:$0xff] %v5899
      %5924 = vst [vmem:[#allocation4 + $0x40] sm:$0xff] %v5900
      %5925 = vst [vmem:[#allocation4 + $0x58] sm:$0xff] %v5901
      %5926 = vst [vmem:[#allocation4 + $0x70] sm:$0xff] %v5902
      %5927 = vst [vmem:[#allocation4 + $0x88] sm:$0xff] %v5903
      %5928 = vst [vmem:[#allocation4 + $0xa0] sm:$0xff] %v5904
      %5929 = vst [vmem:[#allocation4 + $0xb8] sm:$0xff] %v5905
      %v5930 = vld [vmem:[#allocation4] sm:$0xff]
      %v5931 = vld [vmem:[#allocation4 + $0x8] sm:$0xff]
      %v5932 = vld [vmem:[#allocation4 + $0x10] sm:$0xff]
      %v5933 = vld [vmem:[#allocation4 + $0x18] sm:$0xff]
      %v5934 = vld [vmem:[#allocation4 + $0x20] sm:$0xff]
      %v5935 = vld [vmem:[#allocation4 + $0x28] sm:$0xff]
      %v5936 = vld [vmem:[#allocation4 + $0x30] sm:$0xff]
      %v5937 = vld [vmem:[#allocation4 + $0x38] sm:$0xff]
      %v5938 = vld [vmem:[#allocation4 + $0x40] sm:$0xff]
      %v5939 = vld [vmem:[#allocation4 + $0x48] sm:$0xff]
      %v5940 = vld [vmem:[#allocation4 + $0x50] sm:$0xff]
      %v5941 = vld [vmem:[#allocation4 + $0x58] sm:$0xff]
      %v5942 = vld [vmem:[#allocation4 + $0x60] sm:$0xff]
      %v5943 = vld [vmem:[#allocation4 + $0x68] sm:$0xff]
      %v5944 = vld [vmem:[#allocation4 + $0x70] sm:$0xff]
      %v5945 = vld [vmem:[#allocation4 + $0x78] sm:$0xff]
      %v5946 = vld [vmem:[#allocation4 + $0x80] sm:$0xff]
      %v5947 = vld [vmem:[#allocation4 + $0x88] sm:$0xff]
      %v5948 = vld [vmem:[#allocation4 + $0x90] sm:$0xff]
      %v5949 = vld [vmem:[#allocation4 + $0x98] sm:$0xff]
      %v5950 = vld [vmem:[#allocation4 + $0xa0] sm:$0xff]
      %v5951 = vld [vmem:[#allocation4 + $0xa8] sm:$0xff]
      %v5952 = vld [vmem:[#allocation4 + $0xb0] sm:$0xff]
      %v5953 = vld [vmem:[#allocation4 + $0xb8] sm:$0xff]
      %v5954 = vld [vmem:[%s3] sm:$0xff]
      %v5955 = vld [vmem:[%s3 + $0x8] sm:$0xff]
      %v5956 = vld [vmem:[%s3 + $0x10] sm:$0xff]
      %v5957 = vld [vmem:[%s3 + $0x18] sm:$0xff]
      %v5958 = vld [vmem:[%s3 + $0x20] sm:$0xff]
      %v5959 = vld [vmem:[%s3 + $0x28] sm:$0xff]
      %v5960 = vld [vmem:[%s3 + $0x30] sm:$0xff]
      %v5961 = vld [vmem:[%s3 + $0x38] sm:$0xff]
      %v5962 = vld [vmem:[%s3 + $0x40] sm:$0xff]
      %v5963 = vld [vmem:[%s3 + $0x48] sm:$0xff]
      %v5964 = vld [vmem:[%s3 + $0x50] sm:$0xff]
      %v5965 = vld [vmem:[%s3 + $0x58] sm:$0xff]
      %v5966 = vld [vmem:[%s3 + $0x60] sm:$0xff]
      %v5967 = vld [vmem:[%s3 + $0x68] sm:$0xff]
      %v5968 = vld [vmem:[%s3 + $0x70] sm:$0xff]
      %v5969 = vld [vmem:[%s3 + $0x78] sm:$0xff]
      %v5970 = vld [vmem:[%s3 + $0x80] sm:$0xff]
      %v5971 = vld [vmem:[%s3 + $0x88] sm:$0xff]
      %v5972 = vld [vmem:[%s3 + $0x90] sm:$0xff]
      %v5973 = vld [vmem:[%s3 + $0x98] sm:$0xff]
      %v5974 = vld [vmem:[%s3 + $0xa0] sm:$0xff]
      %v5975 = vld [vmem:[%s3 + $0xa8] sm:$0xff]
      %v5976 = vld [vmem:[%s3 + $0xb0] sm:$0xff]
      %v5977 = vld [vmem:[%s3 + $0xb8] sm:$0xff]
      %v5978 = vld [vmem:[%s3 + $0xc0] sm:$0xff]
      %v5979 = vld [vmem:[%s3 + $0xc8] sm:$0xff]
      %v5980 = vld [vmem:[%s3 + $0xd0] sm:$0xff]
      %v5981 = vld [vmem:[%s3 + $0xd8] sm:$0xff]
      %v5982 = vld [vmem:[%s3 + $0xe0] sm:$0xff]
      %v5983 = vld [vmem:[%s3 + $0xe8] sm:$0xff]
      %v5984 = vld [vmem:[%s3 + $0xf0] sm:$0xff]
      %v5985 = vld [vmem:[%s3 + $0xf8] sm:$0xff]
      %v5986 = vld [vmem:[%s3 + $0x100] sm:$0xff]
      %v5987 = vld [vmem:[%s3 + $0x108] sm:$0xff]
      %v5988 = vld [vmem:[%s3 + $0x110] sm:$0xff]
      %v5989 = vld [vmem:[%s3 + $0x118] sm:$0xff]
      %v5990 = vld [vmem:[%s3 + $0x120] sm:$0xff]
      %v5991 = vld [vmem:[%s3 + $0x128] sm:$0xff]
      %v5992 = vld [vmem:[%s3 + $0x130] sm:$0xff]
      %v5993 = vld [vmem:[%s3 + $0x138] sm:$0xff]
      %v5994 = vld [vmem:[%s3 + $0x140] sm:$0xff]
      %v5995 = vld [vmem:[%s3 + $0x148] sm:$0xff]
      %v5996 = vld [vmem:[%s3 + $0x150] sm:$0xff]
      %v5997 = vld [vmem:[%s3 + $0x158] sm:$0xff]
      %v5998 = vld [vmem:[%s3 + $0x160] sm:$0xff]
      %v5999 = vld [vmem:[%s3 + $0x168] sm:$0xff]
      %v6000 = vld [vmem:[%s3 + $0x170] sm:$0xff]
      %v6001 = vld [vmem:[%s3 + $0x178] sm:$0xff]
      %v6002 = vld [vmem:[%s3 + $0x180] sm:$0xff]
      %v6003 = vld [vmem:[%s3 + $0x188] sm:$0xff]
      %v6004 = vld [vmem:[%s3 + $0x190] sm:$0xff]
      %v6005 = vld [vmem:[%s3 + $0x198] sm:$0xff]
      %v6006 = vld [vmem:[%s3 + $0x1a0] sm:$0xff]
      %v6007 = vld [vmem:[%s3 + $0x1a8] sm:$0xff]
      %v6008 = vld [vmem:[%s3 + $0x1b0] sm:$0xff]
      %v6009 = vld [vmem:[%s3 + $0x1b8] sm:$0xff]
      %v6010 = vld [vmem:[%s3 + $0x1c0] sm:$0xff]
      %v6011 = vld [vmem:[%s3 + $0x1c8] sm:$0xff]
      %v6012 = vld [vmem:[%s3 + $0x1d0] sm:$0xff]
      %v6013 = vld [vmem:[%s3 + $0x1d8] sm:$0xff]
      %v6014 = vld [vmem:[%s3 + $0x1e0] sm:$0xff]
      %v6015 = vld [vmem:[%s3 + $0x1e8] sm:$0xff]
      %v6016 = vld [vmem:[%s3 + $0x1f0] sm:$0xff]
      %v6017 = vld [vmem:[%s3 + $0x1f8] sm:$0xff]
      %v6018 = vld [vmem:[%s3 + $0x200] sm:$0xff]
      %v6019 = vld [vmem:[%s3 + $0x208] sm:$0xff]
      %v6020 = vld [vmem:[%s3 + $0x210] sm:$0xff]
      %v6021 = vld [vmem:[%s3 + $0x218] sm:$0xff]
      %v6022 = vld [vmem:[%s3 + $0x220] sm:$0xff]
      %v6023 = vld [vmem:[%s3 + $0x228] sm:$0xff]
      %v6024 = vld [vmem:[%s3 + $0x230] sm:$0xff]
      %v6025 = vld [vmem:[%s3 + $0x238] sm:$0xff]
      %v6026 = vld [vmem:[%s3 + $0x240] sm:$0xff]
      %v6027 = vld [vmem:[%s3 + $0x248] sm:$0xff]
      %v6028 = vld [vmem:[%s3 + $0x250] sm:$0xff]
      %v6029 = vld [vmem:[%s3 + $0x258] sm:$0xff]
      %v6030 = vld [vmem:[%s3 + $0x260] sm:$0xff]
      %v6031 = vld [vmem:[%s3 + $0x268] sm:$0xff]
      %v6032 = vld [vmem:[%s3 + $0x270] sm:$0xff]
      %v6033 = vld [vmem:[%s3 + $0x278] sm:$0xff]
      %v6034 = vld [vmem:[%s3 + $0x280] sm:$0xff]
      %v6035 = vld [vmem:[%s3 + $0x288] sm:$0xff]
      %v6036 = vld [vmem:[%s3 + $0x290] sm:$0xff]
      %v6037 = vld [vmem:[%s3 + $0x298] sm:$0xff]
      %v6038 = vld [vmem:[%s3 + $0x2a0] sm:$0xff]
      %v6039 = vld [vmem:[%s3 + $0x2a8] sm:$0xff]
      %v6040 = vld [vmem:[%s3 + $0x2b0] sm:$0xff]
      %v6041 = vld [vmem:[%s3 + $0x2b8] sm:$0xff]
      %v6042 = vld [vmem:[%s3 + $0x2c0] sm:$0xff]
      %v6043 = vld [vmem:[%s3 + $0x2c8] sm:$0xff]
      %v6044 = vld [vmem:[%s3 + $0x2d0] sm:$0xff]
      %v6045 = vld [vmem:[%s3 + $0x2d8] sm:$0xff]
      %v6046 = vld [vmem:[%s3 + $0x2e0] sm:$0xff]
      %v6047 = vld [vmem:[%s3 + $0x2e8] sm:$0xff]
      %v6048 = vld [vmem:[%s3 + $0x2f0] sm:$0xff]
      %v6049 = vld [vmem:[%s3 + $0x2f8] sm:$0xff]
      %v6050 = vld [vmem:[%s8] sm:$0x3]
      %v6052 = vperm.slane %v6050, 0
      %v6053 = vperm.slane %v6050, 1
      %v6080 = vunpack.c.l.b16 %v5930
      %v6081 = vunpack.c.h.b16 %v5930
      %v6082 = vunpack.c.l.b16 %v5931
      %v6083 = vunpack.c.h.b16 %v5931
      %v6084 = vunpack.c.l.b16 %v5932
      %v6085 = vunpack.c.h.b16 %v5932
      %v6086 = vunpack.c.l.b16 %v5933
      %v6087 = vunpack.c.h.b16 %v5933
      %v6088 = vunpack.c.l.b16 %v5934
      %v6089 = vunpack.c.h.b16 %v5934
      %v6090 = vunpack.c.l.b16 %v5935
      %v6091 = vunpack.c.h.b16 %v5935
      %v6092 = vunpack.c.l.b16 %v5936
      %v6093 = vunpack.c.h.b16 %v5936
      %v6094 = vunpack.c.l.b16 %v5937
      %v6095 = vunpack.c.h.b16 %v5937
      %v6096 = vunpack.c.l.b16 %v5938
      %v6097 = vunpack.c.h.b16 %v5938
      %v6098 = vunpack.c.l.b16 %v5939
      %v6099 = vunpack.c.h.b16 %v5939
      %v6100 = vunpack.c.l.b16 %v5940
      %v6101 = vunpack.c.h.b16 %v5940
      %v6102 = vunpack.c.l.b16 %v5941
      %v6103 = vunpack.c.h.b16 %v5941
      %v6104 = vunpack.c.l.b16 %v5942
      %v6105 = vunpack.c.h.b16 %v5942
      %v6106 = vunpack.c.l.b16 %v5943
      %v6107 = vunpack.c.h.b16 %v5943
      %v6108 = vunpack.c.l.b16 %v5944
      %v6109 = vunpack.c.h.b16 %v5944
      %v6110 = vunpack.c.l.b16 %v5945
      %v6111 = vunpack.c.h.b16 %v5945
      %v6112 = vunpack.c.l.b16 %v5946
      %v6113 = vunpack.c.h.b16 %v5946
      %v6114 = vunpack.c.l.b16 %v5947
      %v6115 = vunpack.c.h.b16 %v5947
      %v6116 = vunpack.c.l.b16 %v5948
      %v6117 = vunpack.c.h.b16 %v5948
      %v6118 = vunpack.c.l.b16 %v5949
      %v6119 = vunpack.c.h.b16 %v5949
      %v6120 = vunpack.c.l.b16 %v5950
      %v6121 = vunpack.c.h.b16 %v5950
      %v6122 = vunpack.c.l.b16 %v5951
      %v6123 = vunpack.c.h.b16 %v5951
      %v6124 = vunpack.c.l.b16 %v5952
      %v6125 = vunpack.c.h.b16 %v5952
      %v6126 = vunpack.c.l.b16 %v5953
      %v6127 = vunpack.c.h.b16 %v5953
      %v6128 = vpack.c.b16 %v6086, %v6080
      %v6129 = vpack.c.b16 %v6087, %v6081
      %v6130 = vpack.c.b16 %v6088, %v6082
      %v6131 = vpack.c.b16 %v6089, %v6083
      %v6132 = vpack.c.b16 %v6090, %v6084
      %v6133 = vpack.c.b16 %v6091, %v6085
      %v6134 = vpack.c.b16 %v6098, %v6092
      %v6135 = vpack.c.b16 %v6099, %v6093
      %v6136 = vpack.c.b16 %v6100, %v6094
      %v6137 = vpack.c.b16 %v6101, %v6095
      %v6138 = vpack.c.b16 %v6102, %v6096
      %v6139 = vpack.c.b16 %v6103, %v6097
      %v6140 = vpack.c.b16 %v6110, %v6104
      %v6141 = vpack.c.b16 %v6111, %v6105
      %v6142 = vpack.c.b16 %v6112, %v6106
      %v6143 = vpack.c.b16 %v6113, %v6107
      %v6144 = vpack.c.b16 %v6114, %v6108
      %v6145 = vpack.c.b16 %v6115, %v6109
      %v6146 = vpack.c.b16 %v6122, %v6116
      %v6147 = vpack.c.b16 %v6123, %v6117
      %v6148 = vpack.c.b16 %v6124, %v6118
      %v6149 = vpack.c.b16 %v6125, %v6119
      %v6150 = vpack.c.b16 %v6126, %v6120
      %v6151 = vpack.c.b16 %v6127, %v6121
      %v6272 = vunpack.c.l.b16 %v5954
      %v6273 = vunpack.c.h.b16 %v5954
      %v6274 = vunpack.c.l.b16 %v5955
      %v6275 = vunpack.c.h.b16 %v5955
      %v6276 = vunpack.c.l.b16 %v5956
      %v6277 = vunpack.c.h.b16 %v5956
      %v6278 = vunpack.c.l.b16 %v5957
      %v6279 = vunpack.c.h.b16 %v5957
      %v6280 = vunpack.c.l.b16 %v5958
      %v6281 = vunpack.c.h.b16 %v5958
      %v6282 = vunpack.c.l.b16 %v5959
      %v6283 = vunpack.c.h.b16 %v5959
      %v6284 = vunpack.c.l.b16 %v5960
      %v6285 = vunpack.c.h.b16 %v5960
      %v6286 = vunpack.c.l.b16 %v5961
      %v6287 = vunpack.c.h.b16 %v5961
      %v6288 = vunpack.c.l.b16 %v5962
      %v6289 = vunpack.c.h.b16 %v5962
      %v6290 = vunpack.c.l.b16 %v5963
      %v6291 = vunpack.c.h.b16 %v5963
      %v6292 = vunpack.c.l.b16 %v5964
      %v6293 = vunpack.c.h.b16 %v5964
      %v6294 = vunpack.c.l.b16 %v5965
      %v6295 = vunpack.c.h.b16 %v5965
      %v6296 = vunpack.c.l.b16 %v5966
      %v6297 = vunpack.c.h.b16 %v5966
      %v6298 = vunpack.c.l.b16 %v5967
      %v6299 = vunpack.c.h.b16 %v5967
      %v6300 = vunpack.c.l.b16 %v5968
      %v6301 = vunpack.c.h.b16 %v5968
      %v6302 = vunpack.c.l.b16 %v5969
      %v6303 = vunpack.c.h.b16 %v5969
      %v6304 = vunpack.c.l.b16 %v5970
      %v6305 = vunpack.c.h.b16 %v5970
      %v6306 = vunpack.c.l.b16 %v5971
      %v6307 = vunpack.c.h.b16 %v5971
      %v6308 = vunpack.c.l.b16 %v5972
      %v6309 = vunpack.c.h.b16 %v5972
      %v6310 = vunpack.c.l.b16 %v5973
      %v6311 = vunpack.c.h.b16 %v5973
      %v6312 = vunpack.c.l.b16 %v5974
      %v6313 = vunpack.c.h.b16 %v5974
      %v6314 = vunpack.c.l.b16 %v5975
      %v6315 = vunpack.c.h.b16 %v5975
      %v6316 = vunpack.c.l.b16 %v5976
      %v6317 = vunpack.c.h.b16 %v5976
      %v6318 = vunpack.c.l.b16 %v5977
      %v6319 = vunpack.c.h.b16 %v5977
      %v6320 = vunpack.c.l.b16 %v5978
      %v6321 = vunpack.c.h.b16 %v5978
      %v6322 = vunpack.c.l.b16 %v5979
      %v6323 = vunpack.c.h.b16 %v5979
      %v6324 = vunpack.c.l.b16 %v5980
      %v6325 = vunpack.c.h.b16 %v5980
      %v6326 = vunpack.c.l.b16 %v5981
      %v6327 = vunpack.c.h.b16 %v5981
      %v6328 = vunpack.c.l.b16 %v5982
      %v6329 = vunpack.c.h.b16 %v5982
      %v6330 = vunpack.c.l.b16 %v5983
      %v6331 = vunpack.c.h.b16 %v5983
      %v6332 = vunpack.c.l.b16 %v5984
      %v6333 = vunpack.c.h.b16 %v5984
      %v6334 = vunpack.c.l.b16 %v5985
      %v6335 = vunpack.c.h.b16 %v5985
      %v6336 = vunpack.c.l.b16 %v5986
      %v6337 = vunpack.c.h.b16 %v5986
      %v6338 = vunpack.c.l.b16 %v5987
      %v6339 = vunpack.c.h.b16 %v5987
      %v6340 = vunpack.c.l.b16 %v5988
      %v6341 = vunpack.c.h.b16 %v5988
      %v6342 = vunpack.c.l.b16 %v5989
      %v6343 = vunpack.c.h.b16 %v5989
      %v6344 = vunpack.c.l.b16 %v5990
      %v6345 = vunpack.c.h.b16 %v5990
      %v6346 = vunpack.c.l.b16 %v5991
      %v6347 = vunpack.c.h.b16 %v5991
      %v6348 = vunpack.c.l.b16 %v5992
      %v6349 = vunpack.c.h.b16 %v5992
      %v6350 = vunpack.c.l.b16 %v5993
      %v6351 = vunpack.c.h.b16 %v5993
      %v6352 = vunpack.c.l.b16 %v5994
      %v6353 = vunpack.c.h.b16 %v5994
      %v6354 = vunpack.c.l.b16 %v5995
      %v6355 = vunpack.c.h.b16 %v5995
      %v6356 = vunpack.c.l.b16 %v5996
      %v6357 = vunpack.c.h.b16 %v5996
      %v6358 = vunpack.c.l.b16 %v5997
      %v6359 = vunpack.c.h.b16 %v5997
      %v6360 = vunpack.c.l.b16 %v5998
      %v6361 = vunpack.c.h.b16 %v5998
      %v6362 = vunpack.c.l.b16 %v5999
      %v6363 = vunpack.c.h.b16 %v5999
      %v6364 = vunpack.c.l.b16 %v6000
      %v6365 = vunpack.c.h.b16 %v6000
      %v6366 = vunpack.c.l.b16 %v6001
      %v6367 = vunpack.c.h.b16 %v6001
      %v6368 = vunpack.c.l.b16 %v6002
      %v6369 = vunpack.c.h.b16 %v6002
      %v6370 = vunpack.c.l.b16 %v6003
      %v6371 = vunpack.c.h.b16 %v6003
      %v6372 = vunpack.c.l.b16 %v6004
      %v6373 = vunpack.c.h.b16 %v6004
      %v6374 = vunpack.c.l.b16 %v6005
      %v6375 = vunpack.c.h.b16 %v6005
      %v6376 = vunpack.c.l.b16 %v6006
      %v6377 = vunpack.c.h.b16 %v6006
      %v6378 = vunpack.c.l.b16 %v6007
      %v6379 = vunpack.c.h.b16 %v6007
      %v6380 = vunpack.c.l.b16 %v6008
      %v6381 = vunpack.c.h.b16 %v6008
      %v6382 = vunpack.c.l.b16 %v6009
      %v6383 = vunpack.c.h.b16 %v6009
      %v6384 = vunpack.c.l.b16 %v6010
      %v6385 = vunpack.c.h.b16 %v6010
      %v6386 = vunpack.c.l.b16 %v6011
      %v6387 = vunpack.c.h.b16 %v6011
      %v6388 = vunpack.c.l.b16 %v6012
      %v6389 = vunpack.c.h.b16 %v6012
      %v6390 = vunpack.c.l.b16 %v6013
      %v6391 = vunpack.c.h.b16 %v6013
      %v6392 = vunpack.c.l.b16 %v6014
      %v6393 = vunpack.c.h.b16 %v6014
      %v6394 = vunpack.c.l.b16 %v6015
      %v6395 = vunpack.c.h.b16 %v6015
      %v6396 = vunpack.c.l.b16 %v6016
      %v6397 = vunpack.c.h.b16 %v6016
      %v6398 = vunpack.c.l.b16 %v6017
      %v6399 = vunpack.c.h.b16 %v6017
      %v6400 = vunpack.c.l.b16 %v6018
      %v6401 = vunpack.c.h.b16 %v6018
      %v6402 = vunpack.c.l.b16 %v6019
      %v6403 = vunpack.c.h.b16 %v6019
      %v6404 = vunpack.c.l.b16 %v6020
      %v6405 = vunpack.c.h.b16 %v6020
      %v6406 = vunpack.c.l.b16 %v6021
      %v6407 = vunpack.c.h.b16 %v6021
      %v6408 = vunpack.c.l.b16 %v6022
      %v6409 = vunpack.c.h.b16 %v6022
      %v6410 = vunpack.c.l.b16 %v6023
      %v6411 = vunpack.c.h.b16 %v6023
      %v6412 = vunpack.c.l.b16 %v6024
      %v6413 = vunpack.c.h.b16 %v6024
      %v6414 = vunpack.c.l.b16 %v6025
      %v6415 = vunpack.c.h.b16 %v6025
      %v6416 = vunpack.c.l.b16 %v6026
      %v6417 = vunpack.c.h.b16 %v6026
      %v6418 = vunpack.c.l.b16 %v6027
      %v6419 = vunpack.c.h.b16 %v6027
      %v6420 = vunpack.c.l.b16 %v6028
      %v6421 = vunpack.c.h.b16 %v6028
      %v6422 = vunpack.c.l.b16 %v6029
      %v6423 = vunpack.c.h.b16 %v6029
      %v6424 = vunpack.c.l.b16 %v6030
      %v6425 = vunpack.c.h.b16 %v6030
      %v6426 = vunpack.c.l.b16 %v6031
      %v6427 = vunpack.c.h.b16 %v6031
      %v6428 = vunpack.c.l.b16 %v6032
      %v6429 = vunpack.c.h.b16 %v6032
      %v6430 = vunpack.c.l.b16 %v6033
      %v6431 = vunpack.c.h.b16 %v6033
      %v6432 = vunpack.c.l.b16 %v6034
      %v6433 = vunpack.c.h.b16 %v6034
      %v6434 = vunpack.c.l.b16 %v6035
      %v6435 = vunpack.c.h.b16 %v6035
      %v6436 = vunpack.c.l.b16 %v6036
      %v6437 = vunpack.c.h.b16 %v6036
      %v6438 = vunpack.c.l.b16 %v6037
      %v6439 = vunpack.c.h.b16 %v6037
      %v6440 = vunpack.c.l.b16 %v6038
      %v6441 = vunpack.c.h.b16 %v6038
      %v6442 = vunpack.c.l.b16 %v6039
      %v6443 = vunpack.c.h.b16 %v6039
      %v6444 = vunpack.c.l.b16 %v6040
      %v6445 = vunpack.c.h.b16 %v6040
      %v6446 = vunpack.c.l.b16 %v6041
      %v6447 = vunpack.c.h.b16 %v6041
      %v6448 = vunpack.c.l.b16 %v6042
      %v6449 = vunpack.c.h.b16 %v6042
      %v6450 = vunpack.c.l.b16 %v6043
      %v6451 = vunpack.c.h.b16 %v6043
      %v6452 = vunpack.c.l.b16 %v6044
      %v6453 = vunpack.c.h.b16 %v6044
      %v6454 = vunpack.c.l.b16 %v6045
      %v6455 = vunpack.c.h.b16 %v6045
      %v6456 = vunpack.c.l.b16 %v6046
      %v6457 = vunpack.c.h.b16 %v6046
      %v6458 = vunpack.c.l.b16 %v6047
      %v6459 = vunpack.c.h.b16 %v6047
      %v6460 = vunpack.c.l.b16 %v6048
      %v6461 = vunpack.c.h.b16 %v6048
      %v6462 = vunpack.c.l.b16 %v6049
      %v6463 = vunpack.c.h.b16 %v6049
      %v6464 = vpack.c.b16 %v6274, %v6272
      %v6465 = vpack.c.b16 %v6275, %v6273
      %v6466 = vpack.c.b16 %v6278, %v6276
      %v6467 = vpack.c.b16 %v6279, %v6277
      %v6468 = vpack.c.b16 %v6282, %v6280
      %v6469 = vpack.c.b16 %v6283, %v6281
      %v6470 = vpack.c.b16 %v6286, %v6284
      %v6471 = vpack.c.b16 %v6287, %v6285
      %v6472 = vpack.c.b16 %v6290, %v6288
      %v6473 = vpack.c.b16 %v6291, %v6289
      %v6474 = vpack.c.b16 %v6294, %v6292
      %v6475 = vpack.c.b16 %v6295, %v6293
      %v6476 = vpack.c.b16 %v6298, %v6296
      %v6477 = vpack.c.b16 %v6299, %v6297
      %v6478 = vpack.c.b16 %v6302, %v6300
      %v6479 = vpack.c.b16 %v6303, %v6301
      %v6480 = vpack.c.b16 %v6306, %v6304
      %v6481 = vpack.c.b16 %v6307, %v6305
      %v6482 = vpack.c.b16 %v6310, %v6308
      %v6483 = vpack.c.b16 %v6311, %v6309
      %v6484 = vpack.c.b16 %v6314, %v6312
      %v6485 = vpack.c.b16 %v6315, %v6313
      %v6486 = vpack.c.b16 %v6318, %v6316
      %v6487 = vpack.c.b16 %v6319, %v6317
      %v6488 = vpack.c.b16 %v6322, %v6320
      %v6489 = vpack.c.b16 %v6323, %v6321
      %v6490 = vpack.c.b16 %v6326, %v6324
      %v6491 = vpack.c.b16 %v6327, %v6325
      %v6492 = vpack.c.b16 %v6330, %v6328
      %v6493 = vpack.c.b16 %v6331, %v6329
      %v6494 = vpack.c.b16 %v6334, %v6332
      %v6495 = vpack.c.b16 %v6335, %v6333
      %v6496 = vpack.c.b16 %v6338, %v6336
      %v6497 = vpack.c.b16 %v6339, %v6337
      %v6498 = vpack.c.b16 %v6342, %v6340
      %v6499 = vpack.c.b16 %v6343, %v6341
      %v6500 = vpack.c.b16 %v6346, %v6344
      %v6501 = vpack.c.b16 %v6347, %v6345
      %v6502 = vpack.c.b16 %v6350, %v6348
      %v6503 = vpack.c.b16 %v6351, %v6349
      %v6504 = vpack.c.b16 %v6354, %v6352
      %v6505 = vpack.c.b16 %v6355, %v6353
      %v6506 = vpack.c.b16 %v6358, %v6356
      %v6507 = vpack.c.b16 %v6359, %v6357
      %v6508 = vpack.c.b16 %v6362, %v6360
      %v6509 = vpack.c.b16 %v6363, %v6361
      %v6510 = vpack.c.b16 %v6366, %v6364
      %v6511 = vpack.c.b16 %v6367, %v6365
      %v6512 = vpack.c.b16 %v6370, %v6368
      %v6513 = vpack.c.b16 %v6371, %v6369
      %v6514 = vpack.c.b16 %v6374, %v6372
      %v6515 = vpack.c.b16 %v6375, %v6373
      %v6516 = vpack.c.b16 %v6378, %v6376
      %v6517 = vpack.c.b16 %v6379, %v6377
      %v6518 = vpack.c.b16 %v6382, %v6380
      %v6519 = vpack.c.b16 %v6383, %v6381
      %v6520 = vpack.c.b16 %v6386, %v6384
      %v6521 = vpack.c.b16 %v6387, %v6385
      %v6522 = vpack.c.b16 %v6390, %v6388
      %v6523 = vpack.c.b16 %v6391, %v6389
      %v6524 = vpack.c.b16 %v6394, %v6392
      %v6525 = vpack.c.b16 %v6395, %v6393
      %v6526 = vpack.c.b16 %v6398, %v6396
      %v6527 = vpack.c.b16 %v6399, %v6397
      %v6528 = vpack.c.b16 %v6402, %v6400
      %v6529 = vpack.c.b16 %v6403, %v6401
      %v6530 = vpack.c.b16 %v6406, %v6404
      %v6531 = vpack.c.b16 %v6407, %v6405
      %v6532 = vpack.c.b16 %v6410, %v6408
      %v6533 = vpack.c.b16 %v6411, %v6409
      %v6534 = vpack.c.b16 %v6414, %v6412
      %v6535 = vpack.c.b16 %v6415, %v6413
      %v6536 = vpack.c.b16 %v6418, %v6416
      %v6537 = vpack.c.b16 %v6419, %v6417
      %v6538 = vpack.c.b16 %v6422, %v6420
      %v6539 = vpack.c.b16 %v6423, %v6421
      %v6540 = vpack.c.b16 %v6426, %v6424
      %v6541 = vpack.c.b16 %v6427, %v6425
      %v6542 = vpack.c.b16 %v6430, %v6428
      %v6543 = vpack.c.b16 %v6431, %v6429
      %v6544 = vpack.c.b16 %v6434, %v6432
      %v6545 = vpack.c.b16 %v6435, %v6433
      %v6546 = vpack.c.b16 %v6438, %v6436
      %v6547 = vpack.c.b16 %v6439, %v6437
      %v6548 = vpack.c.b16 %v6442, %v6440
      %v6549 = vpack.c.b16 %v6443, %v6441
      %v6550 = vpack.c.b16 %v6446, %v6444
      %v6551 = vpack.c.b16 %v6447, %v6445
      %v6552 = vpack.c.b16 %v6450, %v6448
      %v6553 = vpack.c.b16 %v6451, %v6449
      %v6554 = vpack.c.b16 %v6454, %v6452
      %v6555 = vpack.c.b16 %v6455, %v6453
      %v6556 = vpack.c.b16 %v6458, %v6456
      %v6557 = vpack.c.b16 %v6459, %v6457
      %v6558 = vpack.c.b16 %v6462, %v6460
      %v6559 = vpack.c.b16 %v6463, %v6461
      %6656 = vmatpush.bf16.msra.mxu0 %v6478
      %6657 = vmatpush.bf16.msra.mxu0 %v6476
      %6658 = vmatpush.bf16.msra.mxu0 %v6474
      %6659 = vmatpush.bf16.msra.mxu0 %v6472
      %6660 = vmatpush.bf16.msra.mxu0 %v6470
      %6661 = vmatpush.bf16.msra.mxu0 %v6468
      %6662 = vmatpush.bf16.msra.mxu0 %v6466
      %6663 = vmatpush.bf16.msra.mxu0 %v6464
      %6664 = vmatmul.bf16.gmra.mxu0 %v6128
      %v6665 = vpop.f32.mrf.mxu0
      %v6666 = vadd.f32 %v6052, %v6665
      %v6667 = vpop.f32.mrf.mxu0
      %v6668 = vadd.f32 %v6052, %v6667
      %6669 = vmatmul.bf16.gmra.mxu0 %v6134
      %v6670 = vpop.f32.mrf.mxu0
      %v6671 = vadd.f32 %v6052, %v6670
      %v6672 = vpop.f32.mrf.mxu0
      %v6673 = vadd.f32 %v6052, %v6672
      %6674 = vmatmul.bf16.gmra.mxu0 %v6140
      %v6675 = vpop.f32.mrf.mxu0
      %v6676 = vadd.f32 %v6052, %v6675
      %v6677 = vpop.f32.mrf.mxu0
      %v6678 = vadd.f32 %v6052, %v6677
      %6679 = vmatmul.bf16.gmra.mxu0 %v6146
      %v6680 = vpop.f32.mrf.mxu0
      %v6681 = vadd.f32 %v6052, %v6680
      %v6682 = vpop.f32.mrf.mxu0
      %v6683 = vadd.f32 %v6052, %v6682
      %6684 = vdwg.mxu0
      %6685 = vmatpush.bf16.msra.mxu0 %v6494
      %6686 = vmatpush.bf16.msra.mxu0 %v6492
      %6687 = vmatpush.bf16.msra.mxu0 %v6490
      %6688 = vmatpush.bf16.msra.mxu0 %v6488
      %6689 = vmatpush.bf16.msra.mxu0 %v6486
      %6690 = vmatpush.bf16.msra.mxu0 %v6484
      %6691 = vmatpush.bf16.msra.mxu0 %v6482
      %6692 = vmatpush.bf16.msra.mxu0 %v6480
      %6693 = vmatmul.bf16.gmra.mxu0 %v6129
      %v6694 = vpop.f32.mrf.mxu0
      %v6695 = vadd.f32 %v6666, %v6694
      %v6696 = vpop.f32.mrf.mxu0
      %v6697 = vadd.f32 %v6668, %v6696
      %6698 = vmatmul.bf16.gmra.mxu0 %v6135
      %v6699 = vpop.f32.mrf.mxu0
      %v6700 = vadd.f32 %v6671, %v6699
      %v6701 = vpop.f32.mrf.mxu0
      %v6702 = vadd.f32 %v6673, %v6701
      %6703 = vmatmul.bf16.gmra.mxu0 %v6141
      %v6704 = vpop.f32.mrf.mxu0
      %v6705 = vadd.f32 %v6676, %v6704
      %v6706 = vpop.f32.mrf.mxu0
      %v6707 = vadd.f32 %v6678, %v6706
      %6708 = vmatmul.bf16.gmra.mxu0 %v6147
      %v6709 = vpop.f32.mrf.mxu0
      %v6710 = vadd.f32 %v6681, %v6709
      %v6711 = vpop.f32.mrf.mxu0
      %v6712 = vadd.f32 %v6683, %v6711
      %6713 = vdwg.mxu0
      %6714 = vmatpush.bf16.msra.mxu0 %v6510
      %6715 = vmatpush.bf16.msra.mxu0 %v6508
      %6716 = vmatpush.bf16.msra.mxu0 %v6506
      %6717 = vmatpush.bf16.msra.mxu0 %v6504
      %6718 = vmatpush.bf16.msra.mxu0 %v6502
      %6719 = vmatpush.bf16.msra.mxu0 %v6500
      %6720 = vmatpush.bf16.msra.mxu0 %v6498
      %6721 = vmatpush.bf16.msra.mxu0 %v6496
      %6722 = vmatmul.bf16.gmra.mxu0 %v6130
      %v6723 = vpop.f32.mrf.mxu0
      %v6724 = vadd.f32 %v6695, %v6723
      %v6725 = vpop.f32.mrf.mxu0
      %v6726 = vadd.f32 %v6697, %v6725
      %6727 = vmatmul.bf16.gmra.mxu0 %v6136
      %v6728 = vpop.f32.mrf.mxu0
      %v6729 = vadd.f32 %v6700, %v6728
      %v6730 = vpop.f32.mrf.mxu0
      %v6731 = vadd.f32 %v6702, %v6730
      %6732 = vmatmul.bf16.gmra.mxu0 %v6142
      %v6733 = vpop.f32.mrf.mxu0
      %v6734 = vadd.f32 %v6705, %v6733
      %v6735 = vpop.f32.mrf.mxu0
      %v6736 = vadd.f32 %v6707, %v6735
      %6737 = vmatmul.bf16.gmra.mxu0 %v6148
      %v6738 = vpop.f32.mrf.mxu0
      %v6739 = vadd.f32 %v6710, %v6738
      %v6740 = vpop.f32.mrf.mxu0
      %v6741 = vadd.f32 %v6712, %v6740
      %6742 = vdwg.mxu0
      %6743 = vmatpush.bf16.msra.mxu0 %v6526
      %6744 = vmatpush.bf16.msra.mxu0 %v6524
      %6745 = vmatpush.bf16.msra.mxu0 %v6522
      %6746 = vmatpush.bf16.msra.mxu0 %v6520
      %6747 = vmatpush.bf16.msra.mxu0 %v6518
      %6748 = vmatpush.bf16.msra.mxu0 %v6516
      %6749 = vmatpush.bf16.msra.mxu0 %v6514
      %6750 = vmatpush.bf16.msra.mxu0 %v6512
      %6751 = vmatmul.bf16.gmra.mxu0 %v6131
      %v6752 = vpop.f32.mrf.mxu0
      %v6753 = vadd.f32 %v6724, %v6752
      %v6754 = vpop.f32.mrf.mxu0
      %v6755 = vadd.f32 %v6726, %v6754
      %6756 = vmatmul.bf16.gmra.mxu0 %v6137
      %v6757 = vpop.f32.mrf.mxu0
      %v6758 = vadd.f32 %v6729, %v6757
      %v6759 = vpop.f32.mrf.mxu0
      %v6760 = vadd.f32 %v6731, %v6759
      %6761 = vmatmul.bf16.gmra.mxu0 %v6143
      %v6762 = vpop.f32.mrf.mxu0
      %v6763 = vadd.f32 %v6734, %v6762
      %v6764 = vpop.f32.mrf.mxu0
      %v6765 = vadd.f32 %v6736, %v6764
      %6766 = vmatmul.bf16.gmra.mxu0 %v6149
      %v6767 = vpop.f32.mrf.mxu0
      %v6768 = vadd.f32 %v6739, %v6767
      %v6769 = vpop.f32.mrf.mxu0
      %v6770 = vadd.f32 %v6741, %v6769
      %6771 = vdwg.mxu0
      %6772 = vmatpush.bf16.msra.mxu0 %v6542
      %6773 = vmatpush.bf16.msra.mxu0 %v6540
      %6774 = vmatpush.bf16.msra.mxu0 %v6538
      %6775 = vmatpush.bf16.msra.mxu0 %v6536
      %6776 = vmatpush.bf16.msra.mxu0 %v6534
      %6777 = vmatpush.bf16.msra.mxu0 %v6532
      %6778 = vmatpush.bf16.msra.mxu0 %v6530
      %6779 = vmatpush.bf16.msra.mxu0 %v6528
      %6780 = vmatmul.bf16.gmra.mxu0 %v6132
      %v6781 = vpop.f32.mrf.mxu0
      %v6782 = vadd.f32 %v6753, %v6781
      %v6783 = vpop.f32.mrf.mxu0
      %v6784 = vadd.f32 %v6755, %v6783
      %6785 = vmatmul.bf16.gmra.mxu0 %v6138
      %v6786 = vpop.f32.mrf.mxu0
      %v6787 = vadd.f32 %v6758, %v6786
      %v6788 = vpop.f32.mrf.mxu0
      %v6789 = vadd.f32 %v6760, %v6788
      %6790 = vmatmul.bf16.gmra.mxu0 %v6144
      %v6791 = vpop.f32.mrf.mxu0
      %v6792 = vadd.f32 %v6763, %v6791
      %v6793 = vpop.f32.mrf.mxu0
      %v6794 = vadd.f32 %v6765, %v6793
      %6795 = vmatmul.bf16.gmra.mxu0 %v6150
      %v6796 = vpop.f32.mrf.mxu0
      %v6797 = vadd.f32 %v6768, %v6796
      %v6798 = vpop.f32.mrf.mxu0
      %v6799 = vadd.f32 %v6770, %v6798
      %6800 = vdwg.mxu0
      %6801 = vmatpush.bf16.msra.mxu0 %v6558
      %6802 = vmatpush.bf16.msra.mxu0 %v6556
      %6803 = vmatpush.bf16.msra.mxu0 %v6554
      %6804 = vmatpush.bf16.msra.mxu0 %v6552
      %6805 = vmatpush.bf16.msra.mxu0 %v6550
      %6806 = vmatpush.bf16.msra.mxu0 %v6548
      %6807 = vmatpush.bf16.msra.mxu0 %v6546
      %6808 = vmatpush.bf16.msra.mxu0 %v6544
      %6809 = vmatmul.bf16.gmra.mxu0 %v6133
      %v6810 = vpop.f32.mrf.mxu0
      %v6811 = vadd.f32 %v6782, %v6810
      %v6812 = vpop.f32.mrf.mxu0
      %v6813 = vadd.f32 %v6784, %v6812
      %6814 = vmatmul.bf16.gmra.mxu0 %v6139
      %v6815 = vpop.f32.mrf.mxu0
      %v6816 = vadd.f32 %v6787, %v6815
      %v6817 = vpop.f32.mrf.mxu0
      %v6818 = vadd.f32 %v6789, %v6817
      %6819 = vmatmul.bf16.gmra.mxu0 %v6145
      %v6820 = vpop.f32.mrf.mxu0
      %v6821 = vadd.f32 %v6792, %v6820
      %v6822 = vpop.f32.mrf.mxu0
      %v6823 = vadd.f32 %v6794, %v6822
      %6824 = vmatmul.bf16.gmra.mxu0 %v6151
      %v6825 = vpop.f32.mrf.mxu0
      %v6826 = vadd.f32 %v6797, %v6825
      %v6827 = vpop.f32.mrf.mxu0
      %v6828 = vadd.f32 %v6799, %v6827
      %6829 = vdwg.mxu0
      %6830 = vmatpush.bf16.msra.mxu0 %v6479
      %6831 = vmatpush.bf16.msra.mxu0 %v6477
      %6832 = vmatpush.bf16.msra.mxu0 %v6475
      %6833 = vmatpush.bf16.msra.mxu0 %v6473
      %6834 = vmatpush.bf16.msra.mxu0 %v6471
      %6835 = vmatpush.bf16.msra.mxu0 %v6469
      %6836 = vmatpush.bf16.msra.mxu0 %v6467
      %6837 = vmatpush.bf16.msra.mxu0 %v6465
      %6838 = vmatmul.bf16.gmra.mxu0 %v6128
      %v6839 = vpop.f32.mrf.mxu0
      %v6840 = vadd.f32 %v6053, %v6839
      %v6841 = vpop.f32.mrf.mxu0
      %v6842 = vadd.f32 %v6053, %v6841
      %6843 = vmatmul.bf16.gmra.mxu0 %v6134
      %v6844 = vpop.f32.mrf.mxu0
      %v6845 = vadd.f32 %v6053, %v6844
      %v6846 = vpop.f32.mrf.mxu0
      %v6847 = vadd.f32 %v6053, %v6846
      %6848 = vmatmul.bf16.gmra.mxu0 %v6140
      %v6849 = vpop.f32.mrf.mxu0
      %v6850 = vadd.f32 %v6053, %v6849
      %v6851 = vpop.f32.mrf.mxu0
      %v6852 = vadd.f32 %v6053, %v6851
      %6853 = vmatmul.bf16.gmra.mxu0 %v6146
      %v6854 = vpop.f32.mrf.mxu0
      %v6855 = vadd.f32 %v6053, %v6854
      %v6856 = vpop.f32.mrf.mxu0
      %v6857 = vadd.f32 %v6053, %v6856
      %6858 = vdwg.mxu0
      %6859 = vmatpush.bf16.msra.mxu0 %v6495
      %6860 = vmatpush.bf16.msra.mxu0 %v6493
      %6861 = vmatpush.bf16.msra.mxu0 %v6491
      %6862 = vmatpush.bf16.msra.mxu0 %v6489
      %6863 = vmatpush.bf16.msra.mxu0 %v6487
      %6864 = vmatpush.bf16.msra.mxu0 %v6485
      %6865 = vmatpush.bf16.msra.mxu0 %v6483
      %6866 = vmatpush.bf16.msra.mxu0 %v6481
      %6867 = vmatmul.bf16.gmra.mxu0 %v6129
      %v6868 = vpop.f32.mrf.mxu0
      %v6869 = vadd.f32 %v6840, %v6868
      %v6870 = vpop.f32.mrf.mxu0
      %v6871 = vadd.f32 %v6842, %v6870
      %6872 = vmatmul.bf16.gmra.mxu0 %v6135
      %v6873 = vpop.f32.mrf.mxu0
      %v6874 = vadd.f32 %v6845, %v6873
      %v6875 = vpop.f32.mrf.mxu0
      %v6876 = vadd.f32 %v6847, %v6875
      %6877 = vmatmul.bf16.gmra.mxu0 %v6141
      %v6878 = vpop.f32.mrf.mxu0
      %v6879 = vadd.f32 %v6850, %v6878
      %v6880 = vpop.f32.mrf.mxu0
      %v6881 = vadd.f32 %v6852, %v6880
      %6882 = vmatmul.bf16.gmra.mxu0 %v6147
      %v6883 = vpop.f32.mrf.mxu0
      %v6884 = vadd.f32 %v6855, %v6883
      %v6885 = vpop.f32.mrf.mxu0
      %v6886 = vadd.f32 %v6857, %v6885
      %6887 = vdwg.mxu0
      %6888 = vmatpush.bf16.msra.mxu0 %v6511
      %6889 = vmatpush.bf16.msra.mxu0 %v6509
      %6890 = vmatpush.bf16.msra.mxu0 %v6507
      %6891 = vmatpush.bf16.msra.mxu0 %v6505
      %6892 = vmatpush.bf16.msra.mxu0 %v6503
      %6893 = vmatpush.bf16.msra.mxu0 %v6501
      %6894 = vmatpush.bf16.msra.mxu0 %v6499
      %6895 = vmatpush.bf16.msra.mxu0 %v6497
      %6896 = vmatmul.bf16.gmra.mxu0 %v6130
      %v6897 = vpop.f32.mrf.mxu0
      %v6898 = vadd.f32 %v6869, %v6897
      %v6899 = vpop.f32.mrf.mxu0
      %v6900 = vadd.f32 %v6871, %v6899
      %6901 = vmatmul.bf16.gmra.mxu0 %v6136
      %v6902 = vpop.f32.mrf.mxu0
      %v6903 = vadd.f32 %v6874, %v6902
      %v6904 = vpop.f32.mrf.mxu0
      %v6905 = vadd.f32 %v6876, %v6904
      %6906 = vmatmul.bf16.gmra.mxu0 %v6142
      %v6907 = vpop.f32.mrf.mxu0
      %v6908 = vadd.f32 %v6879, %v6907
      %v6909 = vpop.f32.mrf.mxu0
      %v6910 = vadd.f32 %v6881, %v6909
      %6911 = vmatmul.bf16.gmra.mxu0 %v6148
      %v6912 = vpop.f32.mrf.mxu0
      %v6913 = vadd.f32 %v6884, %v6912
      %v6914 = vpop.f32.mrf.mxu0
      %v6915 = vadd.f32 %v6886, %v6914
      %6916 = vdwg.mxu0
      %6917 = vmatpush.bf16.msra.mxu0 %v6527
      %6918 = vmatpush.bf16.msra.mxu0 %v6525
      %6919 = vmatpush.bf16.msra.mxu0 %v6523
      %6920 = vmatpush.bf16.msra.mxu0 %v6521
      %6921 = vmatpush.bf16.msra.mxu0 %v6519
      %6922 = vmatpush.bf16.msra.mxu0 %v6517
      %6923 = vmatpush.bf16.msra.mxu0 %v6515
      %6924 = vmatpush.bf16.msra.mxu0 %v6513
      %6925 = vmatmul.bf16.gmra.mxu0 %v6131
      %v6926 = vpop.f32.mrf.mxu0
      %v6927 = vadd.f32 %v6898, %v6926
      %v6928 = vpop.f32.mrf.mxu0
      %v6929 = vadd.f32 %v6900, %v6928
      %6930 = vmatmul.bf16.gmra.mxu0 %v6137
      %v6931 = vpop.f32.mrf.mxu0
      %v6932 = vadd.f32 %v6903, %v6931
      %v6933 = vpop.f32.mrf.mxu0
      %v6934 = vadd.f32 %v6905, %v6933
      %6935 = vmatmul.bf16.gmra.mxu0 %v6143
      %v6936 = vpop.f32.mrf.mxu0
      %v6937 = vadd.f32 %v6908, %v6936
      %v6938 = vpop.f32.mrf.mxu0
      %v6939 = vadd.f32 %v6910, %v6938
      %6940 = vmatmul.bf16.gmra.mxu0 %v6149
      %v6941 = vpop.f32.mrf.mxu0
      %v6942 = vadd.f32 %v6913, %v6941
      %v6943 = vpop.f32.mrf.mxu0
      %v6944 = vadd.f32 %v6915, %v6943
      %6945 = vdwg.mxu0
      %6946 = vmatpush.bf16.msra.mxu0 %v6543
      %6947 = vmatpush.bf16.msra.mxu0 %v6541
      %6948 = vmatpush.bf16.msra.mxu0 %v6539
      %6949 = vmatpush.bf16.msra.mxu0 %v6537
      %6950 = vmatpush.bf16.msra.mxu0 %v6535
      %6951 = vmatpush.bf16.msra.mxu0 %v6533
      %6952 = vmatpush.bf16.msra.mxu0 %v6531
      %6953 = vmatpush.bf16.msra.mxu0 %v6529
      %6954 = vmatmul.bf16.gmra.mxu0 %v6132
      %v6955 = vpop.f32.mrf.mxu0
      %v6956 = vadd.f32 %v6927, %v6955
      %v6957 = vpop.f32.mrf.mxu0
      %v6958 = vadd.f32 %v6929, %v6957
      %6959 = vmatmul.bf16.gmra.mxu0 %v6138
      %v6960 = vpop.f32.mrf.mxu0
      %v6961 = vadd.f32 %v6932, %v6960
      %v6962 = vpop.f32.mrf.mxu0
      %v6963 = vadd.f32 %v6934, %v6962
      %6964 = vmatmul.bf16.gmra.mxu0 %v6144
      %v6965 = vpop.f32.mrf.mxu0
      %v6966 = vadd.f32 %v6937, %v6965
      %v6967 = vpop.f32.mrf.mxu0
      %v6968 = vadd.f32 %v6939, %v6967
      %6969 = vmatmul.bf16.gmra.mxu0 %v6150
      %v6970 = vpop.f32.mrf.mxu0
      %v6971 = vadd.f32 %v6942, %v6970
      %v6972 = vpop.f32.mrf.mxu0
      %v6973 = vadd.f32 %v6944, %v6972
      %6974 = vdwg.mxu0
      %6975 = vmatpush.bf16.msra.mxu0 %v6559
      %6976 = vmatpush.bf16.msra.mxu0 %v6557
      %6977 = vmatpush.bf16.msra.mxu0 %v6555
      %6978 = vmatpush.bf16.msra.mxu0 %v6553
      %6979 = vmatpush.bf16.msra.mxu0 %v6551
      %6980 = vmatpush.bf16.msra.mxu0 %v6549
      %6981 = vmatpush.bf16.msra.mxu0 %v6547
      %6982 = vmatpush.bf16.msra.mxu0 %v6545
      %6983 = vmatmul.bf16.gmra.mxu0 %v6133
      %v6984 = vpop.f32.mrf.mxu0
      %v6985 = vadd.f32 %v6956, %v6984
      %v6986 = vpop.f32.mrf.mxu0
      %v6987 = vadd.f32 %v6958, %v6986
      %6988 = vmatmul.bf16.gmra.mxu0 %v6139
      %v6989 = vpop.f32.mrf.mxu0
      %v6990 = vadd.f32 %v6961, %v6989
      %v6991 = vpop.f32.mrf.mxu0
      %v6992 = vadd.f32 %v6963, %v6991
      %6993 = vmatmul.bf16.gmra.mxu0 %v6145
      %v6994 = vpop.f32.mrf.mxu0
      %v6995 = vadd.f32 %v6966, %v6994
      %v6996 = vpop.f32.mrf.mxu0
      %v6997 = vadd.f32 %v6968, %v6996
      %6998 = vmatmul.bf16.gmra.mxu0 %v6151
      %v6999 = vpop.f32.mrf.mxu0
      %v7000 = vadd.f32 %v6971, %v6999
      %v7001 = vpop.f32.mrf.mxu0
      %v7002 = vadd.f32 %v6973, %v7001
      %7003 = vdwg.mxu0
      %v7004 = vmax.f32 %v6811, 0.0
      %v7005 = vmax.f32 %v6985, 0.0
      %v7006 = vmax.f32 %v6813, 0.0
      %v7007 = vmax.f32 %v6987, 0.0
      %v7008 = vmax.f32 %v6816, 0.0
      %v7009 = vmax.f32 %v6990, 0.0
      %v7010 = vmax.f32 %v6818, 0.0
      %v7011 = vmax.f32 %v6992, 0.0
      %v7012 = vmax.f32 %v6821, 0.0
      %v7013 = vmax.f32 %v6995, 0.0
      %v7014 = vmax.f32 %v6823, 0.0
      %v7015 = vmax.f32 %v6997, 0.0
      %v7016 = vmax.f32 %v6826, 0.0
      %v7017 = vmax.f32 %v7000, 0.0
      %v7018 = vmax.f32 %v6828, 0.0
      %v7019 = vmax.f32 %v7002, 0.0
      %v7020 = vpack.c.bf16 %v7006, %v7004
      %v7021 = vpack.c.bf16 %v7007, %v7005
      %v7022 = vpack.c.bf16 %v7010, %v7008
      %v7023 = vpack.c.bf16 %v7011, %v7009
      %v7024 = vpack.c.bf16 %v7014, %v7012
      %v7025 = vpack.c.bf16 %v7015, %v7013
      %v7026 = vpack.c.bf16 %v7018, %v7016
      %v7027 = vpack.c.bf16 %v7019, %v7017
      %v7028 = vld [vmem:[%s14] sm:$0xf]
      %v7029 = vld [vmem:[%s14 + $0x4] sm:$0xf]
      %v7030 = vld [vmem:[%s14 + $0x8] sm:$0xf]
      %v7031 = vld [vmem:[%s14 + $0xc] sm:$0xf]
      %v7032 = vld [vmem:[%s14 + $0x10] sm:$0xf]
      %v7033 = vld [vmem:[%s14 + $0x14] sm:$0xf]
      %v7034 = vld [vmem:[%s14 + $0x18] sm:$0xf]
      %v7035 = vld [vmem:[%s14 + $0x1c] sm:$0xf]
      %v7036 = vld [vmem:[%s14 + $0x20] sm:$0xf]
      %v7037 = vld [vmem:[%s14 + $0x24] sm:$0xf]
      %v7038 = vld [vmem:[%s14 + $0x28] sm:$0xf]
      %v7039 = vld [vmem:[%s14 + $0x2c] sm:$0xf]
      %v7052 = vunpack.c.l.b16 %v7028
      %v7053 = vunpack.c.l.b16 %v7029
      %v7054 = vunpack.c.l.b16 %v7030
      %v7055 = vunpack.c.l.b16 %v7031
      %v7056 = vunpack.c.l.b16 %v7032
      %v7057 = vunpack.c.l.b16 %v7033
      %v7058 = vunpack.c.l.b16 %v7034
      %v7059 = vunpack.c.l.b16 %v7035
      %v7060 = vunpack.c.l.b16 %v7036
      %v7061 = vunpack.c.l.b16 %v7037
      %v7062 = vunpack.c.l.b16 %v7038
      %v7063 = vunpack.c.l.b16 %v7039
      %v7064 = vpack.c.b16 %v7053, %v7052
      %v7065 = vpack.c.b16 %v7055, %v7054
      %v7066 = vpack.c.b16 %v7057, %v7056
      %v7067 = vpack.c.b16 %v7059, %v7058
      %v7068 = vpack.c.b16 %v7061, %v7060
      %v7069 = vpack.c.b16 %v7063, %v7062
      %vm7070 = vcmask 523264
      %v7072 = vsel %vm7070, %v7064, 0
      %v7075 = vsel %vm7070, %v7065, 0
      %v7078 = vsel %vm7070, %v7066, 0
      %v7081 = vsel %vm7070, %v7067, 0
      %v7084 = vsel %vm7070, %v7068, 0
      %v7087 = vsel %vm7070, %v7069, 0
      %7089 = vmatpush.bf16.msra.mxu0 0
      %7090 = vmatpush.bf16.msra.mxu0 0
      %7091 = vmatpush.bf16.msra.mxu0 0
      %7092 = vmatpush.bf16.msra.mxu0 0
      %7093 = vmatpush.bf16.msra.mxu0 %v7026
      %7094 = vmatpush.bf16.msra.mxu0 %v7024
      %7095 = vmatpush.bf16.msra.mxu0 %v7022
      %7096 = vmatpush.bf16.msra.mxu0 %v7020
      %7097 = vmatmul.bf16.gmra.mxu0 %v7072
      %v7098 = vpop.f32.mrf.mxu0
      %v7099 = vadd.f32 0.0, %v7098
      %v7100 = vpop.f32.mrf.mxu0
      %v7101 = vadd.f32 0.0, %v7100
      %7102 = vmatmul.bf16.gmra.mxu0 %v7075
      %v7103 = vpop.f32.mrf.mxu0
      %v7104 = vadd.f32 0.0, %v7103
      %v7105 = vpop.f32.mrf.mxu0
      %v7106 = vadd.f32 0.0, %v7105
      %7107 = vmatmul.bf16.gmra.mxu0 %v7078
      %v7108 = vpop.f32.mrf.mxu0
      %v7109 = vadd.f32 0.0, %v7108
      %v7110 = vpop.f32.mrf.mxu0
      %v7111 = vadd.f32 0.0, %v7110
      %7112 = vmatmul.bf16.gmra.mxu0 %v7081
      %v7113 = vpop.f32.mrf.mxu0
      %v7114 = vadd.f32 0.0, %v7113
      %v7115 = vpop.f32.mrf.mxu0
      %v7116 = vadd.f32 0.0, %v7115
      %7117 = vmatmul.bf16.gmra.mxu0 %v7084
      %v7118 = vpop.f32.mrf.mxu0
      %v7119 = vadd.f32 0.0, %v7118
      %v7120 = vpop.f32.mrf.mxu0
      %v7121 = vadd.f32 0.0, %v7120
      %7122 = vmatmul.bf16.gmra.mxu0 %v7087
      %v7123 = vpop.f32.mrf.mxu0
      %v7124 = vadd.f32 0.0, %v7123
      %v7125 = vpop.f32.mrf.mxu0
      %v7126 = vadd.f32 0.0, %v7125
      %7127 = vdwg.mxu0
      %7128 = vmatpush.bf16.msra.mxu0 0
      %7129 = vmatpush.bf16.msra.mxu0 0
      %7130 = vmatpush.bf16.msra.mxu0 0
      %7131 = vmatpush.bf16.msra.mxu0 0
      %7132 = vmatpush.bf16.msra.mxu0 %v7027
      %7133 = vmatpush.bf16.msra.mxu0 %v7025
      %7134 = vmatpush.bf16.msra.mxu0 %v7023
      %7135 = vmatpush.bf16.msra.mxu0 %v7021
      %7136 = vmatmul.bf16.gmra.mxu0 %v7072
      %v7137 = vpop.f32.mrf.mxu0
      %v7138 = vadd.f32 0.0, %v7137
      %v7139 = vpop.f32.mrf.mxu0
      %v7140 = vadd.f32 0.0, %v7139
      %7141 = vmatmul.bf16.gmra.mxu0 %v7075
      %v7142 = vpop.f32.mrf.mxu0
      %v7143 = vadd.f32 0.0, %v7142
      %v7144 = vpop.f32.mrf.mxu0
      %v7145 = vadd.f32 0.0, %v7144
      %7146 = vmatmul.bf16.gmra.mxu0 %v7078
      %v7147 = vpop.f32.mrf.mxu0
      %v7148 = vadd.f32 0.0, %v7147
      %v7149 = vpop.f32.mrf.mxu0
      %v7150 = vadd.f32 0.0, %v7149
      %7151 = vmatmul.bf16.gmra.mxu0 %v7081
      %v7152 = vpop.f32.mrf.mxu0
      %v7153 = vadd.f32 0.0, %v7152
      %v7154 = vpop.f32.mrf.mxu0
      %v7155 = vadd.f32 0.0, %v7154
      %7156 = vmatmul.bf16.gmra.mxu0 %v7084
      %v7157 = vpop.f32.mrf.mxu0
      %v7158 = vadd.f32 0.0, %v7157
      %v7159 = vpop.f32.mrf.mxu0
      %v7160 = vadd.f32 0.0, %v7159
      %7161 = vmatmul.bf16.gmra.mxu0 %v7087
      %v7162 = vpop.f32.mrf.mxu0
      %v7163 = vadd.f32 0.0, %v7162
      %v7164 = vpop.f32.mrf.mxu0
      %v7165 = vadd.f32 0.0, %v7164
      %7166 = vdwg.mxu0
      %v7167 = vpack.c.bf16 %v7138, %v7099
      %v7168 = vpack.c.bf16 %v7140, %v7101
      %v7169 = vpack.c.bf16 %v7143, %v7104
      %v7170 = vpack.c.bf16 %v7145, %v7106
      %v7171 = vpack.c.bf16 %v7148, %v7109
      %v7172 = vpack.c.bf16 %v7150, %v7111
      %v7173 = vpack.c.bf16 %v7153, %v7114
      %v7174 = vpack.c.bf16 %v7155, %v7116
      %v7175 = vpack.c.bf16 %v7158, %v7119
      %v7176 = vpack.c.bf16 %v7160, %v7121
      %v7177 = vpack.c.bf16 %v7163, %v7124
      %v7178 = vpack.c.bf16 %v7165, %v7126
      %7179 = vst [vmem:[#allocation5] sm:$0xff] %v7167
      %7180 = vst [vmem:[#allocation5 + $0x18] sm:$0xff] %v7168
      %7181 = vst [vmem:[#allocation5 + $0x30] sm:$0xff] %v7169
      %7182 = vst [vmem:[#allocation5 + $0x48] sm:$0xff] %v7170
      %7183 = vst [vmem:[#allocation5 + $0x8] sm:$0xff] %v7171
      %7184 = vst [vmem:[#allocation5 + $0x20] sm:$0xff] %v7172
      %7185 = vst [vmem:[#allocation5 + $0x38] sm:$0xff] %v7173
      %7186 = vst [vmem:[#allocation5 + $0x50] sm:$0xff] %v7174
      %7187 = vst [vmem:[#allocation5 + $0x10] sm:$0xff] %v7175
      %7188 = vst [vmem:[#allocation5 + $0x28] sm:$0xff] %v7176
      %7189 = vst [vmem:[#allocation5 + $0x40] sm:$0xff] %v7177
      %7190 = vst [vmem:[#allocation5 + $0x58] sm:$0xff] %v7178
      %v7191 = vld [vmem:[#allocation5] sm:$0xff]
      %v7192 = vld [vmem:[#allocation5 + $0x8] sm:$0xff]
      %v7193 = vld [vmem:[#allocation5 + $0x10] sm:$0xff]
      %v7194 = vld [vmem:[#allocation5 + $0x18] sm:$0xff]
      %v7195 = vld [vmem:[#allocation5 + $0x20] sm:$0xff]
      %v7196 = vld [vmem:[#allocation5 + $0x28] sm:$0xff]
      %v7197 = vld [vmem:[#allocation5 + $0x30] sm:$0xff]
      %v7198 = vld [vmem:[#allocation5 + $0x38] sm:$0xff]
      %v7199 = vld [vmem:[#allocation5 + $0x40] sm:$0xff]
      %v7200 = vld [vmem:[#allocation5 + $0x48] sm:$0xff]
      %v7201 = vld [vmem:[#allocation5 + $0x50] sm:$0xff]
      %v7202 = vld [vmem:[#allocation5 + $0x58] sm:$0xff]
      %v7203 = vld [vmem:[%s4] sm:$0xf]
      %v7204 = vld [vmem:[%s4 + $0x4] sm:$0xf]
      %v7205 = vld [vmem:[%s4 + $0x8] sm:$0xf]
      %v7206 = vld [vmem:[%s4 + $0xc] sm:$0xf]
      %v7207 = vld [vmem:[%s4 + $0x10] sm:$0xf]
      %v7208 = vld [vmem:[%s4 + $0x14] sm:$0xf]
      %v7209 = vld [vmem:[%s4 + $0x18] sm:$0xf]
      %v7210 = vld [vmem:[%s4 + $0x1c] sm:$0xf]
      %v7211 = vld [vmem:[%s4 + $0x20] sm:$0xf]
      %v7212 = vld [vmem:[%s4 + $0x24] sm:$0xf]
      %v7213 = vld [vmem:[%s4 + $0x28] sm:$0xf]
      %v7214 = vld [vmem:[%s4 + $0x2c] sm:$0xf]
      %v7215 = vld [vmem:[%s4 + $0x30] sm:$0xf]
      %v7216 = vld [vmem:[%s4 + $0x34] sm:$0xf]
      %v7217 = vld [vmem:[%s4 + $0x38] sm:$0xf]
      %v7218 = vld [vmem:[%s4 + $0x3c] sm:$0xf]
      %v7219 = vld [vmem:[%s4 + $0x40] sm:$0xf]
      %v7220 = vld [vmem:[%s4 + $0x44] sm:$0xf]
      %v7221 = vld [vmem:[%s4 + $0x48] sm:$0xf]
      %v7222 = vld [vmem:[%s4 + $0x4c] sm:$0xf]
      %v7223 = vld [vmem:[%s4 + $0x50] sm:$0xf]
      %v7224 = vld [vmem:[%s4 + $0x54] sm:$0xf]
      %v7225 = vld [vmem:[%s4 + $0x58] sm:$0xf]
      %v7226 = vld [vmem:[%s4 + $0x5c] sm:$0xf]
      %v7227 = vld [vmem:[%s4 + $0x60] sm:$0xf]
      %v7228 = vld [vmem:[%s4 + $0x64] sm:$0xf]
      %v7229 = vld [vmem:[%s4 + $0x68] sm:$0xf]
      %v7230 = vld [vmem:[%s4 + $0x6c] sm:$0xf]
      %v7231 = vld [vmem:[%s4 + $0x70] sm:$0xf]
      %v7232 = vld [vmem:[%s4 + $0x74] sm:$0xf]
      %v7233 = vld [vmem:[%s4 + $0x78] sm:$0xf]
      %v7234 = vld [vmem:[%s4 + $0x7c] sm:$0xf]
      %v7235 = vld [vmem:[%s4 + $0x80] sm:$0xf]
      %v7236 = vld [vmem:[%s4 + $0x84] sm:$0xf]
      %v7237 = vld [vmem:[%s4 + $0x88] sm:$0xf]
      %v7238 = vld [vmem:[%s4 + $0x8c] sm:$0xf]
      %v7239 = vld [vmem:[%s4 + $0x90] sm:$0xf]
      %v7240 = vld [vmem:[%s4 + $0x94] sm:$0xf]
      %v7241 = vld [vmem:[%s4 + $0x98] sm:$0xf]
      %v7242 = vld [vmem:[%s4 + $0x9c] sm:$0xf]
      %v7243 = vld [vmem:[%s4 + $0xa0] sm:$0xf]
      %v7244 = vld [vmem:[%s4 + $0xa4] sm:$0xf]
      %v7245 = vld [vmem:[%s4 + $0xa8] sm:$0xf]
      %v7246 = vld [vmem:[%s4 + $0xac] sm:$0xf]
      %v7247 = vld [vmem:[%s4 + $0xb0] sm:$0xf]
      %v7248 = vld [vmem:[%s4 + $0xb4] sm:$0xf]
      %v7249 = vld [vmem:[%s4 + $0xb8] sm:$0xf]
      %v7250 = vld [vmem:[%s4 + $0xbc] sm:$0xf]
      %v7251 = vld [vmem:[%s4 + $0xc0] sm:$0xf]
      %v7252 = vld [vmem:[%s4 + $0xc4] sm:$0xf]
      %v7253 = vld [vmem:[%s4 + $0xc8] sm:$0xf]
      %v7254 = vld [vmem:[%s4 + $0xcc] sm:$0xf]
      %v7255 = vld [vmem:[%s4 + $0xd0] sm:$0xf]
      %v7256 = vld [vmem:[%s4 + $0xd4] sm:$0xf]
      %v7257 = vld [vmem:[%s4 + $0xd8] sm:$0xf]
      %v7258 = vld [vmem:[%s4 + $0xdc] sm:$0xf]
      %v7259 = vld [vmem:[%s4 + $0xe0] sm:$0xf]
      %v7260 = vld [vmem:[%s4 + $0xe4] sm:$0xf]
      %v7261 = vld [vmem:[%s4 + $0xe8] sm:$0xf]
      %v7262 = vld [vmem:[%s4 + $0xec] sm:$0xf]
      %v7263 = vld [vmem:[%s4 + $0xf0] sm:$0xf]
      %v7264 = vld [vmem:[%s4 + $0xf4] sm:$0xf]
      %v7265 = vld [vmem:[%s4 + $0xf8] sm:$0xf]
      %v7266 = vld [vmem:[%s4 + $0xfc] sm:$0xf]
      %v7267 = vld [vmem:[%s4 + $0x100] sm:$0xf]
      %v7268 = vld [vmem:[%s4 + $0x104] sm:$0xf]
      %v7269 = vld [vmem:[%s4 + $0x108] sm:$0xf]
      %v7270 = vld [vmem:[%s4 + $0x10c] sm:$0xf]
      %v7271 = vld [vmem:[%s4 + $0x110] sm:$0xf]
      %v7272 = vld [vmem:[%s4 + $0x114] sm:$0xf]
      %v7273 = vld [vmem:[%s4 + $0x118] sm:$0xf]
      %v7274 = vld [vmem:[%s4 + $0x11c] sm:$0xf]
      %v7275 = vld [vmem:[%s4 + $0x120] sm:$0xf]
      %v7276 = vld [vmem:[%s4 + $0x124] sm:$0xf]
      %v7277 = vld [vmem:[%s4 + $0x128] sm:$0xf]
      %v7278 = vld [vmem:[%s4 + $0x12c] sm:$0xf]
      %v7279 = vld [vmem:[%s4 + $0x130] sm:$0xf]
      %v7280 = vld [vmem:[%s4 + $0x134] sm:$0xf]
      %v7281 = vld [vmem:[%s4 + $0x138] sm:$0xf]
      %v7282 = vld [vmem:[%s4 + $0x13c] sm:$0xf]
      %v7283 = vld [vmem:[%s4 + $0x140] sm:$0xf]
      %v7284 = vld [vmem:[%s4 + $0x144] sm:$0xf]
      %v7285 = vld [vmem:[%s4 + $0x148] sm:$0xf]
      %v7286 = vld [vmem:[%s4 + $0x14c] sm:$0xf]
      %v7287 = vld [vmem:[%s4 + $0x150] sm:$0xf]
      %v7288 = vld [vmem:[%s4 + $0x154] sm:$0xf]
      %v7289 = vld [vmem:[%s4 + $0x158] sm:$0xf]
      %v7290 = vld [vmem:[%s4 + $0x15c] sm:$0xf]
      %v7291 = vld [vmem:[%s4 + $0x160] sm:$0xf]
      %v7292 = vld [vmem:[%s4 + $0x164] sm:$0xf]
      %v7293 = vld [vmem:[%s4 + $0x168] sm:$0xf]
      %v7294 = vld [vmem:[%s4 + $0x16c] sm:$0xf]
      %v7295 = vld [vmem:[%s4 + $0x170] sm:$0xf]
      %v7296 = vld [vmem:[%s4 + $0x174] sm:$0xf]
      %v7297 = vld [vmem:[%s4 + $0x178] sm:$0xf]
      %v7298 = vld [vmem:[%s4 + $0x17c] sm:$0xf]
      %v7299 = vld [vmem:[%s9] sm:$0x1]
      %v7301 = vperm.slane %v7299, 0
      %v7315 = vunpack.c.l.b16 %v7191
      %v7316 = vunpack.c.h.b16 %v7191
      %v7317 = vunpack.c.l.b16 %v7192
      %v7318 = vunpack.c.h.b16 %v7192
      %v7319 = vunpack.c.l.b16 %v7193
      %v7320 = vunpack.c.h.b16 %v7193
      %v7321 = vunpack.c.l.b16 %v7194
      %v7322 = vunpack.c.h.b16 %v7194
      %v7323 = vunpack.c.l.b16 %v7195
      %v7324 = vunpack.c.h.b16 %v7195
      %v7325 = vunpack.c.l.b16 %v7196
      %v7326 = vunpack.c.h.b16 %v7196
      %v7327 = vunpack.c.l.b16 %v7197
      %v7328 = vunpack.c.h.b16 %v7197
      %v7329 = vunpack.c.l.b16 %v7198
      %v7330 = vunpack.c.h.b16 %v7198
      %v7331 = vunpack.c.l.b16 %v7199
      %v7332 = vunpack.c.h.b16 %v7199
      %v7333 = vunpack.c.l.b16 %v7200
      %v7334 = vunpack.c.h.b16 %v7200
      %v7335 = vunpack.c.l.b16 %v7201
      %v7336 = vunpack.c.h.b16 %v7201
      %v7337 = vunpack.c.l.b16 %v7202
      %v7338 = vunpack.c.h.b16 %v7202
      %v7339 = vpack.c.b16 %v7321, %v7315
      %v7340 = vpack.c.b16 %v7322, %v7316
      %v7341 = vpack.c.b16 %v7323, %v7317
      %v7342 = vpack.c.b16 %v7324, %v7318
      %v7343 = vpack.c.b16 %v7325, %v7319
      %v7344 = vpack.c.b16 %v7326, %v7320
      %v7345 = vpack.c.b16 %v7333, %v7327
      %v7346 = vpack.c.b16 %v7334, %v7328
      %v7347 = vpack.c.b16 %v7335, %v7329
      %v7348 = vpack.c.b16 %v7336, %v7330
      %v7349 = vpack.c.b16 %v7337, %v7331
      %v7350 = vpack.c.b16 %v7338, %v7332
      %v7459 = vunpack.c.l.b16 %v7203
      %v7460 = vunpack.c.l.b16 %v7204
      %v7461 = vunpack.c.l.b16 %v7205
      %v7462 = vunpack.c.l.b16 %v7206
      %v7463 = vunpack.c.l.b16 %v7207
      %v7464 = vunpack.c.l.b16 %v7208
      %v7465 = vunpack.c.l.b16 %v7209
      %v7466 = vunpack.c.l.b16 %v7210
      %v7467 = vunpack.c.l.b16 %v7211
      %v7468 = vunpack.c.l.b16 %v7212
      %v7469 = vunpack.c.l.b16 %v7213
      %v7470 = vunpack.c.l.b16 %v7214
      %v7471 = vunpack.c.l.b16 %v7215
      %v7472 = vunpack.c.l.b16 %v7216
      %v7473 = vunpack.c.l.b16 %v7217
      %v7474 = vunpack.c.l.b16 %v7218
      %v7475 = vunpack.c.l.b16 %v7219
      %v7476 = vunpack.c.l.b16 %v7220
      %v7477 = vunpack.c.l.b16 %v7221
      %v7478 = vunpack.c.l.b16 %v7222
      %v7479 = vunpack.c.l.b16 %v7223
      %v7480 = vunpack.c.l.b16 %v7224
      %v7481 = vunpack.c.l.b16 %v7225
      %v7482 = vunpack.c.l.b16 %v7226
      %v7483 = vunpack.c.l.b16 %v7227
      %v7484 = vunpack.c.l.b16 %v7228
      %v7485 = vunpack.c.l.b16 %v7229
      %v7486 = vunpack.c.l.b16 %v7230
      %v7487 = vunpack.c.l.b16 %v7231
      %v7488 = vunpack.c.l.b16 %v7232
      %v7489 = vunpack.c.l.b16 %v7233
      %v7490 = vunpack.c.l.b16 %v7234
      %v7491 = vunpack.c.l.b16 %v7235
      %v7492 = vunpack.c.l.b16 %v7236
      %v7493 = vunpack.c.l.b16 %v7237
      %v7494 = vunpack.c.l.b16 %v7238
      %v7495 = vunpack.c.l.b16 %v7239
      %v7496 = vunpack.c.l.b16 %v7240
      %v7497 = vunpack.c.l.b16 %v7241
      %v7498 = vunpack.c.l.b16 %v7242
      %v7499 = vunpack.c.l.b16 %v7243
      %v7500 = vunpack.c.l.b16 %v7244
      %v7501 = vunpack.c.l.b16 %v7245
      %v7502 = vunpack.c.l.b16 %v7246
      %v7503 = vunpack.c.l.b16 %v7247
      %v7504 = vunpack.c.l.b16 %v7248
      %v7505 = vunpack.c.l.b16 %v7249
      %v7506 = vunpack.c.l.b16 %v7250
      %v7507 = vunpack.c.l.b16 %v7251
      %v7508 = vunpack.c.l.b16 %v7252
      %v7509 = vunpack.c.l.b16 %v7253
      %v7510 = vunpack.c.l.b16 %v7254
      %v7511 = vunpack.c.l.b16 %v7255
      %v7512 = vunpack.c.l.b16 %v7256
      %v7513 = vunpack.c.l.b16 %v7257
      %v7514 = vunpack.c.l.b16 %v7258
      %v7515 = vunpack.c.l.b16 %v7259
      %v7516 = vunpack.c.l.b16 %v7260
      %v7517 = vunpack.c.l.b16 %v7261
      %v7518 = vunpack.c.l.b16 %v7262
      %v7519 = vunpack.c.l.b16 %v7263
      %v7520 = vunpack.c.l.b16 %v7264
      %v7521 = vunpack.c.l.b16 %v7265
      %v7522 = vunpack.c.l.b16 %v7266
      %v7523 = vunpack.c.l.b16 %v7267
      %v7524 = vunpack.c.l.b16 %v7268
      %v7525 = vunpack.c.l.b16 %v7269
      %v7526 = vunpack.c.l.b16 %v7270
      %v7527 = vunpack.c.l.b16 %v7271
      %v7528 = vunpack.c.l.b16 %v7272
      %v7529 = vunpack.c.l.b16 %v7273
      %v7530 = vunpack.c.l.b16 %v7274
      %v7531 = vunpack.c.l.b16 %v7275
      %v7532 = vunpack.c.l.b16 %v7276
      %v7533 = vunpack.c.l.b16 %v7277
      %v7534 = vunpack.c.l.b16 %v7278
      %v7535 = vunpack.c.l.b16 %v7279
      %v7536 = vunpack.c.l.b16 %v7280
      %v7537 = vunpack.c.l.b16 %v7281
      %v7538 = vunpack.c.l.b16 %v7282
      %v7539 = vunpack.c.l.b16 %v7283
      %v7540 = vunpack.c.l.b16 %v7284
      %v7541 = vunpack.c.l.b16 %v7285
      %v7542 = vunpack.c.l.b16 %v7286
      %v7543 = vunpack.c.l.b16 %v7287
      %v7544 = vunpack.c.l.b16 %v7288
      %v7545 = vunpack.c.l.b16 %v7289
      %v7546 = vunpack.c.l.b16 %v7290
      %v7547 = vunpack.c.l.b16 %v7291
      %v7548 = vunpack.c.l.b16 %v7292
      %v7549 = vunpack.c.l.b16 %v7293
      %v7550 = vunpack.c.l.b16 %v7294
      %v7551 = vunpack.c.l.b16 %v7295
      %v7552 = vunpack.c.l.b16 %v7296
      %v7553 = vunpack.c.l.b16 %v7297
      %v7554 = vunpack.c.l.b16 %v7298
      %v7555 = vpack.c.b16 %v7460, %v7459
      %v7556 = vpack.c.b16 %v7462, %v7461
      %v7557 = vpack.c.b16 %v7464, %v7463
      %v7558 = vpack.c.b16 %v7466, %v7465
      %v7559 = vpack.c.b16 %v7468, %v7467
      %v7560 = vpack.c.b16 %v7470, %v7469
      %v7561 = vpack.c.b16 %v7472, %v7471
      %v7562 = vpack.c.b16 %v7474, %v7473
      %v7563 = vpack.c.b16 %v7476, %v7475
      %v7564 = vpack.c.b16 %v7478, %v7477
      %v7565 = vpack.c.b16 %v7480, %v7479
      %v7566 = vpack.c.b16 %v7482, %v7481
      %v7567 = vpack.c.b16 %v7484, %v7483
      %v7568 = vpack.c.b16 %v7486, %v7485
      %v7569 = vpack.c.b16 %v7488, %v7487
      %v7570 = vpack.c.b16 %v7490, %v7489
      %v7571 = vpack.c.b16 %v7492, %v7491
      %v7572 = vpack.c.b16 %v7494, %v7493
      %v7573 = vpack.c.b16 %v7496, %v7495
      %v7574 = vpack.c.b16 %v7498, %v7497
      %v7575 = vpack.c.b16 %v7500, %v7499
      %v7576 = vpack.c.b16 %v7502, %v7501
      %v7577 = vpack.c.b16 %v7504, %v7503
      %v7578 = vpack.c.b16 %v7506, %v7505
      %v7579 = vpack.c.b16 %v7508, %v7507
      %v7580 = vpack.c.b16 %v7510, %v7509
      %v7581 = vpack.c.b16 %v7512, %v7511
      %v7582 = vpack.c.b16 %v7514, %v7513
      %v7583 = vpack.c.b16 %v7516, %v7515
      %v7584 = vpack.c.b16 %v7518, %v7517
      %v7585 = vpack.c.b16 %v7520, %v7519
      %v7586 = vpack.c.b16 %v7522, %v7521
      %v7587 = vpack.c.b16 %v7524, %v7523
      %v7588 = vpack.c.b16 %v7526, %v7525
      %v7589 = vpack.c.b16 %v7528, %v7527
      %v7590 = vpack.c.b16 %v7530, %v7529
      %v7591 = vpack.c.b16 %v7532, %v7531
      %v7592 = vpack.c.b16 %v7534, %v7533
      %v7593 = vpack.c.b16 %v7536, %v7535
      %v7594 = vpack.c.b16 %v7538, %v7537
      %v7595 = vpack.c.b16 %v7540, %v7539
      %v7596 = vpack.c.b16 %v7542, %v7541
      %v7597 = vpack.c.b16 %v7544, %v7543
      %v7598 = vpack.c.b16 %v7546, %v7545
      %v7599 = vpack.c.b16 %v7548, %v7547
      %v7600 = vpack.c.b16 %v7550, %v7549
      %v7601 = vpack.c.b16 %v7552, %v7551
      %v7602 = vpack.c.b16 %v7554, %v7553
      %7651 = vmatpush.bf16.msra.mxu0 %v7562
      %7652 = vmatpush.bf16.msra.mxu0 %v7561
      %7653 = vmatpush.bf16.msra.mxu0 %v7560
      %7654 = vmatpush.bf16.msra.mxu0 %v7559
      %7655 = vmatpush.bf16.msra.mxu0 %v7558
      %7656 = vmatpush.bf16.msra.mxu0 %v7557
      %7657 = vmatpush.bf16.msra.mxu0 %v7556
      %7658 = vmatpush.bf16.msra.mxu0 %v7555
      %7659 = vmatmul.bf16.gmra.mxu0 %v7339
      %v7660 = vpop.f32.mrf.mxu0
      %v7661 = vadd.f32 %v7301, %v7660
      %v7662 = vpop.f32.mrf.mxu0
      %v7663 = vadd.f32 %v7301, %v7662
      %7664 = vmatmul.bf16.gmra.mxu0 %v7345
      %v7665 = vpop.f32.mrf.mxu0
      %v7666 = vadd.f32 %v7301, %v7665
      %v7667 = vpop.f32.mrf.mxu0
      %v7668 = vadd.f32 %v7301, %v7667
      %7669 = vdwg.mxu0
      %7670 = vmatpush.bf16.msra.mxu0 %v7570
      %7671 = vmatpush.bf16.msra.mxu0 %v7569
      %7672 = vmatpush.bf16.msra.mxu0 %v7568
      %7673 = vmatpush.bf16.msra.mxu0 %v7567
      %7674 = vmatpush.bf16.msra.mxu0 %v7566
      %7675 = vmatpush.bf16.msra.mxu0 %v7565
      %7676 = vmatpush.bf16.msra.mxu0 %v7564
      %7677 = vmatpush.bf16.msra.mxu0 %v7563
      %7678 = vmatmul.bf16.gmra.mxu0 %v7340
      %v7679 = vpop.f32.mrf.mxu0
      %v7680 = vadd.f32 %v7661, %v7679
      %v7681 = vpop.f32.mrf.mxu0
      %v7682 = vadd.f32 %v7663, %v7681
      %7683 = vmatmul.bf16.gmra.mxu0 %v7346
      %v7684 = vpop.f32.mrf.mxu0
      %v7685 = vadd.f32 %v7666, %v7684
      %v7686 = vpop.f32.mrf.mxu0
      %v7687 = vadd.f32 %v7668, %v7686
      %7688 = vdwg.mxu0
      %7689 = vmatpush.bf16.msra.mxu0 %v7578
      %7690 = vmatpush.bf16.msra.mxu0 %v7577
      %7691 = vmatpush.bf16.msra.mxu0 %v7576
      %7692 = vmatpush.bf16.msra.mxu0 %v7575
      %7693 = vmatpush.bf16.msra.mxu0 %v7574
      %7694 = vmatpush.bf16.msra.mxu0 %v7573
      %7695 = vmatpush.bf16.msra.mxu0 %v7572
      %7696 = vmatpush.bf16.msra.mxu0 %v7571
      %7697 = vmatmul.bf16.gmra.mxu0 %v7341
      %v7698 = vpop.f32.mrf.mxu0
      %v7699 = vadd.f32 %v7680, %v7698
      %v7700 = vpop.f32.mrf.mxu0
      %v7701 = vadd.f32 %v7682, %v7700
      %7702 = vmatmul.bf16.gmra.mxu0 %v7347
      %v7703 = vpop.f32.mrf.mxu0
      %v7704 = vadd.f32 %v7685, %v7703
      %v7705 = vpop.f32.mrf.mxu0
      %v7706 = vadd.f32 %v7687, %v7705
      %7707 = vdwg.mxu0
      %7708 = vmatpush.bf16.msra.mxu0 %v7586
      %7709 = vmatpush.bf16.msra.mxu0 %v7585
      %7710 = vmatpush.bf16.msra.mxu0 %v7584
      %7711 = vmatpush.bf16.msra.mxu0 %v7583
      %7712 = vmatpush.bf16.msra.mxu0 %v7582
      %7713 = vmatpush.bf16.msra.mxu0 %v7581
      %7714 = vmatpush.bf16.msra.mxu0 %v7580
      %7715 = vmatpush.bf16.msra.mxu0 %v7579
      %7716 = vmatmul.bf16.gmra.mxu0 %v7342
      %v7717 = vpop.f32.mrf.mxu0
      %v7718 = vadd.f32 %v7699, %v7717
      %v7719 = vpop.f32.mrf.mxu0
      %v7720 = vadd.f32 %v7701, %v7719
      %7721 = vmatmul.bf16.gmra.mxu0 %v7348
      %v7722 = vpop.f32.mrf.mxu0
      %v7723 = vadd.f32 %v7704, %v7722
      %v7724 = vpop.f32.mrf.mxu0
      %v7725 = vadd.f32 %v7706, %v7724
      %7726 = vdwg.mxu0
      %7727 = vmatpush.bf16.msra.mxu0 %v7594
      %7728 = vmatpush.bf16.msra.mxu0 %v7593
      %7729 = vmatpush.bf16.msra.mxu0 %v7592
      %7730 = vmatpush.bf16.msra.mxu0 %v7591
      %7731 = vmatpush.bf16.msra.mxu0 %v7590
      %7732 = vmatpush.bf16.msra.mxu0 %v7589
      %7733 = vmatpush.bf16.msra.mxu0 %v7588
      %7734 = vmatpush.bf16.msra.mxu0 %v7587
      %7735 = vmatmul.bf16.gmra.mxu0 %v7343
      %v7736 = vpop.f32.mrf.mxu0
      %v7737 = vadd.f32 %v7718, %v7736
      %v7738 = vpop.f32.mrf.mxu0
      %v7739 = vadd.f32 %v7720, %v7738
      %7740 = vmatmul.bf16.gmra.mxu0 %v7349
      %v7741 = vpop.f32.mrf.mxu0
      %v7742 = vadd.f32 %v7723, %v7741
      %v7743 = vpop.f32.mrf.mxu0
      %v7744 = vadd.f32 %v7725, %v7743
      %7745 = vdwg.mxu0
      %7746 = vmatpush.bf16.msra.mxu0 %v7602
      %7747 = vmatpush.bf16.msra.mxu0 %v7601
      %7748 = vmatpush.bf16.msra.mxu0 %v7600
      %7749 = vmatpush.bf16.msra.mxu0 %v7599
      %7750 = vmatpush.bf16.msra.mxu0 %v7598
      %7751 = vmatpush.bf16.msra.mxu0 %v7597
      %7752 = vmatpush.bf16.msra.mxu0 %v7596
      %7753 = vmatpush.bf16.msra.mxu0 %v7595
      %7754 = vmatmul.bf16.gmra.mxu0 %v7344
      %v7755 = vpop.f32.mrf.mxu0
      %v7756 = vadd.f32 %v7737, %v7755
      %v7757 = vpop.f32.mrf.mxu0
      %v7758 = vadd.f32 %v7739, %v7757
      %7759 = vmatmul.bf16.gmra.mxu0 %v7350
      %v7760 = vpop.f32.mrf.mxu0
      %v7761 = vadd.f32 %v7742, %v7760
      %v7762 = vpop.f32.mrf.mxu0
      %v7763 = vadd.f32 %v7744, %v7762
      %7764 = vdwg.mxu0
      %v7765 = vmax.f32 %v7756, 0.0
      %v7766 = vmax.f32 %v7758, 0.0
      %v7767 = vmax.f32 %v7761, 0.0
      %v7768 = vmax.f32 %v7763, 0.0
      %v7769 = vpack.c.bf16 %v7766, %v7765
      %v7770 = vpack.c.bf16 %v7768, %v7767
      %v7771 = vld [vmem:[%s15] sm:$0xf]
      %v7772 = vld [vmem:[%s15 + $0x4] sm:$0xf]
      %v7773 = vld [vmem:[%s15 + $0x8] sm:$0xf]
      %v7774 = vld [vmem:[%s15 + $0xc] sm:$0xf]
      %v7775 = vld [vmem:[%s15 + $0x10] sm:$0xf]
      %v7776 = vld [vmem:[%s15 + $0x14] sm:$0xf]
      %v7783 = vunpack.c.l.b16 %v7771
      %v7784 = vunpack.c.l.b16 %v7772
      %v7785 = vunpack.c.l.b16 %v7773
      %v7786 = vunpack.c.l.b16 %v7774
      %v7787 = vunpack.c.l.b16 %v7775
      %v7788 = vunpack.c.l.b16 %v7776
      %v7789 = vpack.c.b16 %v7784, %v7783
      %v7790 = vpack.c.b16 %v7786, %v7785
      %v7791 = vpack.c.b16 %v7788, %v7787
      %vm7792 = vcmask 261120
      %v7794 = vsel %vm7792, %v7789, 0
      %v7797 = vsel %vm7792, %v7790, 0
      %v7800 = vsel %vm7792, %v7791, 0
      %7802 = vmatpush.bf16.msra.mxu0 0
      %7803 = vmatpush.bf16.msra.mxu0 0
      %7804 = vmatpush.bf16.msra.mxu0 0
      %7805 = vmatpush.bf16.msra.mxu0 0
      %7806 = vmatpush.bf16.msra.mxu0 0
      %7807 = vmatpush.bf16.msra.mxu0 0
      %7808 = vmatpush.bf16.msra.mxu0 %v7770
      %7809 = vmatpush.bf16.msra.mxu0 %v7769
      %7810 = vmatmul.bf16.gmra.mxu0 %v7794
      %v7811 = vpop.f32.mrf.mxu0
      %v7812 = vadd.f32 0.0, %v7811
      %v7813 = vpop.f32.mrf.mxu0
      %v7814 = vadd.f32 0.0, %v7813
      %7815 = vmatmul.bf16.gmra.mxu0 %v7797
      %v7816 = vpop.f32.mrf.mxu0
      %v7817 = vadd.f32 0.0, %v7816
      %v7818 = vpop.f32.mrf.mxu0
      %v7819 = vadd.f32 0.0, %v7818
      %7820 = vmatmul.bf16.gmra.mxu0 %v7800
      %v7821 = vpop.f32.mrf.mxu0
      %v7822 = vadd.f32 0.0, %v7821
      %v7823 = vpop.f32.mrf.mxu0
      %v7824 = vadd.f32 0.0, %v7823
      %7825 = vdwg.mxu0
      %v7826 = vpack.c.bf16 %v7812, %v7812
      %v7827 = vpack.c.bf16 %v7814, %v7814
      %v7828 = vpack.c.bf16 %v7817, %v7817
      %v7829 = vpack.c.bf16 %v7819, %v7819
      %v7830 = vpack.c.bf16 %v7822, %v7822
      %v7831 = vpack.c.bf16 %v7824, %v7824
      %7832 = vst [vmem:[#allocation6] sm:$0xf] %v7826
      %7833 = vst [vmem:[#allocation6 + $0xc] sm:$0xf] %v7827
      %7834 = vst [vmem:[#allocation6 + $0x4] sm:$0xf] %v7828
      %7835 = vst [vmem:[#allocation6 + $0x10] sm:$0xf] %v7829
      %7836 = vst [vmem:[#allocation6 + $0x8] sm:$0xf] %v7830
      %7837 = vst [vmem:[#allocation6 + $0x14] sm:$0xf] %v7831
      %v7838 = vld [vmem:[#allocation6] sm:$0xff]
      %v7839 = vld [vmem:[#allocation6 + $0x8] sm:$0xf]
      %v7840 = vld [vmem:[#allocation6 + $0xc] sm:$0xff]
      %v7841 = vld [vmem:[#allocation6 + $0x14] sm:$0xf]
      %v7842 = vld [vmem:[%s5] sm:$0xf]
      %v7843 = vld [vmem:[%s5 + $0x4] sm:$0xf]
      %v7844 = vld [vmem:[%s5 + $0x8] sm:$0xf]
      %v7845 = vld [vmem:[%s5 + $0xc] sm:$0xf]
      %v7846 = vld [vmem:[%s5 + $0x10] sm:$0xf]
      %v7847 = vld [vmem:[%s5 + $0x14] sm:$0xf]
      %v7848 = vld [vmem:[%s5 + $0x18] sm:$0xf]
      %v7849 = vld [vmem:[%s5 + $0x1c] sm:$0xf]
      %v7850 = vld [vmem:[%s5 + $0x20] sm:$0xf]
      %v7851 = vld [vmem:[%s5 + $0x24] sm:$0xf]
      %v7852 = vld [vmem:[%s5 + $0x28] sm:$0xf]
      %v7853 = vld [vmem:[%s5 + $0x2c] sm:$0xf]
      %v7854 = vld [vmem:[%s5 + $0x30] sm:$0xf]
      %v7855 = vld [vmem:[%s5 + $0x34] sm:$0xf]
      %v7856 = vld [vmem:[%s5 + $0x38] sm:$0xf]
      %v7857 = vld [vmem:[%s5 + $0x3c] sm:$0xf]
      %v7858 = vld [vmem:[%s5 + $0x40] sm:$0xf]
      %v7859 = vld [vmem:[%s5 + $0x44] sm:$0xf]
      %v7860 = vld [vmem:[%s5 + $0x48] sm:$0xf]
      %v7861 = vld [vmem:[%s5 + $0x4c] sm:$0xf]
      %v7862 = vld [vmem:[%s5 + $0x50] sm:$0xf]
      %v7863 = vld [vmem:[%s5 + $0x54] sm:$0xf]
      %v7864 = vld [vmem:[%s5 + $0x58] sm:$0xf]
      %v7865 = vld [vmem:[%s5 + $0x5c] sm:$0xf]
      %v7866 = vld [vmem:[%s5 + $0x60] sm:$0xf]
      %v7867 = vld [vmem:[%s5 + $0x64] sm:$0xf]
      %v7868 = vld [vmem:[%s5 + $0x68] sm:$0xf]
      %v7869 = vld [vmem:[%s5 + $0x6c] sm:$0xf]
      %v7870 = vld [vmem:[%s5 + $0x70] sm:$0xf]
      %v7871 = vld [vmem:[%s5 + $0x74] sm:$0xf]
      %v7872 = vld [vmem:[%s5 + $0x78] sm:$0xf]
      %v7873 = vld [vmem:[%s5 + $0x7c] sm:$0xf]
      %v7874 = vld [vmem:[%s5 + $0x80] sm:$0xf]
      %v7875 = vld [vmem:[%s5 + $0x84] sm:$0xf]
      %v7876 = vld [vmem:[%s5 + $0x88] sm:$0xf]
      %v7877 = vld [vmem:[%s5 + $0x8c] sm:$0xf]
      %v7878 = vld [vmem:[%s5 + $0x90] sm:$0xf]
      %v7879 = vld [vmem:[%s5 + $0x94] sm:$0xf]
      %v7880 = vld [vmem:[%s5 + $0x98] sm:$0xf]
      %v7881 = vld [vmem:[%s5 + $0x9c] sm:$0xf]
      %v7882 = vld [vmem:[%s5 + $0xa0] sm:$0xf]
      %v7883 = vld [vmem:[%s5 + $0xa4] sm:$0xf]
      %v7884 = vld [vmem:[%s5 + $0xa8] sm:$0xf]
      %v7885 = vld [vmem:[%s5 + $0xac] sm:$0xf]
      %v7886 = vld [vmem:[%s5 + $0xb0] sm:$0xf]
      %v7887 = vld [vmem:[%s5 + $0xb4] sm:$0xf]
      %v7888 = vld [vmem:[%s5 + $0xb8] sm:$0xf]
      %v7889 = vld [vmem:[%s5 + $0xbc] sm:$0xf]
      %v7890 = vld [vmem:[%s10] sm:$0x1]
      %v7892 = vperm.slane %v7890, 0
      %v7898 = vunpack.c.l.b16 %v7838
      %v7899 = vunpack.c.h.b16 %v7838
      %v7900 = vunpack.c.l.b16 %v7839
      %v7901 = vunpack.c.l.b16 %v7840
      %v7902 = vunpack.c.h.b16 %v7840
      %v7903 = vunpack.c.l.b16 %v7841
      %v7904 = vpack.c.b16 %v7901, %v7898
      %v7905 = vpack.c.b16 %v7902, %v7899
      %v7906 = vpack.c.b16 %v7903, %v7900
      %v7958 = vunpack.c.l.b16 %v7842
      %v7959 = vunpack.c.l.b16 %v7843
      %v7960 = vunpack.c.l.b16 %v7844
      %v7961 = vunpack.c.l.b16 %v7845
      %v7962 = vunpack.c.l.b16 %v7846
      %v7963 = vunpack.c.l.b16 %v7847
      %v7964 = vunpack.c.l.b16 %v7848
      %v7965 = vunpack.c.l.b16 %v7849
      %v7966 = vunpack.c.l.b16 %v7850
      %v7967 = vunpack.c.l.b16 %v7851
      %v7968 = vunpack.c.l.b16 %v7852
      %v7969 = vunpack.c.l.b16 %v7853
      %v7970 = vunpack.c.l.b16 %v7854
      %v7971 = vunpack.c.l.b16 %v7855
      %v7972 = vunpack.c.l.b16 %v7856
      %v7973 = vunpack.c.l.b16 %v7857
      %v7974 = vunpack.c.l.b16 %v7858
      %v7975 = vunpack.c.l.b16 %v7859
      %v7976 = vunpack.c.l.b16 %v7860
      %v7977 = vunpack.c.l.b16 %v7861
      %v7978 = vunpack.c.l.b16 %v7862
      %v7979 = vunpack.c.l.b16 %v7863
      %v7980 = vunpack.c.l.b16 %v7864
      %v7981 = vunpack.c.l.b16 %v7865
      %v7982 = vunpack.c.l.b16 %v7866
      %v7983 = vunpack.c.l.b16 %v7867
      %v7984 = vunpack.c.l.b16 %v7868
      %v7985 = vunpack.c.l.b16 %v7869
      %v7986 = vunpack.c.l.b16 %v7870
      %v7987 = vunpack.c.l.b16 %v7871
      %v7988 = vunpack.c.l.b16 %v7872
      %v7989 = vunpack.c.l.b16 %v7873
      %v7990 = vunpack.c.l.b16 %v7874
      %v7991 = vunpack.c.l.b16 %v7875
      %v7992 = vunpack.c.l.b16 %v7876
      %v7993 = vunpack.c.l.b16 %v7877
      %v7994 = vunpack.c.l.b16 %v7878
      %v7995 = vunpack.c.l.b16 %v7879
      %v7996 = vunpack.c.l.b16 %v7880
      %v7997 = vunpack.c.l.b16 %v7881
      %v7998 = vunpack.c.l.b16 %v7882
      %v7999 = vunpack.c.l.b16 %v7883
      %v8000 = vunpack.c.l.b16 %v7884
      %v8001 = vunpack.c.l.b16 %v7885
      %v8002 = vunpack.c.l.b16 %v7886
      %v8003 = vunpack.c.l.b16 %v7887
      %v8004 = vunpack.c.l.b16 %v7888
      %v8005 = vunpack.c.l.b16 %v7889
      %v8006 = vpack.c.b16 %v7959, %v7958
      %v8007 = vpack.c.b16 %v7961, %v7960
      %v8008 = vpack.c.b16 %v7963, %v7962
      %v8009 = vpack.c.b16 %v7965, %v7964
      %v8010 = vpack.c.b16 %v7967, %v7966
      %v8011 = vpack.c.b16 %v7969, %v7968
      %v8012 = vpack.c.b16 %v7971, %v7970
      %v8013 = vpack.c.b16 %v7973, %v7972
      %v8014 = vpack.c.b16 %v7975, %v7974
      %v8015 = vpack.c.b16 %v7977, %v7976
      %v8016 = vpack.c.b16 %v7979, %v7978
      %v8017 = vpack.c.b16 %v7981, %v7980
      %v8018 = vpack.c.b16 %v7983, %v7982
      %v8019 = vpack.c.b16 %v7985, %v7984
      %v8020 = vpack.c.b16 %v7987, %v7986
      %v8021 = vpack.c.b16 %v7989, %v7988
      %v8022 = vpack.c.b16 %v7991, %v7990
      %v8023 = vpack.c.b16 %v7993, %v7992
      %v8024 = vpack.c.b16 %v7995, %v7994
      %v8025 = vpack.c.b16 %v7997, %v7996
      %v8026 = vpack.c.b16 %v7999, %v7998
      %v8027 = vpack.c.b16 %v8001, %v8000
      %v8028 = vpack.c.b16 %v8003, %v8002
      %v8029 = vpack.c.b16 %v8005, %v8004
      %8054 = vmatpush.bf16.msra.mxu0 %v8013
      %8055 = vmatpush.bf16.msra.mxu0 %v8012
      %8056 = vmatpush.bf16.msra.mxu0 %v8011
      %8057 = vmatpush.bf16.msra.mxu0 %v8010
      %8058 = vmatpush.bf16.msra.mxu0 %v8009
      %8059 = vmatpush.bf16.msra.mxu0 %v8008
      %8060 = vmatpush.bf16.msra.mxu0 %v8007
      %8061 = vmatpush.bf16.msra.mxu0 %v8006
      %8062 = vmatmul.bf16.gmra.mxu0 %v7904
      %v8063 = vpop.f32.mrf.mxu0
      %v8064 = vadd.f32 %v7892, %v8063
      %v8065 = vpop.f32.mrf.mxu0
      %v8066 = vadd.f32 %v7892, %v8065
      %8067 = vdwg.mxu0
      %8068 = vmatpush.bf16.msra.mxu0 %v8021
      %8069 = vmatpush.bf16.msra.mxu0 %v8020
      %8070 = vmatpush.bf16.msra.mxu0 %v8019
      %8071 = vmatpush.bf16.msra.mxu0 %v8018
      %8072 = vmatpush.bf16.msra.mxu0 %v8017
      %8073 = vmatpush.bf16.msra.mxu0 %v8016
      %8074 = vmatpush.bf16.msra.mxu0 %v8015
      %8075 = vmatpush.bf16.msra.mxu0 %v8014
      %8076 = vmatmul.bf16.gmra.mxu0 %v7905
      %v8077 = vpop.f32.mrf.mxu0
      %v8078 = vadd.f32 %v8064, %v8077
      %v8079 = vpop.f32.mrf.mxu0
      %v8080 = vadd.f32 %v8066, %v8079
      %8081 = vdwg.mxu0
      %8082 = vmatpush.bf16.msra.mxu0 %v8029
      %8083 = vmatpush.bf16.msra.mxu0 %v8028
      %8084 = vmatpush.bf16.msra.mxu0 %v8027
      %8085 = vmatpush.bf16.msra.mxu0 %v8026
      %8086 = vmatpush.bf16.msra.mxu0 %v8025
      %8087 = vmatpush.bf16.msra.mxu0 %v8024
      %8088 = vmatpush.bf16.msra.mxu0 %v8023
      %8089 = vmatpush.bf16.msra.mxu0 %v8022
      %8090 = vmatmul.bf16.gmra.mxu0 %v7906
      %v8091 = vpop.f32.mrf.mxu0
      %v8092 = vadd.f32 %v8078, %v8091
      %v8093 = vpop.f32.mrf.mxu0
      %v8094 = vadd.f32 %v8080, %v8093
      %8095 = vdwg.mxu0
      %v8096 = vld [vmem:[%s16] sm:$0xf]
      %v8097 = vpack.c.bf16 %v8094, %v8092
      %vm8098 = vcmask 130048
      %v8100 = vsel %vm8098, %v8096, 0
      %8102 = vmatpush.bf16.msra.mxu0 0
      %8103 = vmatpush.bf16.msra.mxu0 0
      %8104 = vmatpush.bf16.msra.mxu0 0
      %8105 = vmatpush.bf16.msra.mxu0 0
      %8106 = vmatpush.bf16.msra.mxu0 0
      %8107 = vmatpush.bf16.msra.mxu0 0
      %8108 = vmatpush.bf16.msra.mxu0 0
      %8109 = vmatpush.bf16.msra.mxu0 %v8097
      %8110 = vmatmul.bf16.gmra.mxu0 %v8100
      %v8111 = vpop.f32.mrf.mxu0
      %v8112 = vadd.f32 0.0, %v8111
      %v8113 = vpop.f32.mrf.mxu0
      %8114 = vdwg.mxu0
      %v8115 = vpack.c.bf16 %v8112, %v8112
      %v8116 = vld [vmem:[%s17] sm:$0xf]
      %v8117 = vld [vmem:[%s17 + $0x4] sm:$0xf]
      %v8118 = vld [vmem:[%s17 + $0x8] sm:$0xf]
      %v8119 = vld [vmem:[%s17 + $0xc] sm:$0xf]
      %v8120 = vld [vmem:[%s17 + $0x10] sm:$0xf]
      %v8121 = vld [vmem:[%s17 + $0x14] sm:$0xf]
      %v8122 = vld [vmem:[%s17 + $0x18] sm:$0xf]
      %v8123 = vld [vmem:[%s17 + $0x1c] sm:$0xf]
      %v8124 = vld [vmem:[%s18] sm:$0x1]
      %v8126 = vperm.slane %v8124, 0
      %v8136 = vunpack.c.l.b16 %v8116
      %v8137 = vunpack.c.l.b16 %v8117
      %v8138 = vunpack.c.l.b16 %v8118
      %v8139 = vunpack.c.l.b16 %v8119
      %v8140 = vunpack.c.l.b16 %v8120
      %v8141 = vunpack.c.l.b16 %v8121
      %v8142 = vunpack.c.l.b16 %v8122
      %v8143 = vunpack.c.l.b16 %v8123
      %v8144 = vpack.c.b16 %v8137, %v8136
      %v8145 = vpack.c.b16 %v8139, %v8138
      %v8146 = vpack.c.b16 %v8141, %v8140
      %v8147 = vpack.c.b16 %v8143, %v8142
      %v8153 = vsel %vm7070, %v8115, 0
      %8155 = vmatpush.bf16.msra.mxu0 0
      %8156 = vmatpush.bf16.msra.mxu0 0
      %8157 = vmatpush.bf16.msra.mxu0 0
      %8158 = vmatpush.bf16.msra.mxu0 0
      %8159 = vmatpush.bf16.msra.mxu0 %v8147
      %8160 = vmatpush.bf16.msra.mxu0 %v8146
      %8161 = vmatpush.bf16.msra.mxu0 %v8145
      %8162 = vmatpush.bf16.msra.mxu0 %v8144
      %8163 = vmatmul.bf16.gmra.mxu0 %v8153
      %v8164 = vpop.f32.mrf.mxu0
      %v8165 = vadd.f32 %v8126, %v8164
      %v8166 = vpop.f32.mrf.mxu0
      %8167 = vdwg.mxu0
      %vm8168 = vcmask 80896
      %8169 = vst.msk [vmem:[%s602] sm:$0xff] %vm8168, %v8165
      %p8170 = scmp.lt.s32.totalorder %s30, 1
      %s8171 = scalar_select %p8170, %s30, 1
      %s8172 = smul.addr %s8171, 8
      %s8173 = scalar_lea.vmem %s19, %s8172
      // Predicated region
      $region97: #{model5l_forward.1} parent=95 // pred_check
        %p8174 = pneg %p452
      $region98: #{model5l_forward.1} parent=95 // pred_check_branch
        %8176 = sbr.rel (%p8174) target = $region100
      $region99: #{model5l_forward.1} parent=95 // pred_region
        _
      $region100: #{model5l_forward.1} parent=95 // pred_fallthru
        _
    $region96: #{model5l_forward.1} parent=5 // pred_fallthru
      _
    %p8177 = scmp.le.s32.totalorder 2, %s25
    // Predicated region
    $region101: #{model5l_forward.1} parent=5 // pred_check
      %p8178 = pneg %p8177
    $region102: #{model5l_forward.1} parent=5 // pred_check_branch
      %8180 = sbr.rel (%p8178) target = $region104
    $region103: #{model5l_forward.1} parent=5 // pred_region
      %s8181 = ssub.s32 %s25, 2
      // Predicated region
      $region105: #{model5l_forward.1} parent=103 // pred_check
        %p8182 = pneg %p458
      $region106: #{model5l_forward.1} parent=103 // pred_check_branch
        %8184 = sbr.rel (%p8182) target = $region108
      $region107: #{model5l_forward.1} parent=103 // pred_region
        %p8185 = scmp.lt.s32.totalorder %s31, 1
        %s8186 = scalar_select %p8185, %s31, 1
        %s8187 = smul.addr %s8186, 8
        %s8188 = scalar_lea.vmem %s19, %s8187
      $region108: #{model5l_forward.1} parent=103 // pred_fallthru
        _
    $region104: #{model5l_forward.1} parent=5 // pred_fallthru
      _
  $region6: #{model5l_forward.1} parent=0 // loop_footer
    %s29 = sadd.s32 1, %s25
  $region7: #{model5l_forward.1} parent=0 // loop_footer_branch
    %24 = sbr.rel target = $region3
  $region8: #{model5l_forward.1} parent=0 // loop_exit
    _

</llo_original>
